<compile_context>
chip_gen: v6e
topology: v6e:2x2x1
jax: 0.10.0
libtpu: 0.0.40
codegen_flags: <defaults>
</compile_context>

<pallas_src>
import jax
import jax.numpy as jnp
from jax.experimental import pallas as pl
from jax.experimental.pallas import tpu as pltpu

NUM_GROUPS = 4     # TODO(synk): NormalizationLayer(norm_type='group') assumed GroupNorm(4, C, affine)
GN_EPS = 1e-5
BN_EPS = 1e-5


# ----------------------------------------------------------------------------
# in-kernel math helpers
# ----------------------------------------------------------------------------
def _erf(x):
    # Abramowitz & Stegun 7.1.26 (max abs error ~1.5e-7): exp/abs/where only.
    a1, a2, a3, a4, a5 = 0.254829592, -0.284496736, 1.421413741, -1.453152027, 1.061405429
    p = 0.3275911
    ax = jnp.abs(x)
    t = 1.0 / (1.0 + p * ax)
    poly = ((((a5 * t + a4) * t + a3) * t + a2) * t + a1) * t
    y = 1.0 - poly * jnp.exp(-ax * ax)
    return jnp.where(x >= 0, y, -y)


def _gelu(x):
    # exact (erf-based) GELU, matching torch.nn.GELU() default
    return 0.5 * x * (1.0 + _erf(x * 0.7071067811865476))


# ----------------------------------------------------------------------------
# tiling helpers
# ----------------------------------------------------------------------------
def _pick_tile_d(D, H):
    # largest D tile that keeps >=2 grid steps along D and 8-aligned output rows
    cands = [t for t in range(1, D) if D % t == 0 and (t * H) % 8 == 0 and t * H <= 256]
    return max(cands) if cands else D


def _pick_tile_rows(R):
    cands = [t for t in range(1, R + 1) if R % t == 0 and t <= 512 and (t % 8 == 0 or t == R)]
    return max(cands) if cands else R


# ----------------------------------------------------------------------------
# weight / parameter re-layout (wrapper side, done once)
# ----------------------------------------------------------------------------
def _band_conv_weight(w5, W):
    # (5,5,5,cin,cout) -> (5, 5*(W+4)*cin, W*cout)
    # K order = (kh, w_padded, ci) to match the kernel's lane layout; N = (w, co).
    kD, kH, kW, cin, cout = w5.shape
    Wp = W + kW - 1
    bw = jnp.zeros((kD, kH, Wp, cin, W, cout), w5.dtype)
    for w in range(W):
        bw = bw.at[:, :, w:w + kW, :, w, :].set(w5)
    return bw.reshape(kD, kH * Wp * cin, W * cout)


def _band_pointwise_weight(rw, W):
    # (cin, cout) 1x1 conv as a block-banded matmul on the (w_padded, ci) lanes
    cin, cout = rw.shape
    Wp = W + 4
    bw = jnp.zeros((Wp, cin, W, cout), rw.dtype)
    for w in range(W):
        bw = bw.at[w + 2, :, w, :].set(rw)
    return bw.reshape(Wp * cin, W * cout)


def _row(v, W):
    # per-channel vector (C,) -> (1, W*C) lane row matching the (w, c) lane order
    return jnp.tile(v, W).reshape(1, W * v.shape[0])


# ----------------------------------------------------------------------------
# Kernel A: Conv3d(k=5, pad=2) + bias + partial GroupNorm moments
#           (+ fused residual Conv1x1 + BatchNorm(eval) + GELU for layer 0)
# ----------------------------------------------------------------------------
def _make_conv5_kernel(tile_d, H, W, Wpc, cout, fuse_res):
    rows = tile_d * H          # output rows of this tile, flattened (d, h)
    L = W * cout               # lane-dense output columns, flattened (w, c)
    Kb = 5 * Wpc               # contraction after kh-folding: (kh, w_padded, ci)

    def kernel(*refs):
        if fuse_res:
            (x_ref, w_ref, b_ref, rw_ref, rb_ref, rs_ref, rsh_ref,
             y_ref, ssum_ref, ssq_ref, res_ref, xh_ref) = refs
        else:
            (x_ref, w_ref, b_ref, y_ref, ssum_ref, ssq_ref, xh_ref) = refs

        d = pl.program_id(1)
        dlo = d * tile_d

        # Halo window for this D tile: (tile_d+4, H+4, (W+4)*cin).  Small f32 copy
        # for the (unaligned) sub-lane slicing below.
        xd = x_ref[pl.ds(dlo, tile_d + 4), :, :].astype(jnp.float32)

        # Fold the 5 kh taps into the contraction (lane) axis once per tile and
        # stage the slab in VMEM scratch -> 5 fat matmuls instead of 125 tiny ones.
        xcat = jnp.concatenate([xd[:, kh:kh + H, :] for kh in range(5)], axis=-1)
        xh_ref[...] = xcat.astype(jnp.bfloat16)

        # (tile_d*H, 5*(W+4)*cin) @ (5*(W+4)*cin, W*cout), bf16 in, f32 accumulate.
        # Accumulator is only (rows, L) f32 (~4 vregs): no register spills.
        acc = jnp.zeros((rows, L), jnp.float32)
        for kd in range(5):
            lhs = xh_ref[kd:kd + tile_d, :, :].reshape(rows, Kb)
            acc = acc + jnp.dot(lhs, w_ref[kd, :, :],
                                preferred_element_type=jnp.float32)
        y = acc + b_ref[...]                                   # conv bias (per (w, c) lane)

        # lane-dense store of pre-norm activations + partial GroupNorm moments
        y_ref[...] = y.astype(y_ref.dtype)
        ssum_ref[...] = jnp.sum(y, axis=0, keepdims=True)
        ssq_ref[...] = jnp.sum(y * y, axis=0, keepdims=True)

        if fuse_res:
            # Residual path fused here: Conv3d(k=1) + BatchNorm3d(eval) + GELU on
            # the already-VMEM-resident concatenated input.
            xin = xd[2:2 + tile_d, 2:2 + H, :].reshape(rows, Wpc).astype(jnp.bfloat16)
            r = jnp.dot(xin, rw_ref[...], preferred_element_type=jnp.float32)
            r = (r + rb_ref[...]) * rs_ref[...] + rsh_ref[...]
            res_ref[...] = _gelu(r)

    return kernel


def conv5_bias_stats(xpad2, bw, brow, res_params=None, *, tile_d, H, W, cout):
    # xpad2: (N, D+4, H+4, (W+4)*cin) bf16, zero-padded; bw: (5, 5*(W+4)*cin, W*cout) bf16
    N, Dp, Hp, Wpc = xpad2.shape
    D = Dp - 4
    nd = D // tile_d
    rows = tile_d * H
    L = W * cout
    Kb = 5 * Wpc
    assert bw.shape == (5, Kb, L), bw.shape
    fuse = res_params is not None

    kernel = _make_conv5_kernel(tile_d, H, W, Wpc, cout, fuse)

    in_specs = [
        pl.BlockSpec((None, Dp, Hp, Wpc), lambda n, d: (n, 0, 0, 0)),   # padded input (per-n, reused over d)
        pl.BlockSpec((5, Kb, L), lambda n, d: (0, 0, 0)),               # banded conv weight
        pl.BlockSpec((1, L), lambda n, d: (0, 0)),                      # conv bias row
    ]
    args = [xpad2, bw, brow]
    out_shape = [
        jax.ShapeDtypeStruct((N, D * H, L), jnp.bfloat16),              # pre-norm conv output
        jax.ShapeDtypeStruct((N, nd, 1, L), jnp.float32),               # per-tile sum
        jax.ShapeDtypeStruct((N, nd, 1, L), jnp.float32),               # per-tile sum of squares
    ]
    out_specs = [
        pl.BlockSpec((None, rows, L), lambda n, d: (n, d, 0)),
        pl.BlockSpec((None, None, 1, L), lambda n, d: (n, d, 0, 0)),
        pl.BlockSpec((None, None, 1, L), lambda n, d: (n, d, 0, 0)),
    ]
    if fuse:
        rw, rb, rs, rsh = res_params
        in_specs += [
            pl.BlockSpec((Wpc, L), lambda n, d: (0, 0)),                # banded 1x1 residual weight
            pl.BlockSpec((1, L), lambda n, d: (0, 0)),                  # residual conv bias row
            pl.BlockSpec((1, L), lambda n, d: (0, 0)),                  # BatchNorm scale row
            pl.BlockSpec((1, L), lambda n, d: (0, 0)),                  # BatchNorm shift row
        ]
        args += [rw, rb, rs, rsh]
        out_shape.append(jax.ShapeDtypeStruct((N, D * H, L), jnp.float32))
        out_specs.append(pl.BlockSpec((None, rows, L), lambda n, d: (n, d, 0)))

    return pl.pallas_call(
        kernel,
        out_shape=tuple(out_shape),
        grid=(N, nd),
        in_specs=in_specs,
        out_specs=tuple(out_specs),
        scratch_shapes=[pltpu.VMEM((tile_d + 4, H, Kb), jnp.bfloat16)],  # kh-folded slab
        compiler_params=pltpu.CompilerParams(
            dimension_semantics=("parallel", "arbitrary")),
    )(*args)


# ----------------------------------------------------------------------------
# Kernel B: GroupNorm affine + GELU (+ fused residual add for the last layer)
# ----------------------------------------------------------------------------
def _norm_gelu_kernel(y_ref, sc_ref, sh_ref, o_ref):
    y = y_ref[...].astype(jnp.float32)
    o_ref[...] = _gelu(y * sc_ref[...] + sh_ref[...]).astype(o_ref.dtype)


def _norm_gelu_add_kernel(y_ref, sc_ref, sh_ref, res_ref, o_ref):
    y = y_ref[...].astype(jnp.float32)
    out = _gelu(y * sc_ref[...] + sh_ref[...]) + res_ref[...]
    o_ref[...] = out.astype(o_ref.dtype)


def group_norm_gelu(y, scale_row, shift_row, res=None, out_dtype=jnp.bfloat16):
    # y: (N, D*H, W*C); scale_row/shift_row: (N, 1, W*C) f32; res: (N, D*H, W*C) f32 or None
    N, R, L = y.shape
    tr = _pick_tile_rows(R)
    in_specs = [
        pl.BlockSpec((None, tr, L), lambda n, r: (n, r, 0)),
        pl.BlockSpec((None, 1, L), lambda n, r: (n, 0, 0)),
        pl.BlockSpec((None, 1, L), lambda n, r: (n, 0, 0)),
    ]
    args = [y, scale_row, shift_row]
    kernel = _norm_gelu_kernel
    if res is not None:
        in_specs.append(pl.BlockSpec((None, tr, L), lambda n, r: (n, r, 0)))
        args.append(res)
        kernel = _norm_gelu_add_kernel
    return pl.pallas_call(
        kernel,
        out_shape=jax.ShapeDtypeStruct((N, R, L), out_dtype),
        grid=(N, R // tr),
        in_specs=in_specs,
        out_specs=pl.BlockSpec((None, tr, L), lambda n, r: (n, r, 0)),
        compiler_params=pltpu.CompilerParams(
            dimension_semantics=("parallel", "parallel")),
    )(*args)


# ----------------------------------------------------------------------------
# tiny wrapper-side GroupNorm statistics reduction (replaces the old gmap matmul)
# ----------------------------------------------------------------------------
def _gn_affine(ssum, ssq, gamma, beta, count, W, G=NUM_GROUPS, eps=GN_EPS):
    N = ssum.shape[0]
    C = gamma.shape[0]
    s = ssum.sum(axis=(1, 2)).reshape(N, W, C).sum(axis=1)     # (N, C)
    q = ssq.sum(axis=(1, 2)).reshape(N, W, C).sum(axis=1)      # (N, C)
    mean_c = s / count
    ex2_c = q / count
    cg = C // G
    mean_g = mean_c.reshape(N, G, cg).mean(axis=2)             # (N, G)
    ex2_g = ex2_c.reshape(N, G, cg).mean(axis=2)
    var_g = ex2_g - mean_g * mean_g                            # biased, like torch
    inv_g = jax.lax.rsqrt(var_g + eps)
    mean_ch = jnp.repeat(mean_g, cg, axis=1)                   # (N, C)
    inv_ch = jnp.repeat(inv_g, cg, axis=1)
    scale_c = gamma[None, :] * inv_ch
    shift_c = beta[None, :] - mean_ch * scale_c
    scale_row = jnp.tile(scale_c, (1, W)).reshape(N, 1, W * C)
    shift_row = jnp.tile(shift_c, (1, W)).reshape(N, 1, W * C)
    return scale_row, shift_row


# ----------------------------------------------------------------------------
# parameter init (deterministic, synthetic), pre-laid-out for the kernels
# ----------------------------------------------------------------------------
def init_params(key, skip_c, up_c, out_c, W):
    cat_c = skip_c + up_c
    assert out_c % NUM_GROUPS == 0
    ks = jax.random.split(key, 32)

    def uinit(k, shape, fan_in):
        bound = 1.0 / float(fan_in) ** 0.5
        return jax.random.uniform(k, shape, jnp.float32, -bound, bound)

    p = {}
    # residual path: Conv3d(cat_c -> out_c, k=1) + BatchNorm3d (eval) + GELU
    rw = uinit(ks[0], (cat_c, out_c), cat_c)
    rb = uinit(ks[1], (out_c,), cat_c)
    p["res_bw"] = _band_pointwise_weight(rw, W).astype(jnp.bfloat16)
    p["res_brow"] = _row(rb, W)
    bn_w = 1.0 + 0.1 * jax.random.normal(ks[2], (out_c,), jnp.float32)
    bn_b = 0.1 * jax.random.normal(ks[3], (out_c,), jnp.float32)
    bn_mean = 0.1 * jax.random.normal(ks[4], (out_c,), jnp.float32)
    bn_var = 1.0 + 0.1 * jax.random.uniform(ks[5], (out_c,), jnp.float32)
    scale = bn_w / jnp.sqrt(bn_var + BN_EPS)
    p["res_bn_scale_row"] = _row(scale, W)
    p["res_bn_shift_row"] = _row(bn_b - bn_mean * scale, W)

    # conv_block: 3 x [Conv3d(k=5,p=2) + GroupNorm(4) + GELU + Dropout3d(eval)]
    cins = [cat_c, out_c, out_c]
    for i, cin in enumerate(cins):
        fan = cin * 125
        w5 = uinit(ks[6 + 4 * i], (5, 5, 5, cin, out_c), fan)
        b = uinit(ks[7 + 4 * i], (out_c,), fan)
        p[f"conv{i}_bw"] = _band_conv_weight(w5, W).astype(jnp.bfloat16)
        p[f"conv{i}_brow"] = _row(b, W)
        p[f"gn{i}_gamma"] = 1.0 + 0.1 * jax.random.normal(ks[8 + 4 * i], (out_c,), jnp.float32)
        p[f"gn{i}_beta"] = 0.1 * jax.random.normal(ks[9 + 4 * i], (out_c,), jnp.float32)
    return p


# ----------------------------------------------------------------------------
# DecoderBlock forward (attn_type=None, eval mode)
# ----------------------------------------------------------------------------
def decoder_block_forward(params, skip_feat_ncdhw, up_feat_ncdhw):
    # PyTorch NCDHW -> kernel NDHWC; activations in bf16 (f32 accumulation in-kernel)
    skip = jnp.transpose(skip_feat_ncdhw, (0, 2, 3, 4, 1))
    up = jnp.transpose(up_feat_ncdhw, (0, 2, 3, 4, 1))

    # TODO(synk): AttendingBlock3D source not provided; treated as identity on skip_feat.
    x = jnp.concatenate([skip, up], axis=-1).astype(jnp.bfloat16)
    # attn_type=None -> nn.Identity

    N, D, H, W, _ = x.shape
    C = params["gn0_gamma"].shape[0]
    count = D * H * W
    tile_d = _pick_tile_d(D, H)

    res = None
    out = None
    a = x
    for i in range(3):
        cin = a.shape[-1]
        # zero "same" padding + (W, C) lane flattening (one fused XLA copy).
        # TODO(synk): for large volumes fold this into the producing kernel / halo DMA.
        ap = jnp.pad(a, ((0, 0), (2, 2), (2, 2), (2, 2), (0, 0)))
        ap = ap.reshape(N, D + 4, H + 4, (W + 4) * cin)

        res_params = None
        if i == 0:
            res_params = (params["res_bw"], params["res_brow"],
                          params["res_bn_scale_row"], params["res_bn_shift_row"])
        outs = conv5_bias_stats(ap, params[f"conv{i}_bw"], params[f"conv{i}_brow"],
                                res_params, tile_d=tile_d, H=H, W=W, cout=C)
        if i == 0:
            y, ssum, ssq, res = outs
        else:
            y, ssum, ssq = outs

        scale_row, shift_row = _gn_affine(ssum, ssq, params[f"gn{i}_gamma"],
                                          params[f"gn{i}_beta"], count, W)
        if i < 2:
            a = group_norm_gelu(y, scale_row, shift_row).reshape(N, D, H, W, C)
        else:
            out = group_norm_gelu(y, scale_row, shift_row, res=res, out_dtype=jnp.float32)
        # TODO(synk): Dropout3d(p=0.5) is identity in eval mode.

    out = out.reshape(N, D, H, W, C)
    return jnp.transpose(out, (0, 4, 1, 2, 3))   # back to PyTorch NCDHW


# ----------------------------------------------------------------------------
if __name__ == "__main__":
    key = jax.random.PRNGKey(0)
    k_skip, k_up, k_par = jax.random.split(key, 3)

    N, D, H, W = 2, 8, 8, 8
    skip_c, up_c, out_c = 4, 4, 8

    skip_feat = jax.random.normal(k_skip, (N, skip_c, D, H, W), jnp.float32)  # NCDHW
    up_feat = jax.random.normal(k_up, (N, up_c, D, H, W), jnp.float32)        # NCDHW
    params = init_params(k_par, skip_c, up_c, out_c, W)

    fwd = jax.jit(decoder_block_forward)
    out = jax.block_until_ready(fwd(params, skip_feat, up_feat))

    assert out.shape == (N, out_c, D, H, W), out.shape
    assert bool(jnp.all(jnp.isfinite(out)))
    print("KERNEL_OK")
</pallas_src>

<mosaic_0001>
module attributes {stable_mosaic.version = 11 : i64} {
  func.func @kernel(%arg0: i32, %arg1: i32, %arg2: memref<1x12x12x96xbf16, #tpu.memory_space<vmem>>, %arg3: memref<5x480x64xbf16, #tpu.memory_space<vmem>>, %arg4: memref<1x64xf32, #tpu.memory_space<vmem>>, %arg5: memref<96x64xbf16, #tpu.memory_space<vmem>>, %arg6: memref<1x64xf32, #tpu.memory_space<vmem>>, %arg7: memref<1x64xf32, #tpu.memory_space<vmem>>, %arg8: memref<1x64xf32, #tpu.memory_space<vmem>>, %arg9: memref<1x32x64xbf16, #tpu.memory_space<vmem>>, %arg10: memref<1x1x1x64xf32, #tpu.memory_space<vmem>>, %arg11: memref<1x1x1x64xf32, #tpu.memory_space<vmem>>, %arg12: memref<1x32x64xf32, #tpu.memory_space<vmem>>, %arg13: memref<8x8x480xbf16, #tpu.memory_space<vmem>>) attributes {dimension_semantics = [#tpu.dimension_semantics<parallel>, #tpu.dimension_semantics<arbitrary>], iteration_bounds = array<i64: 2, 2>, scalar_prefetch = 0 : i64, scratch_operands = 1 : i64, tpu.core_type = #tpu.core_type<tc>, window_params = [{transform_indices = @transform_0, window_bounds = array<i64: 1, 12, 12, 96>}, {pipeline_mode = #tpu.pipeline_mode<synchronous>, transform_indices = @transform_1, window_bounds = array<i64: 5, 480, 64>}, {pipeline_mode = #tpu.pipeline_mode<synchronous>, transform_indices = @transform_2, window_bounds = array<i64: 1, 64>}, {pipeline_mode = #tpu.pipeline_mode<synchronous>, transform_indices = @transform_3, window_bounds = array<i64: 96, 64>}, {pipeline_mode = #tpu.pipeline_mode<synchronous>, transform_indices = @transform_4, window_bounds = array<i64: 1, 64>}, {pipeline_mode = #tpu.pipeline_mode<synchronous>, transform_indices = @transform_5, window_bounds = array<i64: 1, 64>}, {pipeline_mode = #tpu.pipeline_mode<synchronous>, transform_indices = @transform_6, window_bounds = array<i64: 1, 64>}, {transform_indices = @transform_7, window_bounds = array<i64: 1, 32, 64>}, {transform_indices = @transform_8, window_bounds = array<i64: 1, 1, 1, 64>}, {transform_indices = @transform_9, window_bounds = array<i64: 1, 1, 1, 64>}, {transform_indices = @transform_10, window_bounds = array<i64: 1, 32, 64>}]} {
    %c4_i32 = arith.constant 4 : i32
    %0 = arith.muli %arg1, %c4_i32 : i32
    %c0 = arith.constant 0 : index
    %1 = arith.index_cast %0 : i32 to index
    %c0_0 = arith.constant 0 : index
    %c0_1 = arith.constant 0 : index
    %2 = vector.load %arg2[%c0, %1, %c0_0, %c0_1] : memref<1x12x12x96xbf16, #tpu.memory_space<vmem>>, vector<1x8x12x96xbf16>
    %3 = vector.shape_cast %2 : vector<1x8x12x96xbf16> to vector<8x12x96xbf16>
    %4 = arith.extf %3 : vector<8x12x96xbf16> to vector<8x12x96xf32>
    %5 = vector.extract_strided_slice %4 {offsets = [0, 0, 0], sizes = [8, 8, 96], strides = [1, 1, 1]} : vector<8x12x96xf32> to vector<8x8x96xf32>
    %6 = vector.extract_strided_slice %4 {offsets = [0, 1, 0], sizes = [8, 8, 96], strides = [1, 1, 1]} : vector<8x12x96xf32> to vector<8x8x96xf32>
    %7 = vector.extract_strided_slice %4 {offsets = [0, 2, 0], sizes = [8, 8, 96], strides = [1, 1, 1]} : vector<8x12x96xf32> to vector<8x8x96xf32>
    %8 = vector.extract_strided_slice %4 {offsets = [0, 3, 0], sizes = [8, 8, 96], strides = [1, 1, 1]} : vector<8x12x96xf32> to vector<8x8x96xf32>
    %9 = vector.extract_strided_slice %4 {offsets = [0, 4, 0], sizes = [8, 8, 96], strides = [1, 1, 1]} : vector<8x12x96xf32> to vector<8x8x96xf32>
    %10 = tpu.concatenate %5, %6, %7, %8, %9 in 2 : vector<8x8x96xf32>, vector<8x8x96xf32>, vector<8x8x96xf32>, vector<8x8x96xf32>, vector<8x8x96xf32> -> vector<8x8x480xf32>
    %11 = arith.truncf %10 : vector<8x8x480xf32> to vector<8x8x480xbf16>
    %c0_2 = arith.constant 0 : index
    %c0_3 = arith.constant 0 : index
    %c0_4 = arith.constant 0 : index
    %12 = vector.load %arg13[%c0_2, %c0_3, %c0_4] : memref<8x8x480xbf16, #tpu.memory_space<vmem>>, vector<8x8x480xbf16>
    tpu.vector_store %arg13[%c0_2, %c0_3, %c0_4], %11 {strides = array<i32>} : memref<8x8x480xbf16, #tpu.memory_space<vmem>>, vector<8x8x480xbf16>,
    %cst = arith.constant 0.000000e+00 : f32
    %13 = vector.broadcast %cst : f32 to vector<32x64xf32>
    %c0_5 = arith.constant 0 : index
    %c0_6 = arith.constant 0 : index
    %c0_7 = arith.constant 0 : index
    %14 = vector.load %arg13[%c0_5, %c0_6, %c0_7] : memref<8x8x480xbf16, #tpu.memory_space<vmem>>, vector<4x8x480xbf16>
    %15 = vector.shape_cast %14 : vector<4x8x480xbf16> to vector<32x480xbf16>
    %c0_8 = arith.constant 0 : index
    %c0_9 = arith.constant 0 : index
    %c0_10 = arith.constant 0 : index
    %16 = vector.load %arg3[%c0_8, %c0_9, %c0_10] : memref<5x480x64xbf16, #tpu.memory_space<vmem>>, vector<1x480x64xbf16>
    %17 = vector.shape_cast %16 : vector<1x480x64xbf16> to vector<480x64xbf16>
    %cst_11 = arith.constant dense<0.000000e+00> : vector<32x64xf32>
    %18 = tpu.matmul %15, %17, %cst_11 {dimension_numbers = #tpu.dot_dimension_numbers<[1], [0], [0], [1], [0, 0, 1, 1], [], []>} : vector<32x480xbf16>, vector<480x64xbf16>, vector<32x64xf32> -> vector<32x64xf32>
    %19 = arith.addf %13, %18 : vector<32x64xf32>
    %c1 = arith.constant 1 : index
    %c0_12 = arith.constant 0 : index
    %c0_13 = arith.constant 0 : index
    %20 = vector.load %arg13[%c1, %c0_12, %c0_13] : memref<8x8x480xbf16, #tpu.memory_space<vmem>>, vector<4x8x480xbf16>
    %21 = vector.shape_cast %20 : vector<4x8x480xbf16> to vector<32x480xbf16>
    %c1_14 = arith.constant 1 : index
    %c0_15 = arith.constant 0 : index
    %c0_16 = arith.constant 0 : index
    %22 = vector.load %arg3[%c1_14, %c0_15, %c0_16] : memref<5x480x64xbf16, #tpu.memory_space<vmem>>, vector<1x480x64xbf16>
    %23 = vector.shape_cast %22 : vector<1x480x64xbf16> to vector<480x64xbf16>
    %cst_17 = arith.constant dense<0.000000e+00> : vector<32x64xf32>
    %24 = tpu.matmul %21, %23, %cst_17 {dimension_numbers = #tpu.dot_dimension_numbers<[1], [0], [0], [1], [0, 0, 1, 1], [], []>} : vector<32x480xbf16>, vector<480x64xbf16>, vector<32x64xf32> -> vector<32x64xf32>
    %25 = arith.addf %19, %24 : vector<32x64xf32>
    %c2 = arith.constant 2 : index
    %c0_18 = arith.constant 0 : index
    %c0_19 = arith.constant 0 : index
    %26 = vector.load %arg13[%c2, %c0_18, %c0_19] : memref<8x8x480xbf16, #tpu.memory_space<vmem>>, vector<4x8x480xbf16>
    %27 = vector.shape_cast %26 : vector<4x8x480xbf16> to vector<32x480xbf16>
    %c2_20 = arith.constant 2 : index
    %c0_21 = arith.constant 0 : index
    %c0_22 = arith.constant 0 : index
    %28 = vector.load %arg3[%c2_20, %c0_21, %c0_22] : memref<5x480x64xbf16, #tpu.memory_space<vmem>>, vector<1x480x64xbf16>
    %29 = vector.shape_cast %28 : vector<1x480x64xbf16> to vector<480x64xbf16>
    %cst_23 = arith.constant dense<0.000000e+00> : vector<32x64xf32>
    %30 = tpu.matmul %27, %29, %cst_23 {dimension_numbers = #tpu.dot_dimension_numbers<[1], [0], [0], [1], [0, 0, 1, 1], [], []>} : vector<32x480xbf16>, vector<480x64xbf16>, vector<32x64xf32> -> vector<32x64xf32>
    %31 = arith.addf %25, %30 : vector<32x64xf32>
    %c3 = arith.constant 3 : index
    %c0_24 = arith.constant 0 : index
    %c0_25 = arith.constant 0 : index
    %32 = vector.load %arg13[%c3, %c0_24, %c0_25] : memref<8x8x480xbf16, #tpu.memory_space<vmem>>, vector<4x8x480xbf16>
    %33 = vector.shape_cast %32 : vector<4x8x480xbf16> to vector<32x480xbf16>
    %c3_26 = arith.constant 3 : index
    %c0_27 = arith.constant 0 : index
    %c0_28 = arith.constant 0 : index
    %34 = vector.load %arg3[%c3_26, %c0_27, %c0_28] : memref<5x480x64xbf16, #tpu.memory_space<vmem>>, vector<1x480x64xbf16>
    %35 = vector.shape_cast %34 : vector<1x480x64xbf16> to vector<480x64xbf16>
    %cst_29 = arith.constant dense<0.000000e+00> : vector<32x64xf32>
    %36 = tpu.matmul %33, %35, %cst_29 {dimension_numbers = #tpu.dot_dimension_numbers<[1], [0], [0], [1], [0, 0, 1, 1], [], []>} : vector<32x480xbf16>, vector<480x64xbf16>, vector<32x64xf32> -> vector<32x64xf32>
    %37 = arith.addf %31, %36 : vector<32x64xf32>
    %c4 = arith.constant 4 : index
    %c0_30 = arith.constant 0 : index
    %c0_31 = arith.constant 0 : index
    %38 = vector.load %arg13[%c4, %c0_30, %c0_31] : memref<8x8x480xbf16, #tpu.memory_space<vmem>>, vector<4x8x480xbf16>
    %39 = vector.shape_cast %38 : vector<4x8x480xbf16> to vector<32x480xbf16>
    %c4_32 = arith.constant 4 : index
    %c0_33 = arith.constant 0 : index
    %c0_34 = arith.constant 0 : index
    %40 = vector.load %arg3[%c4_32, %c0_33, %c0_34] : memref<5x480x64xbf16, #tpu.memory_space<vmem>>, vector<1x480x64xbf16>
    %41 = vector.shape_cast %40 : vector<1x480x64xbf16> to vector<480x64xbf16>
    %cst_35 = arith.constant dense<0.000000e+00> : vector<32x64xf32>
    %42 = tpu.matmul %39, %41, %cst_35 {dimension_numbers = #tpu.dot_dimension_numbers<[1], [0], [0], [1], [0, 0, 1, 1], [], []>} : vector<32x480xbf16>, vector<480x64xbf16>, vector<32x64xf32> -> vector<32x64xf32>
    %43 = arith.addf %37, %42 : vector<32x64xf32>
    %c0_36 = arith.constant 0 : index
    %c0_37 = arith.constant 0 : index
    %44 = vector.load %arg4[%c0_36, %c0_37] : memref<1x64xf32, #tpu.memory_space<vmem>>, vector<1x64xf32>
    %45 = vector.broadcast %44 : vector<1x64xf32> to vector<32x64xf32>
    %46 = arith.addf %43, %45 : vector<32x64xf32>
    %47 = arith.truncf %46 : vector<32x64xf32> to vector<32x64xbf16>
    %c0_38 = arith.constant 0 : index
    %c0_39 = arith.constant 0 : index
    %c0_40 = arith.constant 0 : index
    %48 = vector.load %arg9[%c0_38, %c0_39, %c0_40] : memref<1x32x64xbf16, #tpu.memory_space<vmem>>, vector<1x32x64xbf16>
    %49 = vector.shape_cast %48 : vector<1x32x64xbf16> to vector<32x64xbf16>
    %50 = vector.shape_cast %47 : vector<32x64xbf16> to vector<1x32x64xbf16>
    tpu.vector_store %arg9[%c0_38, %c0_39, %c0_40], %50 {strides = array<i32>} : memref<1x32x64xbf16, #tpu.memory_space<vmem>>, vector<1x32x64xbf16>,
    %cst_41 = arith.constant dense<0.000000e+00> : vector<64xf32>
    %51 = vector.multi_reduction <add>, %46, %cst_41 [0] : vector<32x64xf32> to vector<64xf32>
    %52 = vector.shape_cast %51 : vector<64xf32> to vector<1x64xf32>
    %c0_42 = arith.constant 0 : index
    %c0_43 = arith.constant 0 : index
    %c0_44 = arith.constant 0 : index
    %c0_45 = arith.constant 0 : index
    %53 = vector.load %arg10[%c0_42, %c0_43, %c0_44, %c0_45] : memref<1x1x1x64xf32, #tpu.memory_space<vmem>>, vector<1x1x1x64xf32>
    %54 = vector.shape_cast %53 : vector<1x1x1x64xf32> to vector<1x64xf32>
    %55 = vector.shape_cast %52 : vector<1x64xf32> to vector<1x1x1x64xf32>
    tpu.vector_store %arg10[%c0_42, %c0_43, %c0_44, %c0_45], %55 {strides = array<i32>} : memref<1x1x1x64xf32, #tpu.memory_space<vmem>>, vector<1x1x1x64xf32>,
    %56 = arith.mulf %46, %46 : vector<32x64xf32>
    %cst_46 = arith.constant dense<0.000000e+00> : vector<64xf32>
    %57 = vector.multi_reduction <add>, %56, %cst_46 [0] : vector<32x64xf32> to vector<64xf32>
    %58 = vector.shape_cast %57 : vector<64xf32> to vector<1x64xf32>
    %c0_47 = arith.constant 0 : index
    %c0_48 = arith.constant 0 : index
    %c0_49 = arith.constant 0 : index
    %c0_50 = arith.constant 0 : index
    %59 = vector.load %arg11[%c0_47, %c0_48, %c0_49, %c0_50] : memref<1x1x1x64xf32, #tpu.memory_space<vmem>>, vector<1x1x1x64xf32>
    %60 = vector.shape_cast %59 : vector<1x1x1x64xf32> to vector<1x64xf32>
    %61 = vector.shape_cast %58 : vector<1x64xf32> to vector<1x1x1x64xf32>
    tpu.vector_store %arg11[%c0_47, %c0_48, %c0_49, %c0_50], %61 {strides = array<i32>} : memref<1x1x1x64xf32, #tpu.memory_space<vmem>>, vector<1x1x1x64xf32>,
    %62 = vector.extract_strided_slice %4 {offsets = [2, 2, 0], sizes = [4, 8, 96], strides = [1, 1, 1]} : vector<8x12x96xf32> to vector<4x8x96xf32>
    %63 = vector.shape_cast %62 : vector<4x8x96xf32> to vector<32x96xf32>
    %64 = arith.truncf %63 : vector<32x96xf32> to vector<32x96xbf16>
    %c0_51 = arith.constant 0 : index
    %c0_52 = arith.constant 0 : index
    %65 = vector.load %arg5[%c0_51, %c0_52] : memref<96x64xbf16, #tpu.memory_space<vmem>>, vector<96x64xbf16>
    %cst_53 = arith.constant dense<0.000000e+00> : vector<32x64xf32>
    %66 = tpu.matmul %64, %65, %cst_53 {dimension_numbers = #tpu.dot_dimension_numbers<[1], [0], [0], [1], [0, 0, 1, 1], [], []>} : vector<32x96xbf16>, vector<96x64xbf16>, vector<32x64xf32> -> vector<32x64xf32>
    %c0_54 = arith.constant 0 : index
    %c0_55 = arith.constant 0 : index
    %67 = vector.load %arg6[%c0_54, %c0_55] : memref<1x64xf32, #tpu.memory_space<vmem>>, vector<1x64xf32>
    %68 = vector.broadcast %67 : vector<1x64xf32> to vector<32x64xf32>
    %69 = arith.addf %66, %68 : vector<32x64xf32>
    %c0_56 = arith.constant 0 : index
    %c0_57 = arith.constant 0 : index
    %70 = vector.load %arg7[%c0_56, %c0_57] : memref<1x64xf32, #tpu.memory_space<vmem>>, vector<1x64xf32>
    %71 = vector.broadcast %70 : vector<1x64xf32> to vector<32x64xf32>
    %72 = arith.mulf %69, %71 : vector<32x64xf32>
    %c0_58 = arith.constant 0 : index
    %c0_59 = arith.constant 0 : index
    %73 = vector.load %arg8[%c0_58, %c0_59] : memref<1x64xf32, #tpu.memory_space<vmem>>, vector<1x64xf32>
    %74 = vector.broadcast %73 : vector<1x64xf32> to vector<32x64xf32>
    %75 = arith.addf %72, %74 : vector<32x64xf32>
    %cst_60 = arith.constant 5.000000e-01 : f32
    %76 = vector.broadcast %cst_60 : f32 to vector<32x64xf32>
    %77 = arith.mulf %76, %75 : vector<32x64xf32>
    %cst_61 = arith.constant 0.707106769 : f32
    %78 = vector.broadcast %cst_61 : f32 to vector<32x64xf32>
    %79 = arith.mulf %75, %78 : vector<32x64xf32>
    %80 = math.absf %79 : vector<32x64xf32>
    %cst_62 = arith.constant 0.327591091 : f32
    %81 = vector.broadcast %cst_62 : f32 to vector<32x64xf32>
    %82 = arith.mulf %81, %80 : vector<32x64xf32>
    %cst_63 = arith.constant 1.000000e+00 : f32
    %83 = vector.broadcast %cst_63 : f32 to vector<32x64xf32>
    %84 = arith.addf %83, %82 : vector<32x64xf32>
    %cst_64 = arith.constant 1.000000e+00 : f32
    %85 = vector.broadcast %cst_64 : f32 to vector<32x64xf32>
    %86 = arith.divf %85, %84 : vector<32x64xf32>
    %cst_65 = arith.constant 1.06140542 : f32
    %87 = vector.broadcast %cst_65 : f32 to vector<32x64xf32>
    %88 = arith.mulf %87, %86 : vector<32x64xf32>
    %cst_66 = arith.constant -1.45315206 : f32
    %89 = vector.broadcast %cst_66 : f32 to vector<32x64xf32>
    %90 = arith.addf %88, %89 : vector<32x64xf32>
    %91 = arith.mulf %90, %86 : vector<32x64xf32>
    %cst_67 = arith.constant 1.42141378 : f32
    %92 = vector.broadcast %cst_67 : f32 to vector<32x64xf32>
    %93 = arith.addf %91, %92 : vector<32x64xf32>
    %94 = arith.mulf %93, %86 : vector<32x64xf32>
    %cst_68 = arith.constant -0.284496725 : f32
    %95 = vector.broadcast %cst_68 : f32 to vector<32x64xf32>
    %96 = arith.addf %94, %95 : vector<32x64xf32>
    %97 = arith.mulf %96, %86 : vector<32x64xf32>
    %cst_69 = arith.constant 0.254829586 : f32
    %98 = vector.broadcast %cst_69 : f32 to vector<32x64xf32>
    %99 = arith.addf %97, %98 : vector<32x64xf32>
    %100 = arith.mulf %99, %86 : vector<32x64xf32>
    %cst_70 = arith.constant 0.000000e+00 : f32
    %101 = vector.broadcast %cst_70 : f32 to vector<32x64xf32>
    %102 = arith.subf %101, %80 : vector<32x64xf32>
    %103 = arith.mulf %102, %80 : vector<32x64xf32>
    %104 = math.exp %103 : vector<32x64xf32>
    %105 = arith.mulf %100, %104 : vector<32x64xf32>
    %cst_71 = arith.constant 1.000000e+00 : f32
    %106 = vector.broadcast %cst_71 : f32 to vector<32x64xf32>
    %107 = arith.subf %106, %105 : vector<32x64xf32>
    %cst_72 = arith.constant 0.000000e+00 : f32
    %108 = vector.broadcast %cst_72 : f32 to vector<32x64xf32>
    %109 = arith.cmpf oge, %79, %108 : vector<32x64xf32>
    %cst_73 = arith.constant 0.000000e+00 : f32
    %110 = vector.broadcast %cst_73 : f32 to vector<32x64xf32>
    %111 = arith.subf %110, %107 : vector<32x64xf32>
    %112 = arith.select %109, %107, %111 : vector<32x64xi1>, vector<32x64xf32>
    %cst_74 = arith.constant 1.000000e+00 : f32
    %113 = vector.broadcast %cst_74 : f32 to vector<32x64xf32>
    %114 = arith.addf %113, %112 : vector<32x64xf32>
    %115 = arith.mulf %77, %114 : vector<32x64xf32>
    %c0_75 = arith.constant 0 : index
    %c0_76 = arith.constant 0 : index
    %c0_77 = arith.constant 0 : index
    %116 = vector.load %arg12[%c0_75, %c0_76, %c0_77] : memref<1x32x64xf32, #tpu.memory_space<vmem>>, vector<1x32x64xf32>
    %117 = vector.shape_cast %116 : vector<1x32x64xf32> to vector<32x64xf32>
    %118 = vector.shape_cast %115 : vector<32x64xf32> to vector<1x32x64xf32>
    tpu.vector_store %arg12[%c0_75, %c0_76, %c0_77], %118 {strides = array<i32>} : memref<1x32x64xf32, #tpu.memory_space<vmem>>, vector<1x32x64xf32>,
    return
  }
  func.func @transform_0(%arg0: i32, %arg1: i32) -> (i32, i32, i32, i32) {
    %c0_i32 = arith.constant 0 : i32
    %c0_i32_0 = arith.constant 0 : i32
    %c0_i32_1 = arith.constant 0 : i32
    %c0_i32_2 = arith.constant 0 : i32
    return %arg0, %c0_i32, %c0_i32_0, %c0_i32_1 : i32, i32, i32, i32
  }
  func.func @transform_1(%arg0: i32, %arg1: i32) -> (i32, i32, i32) {
    %c0_i32 = arith.constant 0 : i32
    %c0_i32_0 = arith.constant 0 : i32
    %c0_i32_1 = arith.constant 0 : i32
    %c0_i32_2 = arith.constant 0 : i32
    return %c0_i32, %c0_i32_0, %c0_i32_1 : i32, i32, i32
  }
  func.func @transform_2(%arg0: i32, %arg1: i32) -> (i32, i32) {
    %c0_i32 = arith.constant 0 : i32
    %c0_i32_0 = arith.constant 0 : i32
    %c0_i32_1 = arith.constant 0 : i32
    return %c0_i32, %c0_i32_0 : i32, i32
  }
  func.func @transform_3(%arg0: i32, %arg1: i32) -> (i32, i32) {
    %c0_i32 = arith.constant 0 : i32
    %c0_i32_0 = arith.constant 0 : i32
    %c0_i32_1 = arith.constant 0 : i32
    return %c0_i32, %c0_i32_0 : i32, i32
  }
  func.func @transform_4(%arg0: i32, %arg1: i32) -> (i32, i32) {
    %c0_i32 = arith.constant 0 : i32
    %c0_i32_0 = arith.constant 0 : i32
    %c0_i32_1 = arith.constant 0 : i32
    return %c0_i32, %c0_i32_0 : i32, i32
  }
  func.func @transform_5(%arg0: i32, %arg1: i32) -> (i32, i32) {
    %c0_i32 = arith.constant 0 : i32
    %c0_i32_0 = arith.constant 0 : i32
    %c0_i32_1 = arith.constant 0 : i32
    return %c0_i32, %c0_i32_0 : i32, i32
  }
  func.func @transform_6(%arg0: i32, %arg1: i32) -> (i32, i32) {
    %c0_i32 = arith.constant 0 : i32
    %c0_i32_0 = arith.constant 0 : i32
    %c0_i32_1 = arith.constant 0 : i32
    return %c0_i32, %c0_i32_0 : i32, i32
  }
  func.func @transform_7(%arg0: i32, %arg1: i32) -> (i32, i32, i32) {
    %c0_i32 = arith.constant 0 : i32
    %c0_i32_0 = arith.constant 0 : i32
    return %arg0, %arg1, %c0_i32 : i32, i32, i32
  }
  func.func @transform_8(%arg0: i32, %arg1: i32) -> (i32, i32, i32, i32) {
    %c0_i32 = arith.constant 0 : i32
    %c0_i32_0 = arith.constant 0 : i32
    %c0_i32_1 = arith.constant 0 : i32
    return %arg0, %arg1, %c0_i32, %c0_i32_0 : i32, i32, i32, i32
  }
  func.func @transform_9(%arg0: i32, %arg1: i32) -> (i32, i32, i32, i32) {
    %c0_i32 = arith.constant 0 : i32
    %c0_i32_0 = arith.constant 0 : i32
    %c0_i32_1 = arith.constant 0 : i32
    return %arg0, %arg1, %c0_i32, %c0_i32_0 : i32, i32, i32, i32
  }
  func.func @transform_10(%arg0: i32, %arg1: i32) -> (i32, i32, i32) {
    %c0_i32 = arith.constant 0 : i32
    %c0_i32_0 = arith.constant 0 : i32
    return %arg0, %arg1, %c0_i32 : i32, i32, i32
  }
}

module attributes {stable_mosaic.version = 11 : i64} {
  func.func @_norm_gelu_kernel(%arg0: i32, %arg1: i32, %arg2: memref<1x64x64xbf16, #tpu.memory_space<vmem>>, %arg3: memref<1x1x64xf32, #tpu.memory_space<vmem>>, %arg4: memref<1x1x64xf32, #tpu.memory_space<vmem>>, %arg5: memref<1x64x64xbf16, #tpu.memory_space<vmem>>) attributes {dimension_semantics = [#tpu.dimension_semantics<parallel>, #tpu.dimension_semantics<parallel>], iteration_bounds = array<i64: 2, 1>, scalar_prefetch = 0 : i64, scratch_operands = 0 : i64, tpu.core_type = #tpu.core_type<tc>, window_params = [{transform_indices = @transform_0, window_bounds = array<i64: 1, 64, 64>}, {transform_indices = @transform_1, window_bounds = array<i64: 1, 1, 64>}, {transform_indices = @transform_2, window_bounds = array<i64: 1, 1, 64>}, {transform_indices = @transform_3, window_bounds = array<i64: 1, 64, 64>}]} {
    %c0 = arith.constant 0 : index
    %c0_0 = arith.constant 0 : index
    %c0_1 = arith.constant 0 : index
    %0 = vector.load %arg2[%c0, %c0_0, %c0_1] : memref<1x64x64xbf16, #tpu.memory_space<vmem>>, vector<1x64x64xbf16>
    %1 = vector.shape_cast %0 : vector<1x64x64xbf16> to vector<64x64xbf16>
    %2 = arith.extf %1 : vector<64x64xbf16> to vector<64x64xf32>
    %c0_2 = arith.constant 0 : index
    %c0_3 = arith.constant 0 : index
    %c0_4 = arith.constant 0 : index
    %3 = vector.load %arg3[%c0_2, %c0_3, %c0_4] : memref<1x1x64xf32, #tpu.memory_space<vmem>>, vector<1x1x64xf32>
    %4 = vector.shape_cast %3 : vector<1x1x64xf32> to vector<1x64xf32>
    %5 = vector.broadcast %4 : vector<1x64xf32> to vector<64x64xf32>
    %6 = arith.mulf %2, %5 : vector<64x64xf32>
    %c0_5 = arith.constant 0 : index
    %c0_6 = arith.constant 0 : index
    %c0_7 = arith.constant 0 : index
    %7 = vector.load %arg4[%c0_5, %c0_6, %c0_7] : memref<1x1x64xf32, #tpu.memory_space<vmem>>, vector<1x1x64xf32>
    %8 = vector.shape_cast %7 : vector<1x1x64xf32> to vector<1x64xf32>
    %9 = vector.broadcast %8 : vector<1x64xf32> to vector<64x64xf32>
    %10 = arith.addf %6, %9 : vector<64x64xf32>
    %cst = arith.constant 5.000000e-01 : f32
    %11 = vector.broadcast %cst : f32 to vector<64x64xf32>
    %12 = arith.mulf %11, %10 : vector<64x64xf32>
    %cst_8 = arith.constant 0.707106769 : f32
    %13 = vector.broadcast %cst_8 : f32 to vector<64x64xf32>
    %14 = arith.mulf %10, %13 : vector<64x64xf32>
    %15 = math.absf %14 : vector<64x64xf32>
    %cst_9 = arith.constant 0.327591091 : f32
    %16 = vector.broadcast %cst_9 : f32 to vector<64x64xf32>
    %17 = arith.mulf %16, %15 : vector<64x64xf32>
    %cst_10 = arith.constant 1.000000e+00 : f32
    %18 = vector.broadcast %cst_10 : f32 to vector<64x64xf32>
    %19 = arith.addf %18, %17 : vector<64x64xf32>
    %cst_11 = arith.constant 1.000000e+00 : f32
    %20 = vector.broadcast %cst_11 : f32 to vector<64x64xf32>
    %21 = arith.divf %20, %19 : vector<64x64xf32>
    %cst_12 = arith.constant 1.06140542 : f32
    %22 = vector.broadcast %cst_12 : f32 to vector<64x64xf32>
    %23 = arith.mulf %22, %21 : vector<64x64xf32>
    %cst_13 = arith.constant -1.45315206 : f32
    %24 = vector.broadcast %cst_13 : f32 to vector<64x64xf32>
    %25 = arith.addf %23, %24 : vector<64x64xf32>
    %26 = arith.mulf %25, %21 : vector<64x64xf32>
    %cst_14 = arith.constant 1.42141378 : f32
    %27 = vector.broadcast %cst_14 : f32 to vector<64x64xf32>
    %28 = arith.addf %26, %27 : vector<64x64xf32>
    %29 = arith.mulf %28, %21 : vector<64x64xf32>
    %cst_15 = arith.constant -0.284496725 : f32
    %30 = vector.broadcast %cst_15 : f32 to vector<64x64xf32>
    %31 = arith.addf %29, %30 : vector<64x64xf32>
    %32 = arith.mulf %31, %21 : vector<64x64xf32>
    %cst_16 = arith.constant 0.254829586 : f32
    %33 = vector.broadcast %cst_16 : f32 to vector<64x64xf32>
    %34 = arith.addf %32, %33 : vector<64x64xf32>
    %35 = arith.mulf %34, %21 : vector<64x64xf32>
    %cst_17 = arith.constant 0.000000e+00 : f32
    %36 = vector.broadcast %cst_17 : f32 to vector<64x64xf32>
    %37 = arith.subf %36, %15 : vector<64x64xf32>
    %38 = arith.mulf %37, %15 : vector<64x64xf32>
    %39 = math.exp %38 : vector<64x64xf32>
    %40 = arith.mulf %35, %39 : vector<64x64xf32>
    %cst_18 = arith.constant 1.000000e+00 : f32
    %41 = vector.broadcast %cst_18 : f32 to vector<64x64xf32>
    %42 = arith.subf %41, %40 : vector<64x64xf32>
    %cst_19 = arith.constant 0.000000e+00 : f32
    %43 = vector.broadcast %cst_19 : f32 to vector<64x64xf32>
    %44 = arith.cmpf oge, %14, %43 : vector<64x64xf32>
    %cst_20 = arith.constant 0.000000e+00 : f32
    %45 = vector.broadcast %cst_20 : f32 to vector<64x64xf32>
    %46 = arith.subf %45, %42 : vector<64x64xf32>
    %47 = arith.select %44, %42, %46 : vector<64x64xi1>, vector<64x64xf32>
    %cst_21 = arith.constant 1.000000e+00 : f32
    %48 = vector.broadcast %cst_21 : f32 to vector<64x64xf32>
    %49 = arith.addf %48, %47 : vector<64x64xf32>
    %50 = arith.mulf %12, %49 : vector<64x64xf32>
    %51 = arith.truncf %50 : vector<64x64xf32> to vector<64x64xbf16>
    %c0_22 = arith.constant 0 : index
    %c0_23 = arith.constant 0 : index
    %c0_24 = arith.constant 0 : index
    %52 = vector.load %arg5[%c0_22, %c0_23, %c0_24] : memref<1x64x64xbf16, #tpu.memory_space<vmem>>, vector<1x64x64xbf16>
    %53 = vector.shape_cast %52 : vector<1x64x64xbf16> to vector<64x64xbf16>
    %54 = vector.shape_cast %51 : vector<64x64xbf16> to vector<1x64x64xbf16>
    tpu.vector_store %arg5[%c0_22, %c0_23, %c0_24], %54 {strides = array<i32>} : memref<1x64x64xbf16, #tpu.memory_space<vmem>>, vector<1x64x64xbf16>,
    return
  }
  func.func @transform_0(%arg0: i32, %arg1: i32) -> (i32, i32, i32) {
    %c0_i32 = arith.constant 0 : i32
    %c0_i32_0 = arith.constant 0 : i32
    return %arg0, %arg1, %c0_i32 : i32, i32, i32
  }
  func.func @transform_1(%arg0: i32, %arg1: i32) -> (i32, i32, i32) {
    %c0_i32 = arith.constant 0 : i32
    %c0_i32_0 = arith.constant 0 : i32
    %c0_i32_1 = arith.constant 0 : i32
    return %arg0, %c0_i32, %c0_i32_0 : i32, i32, i32
  }
  func.func @transform_2(%arg0: i32, %arg1: i32) -> (i32, i32, i32) {
    %c0_i32 = arith.constant 0 : i32
    %c0_i32_0 = arith.constant 0 : i32
    %c0_i32_1 = arith.constant 0 : i32
    return %arg0, %c0_i32, %c0_i32_0 : i32, i32, i32
  }
  func.func @transform_3(%arg0: i32, %arg1: i32) -> (i32, i32, i32) {
    %c0_i32 = arith.constant 0 : i32
    %c0_i32_0 = arith.constant 0 : i32
    return %arg0, %arg1, %c0_i32 : i32, i32, i32
  }
}

module attributes {stable_mosaic.version = 11 : i64} {
  func.func @kernel(%arg0: i32, %arg1: i32, %arg2: memref<1x12x12x96xbf16, #tpu.memory_space<vmem>>, %arg3: memref<5x480x64xbf16, #tpu.memory_space<vmem>>, %arg4: memref<1x64xf32, #tpu.memory_space<vmem>>, %arg5: memref<1x32x64xbf16, #tpu.memory_space<vmem>>, %arg6: memref<1x1x1x64xf32, #tpu.memory_space<vmem>>, %arg7: memref<1x1x1x64xf32, #tpu.memory_space<vmem>>, %arg8: memref<8x8x480xbf16, #tpu.memory_space<vmem>>) attributes {dimension_semantics = [#tpu.dimension_semantics<parallel>, #tpu.dimension_semantics<arbitrary>], iteration_bounds = array<i64: 2, 2>, scalar_prefetch = 0 : i64, scratch_operands = 1 : i64, tpu.core_type = #tpu.core_type<tc>, window_params = [{transform_indices = @transform_0, window_bounds = array<i64: 1, 12, 12, 96>}, {pipeline_mode = #tpu.pipeline_mode<synchronous>, transform_indices = @transform_1, window_bounds = array<i64: 5, 480, 64>}, {pipeline_mode = #tpu.pipeline_mode<synchronous>, transform_indices = @transform_2, window_bounds = array<i64: 1, 64>}, {transform_indices = @transform_3, window_bounds = array<i64: 1, 32, 64>}, {transform_indices = @transform_4, window_bounds = array<i64: 1, 1, 1, 64>}, {transform_indices = @transform_5, window_bounds = array<i64: 1, 1, 1, 64>}]} {
    %c4_i32 = arith.constant 4 : i32
    %0 = arith.muli %arg1, %c4_i32 : i32
    %c0 = arith.constant 0 : index
    %1 = arith.index_cast %0 : i32 to index
    %c0_0 = arith.constant 0 : index
    %c0_1 = arith.constant 0 : index
    %2 = vector.load %arg2[%c0, %1, %c0_0, %c0_1] : memref<1x12x12x96xbf16, #tpu.memory_space<vmem>>, vector<1x8x12x96xbf16>
    %3 = vector.shape_cast %2 : vector<1x8x12x96xbf16> to vector<8x12x96xbf16>
    %4 = arith.extf %3 : vector<8x12x96xbf16> to vector<8x12x96xf32>
    %5 = vector.extract_strided_slice %4 {offsets = [0, 0, 0], sizes = [8, 8, 96], strides = [1, 1, 1]} : vector<8x12x96xf32> to vector<8x8x96xf32>
    %6 = vector.extract_strided_slice %4 {offsets = [0, 1, 0], sizes = [8, 8, 96], strides = [1, 1, 1]} : vector<8x12x96xf32> to vector<8x8x96xf32>
    %7 = vector.extract_strided_slice %4 {offsets = [0, 2, 0], sizes = [8, 8, 96], strides = [1, 1, 1]} : vector<8x12x96xf32> to vector<8x8x96xf32>
    %8 = vector.extract_strided_slice %4 {offsets = [0, 3, 0], sizes = [8, 8, 96], strides = [1, 1, 1]} : vector<8x12x96xf32> to vector<8x8x96xf32>
    %9 = vector.extract_strided_slice %4 {offsets = [0, 4, 0], sizes = [8, 8, 96], strides = [1, 1, 1]} : vector<8x12x96xf32> to vector<8x8x96xf32>
    %10 = tpu.concatenate %5, %6, %7, %8, %9 in 2 : vector<8x8x96xf32>, vector<8x8x96xf32>, vector<8x8x96xf32>, vector<8x8x96xf32>, vector<8x8x96xf32> -> vector<8x8x480xf32>
    %11 = arith.truncf %10 : vector<8x8x480xf32> to vector<8x8x480xbf16>
    %c0_2 = arith.constant 0 : index
    %c0_3 = arith.constant 0 : index
    %c0_4 = arith.constant 0 : index
    %12 = vector.load %arg8[%c0_2, %c0_3, %c0_4] : memref<8x8x480xbf16, #tpu.memory_space<vmem>>, vector<8x8x480xbf16>
    tpu.vector_store %arg8[%c0_2, %c0_3, %c0_4], %11 {strides = array<i32>} : memref<8x8x480xbf16, #tpu.memory_space<vmem>>, vector<8x8x480xbf16>,
    %cst = arith.constant 0.000000e+00 : f32
    %13 = vector.broadcast %cst : f32 to vector<32x64xf32>
    %c0_5 = arith.constant 0 : index
    %c0_6 = arith.constant 0 : index
    %c0_7 = arith.constant 0 : index
    %14 = vector.load %arg8[%c0_5, %c0_6, %c0_7] : memref<8x8x480xbf16, #tpu.memory_space<vmem>>, vector<4x8x480xbf16>
    %15 = vector.shape_cast %14 : vector<4x8x480xbf16> to vector<32x480xbf16>
    %c0_8 = arith.constant 0 : index
    %c0_9 = arith.constant 0 : index
    %c0_10 = arith.constant 0 : index
    %16 = vector.load %arg3[%c0_8, %c0_9, %c0_10] : memref<5x480x64xbf16, #tpu.memory_space<vmem>>, vector<1x480x64xbf16>
    %17 = vector.shape_cast %16 : vector<1x480x64xbf16> to vector<480x64xbf16>
    %cst_11 = arith.constant dense<0.000000e+00> : vector<32x64xf32>
    %18 = tpu.matmul %15, %17, %cst_11 {dimension_numbers = #tpu.dot_dimension_numbers<[1], [0], [0], [1], [0, 0, 1, 1], [], []>} : vector<32x480xbf16>, vector<480x64xbf16>, vector<32x64xf32> -> vector<32x64xf32>
    %19 = arith.addf %13, %18 : vector<32x64xf32>
    %c1 = arith.constant 1 : index
    %c0_12 = arith.constant 0 : index
    %c0_13 = arith.constant 0 : index
    %20 = vector.load %arg8[%c1, %c0_12, %c0_13] : memref<8x8x480xbf16, #tpu.memory_space<vmem>>, vector<4x8x480xbf16>
    %21 = vector.shape_cast %20 : vector<4x8x480xbf16> to vector<32x480xbf16>
    %c1_14 = arith.constant 1 : index
    %c0_15 = arith.constant 0 : index
    %c0_16 = arith.constant 0 : index
    %22 = vector.load %arg3[%c1_14, %c0_15, %c0_16] : memref<5x480x64xbf16, #tpu.memory_space<vmem>>, vector<1x480x64xbf16>
    %23 = vector.shape_cast %22 : vector<1x480x64xbf16> to vector<480x64xbf16>
    %cst_17 = arith.constant dense<0.000000e+00> : vector<32x64xf32>
    %24 = tpu.matmul %21, %23, %cst_17 {dimension_numbers = #tpu.dot_dimension_numbers<[1], [0], [0], [1], [0, 0, 1, 1], [], []>} : vector<32x480xbf16>, vector<480x64xbf16>, vector<32x64xf32> -> vector<32x64xf32>
    %25 = arith.addf %19, %24 : vector<32x64xf32>
    %c2 = arith.constant 2 : index
    %c0_18 = arith.constant 0 : index
    %c0_19 = arith.constant 0 : index
    %26 = vector.load %arg8[%c2, %c0_18, %c0_19] : memref<8x8x480xbf16, #tpu.memory_space<vmem>>, vector<4x8x480xbf16>
    %27 = vector.shape_cast %26 : vector<4x8x480xbf16> to vector<32x480xbf16>
    %c2_20 = arith.constant 2 : index
    %c0_21 = arith.constant 0 : index
    %c0_22 = arith.constant 0 : index
    %28 = vector.load %arg3[%c2_20, %c0_21, %c0_22] : memref<5x480x64xbf16, #tpu.memory_space<vmem>>, vector<1x480x64xbf16>
    %29 = vector.shape_cast %28 : vector<1x480x64xbf16> to vector<480x64xbf16>
    %cst_23 = arith.constant dense<0.000000e+00> : vector<32x64xf32>
    %30 = tpu.matmul %27, %29, %cst_23 {dimension_numbers = #tpu.dot_dimension_numbers<[1], [0], [0], [1], [0, 0, 1, 1], [], []>} : vector<32x480xbf16>, vector<480x64xbf16>, vector<32x64xf32> -> vector<32x64xf32>
    %31 = arith.addf %25, %30 : vector<32x64xf32>
    %c3 = arith.constant 3 : index
    %c0_24 = arith.constant 0 : index
    %c0_25 = arith.constant 0 : index
    %32 = vector.load %arg8[%c3, %c0_24, %c0_25] : memref<8x8x480xbf16, #tpu.memory_space<vmem>>, vector<4x8x480xbf16>
    %33 = vector.shape_cast %32 : vector<4x8x480xbf16> to vector<32x480xbf16>
    %c3_26 = arith.constant 3 : index
    %c0_27 = arith.constant 0 : index
    %c0_28 = arith.constant 0 : index
    %34 = vector.load %arg3[%c3_26, %c0_27, %c0_28] : memref<5x480x64xbf16, #tpu.memory_space<vmem>>, vector<1x480x64xbf16>
    %35 = vector.shape_cast %34 : vector<1x480x64xbf16> to vector<480x64xbf16>
    %cst_29 = arith.constant dense<0.000000e+00> : vector<32x64xf32>
    %36 = tpu.matmul %33, %35, %cst_29 {dimension_numbers = #tpu.dot_dimension_numbers<[1], [0], [0], [1], [0, 0, 1, 1], [], []>} : vector<32x480xbf16>, vector<480x64xbf16>, vector<32x64xf32> -> vector<32x64xf32>
    %37 = arith.addf %31, %36 : vector<32x64xf32>
    %c4 = arith.constant 4 : index
    %c0_30 = arith.constant 0 : index
    %c0_31 = arith.constant 0 : index
    %38 = vector.load %arg8[%c4, %c0_30, %c0_31] : memref<8x8x480xbf16, #tpu.memory_space<vmem>>, vector<4x8x480xbf16>
    %39 = vector.shape_cast %38 : vector<4x8x480xbf16> to vector<32x480xbf16>
    %c4_32 = arith.constant 4 : index
    %c0_33 = arith.constant 0 : index
    %c0_34 = arith.constant 0 : index
    %40 = vector.load %arg3[%c4_32, %c0_33, %c0_34] : memref<5x480x64xbf16, #tpu.memory_space<vmem>>, vector<1x480x64xbf16>
    %41 = vector.shape_cast %40 : vector<1x480x64xbf16> to vector<480x64xbf16>
    %cst_35 = arith.constant dense<0.000000e+00> : vector<32x64xf32>
    %42 = tpu.matmul %39, %41, %cst_35 {dimension_numbers = #tpu.dot_dimension_numbers<[1], [0], [0], [1], [0, 0, 1, 1], [], []>} : vector<32x480xbf16>, vector<480x64xbf16>, vector<32x64xf32> -> vector<32x64xf32>
    %43 = arith.addf %37, %42 : vector<32x64xf32>
    %c0_36 = arith.constant 0 : index
    %c0_37 = arith.constant 0 : index
    %44 = vector.load %arg4[%c0_36, %c0_37] : memref<1x64xf32, #tpu.memory_space<vmem>>, vector<1x64xf32>
    %45 = vector.broadcast %44 : vector<1x64xf32> to vector<32x64xf32>
    %46 = arith.addf %43, %45 : vector<32x64xf32>
    %47 = arith.truncf %46 : vector<32x64xf32> to vector<32x64xbf16>
    %c0_38 = arith.constant 0 : index
    %c0_39 = arith.constant 0 : index
    %c0_40 = arith.constant 0 : index
    %48 = vector.load %arg5[%c0_38, %c0_39, %c0_40] : memref<1x32x64xbf16, #tpu.memory_space<vmem>>, vector<1x32x64xbf16>
    %49 = vector.shape_cast %48 : vector<1x32x64xbf16> to vector<32x64xbf16>
    %50 = vector.shape_cast %47 : vector<32x64xbf16> to vector<1x32x64xbf16>
    tpu.vector_store %arg5[%c0_38, %c0_39, %c0_40], %50 {strides = array<i32>} : memref<1x32x64xbf16, #tpu.memory_space<vmem>>, vector<1x32x64xbf16>,
    %cst_41 = arith.constant dense<0.000000e+00> : vector<64xf32>
    %51 = vector.multi_reduction <add>, %46, %cst_41 [0] : vector<32x64xf32> to vector<64xf32>
    %52 = vector.shape_cast %51 : vector<64xf32> to vector<1x64xf32>
    %c0_42 = arith.constant 0 : index
    %c0_43 = arith.constant 0 : index
    %c0_44 = arith.constant 0 : index
    %c0_45 = arith.constant 0 : index
    %53 = vector.load %arg6[%c0_42, %c0_43, %c0_44, %c0_45] : memref<1x1x1x64xf32, #tpu.memory_space<vmem>>, vector<1x1x1x64xf32>
    %54 = vector.shape_cast %53 : vector<1x1x1x64xf32> to vector<1x64xf32>
    %55 = vector.shape_cast %52 : vector<1x64xf32> to vector<1x1x1x64xf32>
    tpu.vector_store %arg6[%c0_42, %c0_43, %c0_44, %c0_45], %55 {strides = array<i32>} : memref<1x1x1x64xf32, #tpu.memory_space<vmem>>, vector<1x1x1x64xf32>,
    %56 = arith.mulf %46, %46 : vector<32x64xf32>
    %cst_46 = arith.constant dense<0.000000e+00> : vector<64xf32>
    %57 = vector.multi_reduction <add>, %56, %cst_46 [0] : vector<32x64xf32> to vector<64xf32>
    %58 = vector.shape_cast %57 : vector<64xf32> to vector<1x64xf32>
    %c0_47 = arith.constant 0 : index
    %c0_48 = arith.constant 0 : index
    %c0_49 = arith.constant 0 : index
    %c0_50 = arith.constant 0 : index
    %59 = vector.load %arg7[%c0_47, %c0_48, %c0_49, %c0_50] : memref<1x1x1x64xf32, #tpu.memory_space<vmem>>, vector<1x1x1x64xf32>
    %60 = vector.shape_cast %59 : vector<1x1x1x64xf32> to vector<1x64xf32>
    %61 = vector.shape_cast %58 : vector<1x64xf32> to vector<1x1x1x64xf32>
    tpu.vector_store %arg7[%c0_47, %c0_48, %c0_49, %c0_50], %61 {strides = array<i32>} : memref<1x1x1x64xf32, #tpu.memory_space<vmem>>, vector<1x1x1x64xf32>,
    return
  }
  func.func @transform_0(%arg0: i32, %arg1: i32) -> (i32, i32, i32, i32) {
    %c0_i32 = arith.constant 0 : i32
    %c0_i32_0 = arith.constant 0 : i32
    %c0_i32_1 = arith.constant 0 : i32
    %c0_i32_2 = arith.constant 0 : i32
    return %arg0, %c0_i32, %c0_i32_0, %c0_i32_1 : i32, i32, i32, i32
  }
  func.func @transform_1(%arg0: i32, %arg1: i32) -> (i32, i32, i32) {
    %c0_i32 = arith.constant 0 : i32
    %c0_i32_0 = arith.constant 0 : i32
    %c0_i32_1 = arith.constant 0 : i32
    %c0_i32_2 = arith.constant 0 : i32
    return %c0_i32, %c0_i32_0, %c0_i32_1 : i32, i32, i32
  }
  func.func @transform_2(%arg0: i32, %arg1: i32) -> (i32, i32) {
    %c0_i32 = arith.constant 0 : i32
    %c0_i32_0 = arith.constant 0 : i32
    %c0_i32_1 = arith.constant 0 : i32
    return %c0_i32, %c0_i32_0 : i32, i32
  }
  func.func @transform_3(%arg0: i32, %arg1: i32) -> (i32, i32, i32) {
    %c0_i32 = arith.constant 0 : i32
    %c0_i32_0 = arith.constant 0 : i32
    return %arg0, %arg1, %c0_i32 : i32, i32, i32
  }
  func.func @transform_4(%arg0: i32, %arg1: i32) -> (i32, i32, i32, i32) {
    %c0_i32 = arith.constant 0 : i32
    %c0_i32_0 = arith.constant 0 : i32
    %c0_i32_1 = arith.constant 0 : i32
    return %arg0, %arg1, %c0_i32, %c0_i32_0 : i32, i32, i32, i32
  }
  func.func @transform_5(%arg0: i32, %arg1: i32) -> (i32, i32, i32, i32) {
    %c0_i32 = arith.constant 0 : i32
    %c0_i32_0 = arith.constant 0 : i32
    %c0_i32_1 = arith.constant 0 : i32
    return %arg0, %arg1, %c0_i32, %c0_i32_0 : i32, i32, i32, i32
  }
}

module attributes {stable_mosaic.version = 11 : i64} {
  func.func @_norm_gelu_add_kernel(%arg0: i32, %arg1: i32, %arg2: memref<1x64x64xbf16, #tpu.memory_space<vmem>>, %arg3: memref<1x1x64xf32, #tpu.memory_space<vmem>>, %arg4: memref<1x1x64xf32, #tpu.memory_space<vmem>>, %arg5: memref<1x64x64xf32, #tpu.memory_space<vmem>>, %arg6: memref<1x64x64xf32, #tpu.memory_space<vmem>>) attributes {dimension_semantics = [#tpu.dimension_semantics<parallel>, #tpu.dimension_semantics<parallel>], iteration_bounds = array<i64: 2, 1>, scalar_prefetch = 0 : i64, scratch_operands = 0 : i64, tpu.core_type = #tpu.core_type<tc>, window_params = [{transform_indices = @transform_0, window_bounds = array<i64: 1, 64, 64>}, {transform_indices = @transform_1, window_bounds = array<i64: 1, 1, 64>}, {transform_indices = @transform_2, window_bounds = array<i64: 1, 1, 64>}, {transform_indices = @transform_3, window_bounds = array<i64: 1, 64, 64>}, {transform_indices = @transform_4, window_bounds = array<i64: 1, 64, 64>}]} {
    %c0 = arith.constant 0 : index
    %c0_0 = arith.constant 0 : index
    %c0_1 = arith.constant 0 : index
    %0 = vector.load %arg2[%c0, %c0_0, %c0_1] : memref<1x64x64xbf16, #tpu.memory_space<vmem>>, vector<1x64x64xbf16>
    %1 = vector.shape_cast %0 : vector<1x64x64xbf16> to vector<64x64xbf16>
    %2 = arith.extf %1 : vector<64x64xbf16> to vector<64x64xf32>
    %c0_2 = arith.constant 0 : index
    %c0_3 = arith.constant 0 : index
    %c0_4 = arith.constant 0 : index
    %3 = vector.load %arg3[%c0_2, %c0_3, %c0_4] : memref<1x1x64xf32, #tpu.memory_space<vmem>>, vector<1x1x64xf32>
    %4 = vector.shape_cast %3 : vector<1x1x64xf32> to vector<1x64xf32>
    %5 = vector.broadcast %4 : vector<1x64xf32> to vector<64x64xf32>
    %6 = arith.mulf %2, %5 : vector<64x64xf32>
    %c0_5 = arith.constant 0 : index
    %c0_6 = arith.constant 0 : index
    %c0_7 = arith.constant 0 : index
    %7 = vector.load %arg4[%c0_5, %c0_6, %c0_7] : memref<1x1x64xf32, #tpu.memory_space<vmem>>, vector<1x1x64xf32>
    %8 = vector.shape_cast %7 : vector<1x1x64xf32> to vector<1x64xf32>
    %9 = vector.broadcast %8 : vector<1x64xf32> to vector<64x64xf32>
    %10 = arith.addf %6, %9 : vector<64x64xf32>
    %cst = arith.constant 5.000000e-01 : f32
    %11 = vector.broadcast %cst : f32 to vector<64x64xf32>
    %12 = arith.mulf %11, %10 : vector<64x64xf32>
    %cst_8 = arith.constant 0.707106769 : f32
    %13 = vector.broadcast %cst_8 : f32 to vector<64x64xf32>
    %14 = arith.mulf %10, %13 : vector<64x64xf32>
    %15 = math.absf %14 : vector<64x64xf32>
    %cst_9 = arith.constant 0.327591091 : f32
    %16 = vector.broadcast %cst_9 : f32 to vector<64x64xf32>
    %17 = arith.mulf %16, %15 : vector<64x64xf32>
    %cst_10 = arith.constant 1.000000e+00 : f32
    %18 = vector.broadcast %cst_10 : f32 to vector<64x64xf32>
    %19 = arith.addf %18, %17 : vector<64x64xf32>
    %cst_11 = arith.constant 1.000000e+00 : f32
    %20 = vector.broadcast %cst_11 : f32 to vector<64x64xf32>
    %21 = arith.divf %20, %19 : vector<64x64xf32>
    %cst_12 = arith.constant 1.06140542 : f32
    %22 = vector.broadcast %cst_12 : f32 to vector<64x64xf32>
    %23 = arith.mulf %22, %21 : vector<64x64xf32>
    %cst_13 = arith.constant -1.45315206 : f32
    %24 = vector.broadcast %cst_13 : f32 to vector<64x64xf32>
    %25 = arith.addf %23, %24 : vector<64x64xf32>
    %26 = arith.mulf %25, %21 : vector<64x64xf32>
    %cst_14 = arith.constant 1.42141378 : f32
    %27 = vector.broadcast %cst_14 : f32 to vector<64x64xf32>
    %28 = arith.addf %26, %27 : vector<64x64xf32>
    %29 = arith.mulf %28, %21 : vector<64x64xf32>
    %cst_15 = arith.constant -0.284496725 : f32
    %30 = vector.broadcast %cst_15 : f32 to vector<64x64xf32>
    %31 = arith.addf %29, %30 : vector<64x64xf32>
    %32 = arith.mulf %31, %21 : vector<64x64xf32>
    %cst_16 = arith.constant 0.254829586 : f32
    %33 = vector.broadcast %cst_16 : f32 to vector<64x64xf32>
    %34 = arith.addf %32, %33 : vector<64x64xf32>
    %35 = arith.mulf %34, %21 : vector<64x64xf32>
    %cst_17 = arith.constant 0.000000e+00 : f32
    %36 = vector.broadcast %cst_17 : f32 to vector<64x64xf32>
    %37 = arith.subf %36, %15 : vector<64x64xf32>
    %38 = arith.mulf %37, %15 : vector<64x64xf32>
    %39 = math.exp %38 : vector<64x64xf32>
    %40 = arith.mulf %35, %39 : vector<64x64xf32>
    %cst_18 = arith.constant 1.000000e+00 : f32
    %41 = vector.broadcast %cst_18 : f32 to vector<64x64xf32>
    %42 = arith.subf %41, %40 : vector<64x64xf32>
    %cst_19 = arith.constant 0.000000e+00 : f32
    %43 = vector.broadcast %cst_19 : f32 to vector<64x64xf32>
    %44 = arith.cmpf oge, %14, %43 : vector<64x64xf32>
    %cst_20 = arith.constant 0.000000e+00 : f32
    %45 = vector.broadcast %cst_20 : f32 to vector<64x64xf32>
    %46 = arith.subf %45, %42 : vector<64x64xf32>
    %47 = arith.select %44, %42, %46 : vector<64x64xi1>, vector<64x64xf32>
    %cst_21 = arith.constant 1.000000e+00 : f32
    %48 = vector.broadcast %cst_21 : f32 to vector<64x64xf32>
    %49 = arith.addf %48, %47 : vector<64x64xf32>
    %50 = arith.mulf %12, %49 : vector<64x64xf32>
    %c0_22 = arith.constant 0 : index
    %c0_23 = arith.constant 0 : index
    %c0_24 = arith.constant 0 : index
    %51 = vector.load %arg5[%c0_22, %c0_23, %c0_24] : memref<1x64x64xf32, #tpu.memory_space<vmem>>, vector<1x64x64xf32>
    %52 = vector.shape_cast %51 : vector<1x64x64xf32> to vector<64x64xf32>
    %53 = arith.addf %50, %52 : vector<64x64xf32>
    %c0_25 = arith.constant 0 : index
    %c0_26 = arith.constant 0 : index
    %c0_27 = arith.constant 0 : index
    %54 = vector.load %arg6[%c0_25, %c0_26, %c0_27] : memref<1x64x64xf32, #tpu.memory_space<vmem>>, vector<1x64x64xf32>
    %55 = vector.shape_cast %54 : vector<1x64x64xf32> to vector<64x64xf32>
    %56 = vector.shape_cast %53 : vector<64x64xf32> to vector<1x64x64xf32>
    tpu.vector_store %arg6[%c0_25, %c0_26, %c0_27], %56 {strides = array<i32>} : memref<1x64x64xf32, #tpu.memory_space<vmem>>, vector<1x64x64xf32>,
    return
  }
  func.func @transform_0(%arg0: i32, %arg1: i32) -> (i32, i32, i32) {
    %c0_i32 = arith.constant 0 : i32
    %c0_i32_0 = arith.constant 0 : i32
    return %arg0, %arg1, %c0_i32 : i32, i32, i32
  }
  func.func @transform_1(%arg0: i32, %arg1: i32) -> (i32, i32, i32) {
    %c0_i32 = arith.constant 0 : i32
    %c0_i32_0 = arith.constant 0 : i32
    %c0_i32_1 = arith.constant 0 : i32
    return %arg0, %c0_i32, %c0_i32_0 : i32, i32, i32
  }
  func.func @transform_2(%arg0: i32, %arg1: i32) -> (i32, i32, i32) {
    %c0_i32 = arith.constant 0 : i32
    %c0_i32_0 = arith.constant 0 : i32
    %c0_i32_1 = arith.constant 0 : i32
    return %arg0, %c0_i32, %c0_i32_0 : i32, i32, i32
  }
  func.func @transform_3(%arg0: i32, %arg1: i32) -> (i32, i32, i32) {
    %c0_i32 = arith.constant 0 : i32
    %c0_i32_0 = arith.constant 0 : i32
    return %arg0, %arg1, %c0_i32 : i32, i32, i32
  }
  func.func @transform_4(%arg0: i32, %arg1: i32) -> (i32, i32, i32) {
    %c0_i32 = arith.constant 0 : i32
    %c0_i32_0 = arith.constant 0 : i32
    return %arg0, %arg1, %c0_i32 : i32, i32, i32
  }
}

</mosaic_0001>

<llo_original>
// kernel: decoder_block_forward.7
$region0: #{decoder_block_forward.7}
  #allocation0 [shape = 'u32[]', space=smem, size = 0x4, offset = 0x4, fixed_abs, tag = 'smem constant byte address 0x4 - core index']
  #allocation1 [shape = 'u32[144,128]{1,0:T(1,128)}', space=vmem, size = 0x12000, scoped, tag = 'internal scratch']
  %s0 = inlined_call_operand.vmem [shape: bf16[2,64,64], index: 0, kind: input, shape index: {}]
  %s1 = inlined_call_operand.vmem [shape: f32[2,1,64], index: 1, kind: input, shape index: {}]
  %s2 = inlined_call_operand.vmem [shape: f32[2,1,64], index: 2, kind: input, shape index: {}]
  %s3 = inlined_call_operand.vmem [shape: bf16[2,64,64], index: 3, kind: output, shape index: {}]
  %s4 = sld [smem:[#allocation0]]
  $region45: #{decoder_block_forward.7} parent=0
    _
  %s6 = ssub.s32 1, %s4
  %s7 = scalar_select 0, %s6, %s4
  loop: start=0, step=1, limit=4
  $region2: #{decoder_block_forward.7} parent=0 // loop_pre_header
    _
  $region3: #{decoder_block_forward.7} parent=0 // loop_header
    %s9 = sphi 0, %s13
    %p10 = scmp.ge.s32.totalorder %s9, 4
    %s16 = sphi 0, %s28
    %s17 = sphi 0, %s24
    %s18 = sphi 0, %s16
    %s19 = sphi 0, %s17
    %s20 = sphi 0, %s18
    %s21 = sphi 0, %s19
    %s33 = sphi 0, %s35
    %s36 = sphi 0, %s33
    %s37 = sphi 0, %s36
    %s53 = sphi 0, %s37
    %s59 = sphi 0, %s61
    %s62 = sphi 0, %s59
    %s63 = sphi 0, %s62
    %s79 = sphi 0, %s63
    %s85 = sphi 0, %s87
    %s88 = sphi 0, %s85
    %s89 = sphi 0, %s88
    %s105 = sphi 0, %s89
    %s113 = sphi 0, %s115
    %s116 = sphi 0, %s113
    %s117 = sphi 0, %s116
    %s133 = sphi 0, %s117
  $region4: #{decoder_block_forward.7} parent=0 // loop_header_branch
    %12 = sbr.rel (%p10) target = $region8
  $region5: #{decoder_block_forward.7} parent=0 // loop_body
    %s14 = ssub.s32 %s9, 1
    %s15 = ssub.s32 %s9, 2
    %s22 = sadd.s32 1, %s17
    %p23 = scmp.ge.s32.totalorder %s22, 1
    %s24 = scalar_select %p23, 0, %s22
    %s25 = sadd.s32 1, %s16
    %s26 = scalar_select %p23, %s25, %s16
    %p27 = scmp.ge.s32.totalorder %s26, 2
    %s28 = scalar_select %p27, 0, %s26
    %s29 = ssub.s32 %s16, %s28
    %s30 = ssub.s32 %s17, %s24
    %s31 = sor.u32 %s29, %s30
    %p32 = scmp.eq.s32.totalorder %s31, 0
    %s34 = sadd.s32 %s33, 1
    %s35 = scalar_select %p32, %s33, %s34
    %p38 = pneg %p32
    %p39 = scmp.eq.s32.totalorder %s9, 1
    %p40 = por %p38, %p39
    %p41 = scmp.ne.s32.totalorder %s33, %s36
    %p42 = scmp.eq.s32.totalorder %s9, 0
    %p43 = por %p41, %p42
    %p44 = scmp.ne.s32.totalorder %s33, %s36
    %p45 = scmp.eq.s32.totalorder %s14, 1
    %p46 = por %p44, %p45
    %p47 = scmp.ne.s32.totalorder %s36, %s37
    %p48 = scmp.eq.s32.totalorder %s14, 0
    %p49 = por %p47, %p48
    %p50 = scmp.ne.s32.totalorder %s36, %s37
    %p51 = scmp.eq.s32.totalorder %s15, 1
    %p52 = por %p50, %p51
    %p54 = scmp.ne.s32.totalorder %s37, %s53
    %p55 = scmp.eq.s32.totalorder %s15, 0
    %p56 = por %p54, %p55
    %s57 = ssub.s32 %s16, %s28
    %p58 = scmp.eq.s32.totalorder %s57, 0
    %s60 = sadd.s32 %s59, 1
    %s61 = scalar_select %p58, %s59, %s60
    %p64 = pneg %p58
    %p65 = scmp.eq.s32.totalorder %s9, 1
    %p66 = por %p64, %p65
    %p67 = scmp.ne.s32.totalorder %s59, %s62
    %p68 = scmp.eq.s32.totalorder %s9, 0
    %p69 = por %p67, %p68
    %p70 = scmp.ne.s32.totalorder %s59, %s62
    %p71 = scmp.eq.s32.totalorder %s14, 1
    %p72 = por %p70, %p71
    %p73 = scmp.ne.s32.totalorder %s62, %s63
    %p74 = scmp.eq.s32.totalorder %s14, 0
    %p75 = por %p73, %p74
    %p76 = scmp.ne.s32.totalorder %s62, %s63
    %p77 = scmp.eq.s32.totalorder %s15, 1
    %p78 = por %p76, %p77
    %p80 = scmp.ne.s32.totalorder %s63, %s79
    %p81 = scmp.eq.s32.totalorder %s15, 0
    %p82 = por %p80, %p81
    %s83 = ssub.s32 %s16, %s28
    %p84 = scmp.eq.s32.totalorder %s83, 0
    %s86 = sadd.s32 %s85, 1
    %s87 = scalar_select %p84, %s85, %s86
    %p90 = pneg %p84
    %p91 = scmp.eq.s32.totalorder %s9, 1
    %p92 = por %p90, %p91
    %p93 = scmp.ne.s32.totalorder %s85, %s88
    %p94 = scmp.eq.s32.totalorder %s9, 0
    %p95 = por %p93, %p94
    %p96 = scmp.ne.s32.totalorder %s85, %s88
    %p97 = scmp.eq.s32.totalorder %s14, 1
    %p98 = por %p96, %p97
    %p99 = scmp.ne.s32.totalorder %s88, %s89
    %p100 = scmp.eq.s32.totalorder %s14, 0
    %p101 = por %p99, %p100
    %p102 = scmp.ne.s32.totalorder %s88, %s89
    %p103 = scmp.eq.s32.totalorder %s15, 1
    %p104 = por %p102, %p103
    %p106 = scmp.ne.s32.totalorder %s89, %s105
    %p107 = scmp.eq.s32.totalorder %s15, 0
    %p108 = por %p106, %p107
    %s109 = ssub.s32 %s16, %s28
    %s110 = ssub.s32 %s17, %s24
    %s111 = sor.u32 %s109, %s110
    %p112 = scmp.eq.s32.totalorder %s111, 0
    %s114 = sadd.s32 %s113, 1
    %s115 = scalar_select %p112, %s113, %s114
    %p118 = pneg %p112
    %p119 = scmp.eq.s32.totalorder %s9, 1
    %p120 = por %p118, %p119
    %p121 = scmp.ne.s32.totalorder %s113, %s116
    %p122 = scmp.eq.s32.totalorder %s9, 0
    %p123 = por %p121, %p122
    %p124 = scmp.ne.s32.totalorder %s113, %s116
    %p125 = scmp.eq.s32.totalorder %s14, 1
    %p126 = por %p124, %p125
    %p127 = scmp.ne.s32.totalorder %s116, %s117
    %p128 = scmp.eq.s32.totalorder %s14, 0
    %p129 = por %p127, %p128
    %p130 = scmp.ne.s32.totalorder %s116, %s117
    %p131 = scmp.eq.s32.totalorder %s15, 1
    %p132 = por %p130, %p131
    %p134 = scmp.ne.s32.totalorder %s117, %s133
    %p135 = scmp.eq.s32.totalorder %s15, 0
    %p136 = por %p134, %p135
    %p137 = scmp.le.s32.totalorder 1, %s9
    %p138 = scmp.lt.s32.totalorder %s9, 3
    %p139 = pnand %p137, %p138
    %p140 = pneg %p139
    // Predicated region
    $region9: #{decoder_block_forward.7} parent=5 // pred_check
      _
    $region10: #{decoder_block_forward.7} parent=5 // pred_check_branch
      %142 = sbr.rel (%p139) target = $region12
    $region11: #{decoder_block_forward.7} parent=5 // pred_region
      %s143 = ssub.s32 %s9, 1
    $region12: #{decoder_block_forward.7} parent=5 // pred_fallthru
      _
    %p144 = scmp.lt.s32.totalorder %s9, 2
    // Predicated region
    $region13: #{decoder_block_forward.7} parent=5 // pred_check
      %p145 = pneg %p144
    $region14: #{decoder_block_forward.7} parent=5 // pred_check_branch
      %147 = sbr.rel (%p145) target = $region16
    $region15: #{decoder_block_forward.7} parent=5 // pred_region
      // Predicated region
      $region17: #{decoder_block_forward.7} parent=15 // pred_check
        %p148 = pneg %p43
      $region18: #{decoder_block_forward.7} parent=15 // pred_check_branch
        %150 = sbr.rel (%p148) target = $region20
      $region19: #{decoder_block_forward.7} parent=15 // pred_region
        %s151 = smul.u32 8, %s17
        %p152 = scmp.lt.s32.totalorder %s16, 1
        %s153 = scalar_select %p152, %s16, 1
        %p154 = scmp.lt.s32.totalorder %s151, 7
        %s155 = scalar_select %p154, %s151, 7
        %s156 = smul.addr %s153, 8
        %s157 = sadd.s32 %s155, %s156
        %s158 = smul.addr %s157, 4
        %s159 = scalar_lea.vmem %s0, %s158
        %s160 = smul.u32 8, %s17
      $region20: #{decoder_block_forward.7} parent=15 // pred_fallthru
        _
      // Predicated region
      $region21: #{decoder_block_forward.7} parent=15 // pred_check
        %p161 = pneg %p69
      $region22: #{decoder_block_forward.7} parent=15 // pred_check_branch
        %163 = sbr.rel (%p161) target = $region24
      $region23: #{decoder_block_forward.7} parent=15 // pred_region
        %p164 = scmp.lt.s32.totalorder %s16, 1
        %s165 = scalar_select %p164, %s16, 1
        %s166 = scalar_lea.vmem %s1, %s165
      $region24: #{decoder_block_forward.7} parent=15 // pred_fallthru
        _
      // Predicated region
      $region25: #{decoder_block_forward.7} parent=15 // pred_check
        %p167 = pneg %p95
      $region26: #{decoder_block_forward.7} parent=15 // pred_check_branch
        %169 = sbr.rel (%p167) target = $region28
      $region27: #{decoder_block_forward.7} parent=15 // pred_region
        %p170 = scmp.lt.s32.totalorder %s16, 1
        %s171 = scalar_select %p170, %s16, 1
        %s172 = scalar_lea.vmem %s2, %s171
      $region28: #{decoder_block_forward.7} parent=15 // pred_fallthru
        _
    $region16: #{decoder_block_forward.7} parent=5 // pred_fallthru
      _
    %p173 = scmp.le.s32.totalorder 1, %s9
    %p174 = scmp.lt.s32.totalorder %s9, 3
    %p175 = pnand %p173, %p174
    %p176 = pneg %p175
    // Predicated region
    $region29: #{decoder_block_forward.7} parent=5 // pred_check
      _
    $region30: #{decoder_block_forward.7} parent=5 // pred_check_branch
      %178 = sbr.rel (%p175) target = $region32
    $region31: #{decoder_block_forward.7} parent=5 // pred_region
      %s179 = ssub.s32 %s9, 1
      %s180 = smul.u32 8, %s19
      %p181 = scmp.lt.s32.totalorder %s18, 1
      %s182 = scalar_select %p181, %s18, 1
      %p183 = scmp.lt.s32.totalorder %s180, 7
      %s184 = scalar_select %p183, %s180, 7
      %s185 = smul.addr %s182, 8
      %s186 = sadd.s32 %s184, %s185
      %s187 = smul.addr %s186, 4
      %s188 = scalar_lea.vmem %s0, %s187
      %p189 = pneg %p49
      %p190 = pneg %p46
      %p191 = scmp.lt.s32.totalorder %s18, 1
      %s192 = scalar_select %p191, %s18, 1
      %s193 = scalar_lea.vmem %s1, %s192
      %p194 = pneg %p75
      %p195 = pneg %p72
      %p196 = scmp.lt.s32.totalorder %s18, 1
      %s197 = scalar_select %p196, %s18, 1
      %s198 = scalar_lea.vmem %s2, %s197
      %p199 = pneg %p101
      %p200 = pneg %p98
      %p201 = pneg %p129
      %p202 = pneg %p126
      %s203 = smul.u32 8, %s19
      %p204 = scmp.lt.s32.totalorder %s18, 1
      %s205 = scalar_select %p204, %s18, 1
      %p206 = scmp.lt.s32.totalorder %s203, 7
      %s207 = scalar_select %p206, %s203, 7
      %s208 = smul.addr %s205, 8
      %s209 = sadd.s32 %s207, %s208
      %s210 = smul.addr %s209, 4
      %s211 = scalar_lea.vmem %s3, %s210
      %s212 = smul.u32 8, %s19
      %p213 = scmp.lt.s32.totalorder %s18, 1
      %s214 = scalar_select %p213, %s18, 1
      %p215 = scmp.lt.s32.totalorder %s212, 7
      %s216 = scalar_select %p215, %s212, 7
      %s217 = smul.addr %s214, 8
      %s218 = sadd.s32 %s216, %s217
      %s219 = smul.addr %s218, 4
      %s220 = scalar_lea.vmem %s0, %s219
      %s221 = smul.u32 8, %s19
      %p222 = scmp.lt.s32.totalorder %s18, 1
      %s223 = scalar_select %p222, %s18, 1
      %s224 = scalar_lea.vmem %s1, %s223
      %p225 = scmp.lt.s32.totalorder %s18, 1
      %s226 = scalar_select %p225, %s18, 1
      %s227 = scalar_lea.vmem %s2, %s226
      %s228 = smul.u32 8, %s19
      %p229 = scmp.lt.s32.totalorder %s18, 1
      %s230 = scalar_select %p229, %s18, 1
      %p231 = scmp.lt.s32.totalorder %s228, 7
      %s232 = scalar_select %p231, %s228, 7
      %s233 = smul.addr %s230, 8
      %s234 = sadd.s32 %s232, %s233
      %s235 = smul.addr %s234, 4
      %s236 = scalar_lea.vmem %s3, %s235
      %s237 = smul.u32 8, %s19
      %v238 = vld [vmem:[%s220] sm:$0xf]
      %v239 = vld [vmem:[%s220 + $0x4] sm:$0xf]
      %v240 = vld [vmem:[%s220 + $0x8] sm:$0xf]
      %v241 = vld [vmem:[%s220 + $0xc] sm:$0xf]
      %v242 = vld [vmem:[%s220 + $0x10] sm:$0xf]
      %v243 = vld [vmem:[%s220 + $0x14] sm:$0xf]
      %v244 = vld [vmem:[%s220 + $0x18] sm:$0xf]
      %v245 = vld [vmem:[%s220 + $0x1c] sm:$0xf]
      %v246 = vunpack.c.l.bf16 %v238
      %v247 = vunpack.c.l.bf16 %v239
      %v248 = vunpack.c.l.bf16 %v240
      %v249 = vunpack.c.l.bf16 %v241
      %v250 = vunpack.c.l.bf16 %v242
      %v251 = vunpack.c.l.bf16 %v243
      %v252 = vunpack.c.l.bf16 %v244
      %v253 = vunpack.c.l.bf16 %v245
      %v254 = vld [vmem:[%s224] sm:$0x1]
      %v256 = vlaneseq
      %v257 = vshrl.u32 %v256, 7
      %v258 = vsub.s32 0, %v257
      %v259 = vrot.slane %v254, %v258
      %v261 = vmul.f32 %v246, %v259
      %v262 = vmul.f32 %v247, %v259
      %v263 = vmul.f32 %v248, %v259
      %v264 = vmul.f32 %v249, %v259
      %v265 = vmul.f32 %v250, %v259
      %v266 = vmul.f32 %v251, %v259
      %v267 = vmul.f32 %v252, %v259
      %v268 = vmul.f32 %v253, %v259
      %v269 = vld [vmem:[%s227] sm:$0x1]
      %v271 = vlaneseq
      %v272 = vshrl.u32 %v271, 7
      %v273 = vsub.s32 0, %v272
      %v274 = vrot.slane %v269, %v273
      %v276 = vadd.f32 %v261, %v274
      %v277 = vadd.f32 %v262, %v274
      %v278 = vadd.f32 %v263, %v274
      %v279 = vadd.f32 %v264, %v274
      %v280 = vadd.f32 %v265, %v274
      %v281 = vadd.f32 %v266, %v274
      %v282 = vadd.f32 %v267, %v274
      %v283 = vadd.f32 %v268, %v274
      %v284 = vmul.f32 %v276, 0.5
      %v285 = vmul.f32 %v277, 0.5
      %v286 = vmul.f32 %v278, 0.5
      %v287 = vmul.f32 %v279, 0.5
      %v288 = vmul.f32 %v280, 0.5
      %v289 = vmul.f32 %v281, 0.5
      %v290 = vmul.f32 %v282, 0.5
      %v291 = vmul.f32 %v283, 0.5
      %v292 = vmul.f32 %v276, 0.70710677
      %v293 = vmul.f32 %v277, 0.70710677
      %v294 = vmul.f32 %v278, 0.70710677
      %v295 = vmul.f32 %v279, 0.70710677
      %v296 = vmul.f32 %v280, 0.70710677
      %v297 = vmul.f32 %v281, 0.70710677
      %v298 = vmul.f32 %v282, 0.70710677
      %v299 = vmul.f32 %v283, 0.70710677
      %v300 = vand.u32 2147483647, %v292
      %v301 = vand.u32 2147483647, %v293
      %v302 = vand.u32 2147483647, %v294
      %v303 = vand.u32 2147483647, %v295
      %v304 = vand.u32 2147483647, %v296
      %v305 = vand.u32 2147483647, %v297
      %v306 = vand.u32 2147483647, %v298
      %v307 = vand.u32 2147483647, %v299
      %v308 = vmul.f32 %v300, 0.3275911
      %v309 = vmul.f32 %v301, 0.3275911
      %v310 = vmul.f32 %v302, 0.3275911
      %v311 = vmul.f32 %v303, 0.3275911
      %v312 = vmul.f32 %v304, 0.3275911
      %v313 = vmul.f32 %v305, 0.3275911
      %v314 = vmul.f32 %v306, 0.3275911
      %v315 = vmul.f32 %v307, 0.3275911
      %v316 = vadd.f32 %v308, 1.0
      %v317 = vadd.f32 %v309, 1.0
      %v318 = vadd.f32 %v310, 1.0
      %v319 = vadd.f32 %v311, 1.0
      %v320 = vadd.f32 %v312, 1.0
      %v321 = vadd.f32 %v313, 1.0
      %v322 = vadd.f32 %v314, 1.0
      %v323 = vadd.f32 %v315, 1.0
      %v324 = vrcp.pop %v316
      %v325 = vmul.f32 1.0, %v324
      %v326 = vrcp.pop %v317
      %v327 = vmul.f32 1.0, %v326
      %v328 = vrcp.pop %v318
      %v329 = vmul.f32 1.0, %v328
      %v330 = vrcp.pop %v319
      %v331 = vmul.f32 1.0, %v330
      %v332 = vrcp.pop %v320
      %v333 = vmul.f32 1.0, %v332
      %v334 = vrcp.pop %v321
      %v335 = vmul.f32 1.0, %v334
      %v336 = vrcp.pop %v322
      %v337 = vmul.f32 1.0, %v336
      %v338 = vrcp.pop %v323
      %v339 = vmul.f32 1.0, %v338
      %v340 = vmul.f32 %v325, 1.0614054
      %v341 = vmul.f32 %v327, 1.0614054
      %v342 = vmul.f32 %v329, 1.0614054
      %v343 = vmul.f32 %v331, 1.0614054
      %v344 = vmul.f32 %v333, 1.0614054
      %v345 = vmul.f32 %v335, 1.0614054
      %v346 = vmul.f32 %v337, 1.0614054
      %v347 = vmul.f32 %v339, 1.0614054
      %v348 = vadd.f32 %v340, -1.4531521
      %v349 = vadd.f32 %v341, -1.4531521
      %v350 = vadd.f32 %v342, -1.4531521
      %v351 = vadd.f32 %v343, -1.4531521
      %v352 = vadd.f32 %v344, -1.4531521
      %v353 = vadd.f32 %v345, -1.4531521
      %v354 = vadd.f32 %v346, -1.4531521
      %v355 = vadd.f32 %v347, -1.4531521
      %v356 = vmul.f32 %v348, %v325
      %v357 = vmul.f32 %v349, %v327
      %v358 = vmul.f32 %v350, %v329
      %v359 = vmul.f32 %v351, %v331
      %v360 = vmul.f32 %v352, %v333
      %v361 = vmul.f32 %v353, %v335
      %v362 = vmul.f32 %v354, %v337
      %v363 = vmul.f32 %v355, %v339
      %v364 = vadd.f32 %v356, 1.4214138
      %v365 = vadd.f32 %v357, 1.4214138
      %v366 = vadd.f32 %v358, 1.4214138
      %v367 = vadd.f32 %v359, 1.4214138
      %v368 = vadd.f32 %v360, 1.4214138
      %v369 = vadd.f32 %v361, 1.4214138
      %v370 = vadd.f32 %v362, 1.4214138
      %v371 = vadd.f32 %v363, 1.4214138
      %v372 = vmul.f32 %v364, %v325
      %v373 = vmul.f32 %v365, %v327
      %v374 = vmul.f32 %v366, %v329
      %v375 = vmul.f32 %v367, %v331
      %v376 = vmul.f32 %v368, %v333
      %v377 = vmul.f32 %v369, %v335
      %v378 = vmul.f32 %v370, %v337
      %v379 = vmul.f32 %v371, %v339
      %v380 = vadd.f32 %v372, -0.28449672
      %v381 = vadd.f32 %v373, -0.28449672
      %v382 = vadd.f32 %v374, -0.28449672
      %v383 = vadd.f32 %v375, -0.28449672
      %v384 = vadd.f32 %v376, -0.28449672
      %v385 = vadd.f32 %v377, -0.28449672
      %v386 = vadd.f32 %v378, -0.28449672
      %v387 = vadd.f32 %v379, -0.28449672
      %v388 = vmul.f32 %v380, %v325
      %v389 = vmul.f32 %v381, %v327
      %v390 = vmul.f32 %v382, %v329
      %v391 = vmul.f32 %v383, %v331
      %v392 = vmul.f32 %v384, %v333
      %v393 = vmul.f32 %v385, %v335
      %v394 = vmul.f32 %v386, %v337
      %v395 = vmul.f32 %v387, %v339
      %v396 = vadd.f32 %v388, 0.2548296
      %v397 = vadd.f32 %v389, 0.2548296
      %v398 = vadd.f32 %v390, 0.2548296
      %v399 = vadd.f32 %v391, 0.2548296
      %v400 = vadd.f32 %v392, 0.2548296
      %v401 = vadd.f32 %v393, 0.2548296
      %v402 = vadd.f32 %v394, 0.2548296
      %v403 = vadd.f32 %v395, 0.2548296
      %v404 = vmul.f32 %v396, %v325
      %v405 = vmul.f32 %v397, %v327
      %v406 = vmul.f32 %v398, %v329
      %v407 = vmul.f32 %v399, %v331
      %v408 = vmul.f32 %v400, %v333
      %v409 = vmul.f32 %v401, %v335
      %v410 = vmul.f32 %v402, %v337
      %v411 = vmul.f32 %v403, %v339
      %v412 = vsub.f32 0.0, %v300
      %v413 = vsub.f32 0.0, %v301
      %v414 = vsub.f32 0.0, %v302
      %v415 = vsub.f32 0.0, %v303
      %v416 = vsub.f32 0.0, %v304
      %v417 = vsub.f32 0.0, %v305
      %v418 = vsub.f32 0.0, %v306
      %v419 = vsub.f32 0.0, %v307
      %v420 = vmul.f32 %v412, %v300
      %v421 = vmul.f32 %v413, %v301
      %v422 = vmul.f32 %v414, %v302
      %v423 = vmul.f32 %v415, %v303
      %v424 = vmul.f32 %v416, %v304
      %v425 = vmul.f32 %v417, %v305
      %v426 = vmul.f32 %v418, %v306
      %v427 = vmul.f32 %v419, %v307
      %v428 = vmul.f32 %v420, 1.442695
      %v429 = vpow.pop %v428
      %v430 = vmul.f32 %v421, 1.442695
      %v431 = vpow.pop %v430
      %v432 = vmul.f32 %v422, 1.442695
      %v433 = vpow.pop %v432
      %v434 = vmul.f32 %v423, 1.442695
      %v435 = vpow.pop %v434
      %v436 = vmul.f32 %v424, 1.442695
      %v437 = vpow.pop %v436
      %v438 = vmul.f32 %v425, 1.442695
      %v439 = vpow.pop %v438
      %v440 = vmul.f32 %v426, 1.442695
      %v441 = vpow.pop %v440
      %v442 = vmul.f32 %v427, 1.442695
      %v443 = vpow.pop %v442
      %v444 = vmul.f32 %v404, %v429
      %v445 = vmul.f32 %v405, %v431
      %v446 = vmul.f32 %v406, %v433
      %v447 = vmul.f32 %v407, %v435
      %v448 = vmul.f32 %v408, %v437
      %v449 = vmul.f32 %v409, %v439
      %v450 = vmul.f32 %v410, %v441
      %v451 = vmul.f32 %v411, %v443
      %v452 = vsub.f32 1.0, %v444
      %v453 = vsub.f32 1.0, %v445
      %v454 = vsub.f32 1.0, %v446
      %v455 = vsub.f32 1.0, %v447
      %v456 = vsub.f32 1.0, %v448
      %v457 = vsub.f32 1.0, %v449
      %v458 = vsub.f32 1.0, %v450
      %v459 = vsub.f32 1.0, %v451
      %vm460 = vcmp.ge.f32.partialorder %v292, 0.0
      %vm461 = vcmp.ge.f32.partialorder %v293, 0.0
      %vm462 = vcmp.ge.f32.partialorder %v294, 0.0
      %vm463 = vcmp.ge.f32.partialorder %v295, 0.0
      %vm464 = vcmp.ge.f32.partialorder %v296, 0.0
      %vm465 = vcmp.ge.f32.partialorder %v297, 0.0
      %vm466 = vcmp.ge.f32.partialorder %v298, 0.0
      %vm467 = vcmp.ge.f32.partialorder %v299, 0.0
      %v468 = vsub.f32 0.0, %v452
      %v469 = vsub.f32 0.0, %v453
      %v470 = vsub.f32 0.0, %v454
      %v471 = vsub.f32 0.0, %v455
      %v472 = vsub.f32 0.0, %v456
      %v473 = vsub.f32 0.0, %v457
      %v474 = vsub.f32 0.0, %v458
      %v475 = vsub.f32 0.0, %v459
      %v476 = vsel %vm460, %v452, %v468
      %v477 = vsel %vm461, %v453, %v469
      %v478 = vsel %vm462, %v454, %v470
      %v479 = vsel %vm463, %v455, %v471
      %v480 = vsel %vm464, %v456, %v472
      %v481 = vsel %vm465, %v457, %v473
      %v482 = vsel %vm466, %v458, %v474
      %v483 = vsel %vm467, %v459, %v475
      %v484 = vadd.f32 %v476, 1.0
      %v485 = vadd.f32 %v477, 1.0
      %v486 = vadd.f32 %v478, 1.0
      %v487 = vadd.f32 %v479, 1.0
      %v488 = vadd.f32 %v480, 1.0
      %v489 = vadd.f32 %v481, 1.0
      %v490 = vadd.f32 %v482, 1.0
      %v491 = vadd.f32 %v483, 1.0
      %v492 = vmul.f32 %v284, %v484
      %v493 = vmul.f32 %v285, %v485
      %v494 = vmul.f32 %v286, %v486
      %v495 = vmul.f32 %v287, %v487
      %v496 = vmul.f32 %v288, %v488
      %v497 = vmul.f32 %v289, %v489
      %v498 = vmul.f32 %v290, %v490
      %v499 = vmul.f32 %v291, %v491
      %v500 = vpack.c.bf16 %v493, %v492
      %v501 = vpack.c.bf16 %v495, %v494
      %v502 = vpack.c.bf16 %v497, %v496
      %v503 = vpack.c.bf16 %v499, %v498
      %v508 = vunpack.c.l.b16 %v500
      %v509 = vunpack.c.h.b16 %v500
      %v510 = vunpack.c.l.b16 %v501
      %v511 = vunpack.c.h.b16 %v501
      %v512 = vunpack.c.l.b16 %v502
      %v513 = vunpack.c.h.b16 %v502
      %v514 = vunpack.c.l.b16 %v503
      %v515 = vunpack.c.h.b16 %v503
      %v516 = vpack.c.b16 %v508, %v508
      %v517 = vpack.c.b16 %v509, %v509
      %v518 = vpack.c.b16 %v510, %v510
      %v519 = vpack.c.b16 %v511, %v511
      %v520 = vpack.c.b16 %v512, %v512
      %v521 = vpack.c.b16 %v513, %v513
      %v522 = vpack.c.b16 %v514, %v514
      %v523 = vpack.c.b16 %v515, %v515
      %vm532 = vcmask 519168
      %533 = vst.msk [vmem:[%s236] sm:$0xf] %vm532, %v516
      %534 = vst.msk [vmem:[%s236 + $0x4] sm:$0xf] %vm532, %v517
      %535 = vst.msk [vmem:[%s236 + $0x8] sm:$0xf] %vm532, %v518
      %536 = vst.msk [vmem:[%s236 + $0xc] sm:$0xf] %vm532, %v519
      %537 = vst.msk [vmem:[%s236 + $0x10] sm:$0xf] %vm532, %v520
      %538 = vst.msk [vmem:[%s236 + $0x14] sm:$0xf] %vm532, %v521
      %539 = vst.msk [vmem:[%s236 + $0x18] sm:$0xf] %vm532, %v522
      %540 = vst.msk [vmem:[%s236 + $0x1c] sm:$0xf] %vm532, %v523
      %s541 = smul.u32 8, %s19
      %p542 = scmp.lt.s32.totalorder %s18, 1
      %s543 = scalar_select %p542, %s18, 1
      %p544 = scmp.lt.s32.totalorder %s541, 7
      %s545 = scalar_select %p544, %s541, 7
      %s546 = smul.addr %s543, 8
      %s547 = sadd.s32 %s545, %s546
      %s548 = smul.addr %s547, 4
      %s549 = scalar_lea.vmem %s3, %s548
      // Predicated region
      $region33: #{decoder_block_forward.7} parent=31 // pred_check
        %p550 = pneg %p126
      $region34: #{decoder_block_forward.7} parent=31 // pred_check_branch
        %552 = sbr.rel (%p550) target = $region36
      $region35: #{decoder_block_forward.7} parent=31 // pred_region
        %s553 = smul.u32 8, %s19
      $region36: #{decoder_block_forward.7} parent=31 // pred_fallthru
        _
    $region32: #{decoder_block_forward.7} parent=5 // pred_fallthru
      _
    %p554 = scmp.le.s32.totalorder 2, %s9
    // Predicated region
    $region37: #{decoder_block_forward.7} parent=5 // pred_check
      %p555 = pneg %p554
    $region38: #{decoder_block_forward.7} parent=5 // pred_check_branch
      %557 = sbr.rel (%p555) target = $region40
    $region39: #{decoder_block_forward.7} parent=5 // pred_region
      %s558 = ssub.s32 %s9, 2
      // Predicated region
      $region41: #{decoder_block_forward.7} parent=39 // pred_check
        %p559 = pneg %p132
      $region42: #{decoder_block_forward.7} parent=39 // pred_check_branch
        %561 = sbr.rel (%p559) target = $region44
      $region43: #{decoder_block_forward.7} parent=39 // pred_region
        %s562 = smul.u32 8, %s21
        %p563 = scmp.lt.s32.totalorder %s20, 1
        %s564 = scalar_select %p563, %s20, 1
        %p565 = scmp.lt.s32.totalorder %s562, 7
        %s566 = scalar_select %p565, %s562, 7
        %s567 = smul.addr %s564, 8
        %s568 = sadd.s32 %s566, %s567
        %s569 = smul.addr %s568, 4
        %s570 = scalar_lea.vmem %s3, %s569
      $region44: #{decoder_block_forward.7} parent=39 // pred_fallthru
        _
    $region40: #{decoder_block_forward.7} parent=5 // pred_fallthru
      _
  $region6: #{decoder_block_forward.7} parent=0 // loop_footer
    %s13 = sadd.s32 1, %s9
  $region7: #{decoder_block_forward.7} parent=0 // loop_footer_branch
    %8 = sbr.rel target = $region3
  $region8: #{decoder_block_forward.7} parent=0 // loop_exit
    _

// kernel: decoder_block_forward.11
$region0: #{decoder_block_forward.11}
  #allocation0 [shape = 'u32[]', space=smem, size = 0x4, offset = 0x4, fixed_abs, tag = 'smem constant byte address 0x4 - core index']
  #allocation1 [shape = 'u32[144,128]{1,0:T(1,128)}', space=vmem, size = 0x12000, scoped, tag = 'internal scratch']
  %s0 = inlined_call_operand.vmem [shape: bf16[2,64,64], index: 0, kind: input, shape index: {}]
  %s1 = inlined_call_operand.vmem [shape: f32[2,1,64], index: 1, kind: input, shape index: {}]
  %s2 = inlined_call_operand.vmem [shape: f32[2,1,64], index: 2, kind: input, shape index: {}]
  %s3 = inlined_call_operand.vmem [shape: f32[2,64,64], index: 3, kind: input, shape index: {}]
  %s4 = inlined_call_operand.vmem [shape: f32[2,64,64], index: 4, kind: output, shape index: {}]
  %s5 = sld [smem:[#allocation0]]
  $region49: #{decoder_block_forward.11} parent=0
    _
  %s7 = ssub.s32 1, %s5
  %s8 = scalar_select 0, %s7, %s5
  loop: start=0, step=1, limit=4
  $region2: #{decoder_block_forward.11} parent=0 // loop_pre_header
    _
  $region3: #{decoder_block_forward.11} parent=0 // loop_header
    %s10 = sphi 0, %s14
    %p11 = scmp.ge.s32.totalorder %s10, 4
    %s17 = sphi 0, %s29
    %s18 = sphi 0, %s25
    %s19 = sphi 0, %s17
    %s20 = sphi 0, %s18
    %s21 = sphi 0, %s19
    %s22 = sphi 0, %s20
    %s34 = sphi 0, %s36
    %s37 = sphi 0, %s34
    %s38 = sphi 0, %s37
    %s54 = sphi 0, %s38
    %s60 = sphi 0, %s62
    %s63 = sphi 0, %s60
    %s64 = sphi 0, %s63
    %s80 = sphi 0, %s64
    %s86 = sphi 0, %s88
    %s89 = sphi 0, %s86
    %s90 = sphi 0, %s89
    %s106 = sphi 0, %s90
    %s114 = sphi 0, %s116
    %s117 = sphi 0, %s114
    %s118 = sphi 0, %s117
    %s134 = sphi 0, %s118
    %s142 = sphi 0, %s144
    %s145 = sphi 0, %s142
    %s146 = sphi 0, %s145
    %s162 = sphi 0, %s146
  $region4: #{decoder_block_forward.11} parent=0 // loop_header_branch
    %13 = sbr.rel (%p11) target = $region8
  $region5: #{decoder_block_forward.11} parent=0 // loop_body
    %s15 = ssub.s32 %s10, 1
    %s16 = ssub.s32 %s10, 2
    %s23 = sadd.s32 1, %s18
    %p24 = scmp.ge.s32.totalorder %s23, 1
    %s25 = scalar_select %p24, 0, %s23
    %s26 = sadd.s32 1, %s17
    %s27 = scalar_select %p24, %s26, %s17
    %p28 = scmp.ge.s32.totalorder %s27, 2
    %s29 = scalar_select %p28, 0, %s27
    %s30 = ssub.s32 %s17, %s29
    %s31 = ssub.s32 %s18, %s25
    %s32 = sor.u32 %s30, %s31
    %p33 = scmp.eq.s32.totalorder %s32, 0
    %s35 = sadd.s32 %s34, 1
    %s36 = scalar_select %p33, %s34, %s35
    %p39 = pneg %p33
    %p40 = scmp.eq.s32.totalorder %s10, 1
    %p41 = por %p39, %p40
    %p42 = scmp.ne.s32.totalorder %s34, %s37
    %p43 = scmp.eq.s32.totalorder %s10, 0
    %p44 = por %p42, %p43
    %p45 = scmp.ne.s32.totalorder %s34, %s37
    %p46 = scmp.eq.s32.totalorder %s15, 1
    %p47 = por %p45, %p46
    %p48 = scmp.ne.s32.totalorder %s37, %s38
    %p49 = scmp.eq.s32.totalorder %s15, 0
    %p50 = por %p48, %p49
    %p51 = scmp.ne.s32.totalorder %s37, %s38
    %p52 = scmp.eq.s32.totalorder %s16, 1
    %p53 = por %p51, %p52
    %p55 = scmp.ne.s32.totalorder %s38, %s54
    %p56 = scmp.eq.s32.totalorder %s16, 0
    %p57 = por %p55, %p56
    %s58 = ssub.s32 %s17, %s29
    %p59 = scmp.eq.s32.totalorder %s58, 0
    %s61 = sadd.s32 %s60, 1
    %s62 = scalar_select %p59, %s60, %s61
    %p65 = pneg %p59
    %p66 = scmp.eq.s32.totalorder %s10, 1
    %p67 = por %p65, %p66
    %p68 = scmp.ne.s32.totalorder %s60, %s63
    %p69 = scmp.eq.s32.totalorder %s10, 0
    %p70 = por %p68, %p69
    %p71 = scmp.ne.s32.totalorder %s60, %s63
    %p72 = scmp.eq.s32.totalorder %s15, 1
    %p73 = por %p71, %p72
    %p74 = scmp.ne.s32.totalorder %s63, %s64
    %p75 = scmp.eq.s32.totalorder %s15, 0
    %p76 = por %p74, %p75
    %p77 = scmp.ne.s32.totalorder %s63, %s64
    %p78 = scmp.eq.s32.totalorder %s16, 1
    %p79 = por %p77, %p78
    %p81 = scmp.ne.s32.totalorder %s64, %s80
    %p82 = scmp.eq.s32.totalorder %s16, 0
    %p83 = por %p81, %p82
    %s84 = ssub.s32 %s17, %s29
    %p85 = scmp.eq.s32.totalorder %s84, 0
    %s87 = sadd.s32 %s86, 1
    %s88 = scalar_select %p85, %s86, %s87
    %p91 = pneg %p85
    %p92 = scmp.eq.s32.totalorder %s10, 1
    %p93 = por %p91, %p92
    %p94 = scmp.ne.s32.totalorder %s86, %s89
    %p95 = scmp.eq.s32.totalorder %s10, 0
    %p96 = por %p94, %p95
    %p97 = scmp.ne.s32.totalorder %s86, %s89
    %p98 = scmp.eq.s32.totalorder %s15, 1
    %p99 = por %p97, %p98
    %p100 = scmp.ne.s32.totalorder %s89, %s90
    %p101 = scmp.eq.s32.totalorder %s15, 0
    %p102 = por %p100, %p101
    %p103 = scmp.ne.s32.totalorder %s89, %s90
    %p104 = scmp.eq.s32.totalorder %s16, 1
    %p105 = por %p103, %p104
    %p107 = scmp.ne.s32.totalorder %s90, %s106
    %p108 = scmp.eq.s32.totalorder %s16, 0
    %p109 = por %p107, %p108
    %s110 = ssub.s32 %s17, %s29
    %s111 = ssub.s32 %s18, %s25
    %s112 = sor.u32 %s110, %s111
    %p113 = scmp.eq.s32.totalorder %s112, 0
    %s115 = sadd.s32 %s114, 1
    %s116 = scalar_select %p113, %s114, %s115
    %p119 = pneg %p113
    %p120 = scmp.eq.s32.totalorder %s10, 1
    %p121 = por %p119, %p120
    %p122 = scmp.ne.s32.totalorder %s114, %s117
    %p123 = scmp.eq.s32.totalorder %s10, 0
    %p124 = por %p122, %p123
    %p125 = scmp.ne.s32.totalorder %s114, %s117
    %p126 = scmp.eq.s32.totalorder %s15, 1
    %p127 = por %p125, %p126
    %p128 = scmp.ne.s32.totalorder %s117, %s118
    %p129 = scmp.eq.s32.totalorder %s15, 0
    %p130 = por %p128, %p129
    %p131 = scmp.ne.s32.totalorder %s117, %s118
    %p132 = scmp.eq.s32.totalorder %s16, 1
    %p133 = por %p131, %p132
    %p135 = scmp.ne.s32.totalorder %s118, %s134
    %p136 = scmp.eq.s32.totalorder %s16, 0
    %p137 = por %p135, %p136
    %s138 = ssub.s32 %s17, %s29
    %s139 = ssub.s32 %s18, %s25
    %s140 = sor.u32 %s138, %s139
    %p141 = scmp.eq.s32.totalorder %s140, 0
    %s143 = sadd.s32 %s142, 1
    %s144 = scalar_select %p141, %s142, %s143
    %p147 = pneg %p141
    %p148 = scmp.eq.s32.totalorder %s10, 1
    %p149 = por %p147, %p148
    %p150 = scmp.ne.s32.totalorder %s142, %s145
    %p151 = scmp.eq.s32.totalorder %s10, 0
    %p152 = por %p150, %p151
    %p153 = scmp.ne.s32.totalorder %s142, %s145
    %p154 = scmp.eq.s32.totalorder %s15, 1
    %p155 = por %p153, %p154
    %p156 = scmp.ne.s32.totalorder %s145, %s146
    %p157 = scmp.eq.s32.totalorder %s15, 0
    %p158 = por %p156, %p157
    %p159 = scmp.ne.s32.totalorder %s145, %s146
    %p160 = scmp.eq.s32.totalorder %s16, 1
    %p161 = por %p159, %p160
    %p163 = scmp.ne.s32.totalorder %s146, %s162
    %p164 = scmp.eq.s32.totalorder %s16, 0
    %p165 = por %p163, %p164
    %p166 = scmp.le.s32.totalorder 1, %s10
    %p167 = scmp.lt.s32.totalorder %s10, 3
    %p168 = pnand %p166, %p167
    %p169 = pneg %p168
    // Predicated region
    $region9: #{decoder_block_forward.11} parent=5 // pred_check
      _
    $region10: #{decoder_block_forward.11} parent=5 // pred_check_branch
      %171 = sbr.rel (%p168) target = $region12
    $region11: #{decoder_block_forward.11} parent=5 // pred_region
      %s172 = ssub.s32 %s10, 1
    $region12: #{decoder_block_forward.11} parent=5 // pred_fallthru
      _
    %p173 = scmp.lt.s32.totalorder %s10, 2
    // Predicated region
    $region13: #{decoder_block_forward.11} parent=5 // pred_check
      %p174 = pneg %p173
    $region14: #{decoder_block_forward.11} parent=5 // pred_check_branch
      %176 = sbr.rel (%p174) target = $region16
    $region15: #{decoder_block_forward.11} parent=5 // pred_region
      // Predicated region
      $region17: #{decoder_block_forward.11} parent=15 // pred_check
        %p177 = pneg %p44
      $region18: #{decoder_block_forward.11} parent=15 // pred_check_branch
        %179 = sbr.rel (%p177) target = $region20
      $region19: #{decoder_block_forward.11} parent=15 // pred_region
        %s180 = smul.u32 8, %s18
        %p181 = scmp.lt.s32.totalorder %s17, 1
        %s182 = scalar_select %p181, %s17, 1
        %p183 = scmp.lt.s32.totalorder %s180, 7
        %s184 = scalar_select %p183, %s180, 7
        %s185 = smul.addr %s182, 8
        %s186 = sadd.s32 %s184, %s185
        %s187 = smul.addr %s186, 4
        %s188 = scalar_lea.vmem %s0, %s187
        %s189 = smul.u32 8, %s18
      $region20: #{decoder_block_forward.11} parent=15 // pred_fallthru
        _
      // Predicated region
      $region21: #{decoder_block_forward.11} parent=15 // pred_check
        %p190 = pneg %p70
      $region22: #{decoder_block_forward.11} parent=15 // pred_check_branch
        %192 = sbr.rel (%p190) target = $region24
      $region23: #{decoder_block_forward.11} parent=15 // pred_region
        %p193 = scmp.lt.s32.totalorder %s17, 1
        %s194 = scalar_select %p193, %s17, 1
        %s195 = scalar_lea.vmem %s1, %s194
      $region24: #{decoder_block_forward.11} parent=15 // pred_fallthru
        _
      // Predicated region
      $region25: #{decoder_block_forward.11} parent=15 // pred_check
        %p196 = pneg %p96
      $region26: #{decoder_block_forward.11} parent=15 // pred_check_branch
        %198 = sbr.rel (%p196) target = $region28
      $region27: #{decoder_block_forward.11} parent=15 // pred_region
        %p199 = scmp.lt.s32.totalorder %s17, 1
        %s200 = scalar_select %p199, %s17, 1
        %s201 = scalar_lea.vmem %s2, %s200
      $region28: #{decoder_block_forward.11} parent=15 // pred_fallthru
        _
      // Predicated region
      $region29: #{decoder_block_forward.11} parent=15 // pred_check
        %p202 = pneg %p124
      $region30: #{decoder_block_forward.11} parent=15 // pred_check_branch
        %204 = sbr.rel (%p202) target = $region32
      $region31: #{decoder_block_forward.11} parent=15 // pred_region
        %s205 = smul.u32 8, %s18
        %p206 = scmp.lt.s32.totalorder %s17, 1
        %s207 = scalar_select %p206, %s17, 1
        %p208 = scmp.lt.s32.totalorder %s205, 7
        %s209 = scalar_select %p208, %s205, 7
        %s210 = smul.addr %s207, 8
        %s211 = sadd.s32 %s209, %s210
        %s212 = smul.addr %s211, 8
        %s213 = scalar_lea.vmem %s3, %s212
        %s214 = smul.u32 8, %s18
      $region32: #{decoder_block_forward.11} parent=15 // pred_fallthru
        _
    $region16: #{decoder_block_forward.11} parent=5 // pred_fallthru
      _
    %p215 = scmp.le.s32.totalorder 1, %s10
    %p216 = scmp.lt.s32.totalorder %s10, 3
    %p217 = pnand %p215, %p216
    %p218 = pneg %p217
    // Predicated region
    $region33: #{decoder_block_forward.11} parent=5 // pred_check
      _
    $region34: #{decoder_block_forward.11} parent=5 // pred_check_branch
      %220 = sbr.rel (%p217) target = $region36
    $region35: #{decoder_block_forward.11} parent=5 // pred_region
      %s221 = ssub.s32 %s10, 1
      %s222 = smul.u32 8, %s20
      %p223 = scmp.lt.s32.totalorder %s19, 1
      %s224 = scalar_select %p223, %s19, 1
      %p225 = scmp.lt.s32.totalorder %s222, 7
      %s226 = scalar_select %p225, %s222, 7
      %s227 = smul.addr %s224, 8
      %s228 = sadd.s32 %s226, %s227
      %s229 = smul.addr %s228, 4
      %s230 = scalar_lea.vmem %s0, %s229
      %p231 = pneg %p50
      %p232 = pneg %p47
      %p233 = scmp.lt.s32.totalorder %s19, 1
      %s234 = scalar_select %p233, %s19, 1
      %s235 = scalar_lea.vmem %s1, %s234
      %p236 = pneg %p76
      %p237 = pneg %p73
      %p238 = scmp.lt.s32.totalorder %s19, 1
      %s239 = scalar_select %p238, %s19, 1
      %s240 = scalar_lea.vmem %s2, %s239
      %p241 = pneg %p102
      %p242 = pneg %p99
      %s243 = smul.u32 8, %s20
      %p244 = scmp.lt.s32.totalorder %s19, 1
      %s245 = scalar_select %p244, %s19, 1
      %p246 = scmp.lt.s32.totalorder %s243, 7
      %s247 = scalar_select %p246, %s243, 7
      %s248 = smul.addr %s245, 8
      %s249 = sadd.s32 %s247, %s248
      %s250 = smul.addr %s249, 8
      %s251 = scalar_lea.vmem %s3, %s250
      %p252 = pneg %p130
      %p253 = pneg %p127
      %p254 = pneg %p158
      %p255 = pneg %p155
      %s256 = smul.u32 8, %s20
      %p257 = scmp.lt.s32.totalorder %s19, 1
      %s258 = scalar_select %p257, %s19, 1
      %p259 = scmp.lt.s32.totalorder %s256, 7
      %s260 = scalar_select %p259, %s256, 7
      %s261 = smul.addr %s258, 8
      %s262 = sadd.s32 %s260, %s261
      %s263 = smul.addr %s262, 8
      %s264 = scalar_lea.vmem %s4, %s263
      %s265 = smul.u32 8, %s20
      %p266 = scmp.lt.s32.totalorder %s19, 1
      %s267 = scalar_select %p266, %s19, 1
      %p268 = scmp.lt.s32.totalorder %s265, 7
      %s269 = scalar_select %p268, %s265, 7
      %s270 = smul.addr %s267, 8
      %s271 = sadd.s32 %s269, %s270
      %s272 = smul.addr %s271, 4
      %s273 = scalar_lea.vmem %s0, %s272
      %s274 = smul.u32 8, %s20
      %p275 = scmp.lt.s32.totalorder %s19, 1
      %s276 = scalar_select %p275, %s19, 1
      %s277 = scalar_lea.vmem %s1, %s276
      %p278 = scmp.lt.s32.totalorder %s19, 1
      %s279 = scalar_select %p278, %s19, 1
      %s280 = scalar_lea.vmem %s2, %s279
      %s281 = smul.u32 8, %s20
      %p282 = scmp.lt.s32.totalorder %s19, 1
      %s283 = scalar_select %p282, %s19, 1
      %p284 = scmp.lt.s32.totalorder %s281, 7
      %s285 = scalar_select %p284, %s281, 7
      %s286 = smul.addr %s283, 8
      %s287 = sadd.s32 %s285, %s286
      %s288 = smul.addr %s287, 8
      %s289 = scalar_lea.vmem %s3, %s288
      %s290 = smul.u32 8, %s20
      %s291 = smul.u32 8, %s20
      %p292 = scmp.lt.s32.totalorder %s19, 1
      %s293 = scalar_select %p292, %s19, 1
      %p294 = scmp.lt.s32.totalorder %s291, 7
      %s295 = scalar_select %p294, %s291, 7
      %s296 = smul.addr %s293, 8
      %s297 = sadd.s32 %s295, %s296
      %s298 = smul.addr %s297, 8
      %s299 = scalar_lea.vmem %s4, %s298
      %s300 = smul.u32 8, %s20
      %v301 = vld [vmem:[%s273] sm:$0xf]
      %v302 = vld [vmem:[%s273 + $0x4] sm:$0xf]
      %v303 = vld [vmem:[%s273 + $0x8] sm:$0xf]
      %v304 = vld [vmem:[%s273 + $0xc] sm:$0xf]
      %v305 = vld [vmem:[%s273 + $0x10] sm:$0xf]
      %v306 = vld [vmem:[%s273 + $0x14] sm:$0xf]
      %v307 = vld [vmem:[%s273 + $0x18] sm:$0xf]
      %v308 = vld [vmem:[%s273 + $0x1c] sm:$0xf]
      %v309 = vunpack.c.l.bf16 %v301
      %v310 = vunpack.c.l.bf16 %v302
      %v311 = vunpack.c.l.bf16 %v303
      %v312 = vunpack.c.l.bf16 %v304
      %v313 = vunpack.c.l.bf16 %v305
      %v314 = vunpack.c.l.bf16 %v306
      %v315 = vunpack.c.l.bf16 %v307
      %v316 = vunpack.c.l.bf16 %v308
      %v317 = vld [vmem:[%s277] sm:$0x1]
      %v319 = vlaneseq
      %v320 = vshrl.u32 %v319, 7
      %v321 = vsub.s32 0, %v320
      %v322 = vrot.slane %v317, %v321
      %v324 = vmul.f32 %v309, %v322
      %v325 = vmul.f32 %v310, %v322
      %v326 = vmul.f32 %v311, %v322
      %v327 = vmul.f32 %v312, %v322
      %v328 = vmul.f32 %v313, %v322
      %v329 = vmul.f32 %v314, %v322
      %v330 = vmul.f32 %v315, %v322
      %v331 = vmul.f32 %v316, %v322
      %v332 = vld [vmem:[%s280] sm:$0x1]
      %v334 = vlaneseq
      %v335 = vshrl.u32 %v334, 7
      %v336 = vsub.s32 0, %v335
      %v337 = vrot.slane %v332, %v336
      %v339 = vadd.f32 %v324, %v337
      %v340 = vadd.f32 %v325, %v337
      %v341 = vadd.f32 %v326, %v337
      %v342 = vadd.f32 %v327, %v337
      %v343 = vadd.f32 %v328, %v337
      %v344 = vadd.f32 %v329, %v337
      %v345 = vadd.f32 %v330, %v337
      %v346 = vadd.f32 %v331, %v337
      %v347 = vmul.f32 %v339, 0.5
      %v348 = vmul.f32 %v340, 0.5
      %v349 = vmul.f32 %v341, 0.5
      %v350 = vmul.f32 %v342, 0.5
      %v351 = vmul.f32 %v343, 0.5
      %v352 = vmul.f32 %v344, 0.5
      %v353 = vmul.f32 %v345, 0.5
      %v354 = vmul.f32 %v346, 0.5
      %v355 = vmul.f32 %v339, 0.70710677
      %v356 = vmul.f32 %v340, 0.70710677
      %v357 = vmul.f32 %v341, 0.70710677
      %v358 = vmul.f32 %v342, 0.70710677
      %v359 = vmul.f32 %v343, 0.70710677
      %v360 = vmul.f32 %v344, 0.70710677
      %v361 = vmul.f32 %v345, 0.70710677
      %v362 = vmul.f32 %v346, 0.70710677
      %v363 = vand.u32 2147483647, %v355
      %v364 = vand.u32 2147483647, %v356
      %v365 = vand.u32 2147483647, %v357
      %v366 = vand.u32 2147483647, %v358
      %v367 = vand.u32 2147483647, %v359
      %v368 = vand.u32 2147483647, %v360
      %v369 = vand.u32 2147483647, %v361
      %v370 = vand.u32 2147483647, %v362
      %v371 = vmul.f32 %v363, 0.3275911
      %v372 = vmul.f32 %v364, 0.3275911
      %v373 = vmul.f32 %v365, 0.3275911
      %v374 = vmul.f32 %v366, 0.3275911
      %v375 = vmul.f32 %v367, 0.3275911
      %v376 = vmul.f32 %v368, 0.3275911
      %v377 = vmul.f32 %v369, 0.3275911
      %v378 = vmul.f32 %v370, 0.3275911
      %v379 = vadd.f32 %v371, 1.0
      %v380 = vadd.f32 %v372, 1.0
      %v381 = vadd.f32 %v373, 1.0
      %v382 = vadd.f32 %v374, 1.0
      %v383 = vadd.f32 %v375, 1.0
      %v384 = vadd.f32 %v376, 1.0
      %v385 = vadd.f32 %v377, 1.0
      %v386 = vadd.f32 %v378, 1.0
      %v387 = vrcp.pop %v379
      %v388 = vmul.f32 1.0, %v387
      %v389 = vrcp.pop %v380
      %v390 = vmul.f32 1.0, %v389
      %v391 = vrcp.pop %v381
      %v392 = vmul.f32 1.0, %v391
      %v393 = vrcp.pop %v382
      %v394 = vmul.f32 1.0, %v393
      %v395 = vrcp.pop %v383
      %v396 = vmul.f32 1.0, %v395
      %v397 = vrcp.pop %v384
      %v398 = vmul.f32 1.0, %v397
      %v399 = vrcp.pop %v385
      %v400 = vmul.f32 1.0, %v399
      %v401 = vrcp.pop %v386
      %v402 = vmul.f32 1.0, %v401
      %v403 = vmul.f32 %v388, 1.0614054
      %v404 = vmul.f32 %v390, 1.0614054
      %v405 = vmul.f32 %v392, 1.0614054
      %v406 = vmul.f32 %v394, 1.0614054
      %v407 = vmul.f32 %v396, 1.0614054
      %v408 = vmul.f32 %v398, 1.0614054
      %v409 = vmul.f32 %v400, 1.0614054
      %v410 = vmul.f32 %v402, 1.0614054
      %v411 = vadd.f32 %v403, -1.4531521
      %v412 = vadd.f32 %v404, -1.4531521
      %v413 = vadd.f32 %v405, -1.4531521
      %v414 = vadd.f32 %v406, -1.4531521
      %v415 = vadd.f32 %v407, -1.4531521
      %v416 = vadd.f32 %v408, -1.4531521
      %v417 = vadd.f32 %v409, -1.4531521
      %v418 = vadd.f32 %v410, -1.4531521
      %v419 = vmul.f32 %v411, %v388
      %v420 = vmul.f32 %v412, %v390
      %v421 = vmul.f32 %v413, %v392
      %v422 = vmul.f32 %v414, %v394
      %v423 = vmul.f32 %v415, %v396
      %v424 = vmul.f32 %v416, %v398
      %v425 = vmul.f32 %v417, %v400
      %v426 = vmul.f32 %v418, %v402
      %v427 = vadd.f32 %v419, 1.4214138
      %v428 = vadd.f32 %v420, 1.4214138
      %v429 = vadd.f32 %v421, 1.4214138
      %v430 = vadd.f32 %v422, 1.4214138
      %v431 = vadd.f32 %v423, 1.4214138
      %v432 = vadd.f32 %v424, 1.4214138
      %v433 = vadd.f32 %v425, 1.4214138
      %v434 = vadd.f32 %v426, 1.4214138
      %v435 = vmul.f32 %v427, %v388
      %v436 = vmul.f32 %v428, %v390
      %v437 = vmul.f32 %v429, %v392
      %v438 = vmul.f32 %v430, %v394
      %v439 = vmul.f32 %v431, %v396
      %v440 = vmul.f32 %v432, %v398
      %v441 = vmul.f32 %v433, %v400
      %v442 = vmul.f32 %v434, %v402
      %v443 = vadd.f32 %v435, -0.28449672
      %v444 = vadd.f32 %v436, -0.28449672
      %v445 = vadd.f32 %v437, -0.28449672
      %v446 = vadd.f32 %v438, -0.28449672
      %v447 = vadd.f32 %v439, -0.28449672
      %v448 = vadd.f32 %v440, -0.28449672
      %v449 = vadd.f32 %v441, -0.28449672
      %v450 = vadd.f32 %v442, -0.28449672
      %v451 = vmul.f32 %v443, %v388
      %v452 = vmul.f32 %v444, %v390
      %v453 = vmul.f32 %v445, %v392
      %v454 = vmul.f32 %v446, %v394
      %v455 = vmul.f32 %v447, %v396
      %v456 = vmul.f32 %v448, %v398
      %v457 = vmul.f32 %v449, %v400
      %v458 = vmul.f32 %v450, %v402
      %v459 = vadd.f32 %v451, 0.2548296
      %v460 = vadd.f32 %v452, 0.2548296
      %v461 = vadd.f32 %v453, 0.2548296
      %v462 = vadd.f32 %v454, 0.2548296
      %v463 = vadd.f32 %v455, 0.2548296
      %v464 = vadd.f32 %v456, 0.2548296
      %v465 = vadd.f32 %v457, 0.2548296
      %v466 = vadd.f32 %v458, 0.2548296
      %v467 = vmul.f32 %v459, %v388
      %v468 = vmul.f32 %v460, %v390
      %v469 = vmul.f32 %v461, %v392
      %v470 = vmul.f32 %v462, %v394
      %v471 = vmul.f32 %v463, %v396
      %v472 = vmul.f32 %v464, %v398
      %v473 = vmul.f32 %v465, %v400
      %v474 = vmul.f32 %v466, %v402
      %v475 = vsub.f32 0.0, %v363
      %v476 = vsub.f32 0.0, %v364
      %v477 = vsub.f32 0.0, %v365
      %v478 = vsub.f32 0.0, %v366
      %v479 = vsub.f32 0.0, %v367
      %v480 = vsub.f32 0.0, %v368
      %v481 = vsub.f32 0.0, %v369
      %v482 = vsub.f32 0.0, %v370
      %v483 = vmul.f32 %v475, %v363
      %v484 = vmul.f32 %v476, %v364
      %v485 = vmul.f32 %v477, %v365
      %v486 = vmul.f32 %v478, %v366
      %v487 = vmul.f32 %v479, %v367
      %v488 = vmul.f32 %v480, %v368
      %v489 = vmul.f32 %v481, %v369
      %v490 = vmul.f32 %v482, %v370
      %v491 = vmul.f32 %v483, 1.442695
      %v492 = vpow.pop %v491
      %v493 = vmul.f32 %v484, 1.442695
      %v494 = vpow.pop %v493
      %v495 = vmul.f32 %v485, 1.442695
      %v496 = vpow.pop %v495
      %v497 = vmul.f32 %v486, 1.442695
      %v498 = vpow.pop %v497
      %v499 = vmul.f32 %v487, 1.442695
      %v500 = vpow.pop %v499
      %v501 = vmul.f32 %v488, 1.442695
      %v502 = vpow.pop %v501
      %v503 = vmul.f32 %v489, 1.442695
      %v504 = vpow.pop %v503
      %v505 = vmul.f32 %v490, 1.442695
      %v506 = vpow.pop %v505
      %v507 = vmul.f32 %v467, %v492
      %v508 = vmul.f32 %v468, %v494
      %v509 = vmul.f32 %v469, %v496
      %v510 = vmul.f32 %v470, %v498
      %v511 = vmul.f32 %v471, %v500
      %v512 = vmul.f32 %v472, %v502
      %v513 = vmul.f32 %v473, %v504
      %v514 = vmul.f32 %v474, %v506
      %v515 = vsub.f32 1.0, %v507
      %v516 = vsub.f32 1.0, %v508
      %v517 = vsub.f32 1.0, %v509
      %v518 = vsub.f32 1.0, %v510
      %v519 = vsub.f32 1.0, %v511
      %v520 = vsub.f32 1.0, %v512
      %v521 = vsub.f32 1.0, %v513
      %v522 = vsub.f32 1.0, %v514
      %vm523 = vcmp.ge.f32.partialorder %v355, 0.0
      %vm524 = vcmp.ge.f32.partialorder %v356, 0.0
      %vm525 = vcmp.ge.f32.partialorder %v357, 0.0
      %vm526 = vcmp.ge.f32.partialorder %v358, 0.0
      %vm527 = vcmp.ge.f32.partialorder %v359, 0.0
      %vm528 = vcmp.ge.f32.partialorder %v360, 0.0
      %vm529 = vcmp.ge.f32.partialorder %v361, 0.0
      %vm530 = vcmp.ge.f32.partialorder %v362, 0.0
      %v531 = vsub.f32 0.0, %v515
      %v532 = vsub.f32 0.0, %v516
      %v533 = vsub.f32 0.0, %v517
      %v534 = vsub.f32 0.0, %v518
      %v535 = vsub.f32 0.0, %v519
      %v536 = vsub.f32 0.0, %v520
      %v537 = vsub.f32 0.0, %v521
      %v538 = vsub.f32 0.0, %v522
      %v539 = vsel %vm523, %v515, %v531
      %v540 = vsel %vm524, %v516, %v532
      %v541 = vsel %vm525, %v517, %v533
      %v542 = vsel %vm526, %v518, %v534
      %v543 = vsel %vm527, %v519, %v535
      %v544 = vsel %vm528, %v520, %v536
      %v545 = vsel %vm529, %v521, %v537
      %v546 = vsel %vm530, %v522, %v538
      %v547 = vadd.f32 %v539, 1.0
      %v548 = vadd.f32 %v540, 1.0
      %v549 = vadd.f32 %v541, 1.0
      %v550 = vadd.f32 %v542, 1.0
      %v551 = vadd.f32 %v543, 1.0
      %v552 = vadd.f32 %v544, 1.0
      %v553 = vadd.f32 %v545, 1.0
      %v554 = vadd.f32 %v546, 1.0
      %v555 = vmul.f32 %v347, %v547
      %v556 = vmul.f32 %v348, %v548
      %v557 = vmul.f32 %v349, %v549
      %v558 = vmul.f32 %v350, %v550
      %v559 = vmul.f32 %v351, %v551
      %v560 = vmul.f32 %v352, %v552
      %v561 = vmul.f32 %v353, %v553
      %v562 = vmul.f32 %v354, %v554
      %v563 = vld [vmem:[%s289] sm:$0xff]
      %v564 = vld [vmem:[%s289 + $0x8] sm:$0xff]
      %v565 = vld [vmem:[%s289 + $0x10] sm:$0xff]
      %v566 = vld [vmem:[%s289 + $0x18] sm:$0xff]
      %v567 = vld [vmem:[%s289 + $0x20] sm:$0xff]
      %v568 = vld [vmem:[%s289 + $0x28] sm:$0xff]
      %v569 = vld [vmem:[%s289 + $0x30] sm:$0xff]
      %v570 = vld [vmem:[%s289 + $0x38] sm:$0xff]
      %v571 = vadd.f32 %v555, %v563
      %v572 = vadd.f32 %v556, %v564
      %v573 = vadd.f32 %v557, %v565
      %v574 = vadd.f32 %v558, %v566
      %v575 = vadd.f32 %v559, %v567
      %v576 = vadd.f32 %v560, %v568
      %v577 = vadd.f32 %v561, %v569
      %v578 = vadd.f32 %v562, %v570
      %vm579 = vcmask 523264
      %580 = vst.msk [vmem:[%s299] sm:$0xff] %vm579, %v571
      %581 = vst.msk [vmem:[%s299 + $0x8] sm:$0xff] %vm579, %v572
      %582 = vst.msk [vmem:[%s299 + $0x10] sm:$0xff] %vm579, %v573
      %583 = vst.msk [vmem:[%s299 + $0x18] sm:$0xff] %vm579, %v574
      %584 = vst.msk [vmem:[%s299 + $0x20] sm:$0xff] %vm579, %v575
      %585 = vst.msk [vmem:[%s299 + $0x28] sm:$0xff] %vm579, %v576
      %586 = vst.msk [vmem:[%s299 + $0x30] sm:$0xff] %vm579, %v577
      %587 = vst.msk [vmem:[%s299 + $0x38] sm:$0xff] %vm579, %v578
      %s588 = smul.u32 8, %s20
      %p589 = scmp.lt.s32.totalorder %s19, 1
      %s590 = scalar_select %p589, %s19, 1
      %p591 = scmp.lt.s32.totalorder %s588, 7
      %s592 = scalar_select %p591, %s588, 7
      %s593 = smul.addr %s590, 8
      %s594 = sadd.s32 %s592, %s593
      %s595 = smul.addr %s594, 8
      %s596 = scalar_lea.vmem %s4, %s595
      // Predicated region
      $region37: #{decoder_block_forward.11} parent=35 // pred_check
        %p597 = pneg %p155
      $region38: #{decoder_block_forward.11} parent=35 // pred_check_branch
        %599 = sbr.rel (%p597) target = $region40
      $region39: #{decoder_block_forward.11} parent=35 // pred_region
        %s600 = smul.u32 8, %s20
      $region40: #{decoder_block_forward.11} parent=35 // pred_fallthru
        _
    $region36: #{decoder_block_forward.11} parent=5 // pred_fallthru
      _
    %p601 = scmp.le.s32.totalorder 2, %s10
    // Predicated region
    $region41: #{decoder_block_forward.11} parent=5 // pred_check
      %p602 = pneg %p601
    $region42: #{decoder_block_forward.11} parent=5 // pred_check_branch
      %604 = sbr.rel (%p602) target = $region44
    $region43: #{decoder_block_forward.11} parent=5 // pred_region
      %s605 = ssub.s32 %s10, 2
      // Predicated region
      $region45: #{decoder_block_forward.11} parent=43 // pred_check
        %p606 = pneg %p161
      $region46: #{decoder_block_forward.11} parent=43 // pred_check_branch
        %608 = sbr.rel (%p606) target = $region48
      $region47: #{decoder_block_forward.11} parent=43 // pred_region
        %s609 = smul.u32 8, %s22
        %p610 = scmp.lt.s32.totalorder %s21, 1
        %s611 = scalar_select %p610, %s21, 1
        %p612 = scmp.lt.s32.totalorder %s609, 7
        %s613 = scalar_select %p612, %s609, 7
        %s614 = smul.addr %s611, 8
        %s615 = sadd.s32 %s613, %s614
        %s616 = smul.addr %s615, 8
        %s617 = scalar_lea.vmem %s4, %s616
      $region48: #{decoder_block_forward.11} parent=43 // pred_fallthru
        _
    $region44: #{decoder_block_forward.11} parent=5 // pred_fallthru
      _
  $region6: #{decoder_block_forward.11} parent=0 // loop_footer
    %s14 = sadd.s32 1, %s10
  $region7: #{decoder_block_forward.11} parent=0 // loop_footer_branch
    %9 = sbr.rel target = $region3
  $region8: #{decoder_block_forward.11} parent=0 // loop_exit
    _

// kernel: decoder_block_forward.6
$region0: #{decoder_block_forward.6}
  #allocation0 [shape = 'u32[]', space=smem, size = 0x4, offset = 0x4, fixed_abs, tag = 'smem constant byte address 0x4 - core index']
  #allocation1 [shape = 'u32[144,128]{1,0:T(1,128)}', space=vmem, size = 0x12000, scoped, tag = 'internal scratch']
  #allocation2 [shape = 'bf16[8,8,480]{2,1,0:T(8,128)(2,1)}', space=vmem, size = 0x10000, scoped, tag = 'scratch operand']
  %s0 = inlined_call_operand.vmem [shape: bf16[2,12,12,96], index: 0, kind: input, shape index: {}]
  %s1 = inlined_call_operand.vmem [shape: bf16[5,480,64], index: 1, kind: input, shape index: {}]
  %s2 = inlined_call_operand.vmem [shape: f32[1,64], index: 2, kind: input, shape index: {}]
  %s3 = inlined_call_operand.vmem [shape: bf16[96,64], index: 3, kind: input, shape index: {}]
  %s4 = inlined_call_operand.vmem [shape: f32[1,64], index: 4, kind: input, shape index: {}]
  %s5 = inlined_call_operand.vmem [shape: f32[1,64], index: 5, kind: input, shape index: {}]
  %s6 = inlined_call_operand.vmem [shape: f32[1,64], index: 6, kind: input, shape index: {}]
  %s7 = inlined_call_operand.vmem [shape: bf16[2,64,64], index: 7, kind: output, shape index: {0}]
  %s8 = inlined_call_operand.vmem [shape: f32[2,2,1,64], index: 8, kind: output, shape index: {1}]
  %s9 = inlined_call_operand.vmem [shape: f32[2,2,1,64], index: 9, kind: output, shape index: {2}]
  %s10 = inlined_call_operand.vmem [shape: f32[2,64,64], index: 10, kind: output, shape index: {3}]
  %11 = xla_tuple %s7, %s8, %s9, %s10
  %s12 = sld [smem:[#allocation0]]
  $region85: #{decoder_block_forward.6} parent=0
    _
  %s14 = ssub.s32 1, %s12
  %s15 = scalar_select 0, %s14, %s12
  loop: start=0, step=1, limit=6
  $region2: #{decoder_block_forward.6} parent=0 // loop_pre_header
    _
  $region3: #{decoder_block_forward.6} parent=0 // loop_header
    %s17 = sphi 0, %s21
    %p18 = scmp.ge.s32.totalorder %s17, 6
    %s24 = sphi 0, %s36
    %s25 = sphi 0, %s32
    %s26 = sphi 0, %s24
    %s27 = sphi 0, %s25
    %s28 = sphi 0, %s26
    %s29 = sphi 0, %s27
    %s39 = sphi 0, %s41
    %s42 = sphi 0, %s39
    %s43 = sphi 0, %s42
    %s59 = sphi 0, %s43
    %s63 = sphi 0, %s63
    %s65 = sphi 0, %s63
    %s66 = sphi 0, %s65
    %s80 = sphi 0, %s66
    %s84 = sphi 0, %s84
    %s86 = sphi 0, %s84
    %s87 = sphi 0, %s86
    %s101 = sphi 0, %s87
    %s105 = sphi 0, %s105
    %s107 = sphi 0, %s105
    %s108 = sphi 0, %s107
    %s122 = sphi 0, %s108
    %s126 = sphi 0, %s126
    %s128 = sphi 0, %s126
    %s129 = sphi 0, %s128
    %s143 = sphi 0, %s129
    %s147 = sphi 0, %s147
    %s149 = sphi 0, %s147
    %s150 = sphi 0, %s149
    %s164 = sphi 0, %s150
    %s168 = sphi 0, %s168
    %s170 = sphi 0, %s168
    %s171 = sphi 0, %s170
    %s185 = sphi 0, %s171
    %s193 = sphi 0, %s195
    %s196 = sphi 0, %s193
    %s197 = sphi 0, %s196
    %s213 = sphi 0, %s197
    %s221 = sphi 0, %s223
    %s224 = sphi 0, %s221
    %s225 = sphi 0, %s224
    %s241 = sphi 0, %s225
    %s249 = sphi 0, %s251
    %s252 = sphi 0, %s249
    %s253 = sphi 0, %s252
    %s269 = sphi 0, %s253
    %s277 = sphi 0, %s279
    %s280 = sphi 0, %s277
    %s281 = sphi 0, %s280
    %s297 = sphi 0, %s281
  $region4: #{decoder_block_forward.6} parent=0 // loop_header_branch
    %20 = sbr.rel (%p18) target = $region8
  $region5: #{decoder_block_forward.6} parent=0 // loop_body
    %s22 = ssub.s32 %s17, 1
    %s23 = ssub.s32 %s17, 2
    %s30 = sadd.s32 1, %s25
    %p31 = scmp.ge.s32.totalorder %s30, 2
    %s32 = scalar_select %p31, 0, %s30
    %s33 = sadd.s32 1, %s24
    %s34 = scalar_select %p31, %s33, %s24
    %p35 = scmp.ge.s32.totalorder %s34, 2
    %s36 = scalar_select %p35, 0, %s34
    %s37 = ssub.s32 %s24, %s36
    %p38 = scmp.eq.s32.totalorder %s37, 0
    %s40 = sadd.s32 %s39, 1
    %s41 = scalar_select %p38, %s39, %s40
    %p44 = pneg %p38
    %p45 = scmp.eq.s32.totalorder %s17, 3
    %p46 = por %p44, %p45
    %p47 = scmp.ne.s32.totalorder %s39, %s42
    %p48 = scmp.eq.s32.totalorder %s17, 0
    %p49 = por %p47, %p48
    %p50 = scmp.ne.s32.totalorder %s39, %s42
    %p51 = scmp.eq.s32.totalorder %s22, 3
    %p52 = por %p50, %p51
    %p53 = scmp.ne.s32.totalorder %s42, %s43
    %p54 = scmp.eq.s32.totalorder %s22, 0
    %p55 = por %p53, %p54
    %p56 = scmp.ne.s32.totalorder %s42, %s43
    %p57 = scmp.eq.s32.totalorder %s23, 3
    %p58 = por %p56, %p57
    %p60 = scmp.ne.s32.totalorder %s43, %s59
    %p61 = scmp.eq.s32.totalorder %s23, 0
    %p62 = por %p60, %p61
    %s64 = sadd.s32 %s63, 1
    %p67 = scmp.eq.s32.totalorder %s17, 3
    %p68 = scmp.ne.s32.totalorder %s63, %s65
    %p69 = scmp.eq.s32.totalorder %s17, 0
    %p70 = por %p68, %p69
    %p71 = scmp.ne.s32.totalorder %s63, %s65
    %p72 = scmp.eq.s32.totalorder %s22, 3
    %p73 = por %p71, %p72
    %p74 = scmp.ne.s32.totalorder %s65, %s66
    %p75 = scmp.eq.s32.totalorder %s22, 0
    %p76 = por %p74, %p75
    %p77 = scmp.ne.s32.totalorder %s65, %s66
    %p78 = scmp.eq.s32.totalorder %s23, 3
    %p79 = por %p77, %p78
    %p81 = scmp.ne.s32.totalorder %s66, %s80
    %p82 = scmp.eq.s32.totalorder %s23, 0
    %p83 = por %p81, %p82
    %s85 = sadd.s32 %s84, 1
    %p88 = scmp.eq.s32.totalorder %s17, 3
    %p89 = scmp.ne.s32.totalorder %s84, %s86
    %p90 = scmp.eq.s32.totalorder %s17, 0
    %p91 = por %p89, %p90
    %p92 = scmp.ne.s32.totalorder %s84, %s86
    %p93 = scmp.eq.s32.totalorder %s22, 3
    %p94 = por %p92, %p93
    %p95 = scmp.ne.s32.totalorder %s86, %s87
    %p96 = scmp.eq.s32.totalorder %s22, 0
    %p97 = por %p95, %p96
    %p98 = scmp.ne.s32.totalorder %s86, %s87
    %p99 = scmp.eq.s32.totalorder %s23, 3
    %p100 = por %p98, %p99
    %p102 = scmp.ne.s32.totalorder %s87, %s101
    %p103 = scmp.eq.s32.totalorder %s23, 0
    %p104 = por %p102, %p103
    %s106 = sadd.s32 %s105, 1
    %p109 = scmp.eq.s32.totalorder %s17, 3
    %p110 = scmp.ne.s32.totalorder %s105, %s107
    %p111 = scmp.eq.s32.totalorder %s17, 0
    %p112 = por %p110, %p111
    %p113 = scmp.ne.s32.totalorder %s105, %s107
    %p114 = scmp.eq.s32.totalorder %s22, 3
    %p115 = por %p113, %p114
    %p116 = scmp.ne.s32.totalorder %s107, %s108
    %p117 = scmp.eq.s32.totalorder %s22, 0
    %p118 = por %p116, %p117
    %p119 = scmp.ne.s32.totalorder %s107, %s108
    %p120 = scmp.eq.s32.totalorder %s23, 3
    %p121 = por %p119, %p120
    %p123 = scmp.ne.s32.totalorder %s108, %s122
    %p124 = scmp.eq.s32.totalorder %s23, 0
    %p125 = por %p123, %p124
    %s127 = sadd.s32 %s126, 1
    %p130 = scmp.eq.s32.totalorder %s17, 3
    %p131 = scmp.ne.s32.totalorder %s126, %s128
    %p132 = scmp.eq.s32.totalorder %s17, 0
    %p133 = por %p131, %p132
    %p134 = scmp.ne.s32.totalorder %s126, %s128
    %p135 = scmp.eq.s32.totalorder %s22, 3
    %p136 = por %p134, %p135
    %p137 = scmp.ne.s32.totalorder %s128, %s129
    %p138 = scmp.eq.s32.totalorder %s22, 0
    %p139 = por %p137, %p138
    %p140 = scmp.ne.s32.totalorder %s128, %s129
    %p141 = scmp.eq.s32.totalorder %s23, 3
    %p142 = por %p140, %p141
    %p144 = scmp.ne.s32.totalorder %s129, %s143
    %p145 = scmp.eq.s32.totalorder %s23, 0
    %p146 = por %p144, %p145
    %s148 = sadd.s32 %s147, 1
    %p151 = scmp.eq.s32.totalorder %s17, 3
    %p152 = scmp.ne.s32.totalorder %s147, %s149
    %p153 = scmp.eq.s32.totalorder %s17, 0
    %p154 = por %p152, %p153
    %p155 = scmp.ne.s32.totalorder %s147, %s149
    %p156 = scmp.eq.s32.totalorder %s22, 3
    %p157 = por %p155, %p156
    %p158 = scmp.ne.s32.totalorder %s149, %s150
    %p159 = scmp.eq.s32.totalorder %s22, 0
    %p160 = por %p158, %p159
    %p161 = scmp.ne.s32.totalorder %s149, %s150
    %p162 = scmp.eq.s32.totalorder %s23, 3
    %p163 = por %p161, %p162
    %p165 = scmp.ne.s32.totalorder %s150, %s164
    %p166 = scmp.eq.s32.totalorder %s23, 0
    %p167 = por %p165, %p166
    %s169 = sadd.s32 %s168, 1
    %p172 = scmp.eq.s32.totalorder %s17, 3
    %p173 = scmp.ne.s32.totalorder %s168, %s170
    %p174 = scmp.eq.s32.totalorder %s17, 0
    %p175 = por %p173, %p174
    %p176 = scmp.ne.s32.totalorder %s168, %s170
    %p177 = scmp.eq.s32.totalorder %s22, 3
    %p178 = por %p176, %p177
    %p179 = scmp.ne.s32.totalorder %s170, %s171
    %p180 = scmp.eq.s32.totalorder %s22, 0
    %p181 = por %p179, %p180
    %p182 = scmp.ne.s32.totalorder %s170, %s171
    %p183 = scmp.eq.s32.totalorder %s23, 3
    %p184 = por %p182, %p183
    %p186 = scmp.ne.s32.totalorder %s171, %s185
    %p187 = scmp.eq.s32.totalorder %s23, 0
    %p188 = por %p186, %p187
    %s189 = ssub.s32 %s24, %s36
    %s190 = ssub.s32 %s25, %s32
    %s191 = sor.u32 %s189, %s190
    %p192 = scmp.eq.s32.totalorder %s191, 0
    %s194 = sadd.s32 %s193, 1
    %s195 = scalar_select %p192, %s193, %s194
    %p198 = pneg %p192
    %p199 = scmp.eq.s32.totalorder %s17, 3
    %p200 = por %p198, %p199
    %p201 = scmp.ne.s32.totalorder %s193, %s196
    %p202 = scmp.eq.s32.totalorder %s17, 0
    %p203 = por %p201, %p202
    %p204 = scmp.ne.s32.totalorder %s193, %s196
    %p205 = scmp.eq.s32.totalorder %s22, 3
    %p206 = por %p204, %p205
    %p207 = scmp.ne.s32.totalorder %s196, %s197
    %p208 = scmp.eq.s32.totalorder %s22, 0
    %p209 = por %p207, %p208
    %p210 = scmp.ne.s32.totalorder %s196, %s197
    %p211 = scmp.eq.s32.totalorder %s23, 3
    %p212 = por %p210, %p211
    %p214 = scmp.ne.s32.totalorder %s197, %s213
    %p215 = scmp.eq.s32.totalorder %s23, 0
    %p216 = por %p214, %p215
    %s217 = ssub.s32 %s24, %s36
    %s218 = ssub.s32 %s25, %s32
    %s219 = sor.u32 %s217, %s218
    %p220 = scmp.eq.s32.totalorder %s219, 0
    %s222 = sadd.s32 %s221, 1
    %s223 = scalar_select %p220, %s221, %s222
    %p226 = pneg %p220
    %p227 = scmp.eq.s32.totalorder %s17, 3
    %p228 = por %p226, %p227
    %p229 = scmp.ne.s32.totalorder %s221, %s224
    %p230 = scmp.eq.s32.totalorder %s17, 0
    %p231 = por %p229, %p230
    %p232 = scmp.ne.s32.totalorder %s221, %s224
    %p233 = scmp.eq.s32.totalorder %s22, 3
    %p234 = por %p232, %p233
    %p235 = scmp.ne.s32.totalorder %s224, %s225
    %p236 = scmp.eq.s32.totalorder %s22, 0
    %p237 = por %p235, %p236
    %p238 = scmp.ne.s32.totalorder %s224, %s225
    %p239 = scmp.eq.s32.totalorder %s23, 3
    %p240 = por %p238, %p239
    %p242 = scmp.ne.s32.totalorder %s225, %s241
    %p243 = scmp.eq.s32.totalorder %s23, 0
    %p244 = por %p242, %p243
    %s245 = ssub.s32 %s24, %s36
    %s246 = ssub.s32 %s25, %s32
    %s247 = sor.u32 %s245, %s246
    %p248 = scmp.eq.s32.totalorder %s247, 0
    %s250 = sadd.s32 %s249, 1
    %s251 = scalar_select %p248, %s249, %s250
    %p254 = pneg %p248
    %p255 = scmp.eq.s32.totalorder %s17, 3
    %p256 = por %p254, %p255
    %p257 = scmp.ne.s32.totalorder %s249, %s252
    %p258 = scmp.eq.s32.totalorder %s17, 0
    %p259 = por %p257, %p258
    %p260 = scmp.ne.s32.totalorder %s249, %s252
    %p261 = scmp.eq.s32.totalorder %s22, 3
    %p262 = por %p260, %p261
    %p263 = scmp.ne.s32.totalorder %s252, %s253
    %p264 = scmp.eq.s32.totalorder %s22, 0
    %p265 = por %p263, %p264
    %p266 = scmp.ne.s32.totalorder %s252, %s253
    %p267 = scmp.eq.s32.totalorder %s23, 3
    %p268 = por %p266, %p267
    %p270 = scmp.ne.s32.totalorder %s253, %s269
    %p271 = scmp.eq.s32.totalorder %s23, 0
    %p272 = por %p270, %p271
    %s273 = ssub.s32 %s24, %s36
    %s274 = ssub.s32 %s25, %s32
    %s275 = sor.u32 %s273, %s274
    %p276 = scmp.eq.s32.totalorder %s275, 0
    %s278 = sadd.s32 %s277, 1
    %s279 = scalar_select %p276, %s277, %s278
    %p282 = pneg %p276
    %p283 = scmp.eq.s32.totalorder %s17, 3
    %p284 = por %p282, %p283
    %p285 = scmp.ne.s32.totalorder %s277, %s280
    %p286 = scmp.eq.s32.totalorder %s17, 0
    %p287 = por %p285, %p286
    %p288 = scmp.ne.s32.totalorder %s277, %s280
    %p289 = scmp.eq.s32.totalorder %s22, 3
    %p290 = por %p288, %p289
    %p291 = scmp.ne.s32.totalorder %s280, %s281
    %p292 = scmp.eq.s32.totalorder %s22, 0
    %p293 = por %p291, %p292
    %p294 = scmp.ne.s32.totalorder %s280, %s281
    %p295 = scmp.eq.s32.totalorder %s23, 3
    %p296 = por %p294, %p295
    %p298 = scmp.ne.s32.totalorder %s281, %s297
    %p299 = scmp.eq.s32.totalorder %s23, 0
    %p300 = por %p298, %p299
    %p301 = scmp.le.s32.totalorder 1, %s17
    %p302 = scmp.lt.s32.totalorder %s17, 5
    %p303 = pnand %p301, %p302
    %p304 = pneg %p303
    // Predicated region
    $region9: #{decoder_block_forward.6} parent=5 // pred_check
      _
    $region10: #{decoder_block_forward.6} parent=5 // pred_check_branch
      %306 = sbr.rel (%p303) target = $region12
    $region11: #{decoder_block_forward.6} parent=5 // pred_region
      %s307 = ssub.s32 %s17, 1
      // Predicated region
      $region13: #{decoder_block_forward.6} parent=11 // pred_check
        %p308 = pneg %p76
      $region14: #{decoder_block_forward.6} parent=11 // pred_check_branch
        %310 = sbr.rel (%p308) target = $region16
      $region15: #{decoder_block_forward.6} parent=11 // pred_region
        _
      $region16: #{decoder_block_forward.6} parent=11 // pred_fallthru
        _
      // Predicated region
      $region17: #{decoder_block_forward.6} parent=11 // pred_check
        %p311 = pneg %p97
      $region18: #{decoder_block_forward.6} parent=11 // pred_check_branch
        %313 = sbr.rel (%p311) target = $region20
      $region19: #{decoder_block_forward.6} parent=11 // pred_region
        _
      $region20: #{decoder_block_forward.6} parent=11 // pred_fallthru
        _
      // Predicated region
      $region21: #{decoder_block_forward.6} parent=11 // pred_check
        %p314 = pneg %p118
      $region22: #{decoder_block_forward.6} parent=11 // pred_check_branch
        %316 = sbr.rel (%p314) target = $region24
      $region23: #{decoder_block_forward.6} parent=11 // pred_region
        _
      $region24: #{decoder_block_forward.6} parent=11 // pred_fallthru
        _
      // Predicated region
      $region25: #{decoder_block_forward.6} parent=11 // pred_check
        %p317 = pneg %p139
      $region26: #{decoder_block_forward.6} parent=11 // pred_check_branch
        %319 = sbr.rel (%p317) target = $region28
      $region27: #{decoder_block_forward.6} parent=11 // pred_region
        _
      $region28: #{decoder_block_forward.6} parent=11 // pred_fallthru
        _
      // Predicated region
      $region29: #{decoder_block_forward.6} parent=11 // pred_check
        %p320 = pneg %p160
      $region30: #{decoder_block_forward.6} parent=11 // pred_check_branch
        %322 = sbr.rel (%p320) target = $region32
      $region31: #{decoder_block_forward.6} parent=11 // pred_region
        _
      $region32: #{decoder_block_forward.6} parent=11 // pred_fallthru
        _
      // Predicated region
      $region33: #{decoder_block_forward.6} parent=11 // pred_check
        %p323 = pneg %p181
      $region34: #{decoder_block_forward.6} parent=11 // pred_check_branch
        %325 = sbr.rel (%p323) target = $region36
      $region35: #{decoder_block_forward.6} parent=11 // pred_region
        _
      $region36: #{decoder_block_forward.6} parent=11 // pred_fallthru
        _
    $region12: #{decoder_block_forward.6} parent=5 // pred_fallthru
      _
    %p326 = scmp.lt.s32.totalorder %s17, 4
    // Predicated region
    $region37: #{decoder_block_forward.6} parent=5 // pred_check
      %p327 = pneg %p326
    $region38: #{decoder_block_forward.6} parent=5 // pred_check_branch
      %329 = sbr.rel (%p327) target = $region40
    $region39: #{decoder_block_forward.6} parent=5 // pred_region
      // Predicated region
      $region41: #{decoder_block_forward.6} parent=39 // pred_check
        %p330 = pneg %p49
      $region42: #{decoder_block_forward.6} parent=39 // pred_check_branch
        %332 = sbr.rel (%p330) target = $region44
      $region43: #{decoder_block_forward.6} parent=39 // pred_region
        %p333 = scmp.lt.s32.totalorder %s24, 1
        %s334 = scalar_select %p333, %s24, 1
        %s335 = smul.addr %s334, 24
        %s336 = smul.addr %s335, 4
        %s337 = scalar_lea.vmem %s0, %s336
      $region44: #{decoder_block_forward.6} parent=39 // pred_fallthru
        _
    $region40: #{decoder_block_forward.6} parent=5 // pred_fallthru
      _
    %p338 = scmp.le.s32.totalorder 1, %s17
    %p339 = scmp.lt.s32.totalorder %s17, 5
    %p340 = pnand %p338, %p339
    %p341 = pneg %p340
    // Predicated region
    $region45: #{decoder_block_forward.6} parent=5 // pred_check
      _
    $region46: #{decoder_block_forward.6} parent=5 // pred_check_branch
      %343 = sbr.rel (%p340) target = $region48
    $region47: #{decoder_block_forward.6} parent=5 // pred_region
      %s344 = ssub.s32 %s17, 1
      %p345 = scmp.lt.s32.totalorder %s26, 1
      %s346 = scalar_select %p345, %s26, 1
      %s347 = smul.addr %s346, 24
      %s348 = smul.addr %s347, 4
      %s349 = scalar_lea.vmem %s0, %s348
      %p350 = pneg %p55
      %p351 = pneg %p52
      %p352 = pneg %p76
      %p353 = pneg %p73
      %p354 = pneg %p97
      %p355 = pneg %p94
      %p356 = pneg %p118
      %p357 = pneg %p115
      %p358 = pneg %p139
      %p359 = pneg %p136
      %p360 = pneg %p160
      %p361 = pneg %p157
      %p362 = pneg %p181
      %p363 = pneg %p178
      %p364 = pneg %p209
      %p365 = pneg %p206
      %s366 = smul.u32 4, %s27
      %p367 = scmp.lt.s32.totalorder %s26, 1
      %s368 = scalar_select %p367, %s26, 1
      %p369 = scmp.lt.s32.totalorder %s366, 7
      %s370 = scalar_select %p369, %s366, 7
      %s371 = smul.addr %s368, 8
      %s372 = sadd.s32 %s370, %s371
      %s373 = smul.addr %s372, 4
      %s374 = scalar_lea.vmem %s7, %s373
      %p375 = pneg %p237
      %p376 = pneg %p234
      %p377 = scmp.lt.s32.totalorder %s26, 1
      %s378 = scalar_select %p377, %s26, 1
      %p379 = scmp.lt.s32.totalorder %s27, 1
      %s380 = scalar_select %p379, %s27, 1
      %s381 = smul.addr %s378, 2
      %s382 = sadd.s32 %s380, %s381
      %s383 = scalar_lea.vmem %s8, %s382
      %p384 = pneg %p265
      %p385 = pneg %p262
      %p386 = scmp.lt.s32.totalorder %s26, 1
      %s387 = scalar_select %p386, %s26, 1
      %p388 = scmp.lt.s32.totalorder %s27, 1
      %s389 = scalar_select %p388, %s27, 1
      %s390 = smul.addr %s387, 2
      %s391 = sadd.s32 %s389, %s390
      %s392 = scalar_lea.vmem %s9, %s391
      %p393 = pneg %p293
      %p394 = pneg %p290
      %s395 = smul.u32 4, %s27
      %p396 = scmp.lt.s32.totalorder %s26, 1
      %s397 = scalar_select %p396, %s26, 1
      %p398 = scmp.lt.s32.totalorder %s395, 7
      %s399 = scalar_select %p398, %s395, 7
      %s400 = smul.addr %s397, 8
      %s401 = sadd.s32 %s399, %s400
      %s402 = smul.addr %s401, 8
      %s403 = scalar_lea.vmem %s10, %s402
      %p404 = scmp.lt.s32.totalorder %s26, 1
      %s405 = scalar_select %p404, %s26, 1
      %s406 = smul.addr %s405, 24
      %s407 = smul.addr %s406, 4
      %s408 = scalar_lea.vmem %s0, %s407
      %s409 = smul.u32 4, %s27
      %p410 = scmp.lt.s32.totalorder %s26, 1
      %s411 = scalar_select %p410, %s26, 1
      %p412 = scmp.lt.s32.totalorder %s409, 7
      %s413 = scalar_select %p412, %s409, 7
      %s414 = smul.addr %s411, 8
      %s415 = sadd.s32 %s413, %s414
      %s416 = smul.addr %s415, 4
      %s417 = scalar_lea.vmem %s7, %s416
      %s418 = smul.u32 4, %s27
      %p419 = scmp.lt.s32.totalorder %s26, 1
      %s420 = scalar_select %p419, %s26, 1
      %p421 = scmp.lt.s32.totalorder %s27, 1
      %s422 = scalar_select %p421, %s27, 1
      %s423 = smul.addr %s420, 2
      %s424 = sadd.s32 %s422, %s423
      %s425 = scalar_lea.vmem %s8, %s424
      %p426 = scmp.lt.s32.totalorder %s26, 1
      %s427 = scalar_select %p426, %s26, 1
      %p428 = scmp.lt.s32.totalorder %s27, 1
      %s429 = scalar_select %p428, %s27, 1
      %s430 = smul.addr %s427, 2
      %s431 = sadd.s32 %s429, %s430
      %s432 = scalar_lea.vmem %s9, %s431
      %s433 = smul.u32 4, %s27
      %p434 = scmp.lt.s32.totalorder %s26, 1
      %s435 = scalar_select %p434, %s26, 1
      %p436 = scmp.lt.s32.totalorder %s433, 7
      %s437 = scalar_select %p436, %s433, 7
      %s438 = smul.addr %s435, 8
      %s439 = sadd.s32 %s437, %s438
      %s440 = smul.addr %s439, 8
      %s441 = scalar_lea.vmem %s10, %s440
      %s442 = smul.u32 4, %s27
      %s444 = smul.u32 %s27, 4
      %s445 = smul.u32 %s444, 2
      %s446 = smul.addr %s445, 4
      %s447 = scalar_lea.vmem %s408, %s446
      %v448 = vld [vmem:[%s447] sm:$0xf]
      %v449 = vld [vmem:[%s447 + $0x4] sm:$0x3]
      %v450 = vld [vmem:[%s447 + $0x8] sm:$0xf]
      %v451 = vld [vmem:[%s447 + $0xc] sm:$0x3]
      %v452 = vld [vmem:[%s447 + $0x10] sm:$0xf]
      %v453 = vld [vmem:[%s447 + $0x14] sm:$0x3]
      %v454 = vld [vmem:[%s447 + $0x18] sm:$0xf]
      %v455 = vld [vmem:[%s447 + $0x1c] sm:$0x3]
      %v456 = vld [vmem:[%s447 + $0x20] sm:$0xf]
      %v457 = vld [vmem:[%s447 + $0x24] sm:$0x3]
      %v458 = vld [vmem:[%s447 + $0x28] sm:$0xf]
      %v459 = vld [vmem:[%s447 + $0x2c] sm:$0x3]
      %v460 = vld [vmem:[%s447 + $0x30] sm:$0xf]
      %v461 = vld [vmem:[%s447 + $0x34] sm:$0x3]
      %v462 = vld [vmem:[%s447 + $0x38] sm:$0xf]
      %v463 = vld [vmem:[%s447 + $0x3c] sm:$0x3]
      %v464 = vunpack.c.l.bf16 %v448
      %v465 = vunpack.c.l.bf16 %v449
      %v466 = vunpack.c.l.bf16 %v450
      %v467 = vunpack.c.l.bf16 %v451
      %v468 = vunpack.c.l.bf16 %v452
      %v469 = vunpack.c.l.bf16 %v453
      %v470 = vunpack.c.l.bf16 %v454
      %v471 = vunpack.c.l.bf16 %v455
      %v472 = vunpack.c.l.bf16 %v456
      %v473 = vunpack.c.l.bf16 %v457
      %v474 = vunpack.c.l.bf16 %v458
      %v475 = vunpack.c.l.bf16 %v459
      %v476 = vunpack.c.l.bf16 %v460
      %v477 = vunpack.c.l.bf16 %v461
      %v478 = vunpack.c.l.bf16 %v462
      %v479 = vunpack.c.l.bf16 %v463
      %vm496 = vcmask 1046528
      %v497 = vrot.slane %v464, 1
      %v498 = vrot.slane %v465, 1
      %v499 = vsel %vm496, %v497, %v498
      %v500 = vrot.slane %v466, 1
      %v501 = vrot.slane %v467, 1
      %v502 = vsel %vm496, %v500, %v501
      %v503 = vrot.slane %v468, 1
      %v504 = vrot.slane %v469, 1
      %v505 = vsel %vm496, %v503, %v504
      %v506 = vrot.slane %v470, 1
      %v507 = vrot.slane %v471, 1
      %v508 = vsel %vm496, %v506, %v507
      %v509 = vrot.slane %v472, 1
      %v510 = vrot.slane %v473, 1
      %v511 = vsel %vm496, %v509, %v510
      %v512 = vrot.slane %v474, 1
      %v513 = vrot.slane %v475, 1
      %v514 = vsel %vm496, %v512, %v513
      %v515 = vrot.slane %v476, 1
      %v516 = vrot.slane %v477, 1
      %v517 = vsel %vm496, %v515, %v516
      %v518 = vrot.slane %v478, 1
      %v519 = vrot.slane %v479, 1
      %v520 = vsel %vm496, %v518, %v519
      %521 = vrot.lane.b32.xlu0 %v499, 96
      %v522 = vpop.permute.xlu0 %521
      %523 = vrot.lane.b32.xlu0 %v502, 96
      %v524 = vpop.permute.xlu0 %523
      %525 = vrot.lane.b32.xlu0 %v505, 96
      %v526 = vpop.permute.xlu0 %525
      %527 = vrot.lane.b32.xlu0 %v508, 96
      %v528 = vpop.permute.xlu0 %527
      %529 = vrot.lane.b32.xlu0 %v511, 96
      %v530 = vpop.permute.xlu0 %529
      %531 = vrot.lane.b32.xlu0 %v514, 96
      %v532 = vpop.permute.xlu0 %531
      %533 = vrot.lane.b32.xlu0 %v517, 96
      %v534 = vpop.permute.xlu0 %533
      %535 = vrot.lane.b32.xlu0 %v520, 96
      %v536 = vpop.permute.xlu0 %535
      %vm545 = vcmask 1045504
      %v546 = vrot.slane %v464, 2
      %v547 = vrot.slane %v465, 2
      %v548 = vsel %vm545, %v546, %v547
      %v549 = vrot.slane %v466, 2
      %v550 = vrot.slane %v467, 2
      %v551 = vsel %vm545, %v549, %v550
      %v552 = vrot.slane %v468, 2
      %v553 = vrot.slane %v469, 2
      %v554 = vsel %vm545, %v552, %v553
      %v555 = vrot.slane %v470, 2
      %v556 = vrot.slane %v471, 2
      %v557 = vsel %vm545, %v555, %v556
      %v558 = vrot.slane %v472, 2
      %v559 = vrot.slane %v473, 2
      %v560 = vsel %vm545, %v558, %v559
      %v561 = vrot.slane %v474, 2
      %v562 = vrot.slane %v475, 2
      %v563 = vsel %vm545, %v561, %v562
      %v564 = vrot.slane %v476, 2
      %v565 = vrot.slane %v477, 2
      %v566 = vsel %vm545, %v564, %v565
      %v567 = vrot.slane %v478, 2
      %v568 = vrot.slane %v479, 2
      %v569 = vsel %vm545, %v567, %v568
      %570 = vrot.lane.b32.xlu0 %v548, 64
      %v571 = vpop.permute.xlu0 %570
      %572 = vrot.lane.b32.xlu0 %v551, 64
      %v573 = vpop.permute.xlu0 %572
      %574 = vrot.lane.b32.xlu0 %v554, 64
      %v575 = vpop.permute.xlu0 %574
      %576 = vrot.lane.b32.xlu0 %v557, 64
      %v577 = vpop.permute.xlu0 %576
      %578 = vrot.lane.b32.xlu0 %v560, 64
      %v579 = vpop.permute.xlu0 %578
      %580 = vrot.lane.b32.xlu0 %v563, 64
      %v581 = vpop.permute.xlu0 %580
      %582 = vrot.lane.b32.xlu0 %v566, 64
      %v583 = vpop.permute.xlu0 %582
      %584 = vrot.lane.b32.xlu0 %v569, 64
      %v585 = vpop.permute.xlu0 %584
      %vm594 = vcmask 1044480
      %v595 = vrot.slane %v464, 3
      %v596 = vrot.slane %v465, 3
      %v597 = vsel %vm594, %v595, %v596
      %v598 = vrot.slane %v466, 3
      %v599 = vrot.slane %v467, 3
      %v600 = vsel %vm594, %v598, %v599
      %v601 = vrot.slane %v468, 3
      %v602 = vrot.slane %v469, 3
      %v603 = vsel %vm594, %v601, %v602
      %v604 = vrot.slane %v470, 3
      %v605 = vrot.slane %v471, 3
      %v606 = vsel %vm594, %v604, %v605
      %v607 = vrot.slane %v472, 3
      %v608 = vrot.slane %v473, 3
      %v609 = vsel %vm594, %v607, %v608
      %v610 = vrot.slane %v474, 3
      %v611 = vrot.slane %v475, 3
      %v612 = vsel %vm594, %v610, %v611
      %v613 = vrot.slane %v476, 3
      %v614 = vrot.slane %v477, 3
      %v615 = vsel %vm594, %v613, %v614
      %v616 = vrot.slane %v478, 3
      %v617 = vrot.slane %v479, 3
      %v618 = vsel %vm594, %v616, %v617
      %619 = vrot.lane.b32.xlu0 %v597, 32
      %v620 = vpop.permute.xlu0 %619
      %621 = vrot.lane.b32.xlu0 %v600, 32
      %v622 = vpop.permute.xlu0 %621
      %623 = vrot.lane.b32.xlu0 %v603, 32
      %v624 = vpop.permute.xlu0 %623
      %625 = vrot.lane.b32.xlu0 %v606, 32
      %v626 = vpop.permute.xlu0 %625
      %627 = vrot.lane.b32.xlu0 %v609, 32
      %v628 = vpop.permute.xlu0 %627
      %629 = vrot.lane.b32.xlu0 %v612, 32
      %v630 = vpop.permute.xlu0 %629
      %631 = vrot.lane.b32.xlu0 %v615, 32
      %v632 = vpop.permute.xlu0 %631
      %633 = vrot.lane.b32.xlu0 %v618, 32
      %v634 = vpop.permute.xlu0 %633
      %vm643 = vcmask 1043456
      %v644 = vrot.slane %v464, 4
      %v645 = vrot.slane %v465, 4
      %v646 = vsel %vm643, %v644, %v645
      %v647 = vrot.slane %v466, 4
      %v648 = vrot.slane %v467, 4
      %v649 = vsel %vm643, %v647, %v648
      %v650 = vrot.slane %v468, 4
      %v651 = vrot.slane %v469, 4
      %v652 = vsel %vm643, %v650, %v651
      %v653 = vrot.slane %v470, 4
      %v654 = vrot.slane %v471, 4
      %v655 = vsel %vm643, %v653, %v654
      %v656 = vrot.slane %v472, 4
      %v657 = vrot.slane %v473, 4
      %v658 = vsel %vm643, %v656, %v657
      %v659 = vrot.slane %v474, 4
      %v660 = vrot.slane %v475, 4
      %v661 = vsel %vm643, %v659, %v660
      %v662 = vrot.slane %v476, 4
      %v663 = vrot.slane %v477, 4
      %v664 = vsel %vm643, %v662, %v663
      %v665 = vrot.slane %v478, 4
      %v666 = vrot.slane %v479, 4
      %v667 = vsel %vm643, %v665, %v666
      %vm676 = vcmask 785408
      %v677 = vsel %vm676, %v464, %v522
      %v678 = vsel %vm676, %v466, %v524
      %v679 = vsel %vm676, %v468, %v526
      %v680 = vsel %vm676, %v470, %v528
      %v681 = vsel %vm676, %v472, %v530
      %v682 = vsel %vm676, %v474, %v532
      %v683 = vsel %vm676, %v476, %v534
      %v684 = vsel %vm676, %v478, %v536
      %vm685 = vcmask 523264
      %v686 = vsel %vm685, %v522, %v571
      %v687 = vsel %vm685, %v524, %v573
      %v688 = vsel %vm685, %v526, %v575
      %v689 = vsel %vm685, %v528, %v577
      %v690 = vsel %vm685, %v530, %v579
      %v691 = vsel %vm685, %v532, %v581
      %v692 = vsel %vm685, %v534, %v583
      %v693 = vsel %vm685, %v536, %v585
      %vm694 = vcmask 261120
      %v695 = vsel %vm694, %v571, %v620
      %v696 = vsel %vm694, %v573, %v622
      %v697 = vsel %vm694, %v575, %v624
      %v698 = vsel %vm694, %v577, %v626
      %v699 = vsel %vm694, %v579, %v628
      %v700 = vsel %vm694, %v581, %v630
      %v701 = vsel %vm694, %v583, %v632
      %v702 = vsel %vm694, %v585, %v634
      %v703 = vpack.c.bf16 %v677, %v677
      %v704 = vpack.c.bf16 %v686, %v686
      %v705 = vpack.c.bf16 %v695, %v695
      %v706 = vpack.c.bf16 %v646, %v646
      %v707 = vpack.c.bf16 %v678, %v678
      %v708 = vpack.c.bf16 %v687, %v687
      %v709 = vpack.c.bf16 %v696, %v696
      %v710 = vpack.c.bf16 %v649, %v649
      %v711 = vpack.c.bf16 %v679, %v679
      %v712 = vpack.c.bf16 %v688, %v688
      %v713 = vpack.c.bf16 %v697, %v697
      %v714 = vpack.c.bf16 %v652, %v652
      %v715 = vpack.c.bf16 %v680, %v680
      %v716 = vpack.c.bf16 %v689, %v689
      %v717 = vpack.c.bf16 %v698, %v698
      %v718 = vpack.c.bf16 %v655, %v655
      %v719 = vpack.c.bf16 %v681, %v681
      %v720 = vpack.c.bf16 %v690, %v690
      %v721 = vpack.c.bf16 %v699, %v699
      %v722 = vpack.c.bf16 %v658, %v658
      %v723 = vpack.c.bf16 %v682, %v682
      %v724 = vpack.c.bf16 %v691, %v691
      %v725 = vpack.c.bf16 %v700, %v700
      %v726 = vpack.c.bf16 %v661, %v661
      %v727 = vpack.c.bf16 %v683, %v683
      %v728 = vpack.c.bf16 %v692, %v692
      %v729 = vpack.c.bf16 %v701, %v701
      %v730 = vpack.c.bf16 %v664, %v664
      %v731 = vpack.c.bf16 %v684, %v684
      %v732 = vpack.c.bf16 %v693, %v693
      %v733 = vpack.c.bf16 %v702, %v702
      %v734 = vpack.c.bf16 %v667, %v667
      %v767 = vunpack.c.l.b16 %v703
      %v768 = vunpack.c.l.b16 %v704
      %v769 = vunpack.c.l.b16 %v705
      %v770 = vunpack.c.l.b16 %v706
      %v771 = vunpack.c.l.b16 %v707
      %v772 = vunpack.c.l.b16 %v708
      %v773 = vunpack.c.l.b16 %v709
      %v774 = vunpack.c.l.b16 %v710
      %v775 = vunpack.c.l.b16 %v711
      %v776 = vunpack.c.l.b16 %v712
      %v777 = vunpack.c.l.b16 %v713
      %v778 = vunpack.c.l.b16 %v714
      %v779 = vunpack.c.l.b16 %v715
      %v780 = vunpack.c.l.b16 %v716
      %v781 = vunpack.c.l.b16 %v717
      %v782 = vunpack.c.l.b16 %v718
      %v783 = vunpack.c.l.b16 %v719
      %v784 = vunpack.c.l.b16 %v720
      %v785 = vunpack.c.l.b16 %v721
      %v786 = vunpack.c.l.b16 %v722
      %v787 = vunpack.c.l.b16 %v723
      %v788 = vunpack.c.l.b16 %v724
      %v789 = vunpack.c.l.b16 %v725
      %v790 = vunpack.c.l.b16 %v726
      %v791 = vunpack.c.l.b16 %v727
      %v792 = vunpack.c.l.b16 %v728
      %v793 = vunpack.c.l.b16 %v729
      %v794 = vunpack.c.l.b16 %v730
      %v795 = vunpack.c.l.b16 %v731
      %v796 = vunpack.c.l.b16 %v732
      %v797 = vunpack.c.l.b16 %v733
      %v798 = vunpack.c.l.b16 %v734
      %v799 = vpack.c.b16 %v768, %v767
      %v800 = vpack.c.b16 %v770, %v769
      %v801 = vpack.c.b16 %v772, %v771
      %v802 = vpack.c.b16 %v774, %v773
      %v803 = vpack.c.b16 %v776, %v775
      %v804 = vpack.c.b16 %v778, %v777
      %v805 = vpack.c.b16 %v780, %v779
      %v806 = vpack.c.b16 %v782, %v781
      %v807 = vpack.c.b16 %v784, %v783
      %v808 = vpack.c.b16 %v786, %v785
      %v809 = vpack.c.b16 %v788, %v787
      %v810 = vpack.c.b16 %v790, %v789
      %v811 = vpack.c.b16 %v792, %v791
      %v812 = vpack.c.b16 %v794, %v793
      %v813 = vpack.c.b16 %v796, %v795
      %v814 = vpack.c.b16 %v798, %v797
      %831 = vst [vmem:[#allocation2] sm:$0xff] %v799
      %vm832 = vcmask 785412
      %vm833 = vmor %vm832, %vm643
      %834 = vst.msk [vmem:[#allocation2 + $0x8] sm:$0xff] %vm833, %v800
      %835 = vst [vmem:[#allocation2 + $0x10] sm:$0xff] %v801
      %836 = vst.msk [vmem:[#allocation2 + $0x18] sm:$0xff] %vm833, %v802
      %837 = vst [vmem:[#allocation2 + $0x20] sm:$0xff] %v803
      %838 = vst.msk [vmem:[#allocation2 + $0x28] sm:$0xff] %vm833, %v804
      %839 = vst [vmem:[#allocation2 + $0x30] sm:$0xff] %v805
      %840 = vst.msk [vmem:[#allocation2 + $0x38] sm:$0xff] %vm833, %v806
      %841 = vst [vmem:[#allocation2 + $0x40] sm:$0xff] %v807
      %842 = vst.msk [vmem:[#allocation2 + $0x48] sm:$0xff] %vm833, %v808
      %843 = vst [vmem:[#allocation2 + $0x50] sm:$0xff] %v809
      %844 = vst.msk [vmem:[#allocation2 + $0x58] sm:$0xff] %vm833, %v810
      %845 = vst [vmem:[#allocation2 + $0x60] sm:$0xff] %v811
      %846 = vst.msk [vmem:[#allocation2 + $0x68] sm:$0xff] %vm833, %v812
      %847 = vst [vmem:[#allocation2 + $0x70] sm:$0xff] %v813
      %848 = vst.msk [vmem:[#allocation2 + $0x78] sm:$0xff] %vm833, %v814
      %v849 = vld [vmem:[#allocation2] sm:$0xff]
      %v850 = vld [vmem:[#allocation2 + $0x8] sm:$0xff]
      %v851 = vld [vmem:[#allocation2 + $0x10] sm:$0xff]
      %v852 = vld [vmem:[#allocation2 + $0x18] sm:$0xff]
      %v853 = vld [vmem:[#allocation2 + $0x20] sm:$0xff]
      %v854 = vld [vmem:[#allocation2 + $0x28] sm:$0xff]
      %v855 = vld [vmem:[#allocation2 + $0x30] sm:$0xff]
      %v856 = vld [vmem:[#allocation2 + $0x38] sm:$0xff]
      %v857 = vld [vmem:[%s1] sm:$0xf]
      %v858 = vld [vmem:[%s1 + $0x4] sm:$0xf]
      %v859 = vld [vmem:[%s1 + $0x8] sm:$0xf]
      %v860 = vld [vmem:[%s1 + $0xc] sm:$0xf]
      %v861 = vld [vmem:[%s1 + $0x10] sm:$0xf]
      %v862 = vld [vmem:[%s1 + $0x14] sm:$0xf]
      %v863 = vld [vmem:[%s1 + $0x18] sm:$0xf]
      %v864 = vld [vmem:[%s1 + $0x1c] sm:$0xf]
      %v865 = vld [vmem:[%s1 + $0x20] sm:$0xf]
      %v866 = vld [vmem:[%s1 + $0x24] sm:$0xf]
      %v867 = vld [vmem:[%s1 + $0x28] sm:$0xf]
      %v868 = vld [vmem:[%s1 + $0x2c] sm:$0xf]
      %v869 = vld [vmem:[%s1 + $0x30] sm:$0xf]
      %v870 = vld [vmem:[%s1 + $0x34] sm:$0xf]
      %v871 = vld [vmem:[%s1 + $0x38] sm:$0xf]
      %v872 = vld [vmem:[%s1 + $0x3c] sm:$0xf]
      %v873 = vld [vmem:[%s1 + $0x40] sm:$0xf]
      %v874 = vld [vmem:[%s1 + $0x44] sm:$0xf]
      %v875 = vld [vmem:[%s1 + $0x48] sm:$0xf]
      %v876 = vld [vmem:[%s1 + $0x4c] sm:$0xf]
      %v877 = vld [vmem:[%s1 + $0x50] sm:$0xf]
      %v878 = vld [vmem:[%s1 + $0x54] sm:$0xf]
      %v879 = vld [vmem:[%s1 + $0x58] sm:$0xf]
      %v880 = vld [vmem:[%s1 + $0x5c] sm:$0xf]
      %v881 = vld [vmem:[%s1 + $0x60] sm:$0xf]
      %v882 = vld [vmem:[%s1 + $0x64] sm:$0xf]
      %v883 = vld [vmem:[%s1 + $0x68] sm:$0xf]
      %v884 = vld [vmem:[%s1 + $0x6c] sm:$0xf]
      %v885 = vld [vmem:[%s1 + $0x70] sm:$0xf]
      %v886 = vld [vmem:[%s1 + $0x74] sm:$0xf]
      %v887 = vld [vmem:[%s1 + $0x78] sm:$0xf]
      %v888 = vld [vmem:[%s1 + $0x7c] sm:$0xf]
      %v889 = vld [vmem:[%s1 + $0x80] sm:$0xf]
      %v890 = vld [vmem:[%s1 + $0x84] sm:$0xf]
      %v891 = vld [vmem:[%s1 + $0x88] sm:$0xf]
      %v892 = vld [vmem:[%s1 + $0x8c] sm:$0xf]
      %v893 = vld [vmem:[%s1 + $0x90] sm:$0xf]
      %v894 = vld [vmem:[%s1 + $0x94] sm:$0xf]
      %v895 = vld [vmem:[%s1 + $0x98] sm:$0xf]
      %v896 = vld [vmem:[%s1 + $0x9c] sm:$0xf]
      %v897 = vld [vmem:[%s1 + $0xa0] sm:$0xf]
      %v898 = vld [vmem:[%s1 + $0xa4] sm:$0xf]
      %v899 = vld [vmem:[%s1 + $0xa8] sm:$0xf]
      %v900 = vld [vmem:[%s1 + $0xac] sm:$0xf]
      %v901 = vld [vmem:[%s1 + $0xb0] sm:$0xf]
      %v902 = vld [vmem:[%s1 + $0xb4] sm:$0xf]
      %v903 = vld [vmem:[%s1 + $0xb8] sm:$0xf]
      %v904 = vld [vmem:[%s1 + $0xbc] sm:$0xf]
      %v905 = vld [vmem:[%s1 + $0xc0] sm:$0xf]
      %v906 = vld [vmem:[%s1 + $0xc4] sm:$0xf]
      %v907 = vld [vmem:[%s1 + $0xc8] sm:$0xf]
      %v908 = vld [vmem:[%s1 + $0xcc] sm:$0xf]
      %v909 = vld [vmem:[%s1 + $0xd0] sm:$0xf]
      %v910 = vld [vmem:[%s1 + $0xd4] sm:$0xf]
      %v911 = vld [vmem:[%s1 + $0xd8] sm:$0xf]
      %v912 = vld [vmem:[%s1 + $0xdc] sm:$0xf]
      %v913 = vld [vmem:[%s1 + $0xe0] sm:$0xf]
      %v914 = vld [vmem:[%s1 + $0xe4] sm:$0xf]
      %v915 = vld [vmem:[%s1 + $0xe8] sm:$0xf]
      %v916 = vld [vmem:[%s1 + $0xec] sm:$0xf]
      %s917 = scalar_lea.vmem [#allocation2], 16
      %v918 = vld [vmem:[%s917] sm:$0xff]
      %v919 = vld [vmem:[%s917 + $0x8] sm:$0xff]
      %v920 = vld [vmem:[%s917 + $0x10] sm:$0xff]
      %v921 = vld [vmem:[%s917 + $0x18] sm:$0xff]
      %v922 = vld [vmem:[%s917 + $0x20] sm:$0xff]
      %v923 = vld [vmem:[%s917 + $0x28] sm:$0xff]
      %v924 = vld [vmem:[%s917 + $0x30] sm:$0xff]
      %v925 = vld [vmem:[%s917 + $0x38] sm:$0xff]
      %s926 = scalar_lea.vmem %s1, 240
      %v927 = vld [vmem:[%s926] sm:$0xf]
      %v928 = vld [vmem:[%s926 + $0x4] sm:$0xf]
      %v929 = vld [vmem:[%s926 + $0x8] sm:$0xf]
      %v930 = vld [vmem:[%s926 + $0xc] sm:$0xf]
      %v931 = vld [vmem:[%s926 + $0x10] sm:$0xf]
      %v932 = vld [vmem:[%s926 + $0x14] sm:$0xf]
      %v933 = vld [vmem:[%s926 + $0x18] sm:$0xf]
      %v934 = vld [vmem:[%s926 + $0x1c] sm:$0xf]
      %v935 = vld [vmem:[%s926 + $0x20] sm:$0xf]
      %v936 = vld [vmem:[%s926 + $0x24] sm:$0xf]
      %v937 = vld [vmem:[%s926 + $0x28] sm:$0xf]
      %v938 = vld [vmem:[%s926 + $0x2c] sm:$0xf]
      %v939 = vld [vmem:[%s926 + $0x30] sm:$0xf]
      %v940 = vld [vmem:[%s926 + $0x34] sm:$0xf]
      %v941 = vld [vmem:[%s926 + $0x38] sm:$0xf]
      %v942 = vld [vmem:[%s926 + $0x3c] sm:$0xf]
      %v943 = vld [vmem:[%s926 + $0x40] sm:$0xf]
      %v944 = vld [vmem:[%s926 + $0x44] sm:$0xf]
      %v945 = vld [vmem:[%s926 + $0x48] sm:$0xf]
      %v946 = vld [vmem:[%s926 + $0x4c] sm:$0xf]
      %v947 = vld [vmem:[%s926 + $0x50] sm:$0xf]
      %v948 = vld [vmem:[%s926 + $0x54] sm:$0xf]
      %v949 = vld [vmem:[%s926 + $0x58] sm:$0xf]
      %v950 = vld [vmem:[%s926 + $0x5c] sm:$0xf]
      %v951 = vld [vmem:[%s926 + $0x60] sm:$0xf]
      %v952 = vld [vmem:[%s926 + $0x64] sm:$0xf]
      %v953 = vld [vmem:[%s926 + $0x68] sm:$0xf]
      %v954 = vld [vmem:[%s926 + $0x6c] sm:$0xf]
      %v955 = vld [vmem:[%s926 + $0x70] sm:$0xf]
      %v956 = vld [vmem:[%s926 + $0x74] sm:$0xf]
      %v957 = vld [vmem:[%s926 + $0x78] sm:$0xf]
      %v958 = vld [vmem:[%s926 + $0x7c] sm:$0xf]
      %v959 = vld [vmem:[%s926 + $0x80] sm:$0xf]
      %v960 = vld [vmem:[%s926 + $0x84] sm:$0xf]
      %v961 = vld [vmem:[%s926 + $0x88] sm:$0xf]
      %v962 = vld [vmem:[%s926 + $0x8c] sm:$0xf]
      %v963 = vld [vmem:[%s926 + $0x90] sm:$0xf]
      %v964 = vld [vmem:[%s926 + $0x94] sm:$0xf]
      %v965 = vld [vmem:[%s926 + $0x98] sm:$0xf]
      %v966 = vld [vmem:[%s926 + $0x9c] sm:$0xf]
      %v967 = vld [vmem:[%s926 + $0xa0] sm:$0xf]
      %v968 = vld [vmem:[%s926 + $0xa4] sm:$0xf]
      %v969 = vld [vmem:[%s926 + $0xa8] sm:$0xf]
      %v970 = vld [vmem:[%s926 + $0xac] sm:$0xf]
      %v971 = vld [vmem:[%s926 + $0xb0] sm:$0xf]
      %v972 = vld [vmem:[%s926 + $0xb4] sm:$0xf]
      %v973 = vld [vmem:[%s926 + $0xb8] sm:$0xf]
      %v974 = vld [vmem:[%s926 + $0xbc] sm:$0xf]
      %v975 = vld [vmem:[%s926 + $0xc0] sm:$0xf]
      %v976 = vld [vmem:[%s926 + $0xc4] sm:$0xf]
      %v977 = vld [vmem:[%s926 + $0xc8] sm:$0xf]
      %v978 = vld [vmem:[%s926 + $0xcc] sm:$0xf]
      %v979 = vld [vmem:[%s926 + $0xd0] sm:$0xf]
      %v980 = vld [vmem:[%s926 + $0xd4] sm:$0xf]
      %v981 = vld [vmem:[%s926 + $0xd8] sm:$0xf]
      %v982 = vld [vmem:[%s926 + $0xdc] sm:$0xf]
      %v983 = vld [vmem:[%s926 + $0xe0] sm:$0xf]
      %v984 = vld [vmem:[%s926 + $0xe4] sm:$0xf]
      %v985 = vld [vmem:[%s926 + $0xe8] sm:$0xf]
      %v986 = vld [vmem:[%s926 + $0xec] sm:$0xf]
      %v995 = vunpack.c.l.b16 %v918
      %v996 = vunpack.c.h.b16 %v918
      %v997 = vunpack.c.l.b16 %v919
      %v998 = vunpack.c.h.b16 %v919
      %v999 = vunpack.c.l.b16 %v920
      %v1000 = vunpack.c.h.b16 %v920
      %v1001 = vunpack.c.l.b16 %v921
      %v1002 = vunpack.c.h.b16 %v921
      %v1003 = vunpack.c.l.b16 %v922
      %v1004 = vunpack.c.h.b16 %v922
      %v1005 = vunpack.c.l.b16 %v923
      %v1006 = vunpack.c.h.b16 %v923
      %v1007 = vunpack.c.l.b16 %v924
      %v1008 = vunpack.c.h.b16 %v924
      %v1009 = vunpack.c.l.b16 %v925
      %v1010 = vunpack.c.h.b16 %v925
      %v1011 = vpack.c.b16 %v999, %v995
      %v1012 = vpack.c.b16 %v1000, %v996
      %v1013 = vpack.c.b16 %v1001, %v997
      %v1014 = vpack.c.b16 %v1002, %v998
      %v1015 = vpack.c.b16 %v1007, %v1003
      %v1016 = vpack.c.b16 %v1008, %v1004
      %v1017 = vpack.c.b16 %v1009, %v1005
      %v1018 = vpack.c.b16 %v1010, %v1006
      %v1085 = vunpack.c.l.b16 %v927
      %v1086 = vunpack.c.l.b16 %v928
      %v1087 = vunpack.c.l.b16 %v929
      %v1088 = vunpack.c.l.b16 %v930
      %v1089 = vunpack.c.l.b16 %v931
      %v1090 = vunpack.c.l.b16 %v932
      %v1091 = vunpack.c.l.b16 %v933
      %v1092 = vunpack.c.l.b16 %v934
      %v1093 = vunpack.c.l.b16 %v935
      %v1094 = vunpack.c.l.b16 %v936
      %v1095 = vunpack.c.l.b16 %v937
      %v1096 = vunpack.c.l.b16 %v938
      %v1097 = vunpack.c.l.b16 %v939
      %v1098 = vunpack.c.l.b16 %v940
      %v1099 = vunpack.c.l.b16 %v941
      %v1100 = vunpack.c.l.b16 %v942
      %v1101 = vunpack.c.l.b16 %v943
      %v1102 = vunpack.c.l.b16 %v944
      %v1103 = vunpack.c.l.b16 %v945
      %v1104 = vunpack.c.l.b16 %v946
      %v1105 = vunpack.c.l.b16 %v947
      %v1106 = vunpack.c.l.b16 %v948
      %v1107 = vunpack.c.l.b16 %v949
      %v1108 = vunpack.c.l.b16 %v950
      %v1109 = vunpack.c.l.b16 %v951
      %v1110 = vunpack.c.l.b16 %v952
      %v1111 = vunpack.c.l.b16 %v953
      %v1112 = vunpack.c.l.b16 %v954
      %v1113 = vunpack.c.l.b16 %v955
      %v1114 = vunpack.c.l.b16 %v956
      %v1115 = vunpack.c.l.b16 %v957
      %v1116 = vunpack.c.l.b16 %v958
      %v1117 = vunpack.c.l.b16 %v959
      %v1118 = vunpack.c.l.b16 %v960
      %v1119 = vunpack.c.l.b16 %v961
      %v1120 = vunpack.c.l.b16 %v962
      %v1121 = vunpack.c.l.b16 %v963
      %v1122 = vunpack.c.l.b16 %v964
      %v1123 = vunpack.c.l.b16 %v965
      %v1124 = vunpack.c.l.b16 %v966
      %v1125 = vunpack.c.l.b16 %v967
      %v1126 = vunpack.c.l.b16 %v968
      %v1127 = vunpack.c.l.b16 %v969
      %v1128 = vunpack.c.l.b16 %v970
      %v1129 = vunpack.c.l.b16 %v971
      %v1130 = vunpack.c.l.b16 %v972
      %v1131 = vunpack.c.l.b16 %v973
      %v1132 = vunpack.c.l.b16 %v974
      %v1133 = vunpack.c.l.b16 %v975
      %v1134 = vunpack.c.l.b16 %v976
      %v1135 = vunpack.c.l.b16 %v977
      %v1136 = vunpack.c.l.b16 %v978
      %v1137 = vunpack.c.l.b16 %v979
      %v1138 = vunpack.c.l.b16 %v980
      %v1139 = vunpack.c.l.b16 %v981
      %v1140 = vunpack.c.l.b16 %v982
      %v1141 = vunpack.c.l.b16 %v983
      %v1142 = vunpack.c.l.b16 %v984
      %v1143 = vunpack.c.l.b16 %v985
      %v1144 = vunpack.c.l.b16 %v986
      %v1145 = vpack.c.b16 %v1086, %v1085
      %v1146 = vpack.c.b16 %v1088, %v1087
      %v1147 = vpack.c.b16 %v1090, %v1089
      %v1148 = vpack.c.b16 %v1092, %v1091
      %v1149 = vpack.c.b16 %v1094, %v1093
      %v1150 = vpack.c.b16 %v1096, %v1095
      %v1151 = vpack.c.b16 %v1098, %v1097
      %v1152 = vpack.c.b16 %v1100, %v1099
      %v1153 = vpack.c.b16 %v1102, %v1101
      %v1154 = vpack.c.b16 %v1104, %v1103
      %v1155 = vpack.c.b16 %v1106, %v1105
      %v1156 = vpack.c.b16 %v1108, %v1107
      %v1157 = vpack.c.b16 %v1110, %v1109
      %v1158 = vpack.c.b16 %v1112, %v1111
      %v1159 = vpack.c.b16 %v1114, %v1113
      %v1160 = vpack.c.b16 %v1116, %v1115
      %v1161 = vpack.c.b16 %v1118, %v1117
      %v1162 = vpack.c.b16 %v1120, %v1119
      %v1163 = vpack.c.b16 %v1122, %v1121
      %v1164 = vpack.c.b16 %v1124, %v1123
      %v1165 = vpack.c.b16 %v1126, %v1125
      %v1166 = vpack.c.b16 %v1128, %v1127
      %v1167 = vpack.c.b16 %v1130, %v1129
      %v1168 = vpack.c.b16 %v1132, %v1131
      %v1169 = vpack.c.b16 %v1134, %v1133
      %v1170 = vpack.c.b16 %v1136, %v1135
      %v1171 = vpack.c.b16 %v1138, %v1137
      %v1172 = vpack.c.b16 %v1140, %v1139
      %v1173 = vpack.c.b16 %v1142, %v1141
      %v1174 = vpack.c.b16 %v1144, %v1143
      %v1206 = vsel %vm676, %v1014, 0
      %v1209 = vsel %vm676, %v1018, 0
      %1211 = vmatprep.subr.bf16.mxu0 0
      %1212 = vmatpush1.bf16.msra.mxu0 %v1152
      %1213 = vmatprep.subr.bf16.mxu0 0
      %1214 = vmatpush1.bf16.msra.mxu0 %v1151
      %1215 = vmatprep.subr.bf16.mxu0 0
      %1216 = vmatpush1.bf16.msra.mxu0 %v1150
      %1217 = vmatprep.subr.bf16.mxu0 0
      %1218 = vmatpush1.bf16.msra.mxu0 %v1149
      %1219 = vmatprep.subr.bf16.mxu0 0
      %1220 = vmatpush1.bf16.msra.mxu0 %v1148
      %1221 = vmatprep.subr.bf16.mxu0 0
      %1222 = vmatpush1.bf16.msra.mxu0 %v1147
      %1223 = vmatprep.subr.bf16.mxu0 0
      %1224 = vmatpush1.bf16.msra.mxu0 %v1146
      %1225 = vmatprep.subr.bf16.mxu0 0
      %1226 = vmatpush1.bf16.msra.mxu0 %v1145
      %1227 = vmatprep.subr.bf16.mxu0 0
      %1228 = vmatpush2.bf16.msra.mxu0 %v1160
      %1229 = vmatprep.subr.bf16.mxu0 0
      %1230 = vmatpush2.bf16.msra.mxu0 %v1159
      %1231 = vmatprep.subr.bf16.mxu0 0
      %1232 = vmatpush2.bf16.msra.mxu0 %v1158
      %1233 = vmatprep.subr.bf16.mxu0 0
      %1234 = vmatpush2.bf16.msra.mxu0 %v1157
      %1235 = vmatprep.subr.bf16.mxu0 0
      %1236 = vmatpush2.bf16.msra.mxu0 %v1156
      %1237 = vmatprep.subr.bf16.mxu0 0
      %1238 = vmatpush2.bf16.msra.mxu0 %v1155
      %1239 = vmatprep.subr.bf16.mxu0 0
      %1240 = vmatpush2.bf16.msra.mxu0 %v1154
      %1241 = vmatprep.subr.bf16.mxu0 0
      %1242 = vmatpush2.bf16.msra.mxu0 %v1153
      %1243 = vmatprep.mubr.bf16.mxu0 %v1012
      %1244 = vmatmul.mubr.bf16.gmra.mxu0 %v1011
      %v1245 = vpop.f32.mrf.mxu0
      %v1246 = vadd.f32 0.0, %v1245
      %v1247 = vpop.f32.mrf.mxu0
      %v1248 = vpop.f32.mrf.mxu0
      %v1249 = vadd.f32 0.0, %v1248
      %v1250 = vpop.f32.mrf.mxu0
      %1251 = vmatprep.mubr.bf16.mxu0 %v1016
      %1252 = vmatmul.mubr.bf16.gmra.mxu0 %v1015
      %v1253 = vpop.f32.mrf.mxu0
      %v1254 = vadd.f32 0.0, %v1253
      %v1255 = vpop.f32.mrf.mxu0
      %v1256 = vpop.f32.mrf.mxu0
      %v1257 = vadd.f32 0.0, %v1256
      %v1258 = vpop.f32.mrf.mxu0
      %1259 = vdwg.mxu0
      %1260 = vmatprep.subr.bf16.mxu0 0
      %1261 = vmatpush1.bf16.msra.mxu0 %v1168
      %1262 = vmatprep.subr.bf16.mxu0 0
      %1263 = vmatpush1.bf16.msra.mxu0 %v1167
      %1264 = vmatprep.subr.bf16.mxu0 0
      %1265 = vmatpush1.bf16.msra.mxu0 %v1166
      %1266 = vmatprep.subr.bf16.mxu0 0
      %1267 = vmatpush1.bf16.msra.mxu0 %v1165
      %1268 = vmatprep.subr.bf16.mxu0 0
      %1269 = vmatpush1.bf16.msra.mxu0 %v1164
      %1270 = vmatprep.subr.bf16.mxu0 0
      %1271 = vmatpush1.bf16.msra.mxu0 %v1163
      %1272 = vmatprep.subr.bf16.mxu0 0
      %1273 = vmatpush1.bf16.msra.mxu0 %v1162
      %1274 = vmatprep.subr.bf16.mxu0 0
      %1275 = vmatpush1.bf16.msra.mxu0 %v1161
      %1276 = vmatprep.subr.bf16.mxu0 0
      %1277 = vmatpush2.bf16.msra.mxu0 0
      %1278 = vmatprep.subr.bf16.mxu0 0
      %1279 = vmatpush2.bf16.msra.mxu0 0
      %1280 = vmatprep.subr.bf16.mxu0 0
      %1281 = vmatpush2.bf16.msra.mxu0 %v1174
      %1282 = vmatprep.subr.bf16.mxu0 0
      %1283 = vmatpush2.bf16.msra.mxu0 %v1173
      %1284 = vmatprep.subr.bf16.mxu0 0
      %1285 = vmatpush2.bf16.msra.mxu0 %v1172
      %1286 = vmatprep.subr.bf16.mxu0 0
      %1287 = vmatpush2.bf16.msra.mxu0 %v1171
      %1288 = vmatprep.subr.bf16.mxu0 0
      %1289 = vmatpush2.bf16.msra.mxu0 %v1170
      %1290 = vmatprep.subr.bf16.mxu0 0
      %1291 = vmatpush2.bf16.msra.mxu0 %v1169
      %1292 = vmatprep.mubr.bf16.mxu0 %v1206
      %1293 = vmatmul.mubr.bf16.gmra.mxu0 %v1013
      %v1294 = vpop.f32.mrf.mxu0
      %v1295 = vadd.f32 %v1246, %v1294
      %v1296 = vpop.f32.mrf.mxu0
      %v1297 = vpop.f32.mrf.mxu0
      %v1298 = vadd.f32 %v1249, %v1297
      %v1299 = vpop.f32.mrf.mxu0
      %1300 = vmatprep.mubr.bf16.mxu0 %v1209
      %1301 = vmatmul.mubr.bf16.gmra.mxu0 %v1017
      %v1302 = vpop.f32.mrf.mxu0
      %v1303 = vadd.f32 %v1254, %v1302
      %v1304 = vpop.f32.mrf.mxu0
      %v1305 = vpop.f32.mrf.mxu0
      %v1306 = vadd.f32 %v1257, %v1305
      %v1307 = vpop.f32.mrf.mxu0
      %1308 = vdwg.mxu0
      %v1317 = vunpack.c.l.b16 %v849
      %v1318 = vunpack.c.h.b16 %v849
      %v1319 = vunpack.c.l.b16 %v850
      %v1320 = vunpack.c.h.b16 %v850
      %v1321 = vunpack.c.l.b16 %v851
      %v1322 = vunpack.c.h.b16 %v851
      %v1323 = vunpack.c.l.b16 %v852
      %v1324 = vunpack.c.h.b16 %v852
      %v1325 = vunpack.c.l.b16 %v853
      %v1326 = vunpack.c.h.b16 %v853
      %v1327 = vunpack.c.l.b16 %v854
      %v1328 = vunpack.c.h.b16 %v854
      %v1329 = vunpack.c.l.b16 %v855
      %v1330 = vunpack.c.h.b16 %v855
      %v1331 = vunpack.c.l.b16 %v856
      %v1332 = vunpack.c.h.b16 %v856
      %v1333 = vpack.c.b16 %v1321, %v1317
      %v1334 = vpack.c.b16 %v1322, %v1318
      %v1335 = vpack.c.b16 %v1323, %v1319
      %v1336 = vpack.c.b16 %v1324, %v1320
      %v1337 = vpack.c.b16 %v1329, %v1325
      %v1338 = vpack.c.b16 %v1330, %v1326
      %v1339 = vpack.c.b16 %v1331, %v1327
      %v1340 = vpack.c.b16 %v1332, %v1328
      %v1407 = vunpack.c.l.b16 %v857
      %v1408 = vunpack.c.l.b16 %v858
      %v1409 = vunpack.c.l.b16 %v859
      %v1410 = vunpack.c.l.b16 %v860
      %v1411 = vunpack.c.l.b16 %v861
      %v1412 = vunpack.c.l.b16 %v862
      %v1413 = vunpack.c.l.b16 %v863
      %v1414 = vunpack.c.l.b16 %v864
      %v1415 = vunpack.c.l.b16 %v865
      %v1416 = vunpack.c.l.b16 %v866
      %v1417 = vunpack.c.l.b16 %v867
      %v1418 = vunpack.c.l.b16 %v868
      %v1419 = vunpack.c.l.b16 %v869
      %v1420 = vunpack.c.l.b16 %v870
      %v1421 = vunpack.c.l.b16 %v871
      %v1422 = vunpack.c.l.b16 %v872
      %v1423 = vunpack.c.l.b16 %v873
      %v1424 = vunpack.c.l.b16 %v874
      %v1425 = vunpack.c.l.b16 %v875
      %v1426 = vunpack.c.l.b16 %v876
      %v1427 = vunpack.c.l.b16 %v877
      %v1428 = vunpack.c.l.b16 %v878
      %v1429 = vunpack.c.l.b16 %v879
      %v1430 = vunpack.c.l.b16 %v880
      %v1431 = vunpack.c.l.b16 %v881
      %v1432 = vunpack.c.l.b16 %v882
      %v1433 = vunpack.c.l.b16 %v883
      %v1434 = vunpack.c.l.b16 %v884
      %v1435 = vunpack.c.l.b16 %v885
      %v1436 = vunpack.c.l.b16 %v886
      %v1437 = vunpack.c.l.b16 %v887
      %v1438 = vunpack.c.l.b16 %v888
      %v1439 = vunpack.c.l.b16 %v889
      %v1440 = vunpack.c.l.b16 %v890
      %v1441 = vunpack.c.l.b16 %v891
      %v1442 = vunpack.c.l.b16 %v892
      %v1443 = vunpack.c.l.b16 %v893
      %v1444 = vunpack.c.l.b16 %v894
      %v1445 = vunpack.c.l.b16 %v895
      %v1446 = vunpack.c.l.b16 %v896
      %v1447 = vunpack.c.l.b16 %v897
      %v1448 = vunpack.c.l.b16 %v898
      %v1449 = vunpack.c.l.b16 %v899
      %v1450 = vunpack.c.l.b16 %v900
      %v1451 = vunpack.c.l.b16 %v901
      %v1452 = vunpack.c.l.b16 %v902
      %v1453 = vunpack.c.l.b16 %v903
      %v1454 = vunpack.c.l.b16 %v904
      %v1455 = vunpack.c.l.b16 %v905
      %v1456 = vunpack.c.l.b16 %v906
      %v1457 = vunpack.c.l.b16 %v907
      %v1458 = vunpack.c.l.b16 %v908
      %v1459 = vunpack.c.l.b16 %v909
      %v1460 = vunpack.c.l.b16 %v910
      %v1461 = vunpack.c.l.b16 %v911
      %v1462 = vunpack.c.l.b16 %v912
      %v1463 = vunpack.c.l.b16 %v913
      %v1464 = vunpack.c.l.b16 %v914
      %v1465 = vunpack.c.l.b16 %v915
      %v1466 = vunpack.c.l.b16 %v916
      %v1467 = vpack.c.b16 %v1408, %v1407
      %v1468 = vpack.c.b16 %v1410, %v1409
      %v1469 = vpack.c.b16 %v1412, %v1411
      %v1470 = vpack.c.b16 %v1414, %v1413
      %v1471 = vpack.c.b16 %v1416, %v1415
      %v1472 = vpack.c.b16 %v1418, %v1417
      %v1473 = vpack.c.b16 %v1420, %v1419
      %v1474 = vpack.c.b16 %v1422, %v1421
      %v1475 = vpack.c.b16 %v1424, %v1423
      %v1476 = vpack.c.b16 %v1426, %v1425
      %v1477 = vpack.c.b16 %v1428, %v1427
      %v1478 = vpack.c.b16 %v1430, %v1429
      %v1479 = vpack.c.b16 %v1432, %v1431
      %v1480 = vpack.c.b16 %v1434, %v1433
      %v1481 = vpack.c.b16 %v1436, %v1435
      %v1482 = vpack.c.b16 %v1438, %v1437
      %v1483 = vpack.c.b16 %v1440, %v1439
      %v1484 = vpack.c.b16 %v1442, %v1441
      %v1485 = vpack.c.b16 %v1444, %v1443
      %v1486 = vpack.c.b16 %v1446, %v1445
      %v1487 = vpack.c.b16 %v1448, %v1447
      %v1488 = vpack.c.b16 %v1450, %v1449
      %v1489 = vpack.c.b16 %v1452, %v1451
      %v1490 = vpack.c.b16 %v1454, %v1453
      %v1491 = vpack.c.b16 %v1456, %v1455
      %v1492 = vpack.c.b16 %v1458, %v1457
      %v1493 = vpack.c.b16 %v1460, %v1459
      %v1494 = vpack.c.b16 %v1462, %v1461
      %v1495 = vpack.c.b16 %v1464, %v1463
      %v1496 = vpack.c.b16 %v1466, %v1465
      %v1528 = vsel %vm676, %v1336, 0
      %v1531 = vsel %vm676, %v1340, 0
      %1533 = vmatprep.subr.bf16.mxu0 0
      %1534 = vmatpush1.bf16.msra.mxu0 %v1474
      %1535 = vmatprep.subr.bf16.mxu0 0
      %1536 = vmatpush1.bf16.msra.mxu0 %v1473
      %1537 = vmatprep.subr.bf16.mxu0 0
      %1538 = vmatpush1.bf16.msra.mxu0 %v1472
      %1539 = vmatprep.subr.bf16.mxu0 0
      %1540 = vmatpush1.bf16.msra.mxu0 %v1471
      %1541 = vmatprep.subr.bf16.mxu0 0
      %1542 = vmatpush1.bf16.msra.mxu0 %v1470
      %1543 = vmatprep.subr.bf16.mxu0 0
      %1544 = vmatpush1.bf16.msra.mxu0 %v1469
      %1545 = vmatprep.subr.bf16.mxu0 0
      %1546 = vmatpush1.bf16.msra.mxu0 %v1468
      %1547 = vmatprep.subr.bf16.mxu0 0
      %1548 = vmatpush1.bf16.msra.mxu0 %v1467
      %1549 = vmatprep.subr.bf16.mxu0 0
      %1550 = vmatpush2.bf16.msra.mxu0 %v1482
      %1551 = vmatprep.subr.bf16.mxu0 0
      %1552 = vmatpush2.bf16.msra.mxu0 %v1481
      %1553 = vmatprep.subr.bf16.mxu0 0
      %1554 = vmatpush2.bf16.msra.mxu0 %v1480
      %1555 = vmatprep.subr.bf16.mxu0 0
      %1556 = vmatpush2.bf16.msra.mxu0 %v1479
      %1557 = vmatprep.subr.bf16.mxu0 0
      %1558 = vmatpush2.bf16.msra.mxu0 %v1478
      %1559 = vmatprep.subr.bf16.mxu0 0
      %1560 = vmatpush2.bf16.msra.mxu0 %v1477
      %1561 = vmatprep.subr.bf16.mxu0 0
      %1562 = vmatpush2.bf16.msra.mxu0 %v1476
      %1563 = vmatprep.subr.bf16.mxu0 0
      %1564 = vmatpush2.bf16.msra.mxu0 %v1475
      %1565 = vmatprep.mubr.bf16.mxu0 %v1334
      %1566 = vmatmul.mubr.bf16.gmra.mxu0 %v1333
      %v1567 = vpop.f32.mrf.mxu0
      %v1568 = vadd.f32 %v1295, %v1567
      %v1569 = vpop.f32.mrf.mxu0
      %v1570 = vpop.f32.mrf.mxu0
      %v1571 = vadd.f32 %v1298, %v1570
      %v1572 = vpop.f32.mrf.mxu0
      %1573 = vmatprep.mubr.bf16.mxu0 %v1338
      %1574 = vmatmul.mubr.bf16.gmra.mxu0 %v1337
      %v1575 = vpop.f32.mrf.mxu0
      %v1576 = vadd.f32 %v1303, %v1575
      %v1577 = vpop.f32.mrf.mxu0
      %v1578 = vpop.f32.mrf.mxu0
      %v1579 = vadd.f32 %v1306, %v1578
      %v1580 = vpop.f32.mrf.mxu0
      %1581 = vdwg.mxu0
      %1582 = vmatprep.subr.bf16.mxu0 0
      %1583 = vmatpush1.bf16.msra.mxu0 %v1490
      %1584 = vmatprep.subr.bf16.mxu0 0
      %1585 = vmatpush1.bf16.msra.mxu0 %v1489
      %1586 = vmatprep.subr.bf16.mxu0 0
      %1587 = vmatpush1.bf16.msra.mxu0 %v1488
      %1588 = vmatprep.subr.bf16.mxu0 0
      %1589 = vmatpush1.bf16.msra.mxu0 %v1487
      %1590 = vmatprep.subr.bf16.mxu0 0
      %1591 = vmatpush1.bf16.msra.mxu0 %v1486
      %1592 = vmatprep.subr.bf16.mxu0 0
      %1593 = vmatpush1.bf16.msra.mxu0 %v1485
      %1594 = vmatprep.subr.bf16.mxu0 0
      %1595 = vmatpush1.bf16.msra.mxu0 %v1484
      %1596 = vmatprep.subr.bf16.mxu0 0
      %1597 = vmatpush1.bf16.msra.mxu0 %v1483
      %1598 = vmatprep.subr.bf16.mxu0 0
      %1599 = vmatpush2.bf16.msra.mxu0 0
      %1600 = vmatprep.subr.bf16.mxu0 0
      %1601 = vmatpush2.bf16.msra.mxu0 0
      %1602 = vmatprep.subr.bf16.mxu0 0
      %1603 = vmatpush2.bf16.msra.mxu0 %v1496
      %1604 = vmatprep.subr.bf16.mxu0 0
      %1605 = vmatpush2.bf16.msra.mxu0 %v1495
      %1606 = vmatprep.subr.bf16.mxu0 0
      %1607 = vmatpush2.bf16.msra.mxu0 %v1494
      %1608 = vmatprep.subr.bf16.mxu0 0
      %1609 = vmatpush2.bf16.msra.mxu0 %v1493
      %1610 = vmatprep.subr.bf16.mxu0 0
      %1611 = vmatpush2.bf16.msra.mxu0 %v1492
      %1612 = vmatprep.subr.bf16.mxu0 0
      %1613 = vmatpush2.bf16.msra.mxu0 %v1491
      %1614 = vmatprep.mubr.bf16.mxu0 %v1528
      %1615 = vmatmul.mubr.bf16.gmra.mxu0 %v1335
      %v1616 = vpop.f32.mrf.mxu0
      %v1617 = vadd.f32 %v1568, %v1616
      %v1618 = vpop.f32.mrf.mxu0
      %v1619 = vpop.f32.mrf.mxu0
      %v1620 = vadd.f32 %v1571, %v1619
      %v1621 = vpop.f32.mrf.mxu0
      %1622 = vmatprep.mubr.bf16.mxu0 %v1531
      %1623 = vmatmul.mubr.bf16.gmra.mxu0 %v1339
      %v1624 = vpop.f32.mrf.mxu0
      %v1625 = vadd.f32 %v1576, %v1624
      %v1626 = vpop.f32.mrf.mxu0
      %v1627 = vpop.f32.mrf.mxu0
      %v1628 = vadd.f32 %v1579, %v1627
      %v1629 = vpop.f32.mrf.mxu0
      %1630 = vdwg.mxu0
      %s1631 = scalar_lea.vmem [#allocation2], 32
      %v1632 = vld [vmem:[%s1631] sm:$0xff]
      %v1633 = vld [vmem:[%s1631 + $0x8] sm:$0xff]
      %v1634 = vld [vmem:[%s1631 + $0x10] sm:$0xff]
      %v1635 = vld [vmem:[%s1631 + $0x18] sm:$0xff]
      %v1636 = vld [vmem:[%s1631 + $0x20] sm:$0xff]
      %v1637 = vld [vmem:[%s1631 + $0x28] sm:$0xff]
      %v1638 = vld [vmem:[%s1631 + $0x30] sm:$0xff]
      %v1639 = vld [vmem:[%s1631 + $0x38] sm:$0xff]
      %s1640 = scalar_lea.vmem %s1, 480
      %v1641 = vld [vmem:[%s1640] sm:$0xf]
      %v1642 = vld [vmem:[%s1640 + $0x4] sm:$0xf]
      %v1643 = vld [vmem:[%s1640 + $0x8] sm:$0xf]
      %v1644 = vld [vmem:[%s1640 + $0xc] sm:$0xf]
      %v1645 = vld [vmem:[%s1640 + $0x10] sm:$0xf]
      %v1646 = vld [vmem:[%s1640 + $0x14] sm:$0xf]
      %v1647 = vld [vmem:[%s1640 + $0x18] sm:$0xf]
      %v1648 = vld [vmem:[%s1640 + $0x1c] sm:$0xf]
      %v1649 = vld [vmem:[%s1640 + $0x20] sm:$0xf]
      %v1650 = vld [vmem:[%s1640 + $0x24] sm:$0xf]
      %v1651 = vld [vmem:[%s1640 + $0x28] sm:$0xf]
      %v1652 = vld [vmem:[%s1640 + $0x2c] sm:$0xf]
      %v1653 = vld [vmem:[%s1640 + $0x30] sm:$0xf]
      %v1654 = vld [vmem:[%s1640 + $0x34] sm:$0xf]
      %v1655 = vld [vmem:[%s1640 + $0x38] sm:$0xf]
      %v1656 = vld [vmem:[%s1640 + $0x3c] sm:$0xf]
      %v1657 = vld [vmem:[%s1640 + $0x40] sm:$0xf]
      %v1658 = vld [vmem:[%s1640 + $0x44] sm:$0xf]
      %v1659 = vld [vmem:[%s1640 + $0x48] sm:$0xf]
      %v1660 = vld [vmem:[%s1640 + $0x4c] sm:$0xf]
      %v1661 = vld [vmem:[%s1640 + $0x50] sm:$0xf]
      %v1662 = vld [vmem:[%s1640 + $0x54] sm:$0xf]
      %v1663 = vld [vmem:[%s1640 + $0x58] sm:$0xf]
      %v1664 = vld [vmem:[%s1640 + $0x5c] sm:$0xf]
      %v1665 = vld [vmem:[%s1640 + $0x60] sm:$0xf]
      %v1666 = vld [vmem:[%s1640 + $0x64] sm:$0xf]
      %v1667 = vld [vmem:[%s1640 + $0x68] sm:$0xf]
      %v1668 = vld [vmem:[%s1640 + $0x6c] sm:$0xf]
      %v1669 = vld [vmem:[%s1640 + $0x70] sm:$0xf]
      %v1670 = vld [vmem:[%s1640 + $0x74] sm:$0xf]
      %v1671 = vld [vmem:[%s1640 + $0x78] sm:$0xf]
      %v1672 = vld [vmem:[%s1640 + $0x7c] sm:$0xf]
      %v1673 = vld [vmem:[%s1640 + $0x80] sm:$0xf]
      %v1674 = vld [vmem:[%s1640 + $0x84] sm:$0xf]
      %v1675 = vld [vmem:[%s1640 + $0x88] sm:$0xf]
      %v1676 = vld [vmem:[%s1640 + $0x8c] sm:$0xf]
      %v1677 = vld [vmem:[%s1640 + $0x90] sm:$0xf]
      %v1678 = vld [vmem:[%s1640 + $0x94] sm:$0xf]
      %v1679 = vld [vmem:[%s1640 + $0x98] sm:$0xf]
      %v1680 = vld [vmem:[%s1640 + $0x9c] sm:$0xf]
      %v1681 = vld [vmem:[%s1640 + $0xa0] sm:$0xf]
      %v1682 = vld [vmem:[%s1640 + $0xa4] sm:$0xf]
      %v1683 = vld [vmem:[%s1640 + $0xa8] sm:$0xf]
      %v1684 = vld [vmem:[%s1640 + $0xac] sm:$0xf]
      %v1685 = vld [vmem:[%s1640 + $0xb0] sm:$0xf]
      %v1686 = vld [vmem:[%s1640 + $0xb4] sm:$0xf]
      %v1687 = vld [vmem:[%s1640 + $0xb8] sm:$0xf]
      %v1688 = vld [vmem:[%s1640 + $0xbc] sm:$0xf]
      %v1689 = vld [vmem:[%s1640 + $0xc0] sm:$0xf]
      %v1690 = vld [vmem:[%s1640 + $0xc4] sm:$0xf]
      %v1691 = vld [vmem:[%s1640 + $0xc8] sm:$0xf]
      %v1692 = vld [vmem:[%s1640 + $0xcc] sm:$0xf]
      %v1693 = vld [vmem:[%s1640 + $0xd0] sm:$0xf]
      %v1694 = vld [vmem:[%s1640 + $0xd4] sm:$0xf]
      %v1695 = vld [vmem:[%s1640 + $0xd8] sm:$0xf]
      %v1696 = vld [vmem:[%s1640 + $0xdc] sm:$0xf]
      %v1697 = vld [vmem:[%s1640 + $0xe0] sm:$0xf]
      %v1698 = vld [vmem:[%s1640 + $0xe4] sm:$0xf]
      %v1699 = vld [vmem:[%s1640 + $0xe8] sm:$0xf]
      %v1700 = vld [vmem:[%s1640 + $0xec] sm:$0xf]
      %v1709 = vunpack.c.l.b16 %v1632
      %v1710 = vunpack.c.h.b16 %v1632
      %v1711 = vunpack.c.l.b16 %v1633
      %v1712 = vunpack.c.h.b16 %v1633
      %v1713 = vunpack.c.l.b16 %v1634
      %v1714 = vunpack.c.h.b16 %v1634
      %v1715 = vunpack.c.l.b16 %v1635
      %v1716 = vunpack.c.h.b16 %v1635
      %v1717 = vunpack.c.l.b16 %v1636
      %v1718 = vunpack.c.h.b16 %v1636
      %v1719 = vunpack.c.l.b16 %v1637
      %v1720 = vunpack.c.h.b16 %v1637
      %v1721 = vunpack.c.l.b16 %v1638
      %v1722 = vunpack.c.h.b16 %v1638
      %v1723 = vunpack.c.l.b16 %v1639
      %v1724 = vunpack.c.h.b16 %v1639
      %v1725 = vpack.c.b16 %v1713, %v1709
      %v1726 = vpack.c.b16 %v1714, %v1710
      %v1727 = vpack.c.b16 %v1715, %v1711
      %v1728 = vpack.c.b16 %v1716, %v1712
      %v1729 = vpack.c.b16 %v1721, %v1717
      %v1730 = vpack.c.b16 %v1722, %v1718
      %v1731 = vpack.c.b16 %v1723, %v1719
      %v1732 = vpack.c.b16 %v1724, %v1720
      %v1799 = vunpack.c.l.b16 %v1641
      %v1800 = vunpack.c.l.b16 %v1642
      %v1801 = vunpack.c.l.b16 %v1643
      %v1802 = vunpack.c.l.b16 %v1644
      %v1803 = vunpack.c.l.b16 %v1645
      %v1804 = vunpack.c.l.b16 %v1646
      %v1805 = vunpack.c.l.b16 %v1647
      %v1806 = vunpack.c.l.b16 %v1648
      %v1807 = vunpack.c.l.b16 %v1649
      %v1808 = vunpack.c.l.b16 %v1650
      %v1809 = vunpack.c.l.b16 %v1651
      %v1810 = vunpack.c.l.b16 %v1652
      %v1811 = vunpack.c.l.b16 %v1653
      %v1812 = vunpack.c.l.b16 %v1654
      %v1813 = vunpack.c.l.b16 %v1655
      %v1814 = vunpack.c.l.b16 %v1656
      %v1815 = vunpack.c.l.b16 %v1657
      %v1816 = vunpack.c.l.b16 %v1658
      %v1817 = vunpack.c.l.b16 %v1659
      %v1818 = vunpack.c.l.b16 %v1660
      %v1819 = vunpack.c.l.b16 %v1661
      %v1820 = vunpack.c.l.b16 %v1662
      %v1821 = vunpack.c.l.b16 %v1663
      %v1822 = vunpack.c.l.b16 %v1664
      %v1823 = vunpack.c.l.b16 %v1665
      %v1824 = vunpack.c.l.b16 %v1666
      %v1825 = vunpack.c.l.b16 %v1667
      %v1826 = vunpack.c.l.b16 %v1668
      %v1827 = vunpack.c.l.b16 %v1669
      %v1828 = vunpack.c.l.b16 %v1670
      %v1829 = vunpack.c.l.b16 %v1671
      %v1830 = vunpack.c.l.b16 %v1672
      %v1831 = vunpack.c.l.b16 %v1673
      %v1832 = vunpack.c.l.b16 %v1674
      %v1833 = vunpack.c.l.b16 %v1675
      %v1834 = vunpack.c.l.b16 %v1676
      %v1835 = vunpack.c.l.b16 %v1677
      %v1836 = vunpack.c.l.b16 %v1678
      %v1837 = vunpack.c.l.b16 %v1679
      %v1838 = vunpack.c.l.b16 %v1680
      %v1839 = vunpack.c.l.b16 %v1681
      %v1840 = vunpack.c.l.b16 %v1682
      %v1841 = vunpack.c.l.b16 %v1683
      %v1842 = vunpack.c.l.b16 %v1684
      %v1843 = vunpack.c.l.b16 %v1685
      %v1844 = vunpack.c.l.b16 %v1686
      %v1845 = vunpack.c.l.b16 %v1687
      %v1846 = vunpack.c.l.b16 %v1688
      %v1847 = vunpack.c.l.b16 %v1689
      %v1848 = vunpack.c.l.b16 %v1690
      %v1849 = vunpack.c.l.b16 %v1691
      %v1850 = vunpack.c.l.b16 %v1692
      %v1851 = vunpack.c.l.b16 %v1693
      %v1852 = vunpack.c.l.b16 %v1694
      %v1853 = vunpack.c.l.b16 %v1695
      %v1854 = vunpack.c.l.b16 %v1696
      %v1855 = vunpack.c.l.b16 %v1697
      %v1856 = vunpack.c.l.b16 %v1698
      %v1857 = vunpack.c.l.b16 %v1699
      %v1858 = vunpack.c.l.b16 %v1700
      %v1859 = vpack.c.b16 %v1800, %v1799
      %v1860 = vpack.c.b16 %v1802, %v1801
      %v1861 = vpack.c.b16 %v1804, %v1803
      %v1862 = vpack.c.b16 %v1806, %v1805
      %v1863 = vpack.c.b16 %v1808, %v1807
      %v1864 = vpack.c.b16 %v1810, %v1809
      %v1865 = vpack.c.b16 %v1812, %v1811
      %v1866 = vpack.c.b16 %v1814, %v1813
      %v1867 = vpack.c.b16 %v1816, %v1815
      %v1868 = vpack.c.b16 %v1818, %v1817
      %v1869 = vpack.c.b16 %v1820, %v1819
      %v1870 = vpack.c.b16 %v1822, %v1821
      %v1871 = vpack.c.b16 %v1824, %v1823
      %v1872 = vpack.c.b16 %v1826, %v1825
      %v1873 = vpack.c.b16 %v1828, %v1827
      %v1874 = vpack.c.b16 %v1830, %v1829
      %v1875 = vpack.c.b16 %v1832, %v1831
      %v1876 = vpack.c.b16 %v1834, %v1833
      %v1877 = vpack.c.b16 %v1836, %v1835
      %v1878 = vpack.c.b16 %v1838, %v1837
      %v1879 = vpack.c.b16 %v1840, %v1839
      %v1880 = vpack.c.b16 %v1842, %v1841
      %v1881 = vpack.c.b16 %v1844, %v1843
      %v1882 = vpack.c.b16 %v1846, %v1845
      %v1883 = vpack.c.b16 %v1848, %v1847
      %v1884 = vpack.c.b16 %v1850, %v1849
      %v1885 = vpack.c.b16 %v1852, %v1851
      %v1886 = vpack.c.b16 %v1854, %v1853
      %v1887 = vpack.c.b16 %v1856, %v1855
      %v1888 = vpack.c.b16 %v1858, %v1857
      %v1920 = vsel %vm676, %v1728, 0
      %v1923 = vsel %vm676, %v1732, 0
      %1925 = vmatprep.subr.bf16.mxu0 0
      %1926 = vmatpush1.bf16.msra.mxu0 %v1866
      %1927 = vmatprep.subr.bf16.mxu0 0
      %1928 = vmatpush1.bf16.msra.mxu0 %v1865
      %1929 = vmatprep.subr.bf16.mxu0 0
      %1930 = vmatpush1.bf16.msra.mxu0 %v1864
      %1931 = vmatprep.subr.bf16.mxu0 0
      %1932 = vmatpush1.bf16.msra.mxu0 %v1863
      %1933 = vmatprep.subr.bf16.mxu0 0
      %1934 = vmatpush1.bf16.msra.mxu0 %v1862
      %1935 = vmatprep.subr.bf16.mxu0 0
      %1936 = vmatpush1.bf16.msra.mxu0 %v1861
      %1937 = vmatprep.subr.bf16.mxu0 0
      %1938 = vmatpush1.bf16.msra.mxu0 %v1860
      %1939 = vmatprep.subr.bf16.mxu0 0
      %1940 = vmatpush1.bf16.msra.mxu0 %v1859
      %1941 = vmatprep.subr.bf16.mxu0 0
      %1942 = vmatpush2.bf16.msra.mxu0 %v1874
      %1943 = vmatprep.subr.bf16.mxu0 0
      %1944 = vmatpush2.bf16.msra.mxu0 %v1873
      %1945 = vmatprep.subr.bf16.mxu0 0
      %1946 = vmatpush2.bf16.msra.mxu0 %v1872
      %1947 = vmatprep.subr.bf16.mxu0 0
      %1948 = vmatpush2.bf16.msra.mxu0 %v1871
      %1949 = vmatprep.subr.bf16.mxu0 0
      %1950 = vmatpush2.bf16.msra.mxu0 %v1870
      %1951 = vmatprep.subr.bf16.mxu0 0
      %1952 = vmatpush2.bf16.msra.mxu0 %v1869
      %1953 = vmatprep.subr.bf16.mxu0 0
      %1954 = vmatpush2.bf16.msra.mxu0 %v1868
      %1955 = vmatprep.subr.bf16.mxu0 0
      %1956 = vmatpush2.bf16.msra.mxu0 %v1867
      %1957 = vmatprep.mubr.bf16.mxu0 %v1726
      %1958 = vmatmul.mubr.bf16.gmra.mxu0 %v1725
      %v1959 = vpop.f32.mrf.mxu0
      %v1960 = vadd.f32 0.0, %v1959
      %v1961 = vpop.f32.mrf.mxu0
      %v1962 = vpop.f32.mrf.mxu0
      %v1963 = vadd.f32 0.0, %v1962
      %v1964 = vpop.f32.mrf.mxu0
      %1965 = vmatprep.mubr.bf16.mxu0 %v1730
      %1966 = vmatmul.mubr.bf16.gmra.mxu0 %v1729
      %v1967 = vpop.f32.mrf.mxu0
      %v1968 = vadd.f32 0.0, %v1967
      %v1969 = vpop.f32.mrf.mxu0
      %v1970 = vpop.f32.mrf.mxu0
      %v1971 = vadd.f32 0.0, %v1970
      %v1972 = vpop.f32.mrf.mxu0
      %1973 = vdwg.mxu0
      %1974 = vmatprep.subr.bf16.mxu0 0
      %1975 = vmatpush1.bf16.msra.mxu0 %v1882
      %1976 = vmatprep.subr.bf16.mxu0 0
      %1977 = vmatpush1.bf16.msra.mxu0 %v1881
      %1978 = vmatprep.subr.bf16.mxu0 0
      %1979 = vmatpush1.bf16.msra.mxu0 %v1880
      %1980 = vmatprep.subr.bf16.mxu0 0
      %1981 = vmatpush1.bf16.msra.mxu0 %v1879
      %1982 = vmatprep.subr.bf16.mxu0 0
      %1983 = vmatpush1.bf16.msra.mxu0 %v1878
      %1984 = vmatprep.subr.bf16.mxu0 0
      %1985 = vmatpush1.bf16.msra.mxu0 %v1877
      %1986 = vmatprep.subr.bf16.mxu0 0
      %1987 = vmatpush1.bf16.msra.mxu0 %v1876
      %1988 = vmatprep.subr.bf16.mxu0 0
      %1989 = vmatpush1.bf16.msra.mxu0 %v1875
      %1990 = vmatprep.subr.bf16.mxu0 0
      %1991 = vmatpush2.bf16.msra.mxu0 0
      %1992 = vmatprep.subr.bf16.mxu0 0
      %1993 = vmatpush2.bf16.msra.mxu0 0
      %1994 = vmatprep.subr.bf16.mxu0 0
      %1995 = vmatpush2.bf16.msra.mxu0 %v1888
      %1996 = vmatprep.subr.bf16.mxu0 0
      %1997 = vmatpush2.bf16.msra.mxu0 %v1887
      %1998 = vmatprep.subr.bf16.mxu0 0
      %1999 = vmatpush2.bf16.msra.mxu0 %v1886
      %2000 = vmatprep.subr.bf16.mxu0 0
      %2001 = vmatpush2.bf16.msra.mxu0 %v1885
      %2002 = vmatprep.subr.bf16.mxu0 0
      %2003 = vmatpush2.bf16.msra.mxu0 %v1884
      %2004 = vmatprep.subr.bf16.mxu0 0
      %2005 = vmatpush2.bf16.msra.mxu0 %v1883
      %2006 = vmatprep.mubr.bf16.mxu0 %v1920
      %2007 = vmatmul.mubr.bf16.gmra.mxu0 %v1727
      %v2008 = vpop.f32.mrf.mxu0
      %v2009 = vadd.f32 %v1960, %v2008
      %v2010 = vpop.f32.mrf.mxu0
      %v2011 = vpop.f32.mrf.mxu0
      %v2012 = vadd.f32 %v1963, %v2011
      %v2013 = vpop.f32.mrf.mxu0
      %2014 = vmatprep.mubr.bf16.mxu0 %v1923
      %2015 = vmatmul.mubr.bf16.gmra.mxu0 %v1731
      %v2016 = vpop.f32.mrf.mxu0
      %v2017 = vadd.f32 %v1968, %v2016
      %v2018 = vpop.f32.mrf.mxu0
      %v2019 = vpop.f32.mrf.mxu0
      %v2020 = vadd.f32 %v1971, %v2019
      %v2021 = vpop.f32.mrf.mxu0
      %2022 = vdwg.mxu0
      %v2023 = vadd.f32 %v1617, %v2009
      %v2024 = vadd.f32 %v1620, %v2012
      %v2025 = vadd.f32 %v1625, %v2017
      %v2026 = vadd.f32 %v1628, %v2020
      %s2027 = scalar_lea.vmem [#allocation2], 48
      %v2028 = vld [vmem:[%s2027] sm:$0xff]
      %v2029 = vld [vmem:[%s2027 + $0x8] sm:$0xff]
      %v2030 = vld [vmem:[%s2027 + $0x10] sm:$0xff]
      %v2031 = vld [vmem:[%s2027 + $0x18] sm:$0xff]
      %v2032 = vld [vmem:[%s2027 + $0x20] sm:$0xff]
      %v2033 = vld [vmem:[%s2027 + $0x28] sm:$0xff]
      %v2034 = vld [vmem:[%s2027 + $0x30] sm:$0xff]
      %v2035 = vld [vmem:[%s2027 + $0x38] sm:$0xff]
      %s2036 = scalar_lea.vmem %s1, 720
      %v2037 = vld [vmem:[%s2036] sm:$0xf]
      %v2038 = vld [vmem:[%s2036 + $0x4] sm:$0xf]
      %v2039 = vld [vmem:[%s2036 + $0x8] sm:$0xf]
      %v2040 = vld [vmem:[%s2036 + $0xc] sm:$0xf]
      %v2041 = vld [vmem:[%s2036 + $0x10] sm:$0xf]
      %v2042 = vld [vmem:[%s2036 + $0x14] sm:$0xf]
      %v2043 = vld [vmem:[%s2036 + $0x18] sm:$0xf]
      %v2044 = vld [vmem:[%s2036 + $0x1c] sm:$0xf]
      %v2045 = vld [vmem:[%s2036 + $0x20] sm:$0xf]
      %v2046 = vld [vmem:[%s2036 + $0x24] sm:$0xf]
      %v2047 = vld [vmem:[%s2036 + $0x28] sm:$0xf]
      %v2048 = vld [vmem:[%s2036 + $0x2c] sm:$0xf]
      %v2049 = vld [vmem:[%s2036 + $0x30] sm:$0xf]
      %v2050 = vld [vmem:[%s2036 + $0x34] sm:$0xf]
      %v2051 = vld [vmem:[%s2036 + $0x38] sm:$0xf]
      %v2052 = vld [vmem:[%s2036 + $0x3c] sm:$0xf]
      %v2053 = vld [vmem:[%s2036 + $0x40] sm:$0xf]
      %v2054 = vld [vmem:[%s2036 + $0x44] sm:$0xf]
      %v2055 = vld [vmem:[%s2036 + $0x48] sm:$0xf]
      %v2056 = vld [vmem:[%s2036 + $0x4c] sm:$0xf]
      %v2057 = vld [vmem:[%s2036 + $0x50] sm:$0xf]
      %v2058 = vld [vmem:[%s2036 + $0x54] sm:$0xf]
      %v2059 = vld [vmem:[%s2036 + $0x58] sm:$0xf]
      %v2060 = vld [vmem:[%s2036 + $0x5c] sm:$0xf]
      %v2061 = vld [vmem:[%s2036 + $0x60] sm:$0xf]
      %v2062 = vld [vmem:[%s2036 + $0x64] sm:$0xf]
      %v2063 = vld [vmem:[%s2036 + $0x68] sm:$0xf]
      %v2064 = vld [vmem:[%s2036 + $0x6c] sm:$0xf]
      %v2065 = vld [vmem:[%s2036 + $0x70] sm:$0xf]
      %v2066 = vld [vmem:[%s2036 + $0x74] sm:$0xf]
      %v2067 = vld [vmem:[%s2036 + $0x78] sm:$0xf]
      %v2068 = vld [vmem:[%s2036 + $0x7c] sm:$0xf]
      %v2069 = vld [vmem:[%s2036 + $0x80] sm:$0xf]
      %v2070 = vld [vmem:[%s2036 + $0x84] sm:$0xf]
      %v2071 = vld [vmem:[%s2036 + $0x88] sm:$0xf]
      %v2072 = vld [vmem:[%s2036 + $0x8c] sm:$0xf]
      %v2073 = vld [vmem:[%s2036 + $0x90] sm:$0xf]
      %v2074 = vld [vmem:[%s2036 + $0x94] sm:$0xf]
      %v2075 = vld [vmem:[%s2036 + $0x98] sm:$0xf]
      %v2076 = vld [vmem:[%s2036 + $0x9c] sm:$0xf]
      %v2077 = vld [vmem:[%s2036 + $0xa0] sm:$0xf]
      %v2078 = vld [vmem:[%s2036 + $0xa4] sm:$0xf]
      %v2079 = vld [vmem:[%s2036 + $0xa8] sm:$0xf]
      %v2080 = vld [vmem:[%s2036 + $0xac] sm:$0xf]
      %v2081 = vld [vmem:[%s2036 + $0xb0] sm:$0xf]
      %v2082 = vld [vmem:[%s2036 + $0xb4] sm:$0xf]
      %v2083 = vld [vmem:[%s2036 + $0xb8] sm:$0xf]
      %v2084 = vld [vmem:[%s2036 + $0xbc] sm:$0xf]
      %v2085 = vld [vmem:[%s2036 + $0xc0] sm:$0xf]
      %v2086 = vld [vmem:[%s2036 + $0xc4] sm:$0xf]
      %v2087 = vld [vmem:[%s2036 + $0xc8] sm:$0xf]
      %v2088 = vld [vmem:[%s2036 + $0xcc] sm:$0xf]
      %v2089 = vld [vmem:[%s2036 + $0xd0] sm:$0xf]
      %v2090 = vld [vmem:[%s2036 + $0xd4] sm:$0xf]
      %v2091 = vld [vmem:[%s2036 + $0xd8] sm:$0xf]
      %v2092 = vld [vmem:[%s2036 + $0xdc] sm:$0xf]
      %v2093 = vld [vmem:[%s2036 + $0xe0] sm:$0xf]
      %v2094 = vld [vmem:[%s2036 + $0xe4] sm:$0xf]
      %v2095 = vld [vmem:[%s2036 + $0xe8] sm:$0xf]
      %v2096 = vld [vmem:[%s2036 + $0xec] sm:$0xf]
      %v2105 = vunpack.c.l.b16 %v2028
      %v2106 = vunpack.c.h.b16 %v2028
      %v2107 = vunpack.c.l.b16 %v2029
      %v2108 = vunpack.c.h.b16 %v2029
      %v2109 = vunpack.c.l.b16 %v2030
      %v2110 = vunpack.c.h.b16 %v2030
      %v2111 = vunpack.c.l.b16 %v2031
      %v2112 = vunpack.c.h.b16 %v2031
      %v2113 = vunpack.c.l.b16 %v2032
      %v2114 = vunpack.c.h.b16 %v2032
      %v2115 = vunpack.c.l.b16 %v2033
      %v2116 = vunpack.c.h.b16 %v2033
      %v2117 = vunpack.c.l.b16 %v2034
      %v2118 = vunpack.c.h.b16 %v2034
      %v2119 = vunpack.c.l.b16 %v2035
      %v2120 = vunpack.c.h.b16 %v2035
      %v2121 = vpack.c.b16 %v2109, %v2105
      %v2122 = vpack.c.b16 %v2110, %v2106
      %v2123 = vpack.c.b16 %v2111, %v2107
      %v2124 = vpack.c.b16 %v2112, %v2108
      %v2125 = vpack.c.b16 %v2117, %v2113
      %v2126 = vpack.c.b16 %v2118, %v2114
      %v2127 = vpack.c.b16 %v2119, %v2115
      %v2128 = vpack.c.b16 %v2120, %v2116
      %v2195 = vunpack.c.l.b16 %v2037
      %v2196 = vunpack.c.l.b16 %v2038
      %v2197 = vunpack.c.l.b16 %v2039
      %v2198 = vunpack.c.l.b16 %v2040
      %v2199 = vunpack.c.l.b16 %v2041
      %v2200 = vunpack.c.l.b16 %v2042
      %v2201 = vunpack.c.l.b16 %v2043
      %v2202 = vunpack.c.l.b16 %v2044
      %v2203 = vunpack.c.l.b16 %v2045
      %v2204 = vunpack.c.l.b16 %v2046
      %v2205 = vunpack.c.l.b16 %v2047
      %v2206 = vunpack.c.l.b16 %v2048
      %v2207 = vunpack.c.l.b16 %v2049
      %v2208 = vunpack.c.l.b16 %v2050
      %v2209 = vunpack.c.l.b16 %v2051
      %v2210 = vunpack.c.l.b16 %v2052
      %v2211 = vunpack.c.l.b16 %v2053
      %v2212 = vunpack.c.l.b16 %v2054
      %v2213 = vunpack.c.l.b16 %v2055
      %v2214 = vunpack.c.l.b16 %v2056
      %v2215 = vunpack.c.l.b16 %v2057
      %v2216 = vunpack.c.l.b16 %v2058
      %v2217 = vunpack.c.l.b16 %v2059
      %v2218 = vunpack.c.l.b16 %v2060
      %v2219 = vunpack.c.l.b16 %v2061
      %v2220 = vunpack.c.l.b16 %v2062
      %v2221 = vunpack.c.l.b16 %v2063
      %v2222 = vunpack.c.l.b16 %v2064
      %v2223 = vunpack.c.l.b16 %v2065
      %v2224 = vunpack.c.l.b16 %v2066
      %v2225 = vunpack.c.l.b16 %v2067
      %v2226 = vunpack.c.l.b16 %v2068
      %v2227 = vunpack.c.l.b16 %v2069
      %v2228 = vunpack.c.l.b16 %v2070
      %v2229 = vunpack.c.l.b16 %v2071
      %v2230 = vunpack.c.l.b16 %v2072
      %v2231 = vunpack.c.l.b16 %v2073
      %v2232 = vunpack.c.l.b16 %v2074
      %v2233 = vunpack.c.l.b16 %v2075
      %v2234 = vunpack.c.l.b16 %v2076
      %v2235 = vunpack.c.l.b16 %v2077
      %v2236 = vunpack.c.l.b16 %v2078
      %v2237 = vunpack.c.l.b16 %v2079
      %v2238 = vunpack.c.l.b16 %v2080
      %v2239 = vunpack.c.l.b16 %v2081
      %v2240 = vunpack.c.l.b16 %v2082
      %v2241 = vunpack.c.l.b16 %v2083
      %v2242 = vunpack.c.l.b16 %v2084
      %v2243 = vunpack.c.l.b16 %v2085
      %v2244 = vunpack.c.l.b16 %v2086
      %v2245 = vunpack.c.l.b16 %v2087
      %v2246 = vunpack.c.l.b16 %v2088
      %v2247 = vunpack.c.l.b16 %v2089
      %v2248 = vunpack.c.l.b16 %v2090
      %v2249 = vunpack.c.l.b16 %v2091
      %v2250 = vunpack.c.l.b16 %v2092
      %v2251 = vunpack.c.l.b16 %v2093
      %v2252 = vunpack.c.l.b16 %v2094
      %v2253 = vunpack.c.l.b16 %v2095
      %v2254 = vunpack.c.l.b16 %v2096
      %v2255 = vpack.c.b16 %v2196, %v2195
      %v2256 = vpack.c.b16 %v2198, %v2197
      %v2257 = vpack.c.b16 %v2200, %v2199
      %v2258 = vpack.c.b16 %v2202, %v2201
      %v2259 = vpack.c.b16 %v2204, %v2203
      %v2260 = vpack.c.b16 %v2206, %v2205
      %v2261 = vpack.c.b16 %v2208, %v2207
      %v2262 = vpack.c.b16 %v2210, %v2209
      %v2263 = vpack.c.b16 %v2212, %v2211
      %v2264 = vpack.c.b16 %v2214, %v2213
      %v2265 = vpack.c.b16 %v2216, %v2215
      %v2266 = vpack.c.b16 %v2218, %v2217
      %v2267 = vpack.c.b16 %v2220, %v2219
      %v2268 = vpack.c.b16 %v2222, %v2221
      %v2269 = vpack.c.b16 %v2224, %v2223
      %v2270 = vpack.c.b16 %v2226, %v2225
      %v2271 = vpack.c.b16 %v2228, %v2227
      %v2272 = vpack.c.b16 %v2230, %v2229
      %v2273 = vpack.c.b16 %v2232, %v2231
      %v2274 = vpack.c.b16 %v2234, %v2233
      %v2275 = vpack.c.b16 %v2236, %v2235
      %v2276 = vpack.c.b16 %v2238, %v2237
      %v2277 = vpack.c.b16 %v2240, %v2239
      %v2278 = vpack.c.b16 %v2242, %v2241
      %v2279 = vpack.c.b16 %v2244, %v2243
      %v2280 = vpack.c.b16 %v2246, %v2245
      %v2281 = vpack.c.b16 %v2248, %v2247
      %v2282 = vpack.c.b16 %v2250, %v2249
      %v2283 = vpack.c.b16 %v2252, %v2251
      %v2284 = vpack.c.b16 %v2254, %v2253
      %v2316 = vsel %vm676, %v2124, 0
      %v2319 = vsel %vm676, %v2128, 0
      %2321 = vmatprep.subr.bf16.mxu0 0
      %2322 = vmatpush1.bf16.msra.mxu0 %v2262
      %2323 = vmatprep.subr.bf16.mxu0 0
      %2324 = vmatpush1.bf16.msra.mxu0 %v2261
      %2325 = vmatprep.subr.bf16.mxu0 0
      %2326 = vmatpush1.bf16.msra.mxu0 %v2260
      %2327 = vmatprep.subr.bf16.mxu0 0
      %2328 = vmatpush1.bf16.msra.mxu0 %v2259
      %2329 = vmatprep.subr.bf16.mxu0 0
      %2330 = vmatpush1.bf16.msra.mxu0 %v2258
      %2331 = vmatprep.subr.bf16.mxu0 0
      %2332 = vmatpush1.bf16.msra.mxu0 %v2257
      %2333 = vmatprep.subr.bf16.mxu0 0
      %2334 = vmatpush1.bf16.msra.mxu0 %v2256
      %2335 = vmatprep.subr.bf16.mxu0 0
      %2336 = vmatpush1.bf16.msra.mxu0 %v2255
      %2337 = vmatprep.subr.bf16.mxu0 0
      %2338 = vmatpush2.bf16.msra.mxu0 %v2270
      %2339 = vmatprep.subr.bf16.mxu0 0
      %2340 = vmatpush2.bf16.msra.mxu0 %v2269
      %2341 = vmatprep.subr.bf16.mxu0 0
      %2342 = vmatpush2.bf16.msra.mxu0 %v2268
      %2343 = vmatprep.subr.bf16.mxu0 0
      %2344 = vmatpush2.bf16.msra.mxu0 %v2267
      %2345 = vmatprep.subr.bf16.mxu0 0
      %2346 = vmatpush2.bf16.msra.mxu0 %v2266
      %2347 = vmatprep.subr.bf16.mxu0 0
      %2348 = vmatpush2.bf16.msra.mxu0 %v2265
      %2349 = vmatprep.subr.bf16.mxu0 0
      %2350 = vmatpush2.bf16.msra.mxu0 %v2264
      %2351 = vmatprep.subr.bf16.mxu0 0
      %2352 = vmatpush2.bf16.msra.mxu0 %v2263
      %2353 = vmatprep.mubr.bf16.mxu0 %v2122
      %2354 = vmatmul.mubr.bf16.gmra.mxu0 %v2121
      %v2355 = vpop.f32.mrf.mxu0
      %v2356 = vadd.f32 0.0, %v2355
      %v2357 = vpop.f32.mrf.mxu0
      %v2358 = vpop.f32.mrf.mxu0
      %v2359 = vadd.f32 0.0, %v2358
      %v2360 = vpop.f32.mrf.mxu0
      %2361 = vmatprep.mubr.bf16.mxu0 %v2126
      %2362 = vmatmul.mubr.bf16.gmra.mxu0 %v2125
      %v2363 = vpop.f32.mrf.mxu0
      %v2364 = vadd.f32 0.0, %v2363
      %v2365 = vpop.f32.mrf.mxu0
      %v2366 = vpop.f32.mrf.mxu0
      %v2367 = vadd.f32 0.0, %v2366
      %v2368 = vpop.f32.mrf.mxu0
      %2369 = vdwg.mxu0
      %2370 = vmatprep.subr.bf16.mxu0 0
      %2371 = vmatpush1.bf16.msra.mxu0 %v2278
      %2372 = vmatprep.subr.bf16.mxu0 0
      %2373 = vmatpush1.bf16.msra.mxu0 %v2277
      %2374 = vmatprep.subr.bf16.mxu0 0
      %2375 = vmatpush1.bf16.msra.mxu0 %v2276
      %2376 = vmatprep.subr.bf16.mxu0 0
      %2377 = vmatpush1.bf16.msra.mxu0 %v2275
      %2378 = vmatprep.subr.bf16.mxu0 0
      %2379 = vmatpush1.bf16.msra.mxu0 %v2274
      %2380 = vmatprep.subr.bf16.mxu0 0
      %2381 = vmatpush1.bf16.msra.mxu0 %v2273
      %2382 = vmatprep.subr.bf16.mxu0 0
      %2383 = vmatpush1.bf16.msra.mxu0 %v2272
      %2384 = vmatprep.subr.bf16.mxu0 0
      %2385 = vmatpush1.bf16.msra.mxu0 %v2271
      %2386 = vmatprep.subr.bf16.mxu0 0
      %2387 = vmatpush2.bf16.msra.mxu0 0
      %2388 = vmatprep.subr.bf16.mxu0 0
      %2389 = vmatpush2.bf16.msra.mxu0 0
      %2390 = vmatprep.subr.bf16.mxu0 0
      %2391 = vmatpush2.bf16.msra.mxu0 %v2284
      %2392 = vmatprep.subr.bf16.mxu0 0
      %2393 = vmatpush2.bf16.msra.mxu0 %v2283
      %2394 = vmatprep.subr.bf16.mxu0 0
      %2395 = vmatpush2.bf16.msra.mxu0 %v2282
      %2396 = vmatprep.subr.bf16.mxu0 0
      %2397 = vmatpush2.bf16.msra.mxu0 %v2281
      %2398 = vmatprep.subr.bf16.mxu0 0
      %2399 = vmatpush2.bf16.msra.mxu0 %v2280
      %2400 = vmatprep.subr.bf16.mxu0 0
      %2401 = vmatpush2.bf16.msra.mxu0 %v2279
      %2402 = vmatprep.mubr.bf16.mxu0 %v2316
      %2403 = vmatmul.mubr.bf16.gmra.mxu0 %v2123
      %v2404 = vpop.f32.mrf.mxu0
      %v2405 = vadd.f32 %v2356, %v2404
      %v2406 = vpop.f32.mrf.mxu0
      %v2407 = vpop.f32.mrf.mxu0
      %v2408 = vadd.f32 %v2359, %v2407
      %v2409 = vpop.f32.mrf.mxu0
      %2410 = vmatprep.mubr.bf16.mxu0 %v2319
      %2411 = vmatmul.mubr.bf16.gmra.mxu0 %v2127
      %v2412 = vpop.f32.mrf.mxu0
      %v2413 = vadd.f32 %v2364, %v2412
      %v2414 = vpop.f32.mrf.mxu0
      %v2415 = vpop.f32.mrf.mxu0
      %v2416 = vadd.f32 %v2367, %v2415
      %v2417 = vpop.f32.mrf.mxu0
      %2418 = vdwg.mxu0
      %v2419 = vadd.f32 %v2023, %v2405
      %v2420 = vadd.f32 %v2024, %v2408
      %v2421 = vadd.f32 %v2025, %v2413
      %v2422 = vadd.f32 %v2026, %v2416
      %s2423 = scalar_lea.vmem [#allocation2], 64
      %v2424 = vld [vmem:[%s2423] sm:$0xff]
      %v2425 = vld [vmem:[%s2423 + $0x8] sm:$0xff]
      %v2426 = vld [vmem:[%s2423 + $0x10] sm:$0xff]
      %v2427 = vld [vmem:[%s2423 + $0x18] sm:$0xff]
      %v2428 = vld [vmem:[%s2423 + $0x20] sm:$0xff]
      %v2429 = vld [vmem:[%s2423 + $0x28] sm:$0xff]
      %v2430 = vld [vmem:[%s2423 + $0x30] sm:$0xff]
      %v2431 = vld [vmem:[%s2423 + $0x38] sm:$0xff]
      %s2432 = scalar_lea.vmem %s1, 960
      %v2433 = vld [vmem:[%s2432] sm:$0xf]
      %v2434 = vld [vmem:[%s2432 + $0x4] sm:$0xf]
      %v2435 = vld [vmem:[%s2432 + $0x8] sm:$0xf]
      %v2436 = vld [vmem:[%s2432 + $0xc] sm:$0xf]
      %v2437 = vld [vmem:[%s2432 + $0x10] sm:$0xf]
      %v2438 = vld [vmem:[%s2432 + $0x14] sm:$0xf]
      %v2439 = vld [vmem:[%s2432 + $0x18] sm:$0xf]
      %v2440 = vld [vmem:[%s2432 + $0x1c] sm:$0xf]
      %v2441 = vld [vmem:[%s2432 + $0x20] sm:$0xf]
      %v2442 = vld [vmem:[%s2432 + $0x24] sm:$0xf]
      %v2443 = vld [vmem:[%s2432 + $0x28] sm:$0xf]
      %v2444 = vld [vmem:[%s2432 + $0x2c] sm:$0xf]
      %v2445 = vld [vmem:[%s2432 + $0x30] sm:$0xf]
      %v2446 = vld [vmem:[%s2432 + $0x34] sm:$0xf]
      %v2447 = vld [vmem:[%s2432 + $0x38] sm:$0xf]
      %v2448 = vld [vmem:[%s2432 + $0x3c] sm:$0xf]
      %v2449 = vld [vmem:[%s2432 + $0x40] sm:$0xf]
      %v2450 = vld [vmem:[%s2432 + $0x44] sm:$0xf]
      %v2451 = vld [vmem:[%s2432 + $0x48] sm:$0xf]
      %v2452 = vld [vmem:[%s2432 + $0x4c] sm:$0xf]
      %v2453 = vld [vmem:[%s2432 + $0x50] sm:$0xf]
      %v2454 = vld [vmem:[%s2432 + $0x54] sm:$0xf]
      %v2455 = vld [vmem:[%s2432 + $0x58] sm:$0xf]
      %v2456 = vld [vmem:[%s2432 + $0x5c] sm:$0xf]
      %v2457 = vld [vmem:[%s2432 + $0x60] sm:$0xf]
      %v2458 = vld [vmem:[%s2432 + $0x64] sm:$0xf]
      %v2459 = vld [vmem:[%s2432 + $0x68] sm:$0xf]
      %v2460 = vld [vmem:[%s2432 + $0x6c] sm:$0xf]
      %v2461 = vld [vmem:[%s2432 + $0x70] sm:$0xf]
      %v2462 = vld [vmem:[%s2432 + $0x74] sm:$0xf]
      %v2463 = vld [vmem:[%s2432 + $0x78] sm:$0xf]
      %v2464 = vld [vmem:[%s2432 + $0x7c] sm:$0xf]
      %v2465 = vld [vmem:[%s2432 + $0x80] sm:$0xf]
      %v2466 = vld [vmem:[%s2432 + $0x84] sm:$0xf]
      %v2467 = vld [vmem:[%s2432 + $0x88] sm:$0xf]
      %v2468 = vld [vmem:[%s2432 + $0x8c] sm:$0xf]
      %v2469 = vld [vmem:[%s2432 + $0x90] sm:$0xf]
      %v2470 = vld [vmem:[%s2432 + $0x94] sm:$0xf]
      %v2471 = vld [vmem:[%s2432 + $0x98] sm:$0xf]
      %v2472 = vld [vmem:[%s2432 + $0x9c] sm:$0xf]
      %v2473 = vld [vmem:[%s2432 + $0xa0] sm:$0xf]
      %v2474 = vld [vmem:[%s2432 + $0xa4] sm:$0xf]
      %v2475 = vld [vmem:[%s2432 + $0xa8] sm:$0xf]
      %v2476 = vld [vmem:[%s2432 + $0xac] sm:$0xf]
      %v2477 = vld [vmem:[%s2432 + $0xb0] sm:$0xf]
      %v2478 = vld [vmem:[%s2432 + $0xb4] sm:$0xf]
      %v2479 = vld [vmem:[%s2432 + $0xb8] sm:$0xf]
      %v2480 = vld [vmem:[%s2432 + $0xbc] sm:$0xf]
      %v2481 = vld [vmem:[%s2432 + $0xc0] sm:$0xf]
      %v2482 = vld [vmem:[%s2432 + $0xc4] sm:$0xf]
      %v2483 = vld [vmem:[%s2432 + $0xc8] sm:$0xf]
      %v2484 = vld [vmem:[%s2432 + $0xcc] sm:$0xf]
      %v2485 = vld [vmem:[%s2432 + $0xd0] sm:$0xf]
      %v2486 = vld [vmem:[%s2432 + $0xd4] sm:$0xf]
      %v2487 = vld [vmem:[%s2432 + $0xd8] sm:$0xf]
      %v2488 = vld [vmem:[%s2432 + $0xdc] sm:$0xf]
      %v2489 = vld [vmem:[%s2432 + $0xe0] sm:$0xf]
      %v2490 = vld [vmem:[%s2432 + $0xe4] sm:$0xf]
      %v2491 = vld [vmem:[%s2432 + $0xe8] sm:$0xf]
      %v2492 = vld [vmem:[%s2432 + $0xec] sm:$0xf]
      %v2501 = vunpack.c.l.b16 %v2424
      %v2502 = vunpack.c.h.b16 %v2424
      %v2503 = vunpack.c.l.b16 %v2425
      %v2504 = vunpack.c.h.b16 %v2425
      %v2505 = vunpack.c.l.b16 %v2426
      %v2506 = vunpack.c.h.b16 %v2426
      %v2507 = vunpack.c.l.b16 %v2427
      %v2508 = vunpack.c.h.b16 %v2427
      %v2509 = vunpack.c.l.b16 %v2428
      %v2510 = vunpack.c.h.b16 %v2428
      %v2511 = vunpack.c.l.b16 %v2429
      %v2512 = vunpack.c.h.b16 %v2429
      %v2513 = vunpack.c.l.b16 %v2430
      %v2514 = vunpack.c.h.b16 %v2430
      %v2515 = vunpack.c.l.b16 %v2431
      %v2516 = vunpack.c.h.b16 %v2431
      %v2517 = vpack.c.b16 %v2505, %v2501
      %v2518 = vpack.c.b16 %v2506, %v2502
      %v2519 = vpack.c.b16 %v2507, %v2503
      %v2520 = vpack.c.b16 %v2508, %v2504
      %v2521 = vpack.c.b16 %v2513, %v2509
      %v2522 = vpack.c.b16 %v2514, %v2510
      %v2523 = vpack.c.b16 %v2515, %v2511
      %v2524 = vpack.c.b16 %v2516, %v2512
      %v2591 = vunpack.c.l.b16 %v2433
      %v2592 = vunpack.c.l.b16 %v2434
      %v2593 = vunpack.c.l.b16 %v2435
      %v2594 = vunpack.c.l.b16 %v2436
      %v2595 = vunpack.c.l.b16 %v2437
      %v2596 = vunpack.c.l.b16 %v2438
      %v2597 = vunpack.c.l.b16 %v2439
      %v2598 = vunpack.c.l.b16 %v2440
      %v2599 = vunpack.c.l.b16 %v2441
      %v2600 = vunpack.c.l.b16 %v2442
      %v2601 = vunpack.c.l.b16 %v2443
      %v2602 = vunpack.c.l.b16 %v2444
      %v2603 = vunpack.c.l.b16 %v2445
      %v2604 = vunpack.c.l.b16 %v2446
      %v2605 = vunpack.c.l.b16 %v2447
      %v2606 = vunpack.c.l.b16 %v2448
      %v2607 = vunpack.c.l.b16 %v2449
      %v2608 = vunpack.c.l.b16 %v2450
      %v2609 = vunpack.c.l.b16 %v2451
      %v2610 = vunpack.c.l.b16 %v2452
      %v2611 = vunpack.c.l.b16 %v2453
      %v2612 = vunpack.c.l.b16 %v2454
      %v2613 = vunpack.c.l.b16 %v2455
      %v2614 = vunpack.c.l.b16 %v2456
      %v2615 = vunpack.c.l.b16 %v2457
      %v2616 = vunpack.c.l.b16 %v2458
      %v2617 = vunpack.c.l.b16 %v2459
      %v2618 = vunpack.c.l.b16 %v2460
      %v2619 = vunpack.c.l.b16 %v2461
      %v2620 = vunpack.c.l.b16 %v2462
      %v2621 = vunpack.c.l.b16 %v2463
      %v2622 = vunpack.c.l.b16 %v2464
      %v2623 = vunpack.c.l.b16 %v2465
      %v2624 = vunpack.c.l.b16 %v2466
      %v2625 = vunpack.c.l.b16 %v2467
      %v2626 = vunpack.c.l.b16 %v2468
      %v2627 = vunpack.c.l.b16 %v2469
      %v2628 = vunpack.c.l.b16 %v2470
      %v2629 = vunpack.c.l.b16 %v2471
      %v2630 = vunpack.c.l.b16 %v2472
      %v2631 = vunpack.c.l.b16 %v2473
      %v2632 = vunpack.c.l.b16 %v2474
      %v2633 = vunpack.c.l.b16 %v2475
      %v2634 = vunpack.c.l.b16 %v2476
      %v2635 = vunpack.c.l.b16 %v2477
      %v2636 = vunpack.c.l.b16 %v2478
      %v2637 = vunpack.c.l.b16 %v2479
      %v2638 = vunpack.c.l.b16 %v2480
      %v2639 = vunpack.c.l.b16 %v2481
      %v2640 = vunpack.c.l.b16 %v2482
      %v2641 = vunpack.c.l.b16 %v2483
      %v2642 = vunpack.c.l.b16 %v2484
      %v2643 = vunpack.c.l.b16 %v2485
      %v2644 = vunpack.c.l.b16 %v2486
      %v2645 = vunpack.c.l.b16 %v2487
      %v2646 = vunpack.c.l.b16 %v2488
      %v2647 = vunpack.c.l.b16 %v2489
      %v2648 = vunpack.c.l.b16 %v2490
      %v2649 = vunpack.c.l.b16 %v2491
      %v2650 = vunpack.c.l.b16 %v2492
      %v2651 = vpack.c.b16 %v2592, %v2591
      %v2652 = vpack.c.b16 %v2594, %v2593
      %v2653 = vpack.c.b16 %v2596, %v2595
      %v2654 = vpack.c.b16 %v2598, %v2597
      %v2655 = vpack.c.b16 %v2600, %v2599
      %v2656 = vpack.c.b16 %v2602, %v2601
      %v2657 = vpack.c.b16 %v2604, %v2603
      %v2658 = vpack.c.b16 %v2606, %v2605
      %v2659 = vpack.c.b16 %v2608, %v2607
      %v2660 = vpack.c.b16 %v2610, %v2609
      %v2661 = vpack.c.b16 %v2612, %v2611
      %v2662 = vpack.c.b16 %v2614, %v2613
      %v2663 = vpack.c.b16 %v2616, %v2615
      %v2664 = vpack.c.b16 %v2618, %v2617
      %v2665 = vpack.c.b16 %v2620, %v2619
      %v2666 = vpack.c.b16 %v2622, %v2621
      %v2667 = vpack.c.b16 %v2624, %v2623
      %v2668 = vpack.c.b16 %v2626, %v2625
      %v2669 = vpack.c.b16 %v2628, %v2627
      %v2670 = vpack.c.b16 %v2630, %v2629
      %v2671 = vpack.c.b16 %v2632, %v2631
      %v2672 = vpack.c.b16 %v2634, %v2633
      %v2673 = vpack.c.b16 %v2636, %v2635
      %v2674 = vpack.c.b16 %v2638, %v2637
      %v2675 = vpack.c.b16 %v2640, %v2639
      %v2676 = vpack.c.b16 %v2642, %v2641
      %v2677 = vpack.c.b16 %v2644, %v2643
      %v2678 = vpack.c.b16 %v2646, %v2645
      %v2679 = vpack.c.b16 %v2648, %v2647
      %v2680 = vpack.c.b16 %v2650, %v2649
      %v2712 = vsel %vm676, %v2520, 0
      %v2715 = vsel %vm676, %v2524, 0
      %2717 = vmatprep.subr.bf16.mxu0 0
      %2718 = vmatpush1.bf16.msra.mxu0 %v2658
      %2719 = vmatprep.subr.bf16.mxu0 0
      %2720 = vmatpush1.bf16.msra.mxu0 %v2657
      %2721 = vmatprep.subr.bf16.mxu0 0
      %2722 = vmatpush1.bf16.msra.mxu0 %v2656
      %2723 = vmatprep.subr.bf16.mxu0 0
      %2724 = vmatpush1.bf16.msra.mxu0 %v2655
      %2725 = vmatprep.subr.bf16.mxu0 0
      %2726 = vmatpush1.bf16.msra.mxu0 %v2654
      %2727 = vmatprep.subr.bf16.mxu0 0
      %2728 = vmatpush1.bf16.msra.mxu0 %v2653
      %2729 = vmatprep.subr.bf16.mxu0 0
      %2730 = vmatpush1.bf16.msra.mxu0 %v2652
      %2731 = vmatprep.subr.bf16.mxu0 0
      %2732 = vmatpush1.bf16.msra.mxu0 %v2651
      %2733 = vmatprep.subr.bf16.mxu0 0
      %2734 = vmatpush2.bf16.msra.mxu0 %v2666
      %2735 = vmatprep.subr.bf16.mxu0 0
      %2736 = vmatpush2.bf16.msra.mxu0 %v2665
      %2737 = vmatprep.subr.bf16.mxu0 0
      %2738 = vmatpush2.bf16.msra.mxu0 %v2664
      %2739 = vmatprep.subr.bf16.mxu0 0
      %2740 = vmatpush2.bf16.msra.mxu0 %v2663
      %2741 = vmatprep.subr.bf16.mxu0 0
      %2742 = vmatpush2.bf16.msra.mxu0 %v2662
      %2743 = vmatprep.subr.bf16.mxu0 0
      %2744 = vmatpush2.bf16.msra.mxu0 %v2661
      %2745 = vmatprep.subr.bf16.mxu0 0
      %2746 = vmatpush2.bf16.msra.mxu0 %v2660
      %2747 = vmatprep.subr.bf16.mxu0 0
      %2748 = vmatpush2.bf16.msra.mxu0 %v2659
      %2749 = vmatprep.mubr.bf16.mxu0 %v2518
      %2750 = vmatmul.mubr.bf16.gmra.mxu0 %v2517
      %v2751 = vpop.f32.mrf.mxu0
      %v2752 = vadd.f32 0.0, %v2751
      %v2753 = vpop.f32.mrf.mxu0
      %v2754 = vpop.f32.mrf.mxu0
      %v2755 = vadd.f32 0.0, %v2754
      %v2756 = vpop.f32.mrf.mxu0
      %2757 = vmatprep.mubr.bf16.mxu0 %v2522
      %2758 = vmatmul.mubr.bf16.gmra.mxu0 %v2521
      %v2759 = vpop.f32.mrf.mxu0
      %v2760 = vadd.f32 0.0, %v2759
      %v2761 = vpop.f32.mrf.mxu0
      %v2762 = vpop.f32.mrf.mxu0
      %v2763 = vadd.f32 0.0, %v2762
      %v2764 = vpop.f32.mrf.mxu0
      %2765 = vdwg.mxu0
      %2766 = vmatprep.subr.bf16.mxu0 0
      %2767 = vmatpush1.bf16.msra.mxu0 %v2674
      %2768 = vmatprep.subr.bf16.mxu0 0
      %2769 = vmatpush1.bf16.msra.mxu0 %v2673
      %2770 = vmatprep.subr.bf16.mxu0 0
      %2771 = vmatpush1.bf16.msra.mxu0 %v2672
      %2772 = vmatprep.subr.bf16.mxu0 0
      %2773 = vmatpush1.bf16.msra.mxu0 %v2671
      %2774 = vmatprep.subr.bf16.mxu0 0
      %2775 = vmatpush1.bf16.msra.mxu0 %v2670
      %2776 = vmatprep.subr.bf16.mxu0 0
      %2777 = vmatpush1.bf16.msra.mxu0 %v2669
      %2778 = vmatprep.subr.bf16.mxu0 0
      %2779 = vmatpush1.bf16.msra.mxu0 %v2668
      %2780 = vmatprep.subr.bf16.mxu0 0
      %2781 = vmatpush1.bf16.msra.mxu0 %v2667
      %2782 = vmatprep.subr.bf16.mxu0 0
      %2783 = vmatpush2.bf16.msra.mxu0 0
      %2784 = vmatprep.subr.bf16.mxu0 0
      %2785 = vmatpush2.bf16.msra.mxu0 0
      %2786 = vmatprep.subr.bf16.mxu0 0
      %2787 = vmatpush2.bf16.msra.mxu0 %v2680
      %2788 = vmatprep.subr.bf16.mxu0 0
      %2789 = vmatpush2.bf16.msra.mxu0 %v2679
      %2790 = vmatprep.subr.bf16.mxu0 0
      %2791 = vmatpush2.bf16.msra.mxu0 %v2678
      %2792 = vmatprep.subr.bf16.mxu0 0
      %2793 = vmatpush2.bf16.msra.mxu0 %v2677
      %2794 = vmatprep.subr.bf16.mxu0 0
      %2795 = vmatpush2.bf16.msra.mxu0 %v2676
      %2796 = vmatprep.subr.bf16.mxu0 0
      %2797 = vmatpush2.bf16.msra.mxu0 %v2675
      %2798 = vmatprep.mubr.bf16.mxu0 %v2712
      %2799 = vmatmul.mubr.bf16.gmra.mxu0 %v2519
      %v2800 = vpop.f32.mrf.mxu0
      %v2801 = vadd.f32 %v2752, %v2800
      %v2802 = vpop.f32.mrf.mxu0
      %v2803 = vpop.f32.mrf.mxu0
      %v2804 = vadd.f32 %v2755, %v2803
      %v2805 = vpop.f32.mrf.mxu0
      %2806 = vmatprep.mubr.bf16.mxu0 %v2715
      %2807 = vmatmul.mubr.bf16.gmra.mxu0 %v2523
      %v2808 = vpop.f32.mrf.mxu0
      %v2809 = vadd.f32 %v2760, %v2808
      %v2810 = vpop.f32.mrf.mxu0
      %v2811 = vpop.f32.mrf.mxu0
      %v2812 = vadd.f32 %v2763, %v2811
      %v2813 = vpop.f32.mrf.mxu0
      %2814 = vdwg.mxu0
      %v2815 = vadd.f32 %v2419, %v2801
      %v2816 = vadd.f32 %v2420, %v2804
      %v2817 = vadd.f32 %v2421, %v2809
      %v2818 = vadd.f32 %v2422, %v2812
      %v2819 = vld [vmem:[%s2] sm:$0x1]
      %v2821 = vlaneseq
      %v2822 = vshrl.u32 %v2821, 7
      %v2823 = vsub.s32 0, %v2822
      %v2824 = vrot.slane %v2819, %v2823
      %v2826 = vadd.f32 %v2815, %v2824
      %v2827 = vadd.f32 %v2816, %v2824
      %v2828 = vadd.f32 %v2817, %v2824
      %v2829 = vadd.f32 %v2818, %v2824
      %v2830 = vpack.c.bf16 %v2827, %v2826
      %v2831 = vpack.c.bf16 %v2829, %v2828
      %v2834 = vunpack.c.l.b16 %v2830
      %v2835 = vunpack.c.h.b16 %v2830
      %v2836 = vunpack.c.l.b16 %v2831
      %v2837 = vunpack.c.h.b16 %v2831
      %v2838 = vpack.c.b16 %v2834, %v2834
      %v2839 = vpack.c.b16 %v2835, %v2835
      %v2840 = vpack.c.b16 %v2836, %v2836
      %v2841 = vpack.c.b16 %v2837, %v2837
      %vm2846 = vcmask 519168
      %2847 = vst.msk [vmem:[%s417] sm:$0xf] %vm2846, %v2838
      %2848 = vst.msk [vmem:[%s417 + $0x4] sm:$0xf] %vm2846, %v2839
      %2849 = vst.msk [vmem:[%s417 + $0x8] sm:$0xf] %vm2846, %v2840
      %2850 = vst.msk [vmem:[%s417 + $0xc] sm:$0xf] %vm2846, %v2841
      %v2851 = vsel %vm685, %v2826, 0.0
      %v2852 = vsel %vm685, %v2827, 0.0
      %v2853 = vadd.f32 %v2851, %v2852
      %v2854 = vsel %vm685, %v2828, 0.0
      %v2855 = vadd.f32 %v2853, %v2854
      %v2856 = vsel %vm685, %v2829, 0.0
      %v2857 = vadd.f32 %v2855, %v2856
      %v2858 = vrot.slane %v2857, 4
      %v2859 = vadd.f32 %v2857, %v2858
      %v2860 = vrot.slane %v2859, 2
      %v2861 = vadd.f32 %v2859, %v2860
      %v2862 = vrot.slane %v2861, 1
      %v2863 = vadd.f32 %v2861, %v2862
      %vm2864 = vcmask 516096
      %2865 = vst.msk [vmem:[%s425] sm:$0x1] %vm2864, %v2863
      %v2866 = vmul.f32 %v2826, %v2826
      %v2867 = vmul.f32 %v2827, %v2827
      %v2868 = vmul.f32 %v2828, %v2828
      %v2869 = vmul.f32 %v2829, %v2829
      %v2870 = vsel %vm685, %v2866, 0.0
      %v2871 = vsel %vm685, %v2867, 0.0
      %v2872 = vadd.f32 %v2870, %v2871
      %v2873 = vsel %vm685, %v2868, 0.0
      %v2874 = vadd.f32 %v2872, %v2873
      %v2875 = vsel %vm685, %v2869, 0.0
      %v2876 = vadd.f32 %v2874, %v2875
      %v2877 = vrot.slane %v2876, 4
      %v2878 = vadd.f32 %v2876, %v2877
      %v2879 = vrot.slane %v2878, 2
      %v2880 = vadd.f32 %v2878, %v2879
      %v2881 = vrot.slane %v2880, 1
      %v2882 = vadd.f32 %v2880, %v2881
      %2883 = vst.msk [vmem:[%s432] sm:$0x1] %vm2864, %v2882
      %v2888 = vpack.c.bf16 %v557, %v554
      %v2889 = vpack.c.bf16 %v563, %v560
      %v2890 = vld [vmem:[%s3] sm:$0xf]
      %v2891 = vld [vmem:[%s3 + $0x4] sm:$0xf]
      %v2892 = vld [vmem:[%s3 + $0x8] sm:$0xf]
      %v2893 = vld [vmem:[%s3 + $0xc] sm:$0xf]
      %v2894 = vld [vmem:[%s3 + $0x10] sm:$0xf]
      %v2895 = vld [vmem:[%s3 + $0x14] sm:$0xf]
      %v2896 = vld [vmem:[%s3 + $0x18] sm:$0xf]
      %v2897 = vld [vmem:[%s3 + $0x1c] sm:$0xf]
      %v2898 = vld [vmem:[%s3 + $0x20] sm:$0xf]
      %v2899 = vld [vmem:[%s3 + $0x24] sm:$0xf]
      %v2900 = vld [vmem:[%s3 + $0x28] sm:$0xf]
      %v2901 = vld [vmem:[%s3 + $0x2c] sm:$0xf]
      %v2902 = vld [vmem:[%s4] sm:$0x1]
      %v2904 = vlaneseq
      %v2905 = vshrl.u32 %v2904, 7
      %v2906 = vsub.s32 0, %v2905
      %v2907 = vrot.slane %v2902, %v2906
      %v2921 = vunpack.c.l.b16 %v2890
      %v2922 = vunpack.c.l.b16 %v2891
      %v2923 = vunpack.c.l.b16 %v2892
      %v2924 = vunpack.c.l.b16 %v2893
      %v2925 = vunpack.c.l.b16 %v2894
      %v2926 = vunpack.c.l.b16 %v2895
      %v2927 = vunpack.c.l.b16 %v2896
      %v2928 = vunpack.c.l.b16 %v2897
      %v2929 = vunpack.c.l.b16 %v2898
      %v2930 = vunpack.c.l.b16 %v2899
      %v2931 = vunpack.c.l.b16 %v2900
      %v2932 = vunpack.c.l.b16 %v2901
      %v2933 = vpack.c.b16 %v2922, %v2921
      %v2934 = vpack.c.b16 %v2924, %v2923
      %v2935 = vpack.c.b16 %v2926, %v2925
      %v2936 = vpack.c.b16 %v2928, %v2927
      %v2937 = vpack.c.b16 %v2930, %v2929
      %v2938 = vpack.c.b16 %v2932, %v2931
      %v2946 = vsel %vm676, %v2888, 0
      %v2949 = vsel %vm676, %v2889, 0
      %2951 = vmatprep.subr.bf16.mxu0 0
      %2952 = vmatpush1.bf16.msra.mxu0 0
      %2953 = vmatprep.subr.bf16.mxu0 0
      %2954 = vmatpush1.bf16.msra.mxu0 0
      %2955 = vmatprep.subr.bf16.mxu0 0
      %2956 = vmatpush1.bf16.msra.mxu0 %v2938
      %2957 = vmatprep.subr.bf16.mxu0 0
      %2958 = vmatpush1.bf16.msra.mxu0 %v2937
      %2959 = vmatprep.subr.bf16.mxu0 0
      %2960 = vmatpush1.bf16.msra.mxu0 %v2936
      %2961 = vmatprep.subr.bf16.mxu0 0
      %2962 = vmatpush1.bf16.msra.mxu0 %v2935
      %2963 = vmatprep.subr.bf16.mxu0 0
      %2964 = vmatpush1.bf16.msra.mxu0 %v2934
      %2965 = vmatprep.subr.bf16.mxu0 0
      %2966 = vmatpush1.bf16.msra.mxu0 %v2933
      %2967 = vmatprep.subr.bf16.mxu0 0
      %2968 = vmatpush2.bf16.msra.mxu0 0
      %2969 = vmatprep.subr.bf16.mxu0 0
      %2970 = vmatpush2.bf16.msra.mxu0 0
      %2971 = vmatprep.subr.bf16.mxu0 0
      %2972 = vmatpush2.bf16.msra.mxu0 0
      %2973 = vmatprep.subr.bf16.mxu0 0
      %2974 = vmatpush2.bf16.msra.mxu0 0
      %2975 = vmatprep.subr.bf16.mxu0 0
      %2976 = vmatpush2.bf16.msra.mxu0 0
      %2977 = vmatprep.subr.bf16.mxu0 0
      %2978 = vmatpush2.bf16.msra.mxu0 0
      %2979 = vmatprep.subr.bf16.mxu0 0
      %2980 = vmatpush2.bf16.msra.mxu0 0
      %2981 = vmatprep.subr.bf16.mxu0 0
      %2982 = vmatpush2.bf16.msra.mxu0 0
      %2983 = vmatprep.mubr.bf16.mxu0 0
      %2984 = vmatmul.mubr.bf16.gmra.mxu0 %v2946
      %v2985 = vpop.f32.mrf.mxu0
      %v2986 = vadd.f32 %v2907, %v2985
      %v2987 = vpop.f32.mrf.mxu0
      %v2988 = vpop.f32.mrf.mxu0
      %v2989 = vadd.f32 %v2907, %v2988
      %v2990 = vpop.f32.mrf.mxu0
      %2991 = vmatprep.mubr.bf16.mxu0 0
      %2992 = vmatmul.mubr.bf16.gmra.mxu0 %v2949
      %v2993 = vpop.f32.mrf.mxu0
      %v2994 = vadd.f32 %v2907, %v2993
      %v2995 = vpop.f32.mrf.mxu0
      %v2996 = vpop.f32.mrf.mxu0
      %v2997 = vadd.f32 %v2907, %v2996
      %v2998 = vpop.f32.mrf.mxu0
      %2999 = vdwg.mxu0
      %v3000 = vld [vmem:[%s5] sm:$0x1]
      %v3002 = vlaneseq
      %v3003 = vshrl.u32 %v3002, 7
      %v3004 = vsub.s32 0, %v3003
      %v3005 = vrot.slane %v3000, %v3004
      %v3007 = vmul.f32 %v2986, %v3005
      %v3008 = vmul.f32 %v2989, %v3005
      %v3009 = vmul.f32 %v2994, %v3005
      %v3010 = vmul.f32 %v2997, %v3005
      %v3011 = vld [vmem:[%s6] sm:$0x1]
      %v3013 = vlaneseq
      %v3014 = vshrl.u32 %v3013, 7
      %v3015 = vsub.s32 0, %v3014
      %v3016 = vrot.slane %v3011, %v3015
      %v3018 = vadd.f32 %v3007, %v3016
      %v3019 = vadd.f32 %v3008, %v3016
      %v3020 = vadd.f32 %v3009, %v3016
      %v3021 = vadd.f32 %v3010, %v3016
      %v3022 = vmul.f32 %v3018, 0.5
      %v3023 = vmul.f32 %v3019, 0.5
      %v3024 = vmul.f32 %v3020, 0.5
      %v3025 = vmul.f32 %v3021, 0.5
      %v3026 = vmul.f32 %v3018, 0.70710677
      %v3027 = vmul.f32 %v3019, 0.70710677
      %v3028 = vmul.f32 %v3020, 0.70710677
      %v3029 = vmul.f32 %v3021, 0.70710677
      %v3030 = vand.u32 2147483647, %v3026
      %v3031 = vand.u32 2147483647, %v3027
      %v3032 = vand.u32 2147483647, %v3028
      %v3033 = vand.u32 2147483647, %v3029
      %v3034 = vmul.f32 %v3030, 0.3275911
      %v3035 = vmul.f32 %v3031, 0.3275911
      %v3036 = vmul.f32 %v3032, 0.3275911
      %v3037 = vmul.f32 %v3033, 0.3275911
      %v3038 = vadd.f32 %v3034, 1.0
      %v3039 = vadd.f32 %v3035, 1.0
      %v3040 = vadd.f32 %v3036, 1.0
      %v3041 = vadd.f32 %v3037, 1.0
      %v3042 = vrcp.pop %v3038
      %v3043 = vmul.f32 1.0, %v3042
      %v3044 = vrcp.pop %v3039
      %v3045 = vmul.f32 1.0, %v3044
      %v3046 = vrcp.pop %v3040
      %v3047 = vmul.f32 1.0, %v3046
      %v3048 = vrcp.pop %v3041
      %v3049 = vmul.f32 1.0, %v3048
      %v3050 = vmul.f32 %v3043, 1.0614054
      %v3051 = vmul.f32 %v3045, 1.0614054
      %v3052 = vmul.f32 %v3047, 1.0614054
      %v3053 = vmul.f32 %v3049, 1.0614054
      %v3054 = vadd.f32 %v3050, -1.4531521
      %v3055 = vadd.f32 %v3051, -1.4531521
      %v3056 = vadd.f32 %v3052, -1.4531521
      %v3057 = vadd.f32 %v3053, -1.4531521
      %v3058 = vmul.f32 %v3054, %v3043
      %v3059 = vmul.f32 %v3055, %v3045
      %v3060 = vmul.f32 %v3056, %v3047
      %v3061 = vmul.f32 %v3057, %v3049
      %v3062 = vadd.f32 %v3058, 1.4214138
      %v3063 = vadd.f32 %v3059, 1.4214138
      %v3064 = vadd.f32 %v3060, 1.4214138
      %v3065 = vadd.f32 %v3061, 1.4214138
      %v3066 = vmul.f32 %v3062, %v3043
      %v3067 = vmul.f32 %v3063, %v3045
      %v3068 = vmul.f32 %v3064, %v3047
      %v3069 = vmul.f32 %v3065, %v3049
      %v3070 = vadd.f32 %v3066, -0.28449672
      %v3071 = vadd.f32 %v3067, -0.28449672
      %v3072 = vadd.f32 %v3068, -0.28449672
      %v3073 = vadd.f32 %v3069, -0.28449672
      %v3074 = vmul.f32 %v3070, %v3043
      %v3075 = vmul.f32 %v3071, %v3045
      %v3076 = vmul.f32 %v3072, %v3047
      %v3077 = vmul.f32 %v3073, %v3049
      %v3078 = vadd.f32 %v3074, 0.2548296
      %v3079 = vadd.f32 %v3075, 0.2548296
      %v3080 = vadd.f32 %v3076, 0.2548296
      %v3081 = vadd.f32 %v3077, 0.2548296
      %v3082 = vmul.f32 %v3078, %v3043
      %v3083 = vmul.f32 %v3079, %v3045
      %v3084 = vmul.f32 %v3080, %v3047
      %v3085 = vmul.f32 %v3081, %v3049
      %v3086 = vsub.f32 0.0, %v3030
      %v3087 = vsub.f32 0.0, %v3031
      %v3088 = vsub.f32 0.0, %v3032
      %v3089 = vsub.f32 0.0, %v3033
      %v3090 = vmul.f32 %v3086, %v3030
      %v3091 = vmul.f32 %v3087, %v3031
      %v3092 = vmul.f32 %v3088, %v3032
      %v3093 = vmul.f32 %v3089, %v3033
      %v3094 = vmul.f32 %v3090, 1.442695
      %v3095 = vpow.pop %v3094
      %v3096 = vmul.f32 %v3091, 1.442695
      %v3097 = vpow.pop %v3096
      %v3098 = vmul.f32 %v3092, 1.442695
      %v3099 = vpow.pop %v3098
      %v3100 = vmul.f32 %v3093, 1.442695
      %v3101 = vpow.pop %v3100
      %v3102 = vmul.f32 %v3082, %v3095
      %v3103 = vmul.f32 %v3083, %v3097
      %v3104 = vmul.f32 %v3084, %v3099
      %v3105 = vmul.f32 %v3085, %v3101
      %v3106 = vsub.f32 1.0, %v3102
      %v3107 = vsub.f32 1.0, %v3103
      %v3108 = vsub.f32 1.0, %v3104
      %v3109 = vsub.f32 1.0, %v3105
      %vm3110 = vcmp.ge.f32.partialorder %v3026, 0.0
      %vm3111 = vcmp.ge.f32.partialorder %v3027, 0.0
      %vm3112 = vcmp.ge.f32.partialorder %v3028, 0.0
      %vm3113 = vcmp.ge.f32.partialorder %v3029, 0.0
      %v3114 = vsub.f32 0.0, %v3106
      %v3115 = vsub.f32 0.0, %v3107
      %v3116 = vsub.f32 0.0, %v3108
      %v3117 = vsub.f32 0.0, %v3109
      %v3118 = vsel %vm3110, %v3106, %v3114
      %v3119 = vsel %vm3111, %v3107, %v3115
      %v3120 = vsel %vm3112, %v3108, %v3116
      %v3121 = vsel %vm3113, %v3109, %v3117
      %v3122 = vadd.f32 %v3118, 1.0
      %v3123 = vadd.f32 %v3119, 1.0
      %v3124 = vadd.f32 %v3120, 1.0
      %v3125 = vadd.f32 %v3121, 1.0
      %v3126 = vmul.f32 %v3022, %v3122
      %v3127 = vmul.f32 %v3023, %v3123
      %v3128 = vmul.f32 %v3024, %v3124
      %v3129 = vmul.f32 %v3025, %v3125
      %3130 = vst.msk [vmem:[%s441] sm:$0xff] %vm685, %v3126
      %3131 = vst.msk [vmem:[%s441 + $0x8] sm:$0xff] %vm685, %v3127
      %3132 = vst.msk [vmem:[%s441 + $0x10] sm:$0xff] %vm685, %v3128
      %3133 = vst.msk [vmem:[%s441 + $0x18] sm:$0xff] %vm685, %v3129
      %s3134 = smul.u32 4, %s27
      %p3135 = scmp.lt.s32.totalorder %s26, 1
      %s3136 = scalar_select %p3135, %s26, 1
      %p3137 = scmp.lt.s32.totalorder %s3134, 7
      %s3138 = scalar_select %p3137, %s3134, 7
      %s3139 = smul.addr %s3136, 8
      %s3140 = sadd.s32 %s3138, %s3139
      %s3141 = smul.addr %s3140, 4
      %s3142 = scalar_lea.vmem %s7, %s3141
      %p3143 = scmp.lt.s32.totalorder %s26, 1
      %s3144 = scalar_select %p3143, %s26, 1
      %p3145 = scmp.lt.s32.totalorder %s27, 1
      %s3146 = scalar_select %p3145, %s27, 1
      %s3147 = smul.addr %s3144, 2
      %s3148 = sadd.s32 %s3146, %s3147
      %s3149 = scalar_lea.vmem %s8, %s3148
      %p3150 = scmp.lt.s32.totalorder %s26, 1
      %s3151 = scalar_select %p3150, %s26, 1
      %p3152 = scmp.lt.s32.totalorder %s27, 1
      %s3153 = scalar_select %p3152, %s27, 1
      %s3154 = smul.addr %s3151, 2
      %s3155 = sadd.s32 %s3153, %s3154
      %s3156 = scalar_lea.vmem %s9, %s3155
      %s3157 = smul.u32 4, %s27
      %p3158 = scmp.lt.s32.totalorder %s26, 1
      %s3159 = scalar_select %p3158, %s26, 1
      %p3160 = scmp.lt.s32.totalorder %s3157, 7
      %s3161 = scalar_select %p3160, %s3157, 7
      %s3162 = smul.addr %s3159, 8
      %s3163 = sadd.s32 %s3161, %s3162
      %s3164 = smul.addr %s3163, 8
      %s3165 = scalar_lea.vmem %s10, %s3164
      // Predicated region
      $region49: #{decoder_block_forward.6} parent=47 // pred_check
        %p3166 = pneg %p206
      $region50: #{decoder_block_forward.6} parent=47 // pred_check_branch
        %3168 = sbr.rel (%p3166) target = $region52
      $region51: #{decoder_block_forward.6} parent=47 // pred_region
        %s3169 = smul.u32 4, %s27
      $region52: #{decoder_block_forward.6} parent=47 // pred_fallthru
        _
      // Predicated region
      $region53: #{decoder_block_forward.6} parent=47 // pred_check
        %p3170 = pneg %p234
      $region54: #{decoder_block_forward.6} parent=47 // pred_check_branch
        %3172 = sbr.rel (%p3170) target = $region56
      $region55: #{decoder_block_forward.6} parent=47 // pred_region
        _
      $region56: #{decoder_block_forward.6} parent=47 // pred_fallthru
        _
      // Predicated region
      $region57: #{decoder_block_forward.6} parent=47 // pred_check
        %p3173 = pneg %p262
      $region58: #{decoder_block_forward.6} parent=47 // pred_check_branch
        %3175 = sbr.rel (%p3173) target = $region60
      $region59: #{decoder_block_forward.6} parent=47 // pred_region
        _
      $region60: #{decoder_block_forward.6} parent=47 // pred_fallthru
        _
      // Predicated region
      $region61: #{decoder_block_forward.6} parent=47 // pred_check
        %p3176 = pneg %p290
      $region62: #{decoder_block_forward.6} parent=47 // pred_check_branch
        %3178 = sbr.rel (%p3176) target = $region64
      $region63: #{decoder_block_forward.6} parent=47 // pred_region
        %s3179 = smul.u32 4, %s27
      $region64: #{decoder_block_forward.6} parent=47 // pred_fallthru
        _
    $region48: #{decoder_block_forward.6} parent=5 // pred_fallthru
      _
    %p3180 = scmp.le.s32.totalorder 2, %s17
    // Predicated region
    $region65: #{decoder_block_forward.6} parent=5 // pred_check
      %p3181 = pneg %p3180
    $region66: #{decoder_block_forward.6} parent=5 // pred_check_branch
      %3183 = sbr.rel (%p3181) target = $region68
    $region67: #{decoder_block_forward.6} parent=5 // pred_region
      %s3184 = ssub.s32 %s17, 2
      // Predicated region
      $region69: #{decoder_block_forward.6} parent=67 // pred_check
        %p3185 = pneg %p212
      $region70: #{decoder_block_forward.6} parent=67 // pred_check_branch
        %3187 = sbr.rel (%p3185) target = $region72
      $region71: #{decoder_block_forward.6} parent=67 // pred_region
        %s3188 = smul.u32 4, %s29
        %p3189 = scmp.lt.s32.totalorder %s28, 1
        %s3190 = scalar_select %p3189, %s28, 1
        %p3191 = scmp.lt.s32.totalorder %s3188, 7
        %s3192 = scalar_select %p3191, %s3188, 7
        %s3193 = smul.addr %s3190, 8
        %s3194 = sadd.s32 %s3192, %s3193
        %s3195 = smul.addr %s3194, 4
        %s3196 = scalar_lea.vmem %s7, %s3195
      $region72: #{decoder_block_forward.6} parent=67 // pred_fallthru
        _
      // Predicated region
      $region73: #{decoder_block_forward.6} parent=67 // pred_check
        %p3197 = pneg %p240
      $region74: #{decoder_block_forward.6} parent=67 // pred_check_branch
        %3199 = sbr.rel (%p3197) target = $region76
      $region75: #{decoder_block_forward.6} parent=67 // pred_region
        %p3200 = scmp.lt.s32.totalorder %s28, 1
        %s3201 = scalar_select %p3200, %s28, 1
        %p3202 = scmp.lt.s32.totalorder %s29, 1
        %s3203 = scalar_select %p3202, %s29, 1
        %s3204 = smul.addr %s3201, 2
        %s3205 = sadd.s32 %s3203, %s3204
        %s3206 = scalar_lea.vmem %s8, %s3205
      $region76: #{decoder_block_forward.6} parent=67 // pred_fallthru
        _
      // Predicated region
      $region77: #{decoder_block_forward.6} parent=67 // pred_check
        %p3207 = pneg %p268
      $region78: #{decoder_block_forward.6} parent=67 // pred_check_branch
        %3209 = sbr.rel (%p3207) target = $region80
      $region79: #{decoder_block_forward.6} parent=67 // pred_region
        %p3210 = scmp.lt.s32.totalorder %s28, 1
        %s3211 = scalar_select %p3210, %s28, 1
        %p3212 = scmp.lt.s32.totalorder %s29, 1
        %s3213 = scalar_select %p3212, %s29, 1
        %s3214 = smul.addr %s3211, 2
        %s3215 = sadd.s32 %s3213, %s3214
        %s3216 = scalar_lea.vmem %s9, %s3215
      $region80: #{decoder_block_forward.6} parent=67 // pred_fallthru
        _
      // Predicated region
      $region81: #{decoder_block_forward.6} parent=67 // pred_check
        %p3217 = pneg %p296
      $region82: #{decoder_block_forward.6} parent=67 // pred_check_branch
        %3219 = sbr.rel (%p3217) target = $region84
      $region83: #{decoder_block_forward.6} parent=67 // pred_region
        %s3220 = smul.u32 4, %s29
        %p3221 = scmp.lt.s32.totalorder %s28, 1
        %s3222 = scalar_select %p3221, %s28, 1
        %p3223 = scmp.lt.s32.totalorder %s3220, 7
        %s3224 = scalar_select %p3223, %s3220, 7
        %s3225 = smul.addr %s3222, 8
        %s3226 = sadd.s32 %s3224, %s3225
        %s3227 = smul.addr %s3226, 8
        %s3228 = scalar_lea.vmem %s10, %s3227
      $region84: #{decoder_block_forward.6} parent=67 // pred_fallthru
        _
    $region68: #{decoder_block_forward.6} parent=5 // pred_fallthru
      _
  $region6: #{decoder_block_forward.6} parent=0 // loop_footer
    %s21 = sadd.s32 1, %s17
  $region7: #{decoder_block_forward.6} parent=0 // loop_footer_branch
    %16 = sbr.rel target = $region3
  $region8: #{decoder_block_forward.6} parent=0 // loop_exit
    _

// kernel: decoder_block_forward.8
$region0: #{decoder_block_forward.8}
  #allocation0 [shape = 'u32[]', space=smem, size = 0x4, offset = 0x4, fixed_abs, tag = 'smem constant byte address 0x4 - core index']
  #allocation1 [shape = 'u32[144,128]{1,0:T(1,128)}', space=vmem, size = 0x12000, scoped, tag = 'internal scratch']
  #allocation2 [shape = 'bf16[8,8,480]{2,1,0:T(8,128)(2,1)}', space=vmem, size = 0x10000, scoped, tag = 'scratch operand']
  %s0 = inlined_call_operand.vmem [shape: bf16[2,12,12,96], index: 0, kind: input, shape index: {}]
  %s1 = inlined_call_operand.vmem [shape: bf16[5,480,64], index: 1, kind: input, shape index: {}]
  %s2 = inlined_call_operand.vmem [shape: f32[1,64], index: 2, kind: input, shape index: {}]
  %s3 = inlined_call_operand.vmem [shape: bf16[2,64,64], index: 3, kind: output, shape index: {0}]
  %s4 = inlined_call_operand.vmem [shape: f32[2,2,1,64], index: 4, kind: output, shape index: {1}]
  %s5 = inlined_call_operand.vmem [shape: f32[2,2,1,64], index: 5, kind: output, shape index: {2}]
  %6 = xla_tuple %s3, %s4, %s5
  %s7 = sld [smem:[#allocation0]]
  $region61: #{decoder_block_forward.8} parent=0
    _
  %s9 = ssub.s32 1, %s7
  %s10 = scalar_select 0, %s9, %s7
  loop: start=0, step=1, limit=6
  $region2: #{decoder_block_forward.8} parent=0 // loop_pre_header
    _
  $region3: #{decoder_block_forward.8} parent=0 // loop_header
    %s12 = sphi 0, %s16
    %p13 = scmp.ge.s32.totalorder %s12, 6
    %s19 = sphi 0, %s31
    %s20 = sphi 0, %s27
    %s21 = sphi 0, %s19
    %s22 = sphi 0, %s20
    %s23 = sphi 0, %s21
    %s24 = sphi 0, %s22
    %s34 = sphi 0, %s36
    %s37 = sphi 0, %s34
    %s38 = sphi 0, %s37
    %s54 = sphi 0, %s38
    %s58 = sphi 0, %s58
    %s60 = sphi 0, %s58
    %s61 = sphi 0, %s60
    %s75 = sphi 0, %s61
    %s79 = sphi 0, %s79
    %s81 = sphi 0, %s79
    %s82 = sphi 0, %s81
    %s96 = sphi 0, %s82
    %s104 = sphi 0, %s106
    %s107 = sphi 0, %s104
    %s108 = sphi 0, %s107
    %s124 = sphi 0, %s108
    %s132 = sphi 0, %s134
    %s135 = sphi 0, %s132
    %s136 = sphi 0, %s135
    %s152 = sphi 0, %s136
    %s160 = sphi 0, %s162
    %s163 = sphi 0, %s160
    %s164 = sphi 0, %s163
    %s180 = sphi 0, %s164
  $region4: #{decoder_block_forward.8} parent=0 // loop_header_branch
    %15 = sbr.rel (%p13) target = $region8
  $region5: #{decoder_block_forward.8} parent=0 // loop_body
    %s17 = ssub.s32 %s12, 1
    %s18 = ssub.s32 %s12, 2
    %s25 = sadd.s32 1, %s20
    %p26 = scmp.ge.s32.totalorder %s25, 2
    %s27 = scalar_select %p26, 0, %s25
    %s28 = sadd.s32 1, %s19
    %s29 = scalar_select %p26, %s28, %s19
    %p30 = scmp.ge.s32.totalorder %s29, 2
    %s31 = scalar_select %p30, 0, %s29
    %s32 = ssub.s32 %s19, %s31
    %p33 = scmp.eq.s32.totalorder %s32, 0
    %s35 = sadd.s32 %s34, 1
    %s36 = scalar_select %p33, %s34, %s35
    %p39 = pneg %p33
    %p40 = scmp.eq.s32.totalorder %s12, 3
    %p41 = por %p39, %p40
    %p42 = scmp.ne.s32.totalorder %s34, %s37
    %p43 = scmp.eq.s32.totalorder %s12, 0
    %p44 = por %p42, %p43
    %p45 = scmp.ne.s32.totalorder %s34, %s37
    %p46 = scmp.eq.s32.totalorder %s17, 3
    %p47 = por %p45, %p46
    %p48 = scmp.ne.s32.totalorder %s37, %s38
    %p49 = scmp.eq.s32.totalorder %s17, 0
    %p50 = por %p48, %p49
    %p51 = scmp.ne.s32.totalorder %s37, %s38
    %p52 = scmp.eq.s32.totalorder %s18, 3
    %p53 = por %p51, %p52
    %p55 = scmp.ne.s32.totalorder %s38, %s54
    %p56 = scmp.eq.s32.totalorder %s18, 0
    %p57 = por %p55, %p56
    %s59 = sadd.s32 %s58, 1
    %p62 = scmp.eq.s32.totalorder %s12, 3
    %p63 = scmp.ne.s32.totalorder %s58, %s60
    %p64 = scmp.eq.s32.totalorder %s12, 0
    %p65 = por %p63, %p64
    %p66 = scmp.ne.s32.totalorder %s58, %s60
    %p67 = scmp.eq.s32.totalorder %s17, 3
    %p68 = por %p66, %p67
    %p69 = scmp.ne.s32.totalorder %s60, %s61
    %p70 = scmp.eq.s32.totalorder %s17, 0
    %p71 = por %p69, %p70
    %p72 = scmp.ne.s32.totalorder %s60, %s61
    %p73 = scmp.eq.s32.totalorder %s18, 3
    %p74 = por %p72, %p73
    %p76 = scmp.ne.s32.totalorder %s61, %s75
    %p77 = scmp.eq.s32.totalorder %s18, 0
    %p78 = por %p76, %p77
    %s80 = sadd.s32 %s79, 1
    %p83 = scmp.eq.s32.totalorder %s12, 3
    %p84 = scmp.ne.s32.totalorder %s79, %s81
    %p85 = scmp.eq.s32.totalorder %s12, 0
    %p86 = por %p84, %p85
    %p87 = scmp.ne.s32.totalorder %s79, %s81
    %p88 = scmp.eq.s32.totalorder %s17, 3
    %p89 = por %p87, %p88
    %p90 = scmp.ne.s32.totalorder %s81, %s82
    %p91 = scmp.eq.s32.totalorder %s17, 0
    %p92 = por %p90, %p91
    %p93 = scmp.ne.s32.totalorder %s81, %s82
    %p94 = scmp.eq.s32.totalorder %s18, 3
    %p95 = por %p93, %p94
    %p97 = scmp.ne.s32.totalorder %s82, %s96
    %p98 = scmp.eq.s32.totalorder %s18, 0
    %p99 = por %p97, %p98
    %s100 = ssub.s32 %s19, %s31
    %s101 = ssub.s32 %s20, %s27
    %s102 = sor.u32 %s100, %s101
    %p103 = scmp.eq.s32.totalorder %s102, 0
    %s105 = sadd.s32 %s104, 1
    %s106 = scalar_select %p103, %s104, %s105
    %p109 = pneg %p103
    %p110 = scmp.eq.s32.totalorder %s12, 3
    %p111 = por %p109, %p110
    %p112 = scmp.ne.s32.totalorder %s104, %s107
    %p113 = scmp.eq.s32.totalorder %s12, 0
    %p114 = por %p112, %p113
    %p115 = scmp.ne.s32.totalorder %s104, %s107
    %p116 = scmp.eq.s32.totalorder %s17, 3
    %p117 = por %p115, %p116
    %p118 = scmp.ne.s32.totalorder %s107, %s108
    %p119 = scmp.eq.s32.totalorder %s17, 0
    %p120 = por %p118, %p119
    %p121 = scmp.ne.s32.totalorder %s107, %s108
    %p122 = scmp.eq.s32.totalorder %s18, 3
    %p123 = por %p121, %p122
    %p125 = scmp.ne.s32.totalorder %s108, %s124
    %p126 = scmp.eq.s32.totalorder %s18, 0
    %p127 = por %p125, %p126
    %s128 = ssub.s32 %s19, %s31
    %s129 = ssub.s32 %s20, %s27
    %s130 = sor.u32 %s128, %s129
    %p131 = scmp.eq.s32.totalorder %s130, 0
    %s133 = sadd.s32 %s132, 1
    %s134 = scalar_select %p131, %s132, %s133
    %p137 = pneg %p131
    %p138 = scmp.eq.s32.totalorder %s12, 3
    %p139 = por %p137, %p138
    %p140 = scmp.ne.s32.totalorder %s132, %s135
    %p141 = scmp.eq.s32.totalorder %s12, 0
    %p142 = por %p140, %p141
    %p143 = scmp.ne.s32.totalorder %s132, %s135
    %p144 = scmp.eq.s32.totalorder %s17, 3
    %p145 = por %p143, %p144
    %p146 = scmp.ne.s32.totalorder %s135, %s136
    %p147 = scmp.eq.s32.totalorder %s17, 0
    %p148 = por %p146, %p147
    %p149 = scmp.ne.s32.totalorder %s135, %s136
    %p150 = scmp.eq.s32.totalorder %s18, 3
    %p151 = por %p149, %p150
    %p153 = scmp.ne.s32.totalorder %s136, %s152
    %p154 = scmp.eq.s32.totalorder %s18, 0
    %p155 = por %p153, %p154
    %s156 = ssub.s32 %s19, %s31
    %s157 = ssub.s32 %s20, %s27
    %s158 = sor.u32 %s156, %s157
    %p159 = scmp.eq.s32.totalorder %s158, 0
    %s161 = sadd.s32 %s160, 1
    %s162 = scalar_select %p159, %s160, %s161
    %p165 = pneg %p159
    %p166 = scmp.eq.s32.totalorder %s12, 3
    %p167 = por %p165, %p166
    %p168 = scmp.ne.s32.totalorder %s160, %s163
    %p169 = scmp.eq.s32.totalorder %s12, 0
    %p170 = por %p168, %p169
    %p171 = scmp.ne.s32.totalorder %s160, %s163
    %p172 = scmp.eq.s32.totalorder %s17, 3
    %p173 = por %p171, %p172
    %p174 = scmp.ne.s32.totalorder %s163, %s164
    %p175 = scmp.eq.s32.totalorder %s17, 0
    %p176 = por %p174, %p175
    %p177 = scmp.ne.s32.totalorder %s163, %s164
    %p178 = scmp.eq.s32.totalorder %s18, 3
    %p179 = por %p177, %p178
    %p181 = scmp.ne.s32.totalorder %s164, %s180
    %p182 = scmp.eq.s32.totalorder %s18, 0
    %p183 = por %p181, %p182
    %p184 = scmp.le.s32.totalorder 1, %s12
    %p185 = scmp.lt.s32.totalorder %s12, 5
    %p186 = pnand %p184, %p185
    %p187 = pneg %p186
    // Predicated region
    $region9: #{decoder_block_forward.8} parent=5 // pred_check
      _
    $region10: #{decoder_block_forward.8} parent=5 // pred_check_branch
      %189 = sbr.rel (%p186) target = $region12
    $region11: #{decoder_block_forward.8} parent=5 // pred_region
      %s190 = ssub.s32 %s12, 1
      // Predicated region
      $region13: #{decoder_block_forward.8} parent=11 // pred_check
        %p191 = pneg %p71
      $region14: #{decoder_block_forward.8} parent=11 // pred_check_branch
        %193 = sbr.rel (%p191) target = $region16
      $region15: #{decoder_block_forward.8} parent=11 // pred_region
        _
      $region16: #{decoder_block_forward.8} parent=11 // pred_fallthru
        _
      // Predicated region
      $region17: #{decoder_block_forward.8} parent=11 // pred_check
        %p194 = pneg %p92
      $region18: #{decoder_block_forward.8} parent=11 // pred_check_branch
        %196 = sbr.rel (%p194) target = $region20
      $region19: #{decoder_block_forward.8} parent=11 // pred_region
        _
      $region20: #{decoder_block_forward.8} parent=11 // pred_fallthru
        _
    $region12: #{decoder_block_forward.8} parent=5 // pred_fallthru
      _
    %p197 = scmp.lt.s32.totalorder %s12, 4
    // Predicated region
    $region21: #{decoder_block_forward.8} parent=5 // pred_check
      %p198 = pneg %p197
    $region22: #{decoder_block_forward.8} parent=5 // pred_check_branch
      %200 = sbr.rel (%p198) target = $region24
    $region23: #{decoder_block_forward.8} parent=5 // pred_region
      // Predicated region
      $region25: #{decoder_block_forward.8} parent=23 // pred_check
        %p201 = pneg %p44
      $region26: #{decoder_block_forward.8} parent=23 // pred_check_branch
        %203 = sbr.rel (%p201) target = $region28
      $region27: #{decoder_block_forward.8} parent=23 // pred_region
        %p204 = scmp.lt.s32.totalorder %s19, 1
        %s205 = scalar_select %p204, %s19, 1
        %s206 = smul.addr %s205, 24
        %s207 = smul.addr %s206, 4
        %s208 = scalar_lea.vmem %s0, %s207
      $region28: #{decoder_block_forward.8} parent=23 // pred_fallthru
        _
    $region24: #{decoder_block_forward.8} parent=5 // pred_fallthru
      _
    %p209 = scmp.le.s32.totalorder 1, %s12
    %p210 = scmp.lt.s32.totalorder %s12, 5
    %p211 = pnand %p209, %p210
    %p212 = pneg %p211
    // Predicated region
    $region29: #{decoder_block_forward.8} parent=5 // pred_check
      _
    $region30: #{decoder_block_forward.8} parent=5 // pred_check_branch
      %214 = sbr.rel (%p211) target = $region32
    $region31: #{decoder_block_forward.8} parent=5 // pred_region
      %s215 = ssub.s32 %s12, 1
      %p216 = scmp.lt.s32.totalorder %s21, 1
      %s217 = scalar_select %p216, %s21, 1
      %s218 = smul.addr %s217, 24
      %s219 = smul.addr %s218, 4
      %s220 = scalar_lea.vmem %s0, %s219
      %p221 = pneg %p50
      %p222 = pneg %p47
      %p223 = pneg %p71
      %p224 = pneg %p68
      %p225 = pneg %p92
      %p226 = pneg %p89
      %p227 = pneg %p120
      %p228 = pneg %p117
      %s229 = smul.u32 4, %s22
      %p230 = scmp.lt.s32.totalorder %s21, 1
      %s231 = scalar_select %p230, %s21, 1
      %p232 = scmp.lt.s32.totalorder %s229, 7
      %s233 = scalar_select %p232, %s229, 7
      %s234 = smul.addr %s231, 8
      %s235 = sadd.s32 %s233, %s234
      %s236 = smul.addr %s235, 4
      %s237 = scalar_lea.vmem %s3, %s236
      %p238 = pneg %p148
      %p239 = pneg %p145
      %p240 = scmp.lt.s32.totalorder %s21, 1
      %s241 = scalar_select %p240, %s21, 1
      %p242 = scmp.lt.s32.totalorder %s22, 1
      %s243 = scalar_select %p242, %s22, 1
      %s244 = smul.addr %s241, 2
      %s245 = sadd.s32 %s243, %s244
      %s246 = scalar_lea.vmem %s4, %s245
      %p247 = pneg %p176
      %p248 = pneg %p173
      %p249 = scmp.lt.s32.totalorder %s21, 1
      %s250 = scalar_select %p249, %s21, 1
      %p251 = scmp.lt.s32.totalorder %s22, 1
      %s252 = scalar_select %p251, %s22, 1
      %s253 = smul.addr %s250, 2
      %s254 = sadd.s32 %s252, %s253
      %s255 = scalar_lea.vmem %s5, %s254
      %p256 = scmp.lt.s32.totalorder %s21, 1
      %s257 = scalar_select %p256, %s21, 1
      %s258 = smul.addr %s257, 24
      %s259 = smul.addr %s258, 4
      %s260 = scalar_lea.vmem %s0, %s259
      %s261 = smul.u32 4, %s22
      %p262 = scmp.lt.s32.totalorder %s21, 1
      %s263 = scalar_select %p262, %s21, 1
      %p264 = scmp.lt.s32.totalorder %s261, 7
      %s265 = scalar_select %p264, %s261, 7
      %s266 = smul.addr %s263, 8
      %s267 = sadd.s32 %s265, %s266
      %s268 = smul.addr %s267, 4
      %s269 = scalar_lea.vmem %s3, %s268
      %s270 = smul.u32 4, %s22
      %p271 = scmp.lt.s32.totalorder %s21, 1
      %s272 = scalar_select %p271, %s21, 1
      %p273 = scmp.lt.s32.totalorder %s22, 1
      %s274 = scalar_select %p273, %s22, 1
      %s275 = smul.addr %s272, 2
      %s276 = sadd.s32 %s274, %s275
      %s277 = scalar_lea.vmem %s4, %s276
      %p278 = scmp.lt.s32.totalorder %s21, 1
      %s279 = scalar_select %p278, %s21, 1
      %p280 = scmp.lt.s32.totalorder %s22, 1
      %s281 = scalar_select %p280, %s22, 1
      %s282 = smul.addr %s279, 2
      %s283 = sadd.s32 %s281, %s282
      %s284 = scalar_lea.vmem %s5, %s283
      %s286 = smul.u32 %s22, 4
      %s287 = smul.u32 %s286, 2
      %s288 = smul.addr %s287, 4
      %s289 = scalar_lea.vmem %s260, %s288
      %v290 = vld [vmem:[%s289] sm:$0xf]
      %v291 = vld [vmem:[%s289 + $0x4] sm:$0x3]
      %v292 = vld [vmem:[%s289 + $0x8] sm:$0xf]
      %v293 = vld [vmem:[%s289 + $0xc] sm:$0x3]
      %v294 = vld [vmem:[%s289 + $0x10] sm:$0xf]
      %v295 = vld [vmem:[%s289 + $0x14] sm:$0x3]
      %v296 = vld [vmem:[%s289 + $0x18] sm:$0xf]
      %v297 = vld [vmem:[%s289 + $0x1c] sm:$0x3]
      %v298 = vld [vmem:[%s289 + $0x20] sm:$0xf]
      %v299 = vld [vmem:[%s289 + $0x24] sm:$0x3]
      %v300 = vld [vmem:[%s289 + $0x28] sm:$0xf]
      %v301 = vld [vmem:[%s289 + $0x2c] sm:$0x3]
      %v302 = vld [vmem:[%s289 + $0x30] sm:$0xf]
      %v303 = vld [vmem:[%s289 + $0x34] sm:$0x3]
      %v304 = vld [vmem:[%s289 + $0x38] sm:$0xf]
      %v305 = vld [vmem:[%s289 + $0x3c] sm:$0x3]
      %v306 = vunpack.c.l.bf16 %v290
      %v307 = vunpack.c.l.bf16 %v291
      %v308 = vunpack.c.l.bf16 %v292
      %v309 = vunpack.c.l.bf16 %v293
      %v310 = vunpack.c.l.bf16 %v294
      %v311 = vunpack.c.l.bf16 %v295
      %v312 = vunpack.c.l.bf16 %v296
      %v313 = vunpack.c.l.bf16 %v297
      %v314 = vunpack.c.l.bf16 %v298
      %v315 = vunpack.c.l.bf16 %v299
      %v316 = vunpack.c.l.bf16 %v300
      %v317 = vunpack.c.l.bf16 %v301
      %v318 = vunpack.c.l.bf16 %v302
      %v319 = vunpack.c.l.bf16 %v303
      %v320 = vunpack.c.l.bf16 %v304
      %v321 = vunpack.c.l.bf16 %v305
      %vm338 = vcmask 1046528
      %v339 = vrot.slane %v306, 1
      %v340 = vrot.slane %v307, 1
      %v341 = vsel %vm338, %v339, %v340
      %v342 = vrot.slane %v308, 1
      %v343 = vrot.slane %v309, 1
      %v344 = vsel %vm338, %v342, %v343
      %v345 = vrot.slane %v310, 1
      %v346 = vrot.slane %v311, 1
      %v347 = vsel %vm338, %v345, %v346
      %v348 = vrot.slane %v312, 1
      %v349 = vrot.slane %v313, 1
      %v350 = vsel %vm338, %v348, %v349
      %v351 = vrot.slane %v314, 1
      %v352 = vrot.slane %v315, 1
      %v353 = vsel %vm338, %v351, %v352
      %v354 = vrot.slane %v316, 1
      %v355 = vrot.slane %v317, 1
      %v356 = vsel %vm338, %v354, %v355
      %v357 = vrot.slane %v318, 1
      %v358 = vrot.slane %v319, 1
      %v359 = vsel %vm338, %v357, %v358
      %v360 = vrot.slane %v320, 1
      %v361 = vrot.slane %v321, 1
      %v362 = vsel %vm338, %v360, %v361
      %363 = vrot.lane.b32.xlu0 %v341, 96
      %v364 = vpop.permute.xlu0 %363
      %365 = vrot.lane.b32.xlu0 %v344, 96
      %v366 = vpop.permute.xlu0 %365
      %367 = vrot.lane.b32.xlu0 %v347, 96
      %v368 = vpop.permute.xlu0 %367
      %369 = vrot.lane.b32.xlu0 %v350, 96
      %v370 = vpop.permute.xlu0 %369
      %371 = vrot.lane.b32.xlu0 %v353, 96
      %v372 = vpop.permute.xlu0 %371
      %373 = vrot.lane.b32.xlu0 %v356, 96
      %v374 = vpop.permute.xlu0 %373
      %375 = vrot.lane.b32.xlu0 %v359, 96
      %v376 = vpop.permute.xlu0 %375
      %377 = vrot.lane.b32.xlu0 %v362, 96
      %v378 = vpop.permute.xlu0 %377
      %vm387 = vcmask 1045504
      %v388 = vrot.slane %v306, 2
      %v389 = vrot.slane %v307, 2
      %v390 = vsel %vm387, %v388, %v389
      %v391 = vrot.slane %v308, 2
      %v392 = vrot.slane %v309, 2
      %v393 = vsel %vm387, %v391, %v392
      %v394 = vrot.slane %v310, 2
      %v395 = vrot.slane %v311, 2
      %v396 = vsel %vm387, %v394, %v395
      %v397 = vrot.slane %v312, 2
      %v398 = vrot.slane %v313, 2
      %v399 = vsel %vm387, %v397, %v398
      %v400 = vrot.slane %v314, 2
      %v401 = vrot.slane %v315, 2
      %v402 = vsel %vm387, %v400, %v401
      %v403 = vrot.slane %v316, 2
      %v404 = vrot.slane %v317, 2
      %v405 = vsel %vm387, %v403, %v404
      %v406 = vrot.slane %v318, 2
      %v407 = vrot.slane %v319, 2
      %v408 = vsel %vm387, %v406, %v407
      %v409 = vrot.slane %v320, 2
      %v410 = vrot.slane %v321, 2
      %v411 = vsel %vm387, %v409, %v410
      %412 = vrot.lane.b32.xlu0 %v390, 64
      %v413 = vpop.permute.xlu0 %412
      %414 = vrot.lane.b32.xlu0 %v393, 64
      %v415 = vpop.permute.xlu0 %414
      %416 = vrot.lane.b32.xlu0 %v396, 64
      %v417 = vpop.permute.xlu0 %416
      %418 = vrot.lane.b32.xlu0 %v399, 64
      %v419 = vpop.permute.xlu0 %418
      %420 = vrot.lane.b32.xlu0 %v402, 64
      %v421 = vpop.permute.xlu0 %420
      %422 = vrot.lane.b32.xlu0 %v405, 64
      %v423 = vpop.permute.xlu0 %422
      %424 = vrot.lane.b32.xlu0 %v408, 64
      %v425 = vpop.permute.xlu0 %424
      %426 = vrot.lane.b32.xlu0 %v411, 64
      %v427 = vpop.permute.xlu0 %426
      %vm436 = vcmask 1044480
      %v437 = vrot.slane %v306, 3
      %v438 = vrot.slane %v307, 3
      %v439 = vsel %vm436, %v437, %v438
      %v440 = vrot.slane %v308, 3
      %v441 = vrot.slane %v309, 3
      %v442 = vsel %vm436, %v440, %v441
      %v443 = vrot.slane %v310, 3
      %v444 = vrot.slane %v311, 3
      %v445 = vsel %vm436, %v443, %v444
      %v446 = vrot.slane %v312, 3
      %v447 = vrot.slane %v313, 3
      %v448 = vsel %vm436, %v446, %v447
      %v449 = vrot.slane %v314, 3
      %v450 = vrot.slane %v315, 3
      %v451 = vsel %vm436, %v449, %v450
      %v452 = vrot.slane %v316, 3
      %v453 = vrot.slane %v317, 3
      %v454 = vsel %vm436, %v452, %v453
      %v455 = vrot.slane %v318, 3
      %v456 = vrot.slane %v319, 3
      %v457 = vsel %vm436, %v455, %v456
      %v458 = vrot.slane %v320, 3
      %v459 = vrot.slane %v321, 3
      %v460 = vsel %vm436, %v458, %v459
      %461 = vrot.lane.b32.xlu0 %v439, 32
      %v462 = vpop.permute.xlu0 %461
      %463 = vrot.lane.b32.xlu0 %v442, 32
      %v464 = vpop.permute.xlu0 %463
      %465 = vrot.lane.b32.xlu0 %v445, 32
      %v466 = vpop.permute.xlu0 %465
      %467 = vrot.lane.b32.xlu0 %v448, 32
      %v468 = vpop.permute.xlu0 %467
      %469 = vrot.lane.b32.xlu0 %v451, 32
      %v470 = vpop.permute.xlu0 %469
      %471 = vrot.lane.b32.xlu0 %v454, 32
      %v472 = vpop.permute.xlu0 %471
      %473 = vrot.lane.b32.xlu0 %v457, 32
      %v474 = vpop.permute.xlu0 %473
      %475 = vrot.lane.b32.xlu0 %v460, 32
      %v476 = vpop.permute.xlu0 %475
      %vm485 = vcmask 1043456
      %v486 = vrot.slane %v306, 4
      %v487 = vrot.slane %v307, 4
      %v488 = vsel %vm485, %v486, %v487
      %v489 = vrot.slane %v308, 4
      %v490 = vrot.slane %v309, 4
      %v491 = vsel %vm485, %v489, %v490
      %v492 = vrot.slane %v310, 4
      %v493 = vrot.slane %v311, 4
      %v494 = vsel %vm485, %v492, %v493
      %v495 = vrot.slane %v312, 4
      %v496 = vrot.slane %v313, 4
      %v497 = vsel %vm485, %v495, %v496
      %v498 = vrot.slane %v314, 4
      %v499 = vrot.slane %v315, 4
      %v500 = vsel %vm485, %v498, %v499
      %v501 = vrot.slane %v316, 4
      %v502 = vrot.slane %v317, 4
      %v503 = vsel %vm485, %v501, %v502
      %v504 = vrot.slane %v318, 4
      %v505 = vrot.slane %v319, 4
      %v506 = vsel %vm485, %v504, %v505
      %v507 = vrot.slane %v320, 4
      %v508 = vrot.slane %v321, 4
      %v509 = vsel %vm485, %v507, %v508
      %vm518 = vcmask 785408
      %v519 = vsel %vm518, %v306, %v364
      %v520 = vsel %vm518, %v308, %v366
      %v521 = vsel %vm518, %v310, %v368
      %v522 = vsel %vm518, %v312, %v370
      %v523 = vsel %vm518, %v314, %v372
      %v524 = vsel %vm518, %v316, %v374
      %v525 = vsel %vm518, %v318, %v376
      %v526 = vsel %vm518, %v320, %v378
      %vm527 = vcmask 523264
      %v528 = vsel %vm527, %v364, %v413
      %v529 = vsel %vm527, %v366, %v415
      %v530 = vsel %vm527, %v368, %v417
      %v531 = vsel %vm527, %v370, %v419
      %v532 = vsel %vm527, %v372, %v421
      %v533 = vsel %vm527, %v374, %v423
      %v534 = vsel %vm527, %v376, %v425
      %v535 = vsel %vm527, %v378, %v427
      %vm536 = vcmask 261120
      %v537 = vsel %vm536, %v413, %v462
      %v538 = vsel %vm536, %v415, %v464
      %v539 = vsel %vm536, %v417, %v466
      %v540 = vsel %vm536, %v419, %v468
      %v541 = vsel %vm536, %v421, %v470
      %v542 = vsel %vm536, %v423, %v472
      %v543 = vsel %vm536, %v425, %v474
      %v544 = vsel %vm536, %v427, %v476
      %v545 = vpack.c.bf16 %v519, %v519
      %v546 = vpack.c.bf16 %v528, %v528
      %v547 = vpack.c.bf16 %v537, %v537
      %v548 = vpack.c.bf16 %v488, %v488
      %v549 = vpack.c.bf16 %v520, %v520
      %v550 = vpack.c.bf16 %v529, %v529
      %v551 = vpack.c.bf16 %v538, %v538
      %v552 = vpack.c.bf16 %v491, %v491
      %v553 = vpack.c.bf16 %v521, %v521
      %v554 = vpack.c.bf16 %v530, %v530
      %v555 = vpack.c.bf16 %v539, %v539
      %v556 = vpack.c.bf16 %v494, %v494
      %v557 = vpack.c.bf16 %v522, %v522
      %v558 = vpack.c.bf16 %v531, %v531
      %v559 = vpack.c.bf16 %v540, %v540
      %v560 = vpack.c.bf16 %v497, %v497
      %v561 = vpack.c.bf16 %v523, %v523
      %v562 = vpack.c.bf16 %v532, %v532
      %v563 = vpack.c.bf16 %v541, %v541
      %v564 = vpack.c.bf16 %v500, %v500
      %v565 = vpack.c.bf16 %v524, %v524
      %v566 = vpack.c.bf16 %v533, %v533
      %v567 = vpack.c.bf16 %v542, %v542
      %v568 = vpack.c.bf16 %v503, %v503
      %v569 = vpack.c.bf16 %v525, %v525
      %v570 = vpack.c.bf16 %v534, %v534
      %v571 = vpack.c.bf16 %v543, %v543
      %v572 = vpack.c.bf16 %v506, %v506
      %v573 = vpack.c.bf16 %v526, %v526
      %v574 = vpack.c.bf16 %v535, %v535
      %v575 = vpack.c.bf16 %v544, %v544
      %v576 = vpack.c.bf16 %v509, %v509
      %v609 = vunpack.c.l.b16 %v545
      %v610 = vunpack.c.l.b16 %v546
      %v611 = vunpack.c.l.b16 %v547
      %v612 = vunpack.c.l.b16 %v548
      %v613 = vunpack.c.l.b16 %v549
      %v614 = vunpack.c.l.b16 %v550
      %v615 = vunpack.c.l.b16 %v551
      %v616 = vunpack.c.l.b16 %v552
      %v617 = vunpack.c.l.b16 %v553
      %v618 = vunpack.c.l.b16 %v554
      %v619 = vunpack.c.l.b16 %v555
      %v620 = vunpack.c.l.b16 %v556
      %v621 = vunpack.c.l.b16 %v557
      %v622 = vunpack.c.l.b16 %v558
      %v623 = vunpack.c.l.b16 %v559
      %v624 = vunpack.c.l.b16 %v560
      %v625 = vunpack.c.l.b16 %v561
      %v626 = vunpack.c.l.b16 %v562
      %v627 = vunpack.c.l.b16 %v563
      %v628 = vunpack.c.l.b16 %v564
      %v629 = vunpack.c.l.b16 %v565
      %v630 = vunpack.c.l.b16 %v566
      %v631 = vunpack.c.l.b16 %v567
      %v632 = vunpack.c.l.b16 %v568
      %v633 = vunpack.c.l.b16 %v569
      %v634 = vunpack.c.l.b16 %v570
      %v635 = vunpack.c.l.b16 %v571
      %v636 = vunpack.c.l.b16 %v572
      %v637 = vunpack.c.l.b16 %v573
      %v638 = vunpack.c.l.b16 %v574
      %v639 = vunpack.c.l.b16 %v575
      %v640 = vunpack.c.l.b16 %v576
      %v641 = vpack.c.b16 %v610, %v609
      %v642 = vpack.c.b16 %v612, %v611
      %v643 = vpack.c.b16 %v614, %v613
      %v644 = vpack.c.b16 %v616, %v615
      %v645 = vpack.c.b16 %v618, %v617
      %v646 = vpack.c.b16 %v620, %v619
      %v647 = vpack.c.b16 %v622, %v621
      %v648 = vpack.c.b16 %v624, %v623
      %v649 = vpack.c.b16 %v626, %v625
      %v650 = vpack.c.b16 %v628, %v627
      %v651 = vpack.c.b16 %v630, %v629
      %v652 = vpack.c.b16 %v632, %v631
      %v653 = vpack.c.b16 %v634, %v633
      %v654 = vpack.c.b16 %v636, %v635
      %v655 = vpack.c.b16 %v638, %v637
      %v656 = vpack.c.b16 %v640, %v639
      %673 = vst [vmem:[#allocation2] sm:$0xff] %v641
      %vm674 = vcmask 785412
      %vm675 = vmor %vm674, %vm485
      %676 = vst.msk [vmem:[#allocation2 + $0x8] sm:$0xff] %vm675, %v642
      %677 = vst [vmem:[#allocation2 + $0x10] sm:$0xff] %v643
      %678 = vst.msk [vmem:[#allocation2 + $0x18] sm:$0xff] %vm675, %v644
      %679 = vst [vmem:[#allocation2 + $0x20] sm:$0xff] %v645
      %680 = vst.msk [vmem:[#allocation2 + $0x28] sm:$0xff] %vm675, %v646
      %681 = vst [vmem:[#allocation2 + $0x30] sm:$0xff] %v647
      %682 = vst.msk [vmem:[#allocation2 + $0x38] sm:$0xff] %vm675, %v648
      %683 = vst [vmem:[#allocation2 + $0x40] sm:$0xff] %v649
      %684 = vst.msk [vmem:[#allocation2 + $0x48] sm:$0xff] %vm675, %v650
      %685 = vst [vmem:[#allocation2 + $0x50] sm:$0xff] %v651
      %686 = vst.msk [vmem:[#allocation2 + $0x58] sm:$0xff] %vm675, %v652
      %687 = vst [vmem:[#allocation2 + $0x60] sm:$0xff] %v653
      %688 = vst.msk [vmem:[#allocation2 + $0x68] sm:$0xff] %vm675, %v654
      %689 = vst [vmem:[#allocation2 + $0x70] sm:$0xff] %v655
      %690 = vst.msk [vmem:[#allocation2 + $0x78] sm:$0xff] %vm675, %v656
      %v691 = vld [vmem:[#allocation2] sm:$0xff]
      %v692 = vld [vmem:[#allocation2 + $0x8] sm:$0xff]
      %v693 = vld [vmem:[#allocation2 + $0x10] sm:$0xff]
      %v694 = vld [vmem:[#allocation2 + $0x18] sm:$0xff]
      %v695 = vld [vmem:[#allocation2 + $0x20] sm:$0xff]
      %v696 = vld [vmem:[#allocation2 + $0x28] sm:$0xff]
      %v697 = vld [vmem:[#allocation2 + $0x30] sm:$0xff]
      %v698 = vld [vmem:[#allocation2 + $0x38] sm:$0xff]
      %v699 = vld [vmem:[%s1] sm:$0xf]
      %v700 = vld [vmem:[%s1 + $0x4] sm:$0xf]
      %v701 = vld [vmem:[%s1 + $0x8] sm:$0xf]
      %v702 = vld [vmem:[%s1 + $0xc] sm:$0xf]
      %v703 = vld [vmem:[%s1 + $0x10] sm:$0xf]
      %v704 = vld [vmem:[%s1 + $0x14] sm:$0xf]
      %v705 = vld [vmem:[%s1 + $0x18] sm:$0xf]
      %v706 = vld [vmem:[%s1 + $0x1c] sm:$0xf]
      %v707 = vld [vmem:[%s1 + $0x20] sm:$0xf]
      %v708 = vld [vmem:[%s1 + $0x24] sm:$0xf]
      %v709 = vld [vmem:[%s1 + $0x28] sm:$0xf]
      %v710 = vld [vmem:[%s1 + $0x2c] sm:$0xf]
      %v711 = vld [vmem:[%s1 + $0x30] sm:$0xf]
      %v712 = vld [vmem:[%s1 + $0x34] sm:$0xf]
      %v713 = vld [vmem:[%s1 + $0x38] sm:$0xf]
      %v714 = vld [vmem:[%s1 + $0x3c] sm:$0xf]
      %v715 = vld [vmem:[%s1 + $0x40] sm:$0xf]
      %v716 = vld [vmem:[%s1 + $0x44] sm:$0xf]
      %v717 = vld [vmem:[%s1 + $0x48] sm:$0xf]
      %v718 = vld [vmem:[%s1 + $0x4c] sm:$0xf]
      %v719 = vld [vmem:[%s1 + $0x50] sm:$0xf]
      %v720 = vld [vmem:[%s1 + $0x54] sm:$0xf]
      %v721 = vld [vmem:[%s1 + $0x58] sm:$0xf]
      %v722 = vld [vmem:[%s1 + $0x5c] sm:$0xf]
      %v723 = vld [vmem:[%s1 + $0x60] sm:$0xf]
      %v724 = vld [vmem:[%s1 + $0x64] sm:$0xf]
      %v725 = vld [vmem:[%s1 + $0x68] sm:$0xf]
      %v726 = vld [vmem:[%s1 + $0x6c] sm:$0xf]
      %v727 = vld [vmem:[%s1 + $0x70] sm:$0xf]
      %v728 = vld [vmem:[%s1 + $0x74] sm:$0xf]
      %v729 = vld [vmem:[%s1 + $0x78] sm:$0xf]
      %v730 = vld [vmem:[%s1 + $0x7c] sm:$0xf]
      %v731 = vld [vmem:[%s1 + $0x80] sm:$0xf]
      %v732 = vld [vmem:[%s1 + $0x84] sm:$0xf]
      %v733 = vld [vmem:[%s1 + $0x88] sm:$0xf]
      %v734 = vld [vmem:[%s1 + $0x8c] sm:$0xf]
      %v735 = vld [vmem:[%s1 + $0x90] sm:$0xf]
      %v736 = vld [vmem:[%s1 + $0x94] sm:$0xf]
      %v737 = vld [vmem:[%s1 + $0x98] sm:$0xf]
      %v738 = vld [vmem:[%s1 + $0x9c] sm:$0xf]
      %v739 = vld [vmem:[%s1 + $0xa0] sm:$0xf]
      %v740 = vld [vmem:[%s1 + $0xa4] sm:$0xf]
      %v741 = vld [vmem:[%s1 + $0xa8] sm:$0xf]
      %v742 = vld [vmem:[%s1 + $0xac] sm:$0xf]
      %v743 = vld [vmem:[%s1 + $0xb0] sm:$0xf]
      %v744 = vld [vmem:[%s1 + $0xb4] sm:$0xf]
      %v745 = vld [vmem:[%s1 + $0xb8] sm:$0xf]
      %v746 = vld [vmem:[%s1 + $0xbc] sm:$0xf]
      %v747 = vld [vmem:[%s1 + $0xc0] sm:$0xf]
      %v748 = vld [vmem:[%s1 + $0xc4] sm:$0xf]
      %v749 = vld [vmem:[%s1 + $0xc8] sm:$0xf]
      %v750 = vld [vmem:[%s1 + $0xcc] sm:$0xf]
      %v751 = vld [vmem:[%s1 + $0xd0] sm:$0xf]
      %v752 = vld [vmem:[%s1 + $0xd4] sm:$0xf]
      %v753 = vld [vmem:[%s1 + $0xd8] sm:$0xf]
      %v754 = vld [vmem:[%s1 + $0xdc] sm:$0xf]
      %v755 = vld [vmem:[%s1 + $0xe0] sm:$0xf]
      %v756 = vld [vmem:[%s1 + $0xe4] sm:$0xf]
      %v757 = vld [vmem:[%s1 + $0xe8] sm:$0xf]
      %v758 = vld [vmem:[%s1 + $0xec] sm:$0xf]
      %s759 = scalar_lea.vmem [#allocation2], 16
      %v760 = vld [vmem:[%s759] sm:$0xff]
      %v761 = vld [vmem:[%s759 + $0x8] sm:$0xff]
      %v762 = vld [vmem:[%s759 + $0x10] sm:$0xff]
      %v763 = vld [vmem:[%s759 + $0x18] sm:$0xff]
      %v764 = vld [vmem:[%s759 + $0x20] sm:$0xff]
      %v765 = vld [vmem:[%s759 + $0x28] sm:$0xff]
      %v766 = vld [vmem:[%s759 + $0x30] sm:$0xff]
      %v767 = vld [vmem:[%s759 + $0x38] sm:$0xff]
      %s768 = scalar_lea.vmem %s1, 240
      %v769 = vld [vmem:[%s768] sm:$0xf]
      %v770 = vld [vmem:[%s768 + $0x4] sm:$0xf]
      %v771 = vld [vmem:[%s768 + $0x8] sm:$0xf]
      %v772 = vld [vmem:[%s768 + $0xc] sm:$0xf]
      %v773 = vld [vmem:[%s768 + $0x10] sm:$0xf]
      %v774 = vld [vmem:[%s768 + $0x14] sm:$0xf]
      %v775 = vld [vmem:[%s768 + $0x18] sm:$0xf]
      %v776 = vld [vmem:[%s768 + $0x1c] sm:$0xf]
      %v777 = vld [vmem:[%s768 + $0x20] sm:$0xf]
      %v778 = vld [vmem:[%s768 + $0x24] sm:$0xf]
      %v779 = vld [vmem:[%s768 + $0x28] sm:$0xf]
      %v780 = vld [vmem:[%s768 + $0x2c] sm:$0xf]
      %v781 = vld [vmem:[%s768 + $0x30] sm:$0xf]
      %v782 = vld [vmem:[%s768 + $0x34] sm:$0xf]
      %v783 = vld [vmem:[%s768 + $0x38] sm:$0xf]
      %v784 = vld [vmem:[%s768 + $0x3c] sm:$0xf]
      %v785 = vld [vmem:[%s768 + $0x40] sm:$0xf]
      %v786 = vld [vmem:[%s768 + $0x44] sm:$0xf]
      %v787 = vld [vmem:[%s768 + $0x48] sm:$0xf]
      %v788 = vld [vmem:[%s768 + $0x4c] sm:$0xf]
      %v789 = vld [vmem:[%s768 + $0x50] sm:$0xf]
      %v790 = vld [vmem:[%s768 + $0x54] sm:$0xf]
      %v791 = vld [vmem:[%s768 + $0x58] sm:$0xf]
      %v792 = vld [vmem:[%s768 + $0x5c] sm:$0xf]
      %v793 = vld [vmem:[%s768 + $0x60] sm:$0xf]
      %v794 = vld [vmem:[%s768 + $0x64] sm:$0xf]
      %v795 = vld [vmem:[%s768 + $0x68] sm:$0xf]
      %v796 = vld [vmem:[%s768 + $0x6c] sm:$0xf]
      %v797 = vld [vmem:[%s768 + $0x70] sm:$0xf]
      %v798 = vld [vmem:[%s768 + $0x74] sm:$0xf]
      %v799 = vld [vmem:[%s768 + $0x78] sm:$0xf]
      %v800 = vld [vmem:[%s768 + $0x7c] sm:$0xf]
      %v801 = vld [vmem:[%s768 + $0x80] sm:$0xf]
      %v802 = vld [vmem:[%s768 + $0x84] sm:$0xf]
      %v803 = vld [vmem:[%s768 + $0x88] sm:$0xf]
      %v804 = vld [vmem:[%s768 + $0x8c] sm:$0xf]
      %v805 = vld [vmem:[%s768 + $0x90] sm:$0xf]
      %v806 = vld [vmem:[%s768 + $0x94] sm:$0xf]
      %v807 = vld [vmem:[%s768 + $0x98] sm:$0xf]
      %v808 = vld [vmem:[%s768 + $0x9c] sm:$0xf]
      %v809 = vld [vmem:[%s768 + $0xa0] sm:$0xf]
      %v810 = vld [vmem:[%s768 + $0xa4] sm:$0xf]
      %v811 = vld [vmem:[%s768 + $0xa8] sm:$0xf]
      %v812 = vld [vmem:[%s768 + $0xac] sm:$0xf]
      %v813 = vld [vmem:[%s768 + $0xb0] sm:$0xf]
      %v814 = vld [vmem:[%s768 + $0xb4] sm:$0xf]
      %v815 = vld [vmem:[%s768 + $0xb8] sm:$0xf]
      %v816 = vld [vmem:[%s768 + $0xbc] sm:$0xf]
      %v817 = vld [vmem:[%s768 + $0xc0] sm:$0xf]
      %v818 = vld [vmem:[%s768 + $0xc4] sm:$0xf]
      %v819 = vld [vmem:[%s768 + $0xc8] sm:$0xf]
      %v820 = vld [vmem:[%s768 + $0xcc] sm:$0xf]
      %v821 = vld [vmem:[%s768 + $0xd0] sm:$0xf]
      %v822 = vld [vmem:[%s768 + $0xd4] sm:$0xf]
      %v823 = vld [vmem:[%s768 + $0xd8] sm:$0xf]
      %v824 = vld [vmem:[%s768 + $0xdc] sm:$0xf]
      %v825 = vld [vmem:[%s768 + $0xe0] sm:$0xf]
      %v826 = vld [vmem:[%s768 + $0xe4] sm:$0xf]
      %v827 = vld [vmem:[%s768 + $0xe8] sm:$0xf]
      %v828 = vld [vmem:[%s768 + $0xec] sm:$0xf]
      %v837 = vunpack.c.l.b16 %v760
      %v838 = vunpack.c.h.b16 %v760
      %v839 = vunpack.c.l.b16 %v761
      %v840 = vunpack.c.h.b16 %v761
      %v841 = vunpack.c.l.b16 %v762
      %v842 = vunpack.c.h.b16 %v762
      %v843 = vunpack.c.l.b16 %v763
      %v844 = vunpack.c.h.b16 %v763
      %v845 = vunpack.c.l.b16 %v764
      %v846 = vunpack.c.h.b16 %v764
      %v847 = vunpack.c.l.b16 %v765
      %v848 = vunpack.c.h.b16 %v765
      %v849 = vunpack.c.l.b16 %v766
      %v850 = vunpack.c.h.b16 %v766
      %v851 = vunpack.c.l.b16 %v767
      %v852 = vunpack.c.h.b16 %v767
      %v853 = vpack.c.b16 %v841, %v837
      %v854 = vpack.c.b16 %v842, %v838
      %v855 = vpack.c.b16 %v843, %v839
      %v856 = vpack.c.b16 %v844, %v840
      %v857 = vpack.c.b16 %v849, %v845
      %v858 = vpack.c.b16 %v850, %v846
      %v859 = vpack.c.b16 %v851, %v847
      %v860 = vpack.c.b16 %v852, %v848
      %v927 = vunpack.c.l.b16 %v769
      %v928 = vunpack.c.l.b16 %v770
      %v929 = vunpack.c.l.b16 %v771
      %v930 = vunpack.c.l.b16 %v772
      %v931 = vunpack.c.l.b16 %v773
      %v932 = vunpack.c.l.b16 %v774
      %v933 = vunpack.c.l.b16 %v775
      %v934 = vunpack.c.l.b16 %v776
      %v935 = vunpack.c.l.b16 %v777
      %v936 = vunpack.c.l.b16 %v778
      %v937 = vunpack.c.l.b16 %v779
      %v938 = vunpack.c.l.b16 %v780
      %v939 = vunpack.c.l.b16 %v781
      %v940 = vunpack.c.l.b16 %v782
      %v941 = vunpack.c.l.b16 %v783
      %v942 = vunpack.c.l.b16 %v784
      %v943 = vunpack.c.l.b16 %v785
      %v944 = vunpack.c.l.b16 %v786
      %v945 = vunpack.c.l.b16 %v787
      %v946 = vunpack.c.l.b16 %v788
      %v947 = vunpack.c.l.b16 %v789
      %v948 = vunpack.c.l.b16 %v790
      %v949 = vunpack.c.l.b16 %v791
      %v950 = vunpack.c.l.b16 %v792
      %v951 = vunpack.c.l.b16 %v793
      %v952 = vunpack.c.l.b16 %v794
      %v953 = vunpack.c.l.b16 %v795
      %v954 = vunpack.c.l.b16 %v796
      %v955 = vunpack.c.l.b16 %v797
      %v956 = vunpack.c.l.b16 %v798
      %v957 = vunpack.c.l.b16 %v799
      %v958 = vunpack.c.l.b16 %v800
      %v959 = vunpack.c.l.b16 %v801
      %v960 = vunpack.c.l.b16 %v802
      %v961 = vunpack.c.l.b16 %v803
      %v962 = vunpack.c.l.b16 %v804
      %v963 = vunpack.c.l.b16 %v805
      %v964 = vunpack.c.l.b16 %v806
      %v965 = vunpack.c.l.b16 %v807
      %v966 = vunpack.c.l.b16 %v808
      %v967 = vunpack.c.l.b16 %v809
      %v968 = vunpack.c.l.b16 %v810
      %v969 = vunpack.c.l.b16 %v811
      %v970 = vunpack.c.l.b16 %v812
      %v971 = vunpack.c.l.b16 %v813
      %v972 = vunpack.c.l.b16 %v814
      %v973 = vunpack.c.l.b16 %v815
      %v974 = vunpack.c.l.b16 %v816
      %v975 = vunpack.c.l.b16 %v817
      %v976 = vunpack.c.l.b16 %v818
      %v977 = vunpack.c.l.b16 %v819
      %v978 = vunpack.c.l.b16 %v820
      %v979 = vunpack.c.l.b16 %v821
      %v980 = vunpack.c.l.b16 %v822
      %v981 = vunpack.c.l.b16 %v823
      %v982 = vunpack.c.l.b16 %v824
      %v983 = vunpack.c.l.b16 %v825
      %v984 = vunpack.c.l.b16 %v826
      %v985 = vunpack.c.l.b16 %v827
      %v986 = vunpack.c.l.b16 %v828
      %v987 = vpack.c.b16 %v928, %v927
      %v988 = vpack.c.b16 %v930, %v929
      %v989 = vpack.c.b16 %v932, %v931
      %v990 = vpack.c.b16 %v934, %v933
      %v991 = vpack.c.b16 %v936, %v935
      %v992 = vpack.c.b16 %v938, %v937
      %v993 = vpack.c.b16 %v940, %v939
      %v994 = vpack.c.b16 %v942, %v941
      %v995 = vpack.c.b16 %v944, %v943
      %v996 = vpack.c.b16 %v946, %v945
      %v997 = vpack.c.b16 %v948, %v947
      %v998 = vpack.c.b16 %v950, %v949
      %v999 = vpack.c.b16 %v952, %v951
      %v1000 = vpack.c.b16 %v954, %v953
      %v1001 = vpack.c.b16 %v956, %v955
      %v1002 = vpack.c.b16 %v958, %v957
      %v1003 = vpack.c.b16 %v960, %v959
      %v1004 = vpack.c.b16 %v962, %v961
      %v1005 = vpack.c.b16 %v964, %v963
      %v1006 = vpack.c.b16 %v966, %v965
      %v1007 = vpack.c.b16 %v968, %v967
      %v1008 = vpack.c.b16 %v970, %v969
      %v1009 = vpack.c.b16 %v972, %v971
      %v1010 = vpack.c.b16 %v974, %v973
      %v1011 = vpack.c.b16 %v976, %v975
      %v1012 = vpack.c.b16 %v978, %v977
      %v1013 = vpack.c.b16 %v980, %v979
      %v1014 = vpack.c.b16 %v982, %v981
      %v1015 = vpack.c.b16 %v984, %v983
      %v1016 = vpack.c.b16 %v986, %v985
      %v1048 = vsel %vm518, %v856, 0
      %v1051 = vsel %vm518, %v860, 0
      %1053 = vmatprep.subr.bf16.mxu0 0
      %1054 = vmatpush1.bf16.msra.mxu0 %v994
      %1055 = vmatprep.subr.bf16.mxu0 0
      %1056 = vmatpush1.bf16.msra.mxu0 %v993
      %1057 = vmatprep.subr.bf16.mxu0 0
      %1058 = vmatpush1.bf16.msra.mxu0 %v992
      %1059 = vmatprep.subr.bf16.mxu0 0
      %1060 = vmatpush1.bf16.msra.mxu0 %v991
      %1061 = vmatprep.subr.bf16.mxu0 0
      %1062 = vmatpush1.bf16.msra.mxu0 %v990
      %1063 = vmatprep.subr.bf16.mxu0 0
      %1064 = vmatpush1.bf16.msra.mxu0 %v989
      %1065 = vmatprep.subr.bf16.mxu0 0
      %1066 = vmatpush1.bf16.msra.mxu0 %v988
      %1067 = vmatprep.subr.bf16.mxu0 0
      %1068 = vmatpush1.bf16.msra.mxu0 %v987
      %1069 = vmatprep.subr.bf16.mxu0 0
      %1070 = vmatpush2.bf16.msra.mxu0 %v1002
      %1071 = vmatprep.subr.bf16.mxu0 0
      %1072 = vmatpush2.bf16.msra.mxu0 %v1001
      %1073 = vmatprep.subr.bf16.mxu0 0
      %1074 = vmatpush2.bf16.msra.mxu0 %v1000
      %1075 = vmatprep.subr.bf16.mxu0 0
      %1076 = vmatpush2.bf16.msra.mxu0 %v999
      %1077 = vmatprep.subr.bf16.mxu0 0
      %1078 = vmatpush2.bf16.msra.mxu0 %v998
      %1079 = vmatprep.subr.bf16.mxu0 0
      %1080 = vmatpush2.bf16.msra.mxu0 %v997
      %1081 = vmatprep.subr.bf16.mxu0 0
      %1082 = vmatpush2.bf16.msra.mxu0 %v996
      %1083 = vmatprep.subr.bf16.mxu0 0
      %1084 = vmatpush2.bf16.msra.mxu0 %v995
      %1085 = vmatprep.mubr.bf16.mxu0 %v854
      %1086 = vmatmul.mubr.bf16.gmra.mxu0 %v853
      %v1087 = vpop.f32.mrf.mxu0
      %v1088 = vadd.f32 0.0, %v1087
      %v1089 = vpop.f32.mrf.mxu0
      %v1090 = vpop.f32.mrf.mxu0
      %v1091 = vadd.f32 0.0, %v1090
      %v1092 = vpop.f32.mrf.mxu0
      %1093 = vmatprep.mubr.bf16.mxu0 %v858
      %1094 = vmatmul.mubr.bf16.gmra.mxu0 %v857
      %v1095 = vpop.f32.mrf.mxu0
      %v1096 = vadd.f32 0.0, %v1095
      %v1097 = vpop.f32.mrf.mxu0
      %v1098 = vpop.f32.mrf.mxu0
      %v1099 = vadd.f32 0.0, %v1098
      %v1100 = vpop.f32.mrf.mxu0
      %1101 = vdwg.mxu0
      %1102 = vmatprep.subr.bf16.mxu0 0
      %1103 = vmatpush1.bf16.msra.mxu0 %v1010
      %1104 = vmatprep.subr.bf16.mxu0 0
      %1105 = vmatpush1.bf16.msra.mxu0 %v1009
      %1106 = vmatprep.subr.bf16.mxu0 0
      %1107 = vmatpush1.bf16.msra.mxu0 %v1008
      %1108 = vmatprep.subr.bf16.mxu0 0
      %1109 = vmatpush1.bf16.msra.mxu0 %v1007
      %1110 = vmatprep.subr.bf16.mxu0 0
      %1111 = vmatpush1.bf16.msra.mxu0 %v1006
      %1112 = vmatprep.subr.bf16.mxu0 0
      %1113 = vmatpush1.bf16.msra.mxu0 %v1005
      %1114 = vmatprep.subr.bf16.mxu0 0
      %1115 = vmatpush1.bf16.msra.mxu0 %v1004
      %1116 = vmatprep.subr.bf16.mxu0 0
      %1117 = vmatpush1.bf16.msra.mxu0 %v1003
      %1118 = vmatprep.subr.bf16.mxu0 0
      %1119 = vmatpush2.bf16.msra.mxu0 0
      %1120 = vmatprep.subr.bf16.mxu0 0
      %1121 = vmatpush2.bf16.msra.mxu0 0
      %1122 = vmatprep.subr.bf16.mxu0 0
      %1123 = vmatpush2.bf16.msra.mxu0 %v1016
      %1124 = vmatprep.subr.bf16.mxu0 0
      %1125 = vmatpush2.bf16.msra.mxu0 %v1015
      %1126 = vmatprep.subr.bf16.mxu0 0
      %1127 = vmatpush2.bf16.msra.mxu0 %v1014
      %1128 = vmatprep.subr.bf16.mxu0 0
      %1129 = vmatpush2.bf16.msra.mxu0 %v1013
      %1130 = vmatprep.subr.bf16.mxu0 0
      %1131 = vmatpush2.bf16.msra.mxu0 %v1012
      %1132 = vmatprep.subr.bf16.mxu0 0
      %1133 = vmatpush2.bf16.msra.mxu0 %v1011
      %1134 = vmatprep.mubr.bf16.mxu0 %v1048
      %1135 = vmatmul.mubr.bf16.gmra.mxu0 %v855
      %v1136 = vpop.f32.mrf.mxu0
      %v1137 = vadd.f32 %v1088, %v1136
      %v1138 = vpop.f32.mrf.mxu0
      %v1139 = vpop.f32.mrf.mxu0
      %v1140 = vadd.f32 %v1091, %v1139
      %v1141 = vpop.f32.mrf.mxu0
      %1142 = vmatprep.mubr.bf16.mxu0 %v1051
      %1143 = vmatmul.mubr.bf16.gmra.mxu0 %v859
      %v1144 = vpop.f32.mrf.mxu0
      %v1145 = vadd.f32 %v1096, %v1144
      %v1146 = vpop.f32.mrf.mxu0
      %v1147 = vpop.f32.mrf.mxu0
      %v1148 = vadd.f32 %v1099, %v1147
      %v1149 = vpop.f32.mrf.mxu0
      %1150 = vdwg.mxu0
      %v1159 = vunpack.c.l.b16 %v691
      %v1160 = vunpack.c.h.b16 %v691
      %v1161 = vunpack.c.l.b16 %v692
      %v1162 = vunpack.c.h.b16 %v692
      %v1163 = vunpack.c.l.b16 %v693
      %v1164 = vunpack.c.h.b16 %v693
      %v1165 = vunpack.c.l.b16 %v694
      %v1166 = vunpack.c.h.b16 %v694
      %v1167 = vunpack.c.l.b16 %v695
      %v1168 = vunpack.c.h.b16 %v695
      %v1169 = vunpack.c.l.b16 %v696
      %v1170 = vunpack.c.h.b16 %v696
      %v1171 = vunpack.c.l.b16 %v697
      %v1172 = vunpack.c.h.b16 %v697
      %v1173 = vunpack.c.l.b16 %v698
      %v1174 = vunpack.c.h.b16 %v698
      %v1175 = vpack.c.b16 %v1163, %v1159
      %v1176 = vpack.c.b16 %v1164, %v1160
      %v1177 = vpack.c.b16 %v1165, %v1161
      %v1178 = vpack.c.b16 %v1166, %v1162
      %v1179 = vpack.c.b16 %v1171, %v1167
      %v1180 = vpack.c.b16 %v1172, %v1168
      %v1181 = vpack.c.b16 %v1173, %v1169
      %v1182 = vpack.c.b16 %v1174, %v1170
      %v1249 = vunpack.c.l.b16 %v699
      %v1250 = vunpack.c.l.b16 %v700
      %v1251 = vunpack.c.l.b16 %v701
      %v1252 = vunpack.c.l.b16 %v702
      %v1253 = vunpack.c.l.b16 %v703
      %v1254 = vunpack.c.l.b16 %v704
      %v1255 = vunpack.c.l.b16 %v705
      %v1256 = vunpack.c.l.b16 %v706
      %v1257 = vunpack.c.l.b16 %v707
      %v1258 = vunpack.c.l.b16 %v708
      %v1259 = vunpack.c.l.b16 %v709
      %v1260 = vunpack.c.l.b16 %v710
      %v1261 = vunpack.c.l.b16 %v711
      %v1262 = vunpack.c.l.b16 %v712
      %v1263 = vunpack.c.l.b16 %v713
      %v1264 = vunpack.c.l.b16 %v714
      %v1265 = vunpack.c.l.b16 %v715
      %v1266 = vunpack.c.l.b16 %v716
      %v1267 = vunpack.c.l.b16 %v717
      %v1268 = vunpack.c.l.b16 %v718
      %v1269 = vunpack.c.l.b16 %v719
      %v1270 = vunpack.c.l.b16 %v720
      %v1271 = vunpack.c.l.b16 %v721
      %v1272 = vunpack.c.l.b16 %v722
      %v1273 = vunpack.c.l.b16 %v723
      %v1274 = vunpack.c.l.b16 %v724
      %v1275 = vunpack.c.l.b16 %v725
      %v1276 = vunpack.c.l.b16 %v726
      %v1277 = vunpack.c.l.b16 %v727
      %v1278 = vunpack.c.l.b16 %v728
      %v1279 = vunpack.c.l.b16 %v729
      %v1280 = vunpack.c.l.b16 %v730
      %v1281 = vunpack.c.l.b16 %v731
      %v1282 = vunpack.c.l.b16 %v732
      %v1283 = vunpack.c.l.b16 %v733
      %v1284 = vunpack.c.l.b16 %v734
      %v1285 = vunpack.c.l.b16 %v735
      %v1286 = vunpack.c.l.b16 %v736
      %v1287 = vunpack.c.l.b16 %v737
      %v1288 = vunpack.c.l.b16 %v738
      %v1289 = vunpack.c.l.b16 %v739
      %v1290 = vunpack.c.l.b16 %v740
      %v1291 = vunpack.c.l.b16 %v741
      %v1292 = vunpack.c.l.b16 %v742
      %v1293 = vunpack.c.l.b16 %v743
      %v1294 = vunpack.c.l.b16 %v744
      %v1295 = vunpack.c.l.b16 %v745
      %v1296 = vunpack.c.l.b16 %v746
      %v1297 = vunpack.c.l.b16 %v747
      %v1298 = vunpack.c.l.b16 %v748
      %v1299 = vunpack.c.l.b16 %v749
      %v1300 = vunpack.c.l.b16 %v750
      %v1301 = vunpack.c.l.b16 %v751
      %v1302 = vunpack.c.l.b16 %v752
      %v1303 = vunpack.c.l.b16 %v753
      %v1304 = vunpack.c.l.b16 %v754
      %v1305 = vunpack.c.l.b16 %v755
      %v1306 = vunpack.c.l.b16 %v756
      %v1307 = vunpack.c.l.b16 %v757
      %v1308 = vunpack.c.l.b16 %v758
      %v1309 = vpack.c.b16 %v1250, %v1249
      %v1310 = vpack.c.b16 %v1252, %v1251
      %v1311 = vpack.c.b16 %v1254, %v1253
      %v1312 = vpack.c.b16 %v1256, %v1255
      %v1313 = vpack.c.b16 %v1258, %v1257
      %v1314 = vpack.c.b16 %v1260, %v1259
      %v1315 = vpack.c.b16 %v1262, %v1261
      %v1316 = vpack.c.b16 %v1264, %v1263
      %v1317 = vpack.c.b16 %v1266, %v1265
      %v1318 = vpack.c.b16 %v1268, %v1267
      %v1319 = vpack.c.b16 %v1270, %v1269
      %v1320 = vpack.c.b16 %v1272, %v1271
      %v1321 = vpack.c.b16 %v1274, %v1273
      %v1322 = vpack.c.b16 %v1276, %v1275
      %v1323 = vpack.c.b16 %v1278, %v1277
      %v1324 = vpack.c.b16 %v1280, %v1279
      %v1325 = vpack.c.b16 %v1282, %v1281
      %v1326 = vpack.c.b16 %v1284, %v1283
      %v1327 = vpack.c.b16 %v1286, %v1285
      %v1328 = vpack.c.b16 %v1288, %v1287
      %v1329 = vpack.c.b16 %v1290, %v1289
      %v1330 = vpack.c.b16 %v1292, %v1291
      %v1331 = vpack.c.b16 %v1294, %v1293
      %v1332 = vpack.c.b16 %v1296, %v1295
      %v1333 = vpack.c.b16 %v1298, %v1297
      %v1334 = vpack.c.b16 %v1300, %v1299
      %v1335 = vpack.c.b16 %v1302, %v1301
      %v1336 = vpack.c.b16 %v1304, %v1303
      %v1337 = vpack.c.b16 %v1306, %v1305
      %v1338 = vpack.c.b16 %v1308, %v1307
      %v1370 = vsel %vm518, %v1178, 0
      %v1373 = vsel %vm518, %v1182, 0
      %1375 = vmatprep.subr.bf16.mxu0 0
      %1376 = vmatpush1.bf16.msra.mxu0 %v1316
      %1377 = vmatprep.subr.bf16.mxu0 0
      %1378 = vmatpush1.bf16.msra.mxu0 %v1315
      %1379 = vmatprep.subr.bf16.mxu0 0
      %1380 = vmatpush1.bf16.msra.mxu0 %v1314
      %1381 = vmatprep.subr.bf16.mxu0 0
      %1382 = vmatpush1.bf16.msra.mxu0 %v1313
      %1383 = vmatprep.subr.bf16.mxu0 0
      %1384 = vmatpush1.bf16.msra.mxu0 %v1312
      %1385 = vmatprep.subr.bf16.mxu0 0
      %1386 = vmatpush1.bf16.msra.mxu0 %v1311
      %1387 = vmatprep.subr.bf16.mxu0 0
      %1388 = vmatpush1.bf16.msra.mxu0 %v1310
      %1389 = vmatprep.subr.bf16.mxu0 0
      %1390 = vmatpush1.bf16.msra.mxu0 %v1309
      %1391 = vmatprep.subr.bf16.mxu0 0
      %1392 = vmatpush2.bf16.msra.mxu0 %v1324
      %1393 = vmatprep.subr.bf16.mxu0 0
      %1394 = vmatpush2.bf16.msra.mxu0 %v1323
      %1395 = vmatprep.subr.bf16.mxu0 0
      %1396 = vmatpush2.bf16.msra.mxu0 %v1322
      %1397 = vmatprep.subr.bf16.mxu0 0
      %1398 = vmatpush2.bf16.msra.mxu0 %v1321
      %1399 = vmatprep.subr.bf16.mxu0 0
      %1400 = vmatpush2.bf16.msra.mxu0 %v1320
      %1401 = vmatprep.subr.bf16.mxu0 0
      %1402 = vmatpush2.bf16.msra.mxu0 %v1319
      %1403 = vmatprep.subr.bf16.mxu0 0
      %1404 = vmatpush2.bf16.msra.mxu0 %v1318
      %1405 = vmatprep.subr.bf16.mxu0 0
      %1406 = vmatpush2.bf16.msra.mxu0 %v1317
      %1407 = vmatprep.mubr.bf16.mxu0 %v1176
      %1408 = vmatmul.mubr.bf16.gmra.mxu0 %v1175
      %v1409 = vpop.f32.mrf.mxu0
      %v1410 = vadd.f32 %v1137, %v1409
      %v1411 = vpop.f32.mrf.mxu0
      %v1412 = vpop.f32.mrf.mxu0
      %v1413 = vadd.f32 %v1140, %v1412
      %v1414 = vpop.f32.mrf.mxu0
      %1415 = vmatprep.mubr.bf16.mxu0 %v1180
      %1416 = vmatmul.mubr.bf16.gmra.mxu0 %v1179
      %v1417 = vpop.f32.mrf.mxu0
      %v1418 = vadd.f32 %v1145, %v1417
      %v1419 = vpop.f32.mrf.mxu0
      %v1420 = vpop.f32.mrf.mxu0
      %v1421 = vadd.f32 %v1148, %v1420
      %v1422 = vpop.f32.mrf.mxu0
      %1423 = vdwg.mxu0
      %1424 = vmatprep.subr.bf16.mxu0 0
      %1425 = vmatpush1.bf16.msra.mxu0 %v1332
      %1426 = vmatprep.subr.bf16.mxu0 0
      %1427 = vmatpush1.bf16.msra.mxu0 %v1331
      %1428 = vmatprep.subr.bf16.mxu0 0
      %1429 = vmatpush1.bf16.msra.mxu0 %v1330
      %1430 = vmatprep.subr.bf16.mxu0 0
      %1431 = vmatpush1.bf16.msra.mxu0 %v1329
      %1432 = vmatprep.subr.bf16.mxu0 0
      %1433 = vmatpush1.bf16.msra.mxu0 %v1328
      %1434 = vmatprep.subr.bf16.mxu0 0
      %1435 = vmatpush1.bf16.msra.mxu0 %v1327
      %1436 = vmatprep.subr.bf16.mxu0 0
      %1437 = vmatpush1.bf16.msra.mxu0 %v1326
      %1438 = vmatprep.subr.bf16.mxu0 0
      %1439 = vmatpush1.bf16.msra.mxu0 %v1325
      %1440 = vmatprep.subr.bf16.mxu0 0
      %1441 = vmatpush2.bf16.msra.mxu0 0
      %1442 = vmatprep.subr.bf16.mxu0 0
      %1443 = vmatpush2.bf16.msra.mxu0 0
      %1444 = vmatprep.subr.bf16.mxu0 0
      %1445 = vmatpush2.bf16.msra.mxu0 %v1338
      %1446 = vmatprep.subr.bf16.mxu0 0
      %1447 = vmatpush2.bf16.msra.mxu0 %v1337
      %1448 = vmatprep.subr.bf16.mxu0 0
      %1449 = vmatpush2.bf16.msra.mxu0 %v1336
      %1450 = vmatprep.subr.bf16.mxu0 0
      %1451 = vmatpush2.bf16.msra.mxu0 %v1335
      %1452 = vmatprep.subr.bf16.mxu0 0
      %1453 = vmatpush2.bf16.msra.mxu0 %v1334
      %1454 = vmatprep.subr.bf16.mxu0 0
      %1455 = vmatpush2.bf16.msra.mxu0 %v1333
      %1456 = vmatprep.mubr.bf16.mxu0 %v1370
      %1457 = vmatmul.mubr.bf16.gmra.mxu0 %v1177
      %v1458 = vpop.f32.mrf.mxu0
      %v1459 = vadd.f32 %v1410, %v1458
      %v1460 = vpop.f32.mrf.mxu0
      %v1461 = vpop.f32.mrf.mxu0
      %v1462 = vadd.f32 %v1413, %v1461
      %v1463 = vpop.f32.mrf.mxu0
      %1464 = vmatprep.mubr.bf16.mxu0 %v1373
      %1465 = vmatmul.mubr.bf16.gmra.mxu0 %v1181
      %v1466 = vpop.f32.mrf.mxu0
      %v1467 = vadd.f32 %v1418, %v1466
      %v1468 = vpop.f32.mrf.mxu0
      %v1469 = vpop.f32.mrf.mxu0
      %v1470 = vadd.f32 %v1421, %v1469
      %v1471 = vpop.f32.mrf.mxu0
      %1472 = vdwg.mxu0
      %s1473 = scalar_lea.vmem [#allocation2], 32
      %v1474 = vld [vmem:[%s1473] sm:$0xff]
      %v1475 = vld [vmem:[%s1473 + $0x8] sm:$0xff]
      %v1476 = vld [vmem:[%s1473 + $0x10] sm:$0xff]
      %v1477 = vld [vmem:[%s1473 + $0x18] sm:$0xff]
      %v1478 = vld [vmem:[%s1473 + $0x20] sm:$0xff]
      %v1479 = vld [vmem:[%s1473 + $0x28] sm:$0xff]
      %v1480 = vld [vmem:[%s1473 + $0x30] sm:$0xff]
      %v1481 = vld [vmem:[%s1473 + $0x38] sm:$0xff]
      %s1482 = scalar_lea.vmem %s1, 480
      %v1483 = vld [vmem:[%s1482] sm:$0xf]
      %v1484 = vld [vmem:[%s1482 + $0x4] sm:$0xf]
      %v1485 = vld [vmem:[%s1482 + $0x8] sm:$0xf]
      %v1486 = vld [vmem:[%s1482 + $0xc] sm:$0xf]
      %v1487 = vld [vmem:[%s1482 + $0x10] sm:$0xf]
      %v1488 = vld [vmem:[%s1482 + $0x14] sm:$0xf]
      %v1489 = vld [vmem:[%s1482 + $0x18] sm:$0xf]
      %v1490 = vld [vmem:[%s1482 + $0x1c] sm:$0xf]
      %v1491 = vld [vmem:[%s1482 + $0x20] sm:$0xf]
      %v1492 = vld [vmem:[%s1482 + $0x24] sm:$0xf]
      %v1493 = vld [vmem:[%s1482 + $0x28] sm:$0xf]
      %v1494 = vld [vmem:[%s1482 + $0x2c] sm:$0xf]
      %v1495 = vld [vmem:[%s1482 + $0x30] sm:$0xf]
      %v1496 = vld [vmem:[%s1482 + $0x34] sm:$0xf]
      %v1497 = vld [vmem:[%s1482 + $0x38] sm:$0xf]
      %v1498 = vld [vmem:[%s1482 + $0x3c] sm:$0xf]
      %v1499 = vld [vmem:[%s1482 + $0x40] sm:$0xf]
      %v1500 = vld [vmem:[%s1482 + $0x44] sm:$0xf]
      %v1501 = vld [vmem:[%s1482 + $0x48] sm:$0xf]
      %v1502 = vld [vmem:[%s1482 + $0x4c] sm:$0xf]
      %v1503 = vld [vmem:[%s1482 + $0x50] sm:$0xf]
      %v1504 = vld [vmem:[%s1482 + $0x54] sm:$0xf]
      %v1505 = vld [vmem:[%s1482 + $0x58] sm:$0xf]
      %v1506 = vld [vmem:[%s1482 + $0x5c] sm:$0xf]
      %v1507 = vld [vmem:[%s1482 + $0x60] sm:$0xf]
      %v1508 = vld [vmem:[%s1482 + $0x64] sm:$0xf]
      %v1509 = vld [vmem:[%s1482 + $0x68] sm:$0xf]
      %v1510 = vld [vmem:[%s1482 + $0x6c] sm:$0xf]
      %v1511 = vld [vmem:[%s1482 + $0x70] sm:$0xf]
      %v1512 = vld [vmem:[%s1482 + $0x74] sm:$0xf]
      %v1513 = vld [vmem:[%s1482 + $0x78] sm:$0xf]
      %v1514 = vld [vmem:[%s1482 + $0x7c] sm:$0xf]
      %v1515 = vld [vmem:[%s1482 + $0x80] sm:$0xf]
      %v1516 = vld [vmem:[%s1482 + $0x84] sm:$0xf]
      %v1517 = vld [vmem:[%s1482 + $0x88] sm:$0xf]
      %v1518 = vld [vmem:[%s1482 + $0x8c] sm:$0xf]
      %v1519 = vld [vmem:[%s1482 + $0x90] sm:$0xf]
      %v1520 = vld [vmem:[%s1482 + $0x94] sm:$0xf]
      %v1521 = vld [vmem:[%s1482 + $0x98] sm:$0xf]
      %v1522 = vld [vmem:[%s1482 + $0x9c] sm:$0xf]
      %v1523 = vld [vmem:[%s1482 + $0xa0] sm:$0xf]
      %v1524 = vld [vmem:[%s1482 + $0xa4] sm:$0xf]
      %v1525 = vld [vmem:[%s1482 + $0xa8] sm:$0xf]
      %v1526 = vld [vmem:[%s1482 + $0xac] sm:$0xf]
      %v1527 = vld [vmem:[%s1482 + $0xb0] sm:$0xf]
      %v1528 = vld [vmem:[%s1482 + $0xb4] sm:$0xf]
      %v1529 = vld [vmem:[%s1482 + $0xb8] sm:$0xf]
      %v1530 = vld [vmem:[%s1482 + $0xbc] sm:$0xf]
      %v1531 = vld [vmem:[%s1482 + $0xc0] sm:$0xf]
      %v1532 = vld [vmem:[%s1482 + $0xc4] sm:$0xf]
      %v1533 = vld [vmem:[%s1482 + $0xc8] sm:$0xf]
      %v1534 = vld [vmem:[%s1482 + $0xcc] sm:$0xf]
      %v1535 = vld [vmem:[%s1482 + $0xd0] sm:$0xf]
      %v1536 = vld [vmem:[%s1482 + $0xd4] sm:$0xf]
      %v1537 = vld [vmem:[%s1482 + $0xd8] sm:$0xf]
      %v1538 = vld [vmem:[%s1482 + $0xdc] sm:$0xf]
      %v1539 = vld [vmem:[%s1482 + $0xe0] sm:$0xf]
      %v1540 = vld [vmem:[%s1482 + $0xe4] sm:$0xf]
      %v1541 = vld [vmem:[%s1482 + $0xe8] sm:$0xf]
      %v1542 = vld [vmem:[%s1482 + $0xec] sm:$0xf]
      %v1551 = vunpack.c.l.b16 %v1474
      %v1552 = vunpack.c.h.b16 %v1474
      %v1553 = vunpack.c.l.b16 %v1475
      %v1554 = vunpack.c.h.b16 %v1475
      %v1555 = vunpack.c.l.b16 %v1476
      %v1556 = vunpack.c.h.b16 %v1476
      %v1557 = vunpack.c.l.b16 %v1477
      %v1558 = vunpack.c.h.b16 %v1477
      %v1559 = vunpack.c.l.b16 %v1478
      %v1560 = vunpack.c.h.b16 %v1478
      %v1561 = vunpack.c.l.b16 %v1479
      %v1562 = vunpack.c.h.b16 %v1479
      %v1563 = vunpack.c.l.b16 %v1480
      %v1564 = vunpack.c.h.b16 %v1480
      %v1565 = vunpack.c.l.b16 %v1481
      %v1566 = vunpack.c.h.b16 %v1481
      %v1567 = vpack.c.b16 %v1555, %v1551
      %v1568 = vpack.c.b16 %v1556, %v1552
      %v1569 = vpack.c.b16 %v1557, %v1553
      %v1570 = vpack.c.b16 %v1558, %v1554
      %v1571 = vpack.c.b16 %v1563, %v1559
      %v1572 = vpack.c.b16 %v1564, %v1560
      %v1573 = vpack.c.b16 %v1565, %v1561
      %v1574 = vpack.c.b16 %v1566, %v1562
      %v1641 = vunpack.c.l.b16 %v1483
      %v1642 = vunpack.c.l.b16 %v1484
      %v1643 = vunpack.c.l.b16 %v1485
      %v1644 = vunpack.c.l.b16 %v1486
      %v1645 = vunpack.c.l.b16 %v1487
      %v1646 = vunpack.c.l.b16 %v1488
      %v1647 = vunpack.c.l.b16 %v1489
      %v1648 = vunpack.c.l.b16 %v1490
      %v1649 = vunpack.c.l.b16 %v1491
      %v1650 = vunpack.c.l.b16 %v1492
      %v1651 = vunpack.c.l.b16 %v1493
      %v1652 = vunpack.c.l.b16 %v1494
      %v1653 = vunpack.c.l.b16 %v1495
      %v1654 = vunpack.c.l.b16 %v1496
      %v1655 = vunpack.c.l.b16 %v1497
      %v1656 = vunpack.c.l.b16 %v1498
      %v1657 = vunpack.c.l.b16 %v1499
      %v1658 = vunpack.c.l.b16 %v1500
      %v1659 = vunpack.c.l.b16 %v1501
      %v1660 = vunpack.c.l.b16 %v1502
      %v1661 = vunpack.c.l.b16 %v1503
      %v1662 = vunpack.c.l.b16 %v1504
      %v1663 = vunpack.c.l.b16 %v1505
      %v1664 = vunpack.c.l.b16 %v1506
      %v1665 = vunpack.c.l.b16 %v1507
      %v1666 = vunpack.c.l.b16 %v1508
      %v1667 = vunpack.c.l.b16 %v1509
      %v1668 = vunpack.c.l.b16 %v1510
      %v1669 = vunpack.c.l.b16 %v1511
      %v1670 = vunpack.c.l.b16 %v1512
      %v1671 = vunpack.c.l.b16 %v1513
      %v1672 = vunpack.c.l.b16 %v1514
      %v1673 = vunpack.c.l.b16 %v1515
      %v1674 = vunpack.c.l.b16 %v1516
      %v1675 = vunpack.c.l.b16 %v1517
      %v1676 = vunpack.c.l.b16 %v1518
      %v1677 = vunpack.c.l.b16 %v1519
      %v1678 = vunpack.c.l.b16 %v1520
      %v1679 = vunpack.c.l.b16 %v1521
      %v1680 = vunpack.c.l.b16 %v1522
      %v1681 = vunpack.c.l.b16 %v1523
      %v1682 = vunpack.c.l.b16 %v1524
      %v1683 = vunpack.c.l.b16 %v1525
      %v1684 = vunpack.c.l.b16 %v1526
      %v1685 = vunpack.c.l.b16 %v1527
      %v1686 = vunpack.c.l.b16 %v1528
      %v1687 = vunpack.c.l.b16 %v1529
      %v1688 = vunpack.c.l.b16 %v1530
      %v1689 = vunpack.c.l.b16 %v1531
      %v1690 = vunpack.c.l.b16 %v1532
      %v1691 = vunpack.c.l.b16 %v1533
      %v1692 = vunpack.c.l.b16 %v1534
      %v1693 = vunpack.c.l.b16 %v1535
      %v1694 = vunpack.c.l.b16 %v1536
      %v1695 = vunpack.c.l.b16 %v1537
      %v1696 = vunpack.c.l.b16 %v1538
      %v1697 = vunpack.c.l.b16 %v1539
      %v1698 = vunpack.c.l.b16 %v1540
      %v1699 = vunpack.c.l.b16 %v1541
      %v1700 = vunpack.c.l.b16 %v1542
      %v1701 = vpack.c.b16 %v1642, %v1641
      %v1702 = vpack.c.b16 %v1644, %v1643
      %v1703 = vpack.c.b16 %v1646, %v1645
      %v1704 = vpack.c.b16 %v1648, %v1647
      %v1705 = vpack.c.b16 %v1650, %v1649
      %v1706 = vpack.c.b16 %v1652, %v1651
      %v1707 = vpack.c.b16 %v1654, %v1653
      %v1708 = vpack.c.b16 %v1656, %v1655
      %v1709 = vpack.c.b16 %v1658, %v1657
      %v1710 = vpack.c.b16 %v1660, %v1659
      %v1711 = vpack.c.b16 %v1662, %v1661
      %v1712 = vpack.c.b16 %v1664, %v1663
      %v1713 = vpack.c.b16 %v1666, %v1665
      %v1714 = vpack.c.b16 %v1668, %v1667
      %v1715 = vpack.c.b16 %v1670, %v1669
      %v1716 = vpack.c.b16 %v1672, %v1671
      %v1717 = vpack.c.b16 %v1674, %v1673
      %v1718 = vpack.c.b16 %v1676, %v1675
      %v1719 = vpack.c.b16 %v1678, %v1677
      %v1720 = vpack.c.b16 %v1680, %v1679
      %v1721 = vpack.c.b16 %v1682, %v1681
      %v1722 = vpack.c.b16 %v1684, %v1683
      %v1723 = vpack.c.b16 %v1686, %v1685
      %v1724 = vpack.c.b16 %v1688, %v1687
      %v1725 = vpack.c.b16 %v1690, %v1689
      %v1726 = vpack.c.b16 %v1692, %v1691
      %v1727 = vpack.c.b16 %v1694, %v1693
      %v1728 = vpack.c.b16 %v1696, %v1695
      %v1729 = vpack.c.b16 %v1698, %v1697
      %v1730 = vpack.c.b16 %v1700, %v1699
      %v1762 = vsel %vm518, %v1570, 0
      %v1765 = vsel %vm518, %v1574, 0
      %1767 = vmatprep.subr.bf16.mxu0 0
      %1768 = vmatpush1.bf16.msra.mxu0 %v1708
      %1769 = vmatprep.subr.bf16.mxu0 0
      %1770 = vmatpush1.bf16.msra.mxu0 %v1707
      %1771 = vmatprep.subr.bf16.mxu0 0
      %1772 = vmatpush1.bf16.msra.mxu0 %v1706
      %1773 = vmatprep.subr.bf16.mxu0 0
      %1774 = vmatpush1.bf16.msra.mxu0 %v1705
      %1775 = vmatprep.subr.bf16.mxu0 0
      %1776 = vmatpush1.bf16.msra.mxu0 %v1704
      %1777 = vmatprep.subr.bf16.mxu0 0
      %1778 = vmatpush1.bf16.msra.mxu0 %v1703
      %1779 = vmatprep.subr.bf16.mxu0 0
      %1780 = vmatpush1.bf16.msra.mxu0 %v1702
      %1781 = vmatprep.subr.bf16.mxu0 0
      %1782 = vmatpush1.bf16.msra.mxu0 %v1701
      %1783 = vmatprep.subr.bf16.mxu0 0
      %1784 = vmatpush2.bf16.msra.mxu0 %v1716
      %1785 = vmatprep.subr.bf16.mxu0 0
      %1786 = vmatpush2.bf16.msra.mxu0 %v1715
      %1787 = vmatprep.subr.bf16.mxu0 0
      %1788 = vmatpush2.bf16.msra.mxu0 %v1714
      %1789 = vmatprep.subr.bf16.mxu0 0
      %1790 = vmatpush2.bf16.msra.mxu0 %v1713
      %1791 = vmatprep.subr.bf16.mxu0 0
      %1792 = vmatpush2.bf16.msra.mxu0 %v1712
      %1793 = vmatprep.subr.bf16.mxu0 0
      %1794 = vmatpush2.bf16.msra.mxu0 %v1711
      %1795 = vmatprep.subr.bf16.mxu0 0
      %1796 = vmatpush2.bf16.msra.mxu0 %v1710
      %1797 = vmatprep.subr.bf16.mxu0 0
      %1798 = vmatpush2.bf16.msra.mxu0 %v1709
      %1799 = vmatprep.mubr.bf16.mxu0 %v1568
      %1800 = vmatmul.mubr.bf16.gmra.mxu0 %v1567
      %v1801 = vpop.f32.mrf.mxu0
      %v1802 = vadd.f32 0.0, %v1801
      %v1803 = vpop.f32.mrf.mxu0
      %v1804 = vpop.f32.mrf.mxu0
      %v1805 = vadd.f32 0.0, %v1804
      %v1806 = vpop.f32.mrf.mxu0
      %1807 = vmatprep.mubr.bf16.mxu0 %v1572
      %1808 = vmatmul.mubr.bf16.gmra.mxu0 %v1571
      %v1809 = vpop.f32.mrf.mxu0
      %v1810 = vadd.f32 0.0, %v1809
      %v1811 = vpop.f32.mrf.mxu0
      %v1812 = vpop.f32.mrf.mxu0
      %v1813 = vadd.f32 0.0, %v1812
      %v1814 = vpop.f32.mrf.mxu0
      %1815 = vdwg.mxu0
      %1816 = vmatprep.subr.bf16.mxu0 0
      %1817 = vmatpush1.bf16.msra.mxu0 %v1724
      %1818 = vmatprep.subr.bf16.mxu0 0
      %1819 = vmatpush1.bf16.msra.mxu0 %v1723
      %1820 = vmatprep.subr.bf16.mxu0 0
      %1821 = vmatpush1.bf16.msra.mxu0 %v1722
      %1822 = vmatprep.subr.bf16.mxu0 0
      %1823 = vmatpush1.bf16.msra.mxu0 %v1721
      %1824 = vmatprep.subr.bf16.mxu0 0
      %1825 = vmatpush1.bf16.msra.mxu0 %v1720
      %1826 = vmatprep.subr.bf16.mxu0 0
      %1827 = vmatpush1.bf16.msra.mxu0 %v1719
      %1828 = vmatprep.subr.bf16.mxu0 0
      %1829 = vmatpush1.bf16.msra.mxu0 %v1718
      %1830 = vmatprep.subr.bf16.mxu0 0
      %1831 = vmatpush1.bf16.msra.mxu0 %v1717
      %1832 = vmatprep.subr.bf16.mxu0 0
      %1833 = vmatpush2.bf16.msra.mxu0 0
      %1834 = vmatprep.subr.bf16.mxu0 0
      %1835 = vmatpush2.bf16.msra.mxu0 0
      %1836 = vmatprep.subr.bf16.mxu0 0
      %1837 = vmatpush2.bf16.msra.mxu0 %v1730
      %1838 = vmatprep.subr.bf16.mxu0 0
      %1839 = vmatpush2.bf16.msra.mxu0 %v1729
      %1840 = vmatprep.subr.bf16.mxu0 0
      %1841 = vmatpush2.bf16.msra.mxu0 %v1728
      %1842 = vmatprep.subr.bf16.mxu0 0
      %1843 = vmatpush2.bf16.msra.mxu0 %v1727
      %1844 = vmatprep.subr.bf16.mxu0 0
      %1845 = vmatpush2.bf16.msra.mxu0 %v1726
      %1846 = vmatprep.subr.bf16.mxu0 0
      %1847 = vmatpush2.bf16.msra.mxu0 %v1725
      %1848 = vmatprep.mubr.bf16.mxu0 %v1762
      %1849 = vmatmul.mubr.bf16.gmra.mxu0 %v1569
      %v1850 = vpop.f32.mrf.mxu0
      %v1851 = vadd.f32 %v1802, %v1850
      %v1852 = vpop.f32.mrf.mxu0
      %v1853 = vpop.f32.mrf.mxu0
      %v1854 = vadd.f32 %v1805, %v1853
      %v1855 = vpop.f32.mrf.mxu0
      %1856 = vmatprep.mubr.bf16.mxu0 %v1765
      %1857 = vmatmul.mubr.bf16.gmra.mxu0 %v1573
      %v1858 = vpop.f32.mrf.mxu0
      %v1859 = vadd.f32 %v1810, %v1858
      %v1860 = vpop.f32.mrf.mxu0
      %v1861 = vpop.f32.mrf.mxu0
      %v1862 = vadd.f32 %v1813, %v1861
      %v1863 = vpop.f32.mrf.mxu0
      %1864 = vdwg.mxu0
      %v1865 = vadd.f32 %v1459, %v1851
      %v1866 = vadd.f32 %v1462, %v1854
      %v1867 = vadd.f32 %v1467, %v1859
      %v1868 = vadd.f32 %v1470, %v1862
      %s1869 = scalar_lea.vmem [#allocation2], 48
      %v1870 = vld [vmem:[%s1869] sm:$0xff]
      %v1871 = vld [vmem:[%s1869 + $0x8] sm:$0xff]
      %v1872 = vld [vmem:[%s1869 + $0x10] sm:$0xff]
      %v1873 = vld [vmem:[%s1869 + $0x18] sm:$0xff]
      %v1874 = vld [vmem:[%s1869 + $0x20] sm:$0xff]
      %v1875 = vld [vmem:[%s1869 + $0x28] sm:$0xff]
      %v1876 = vld [vmem:[%s1869 + $0x30] sm:$0xff]
      %v1877 = vld [vmem:[%s1869 + $0x38] sm:$0xff]
      %s1878 = scalar_lea.vmem %s1, 720
      %v1879 = vld [vmem:[%s1878] sm:$0xf]
      %v1880 = vld [vmem:[%s1878 + $0x4] sm:$0xf]
      %v1881 = vld [vmem:[%s1878 + $0x8] sm:$0xf]
      %v1882 = vld [vmem:[%s1878 + $0xc] sm:$0xf]
      %v1883 = vld [vmem:[%s1878 + $0x10] sm:$0xf]
      %v1884 = vld [vmem:[%s1878 + $0x14] sm:$0xf]
      %v1885 = vld [vmem:[%s1878 + $0x18] sm:$0xf]
      %v1886 = vld [vmem:[%s1878 + $0x1c] sm:$0xf]
      %v1887 = vld [vmem:[%s1878 + $0x20] sm:$0xf]
      %v1888 = vld [vmem:[%s1878 + $0x24] sm:$0xf]
      %v1889 = vld [vmem:[%s1878 + $0x28] sm:$0xf]
      %v1890 = vld [vmem:[%s1878 + $0x2c] sm:$0xf]
      %v1891 = vld [vmem:[%s1878 + $0x30] sm:$0xf]
      %v1892 = vld [vmem:[%s1878 + $0x34] sm:$0xf]
      %v1893 = vld [vmem:[%s1878 + $0x38] sm:$0xf]
      %v1894 = vld [vmem:[%s1878 + $0x3c] sm:$0xf]
      %v1895 = vld [vmem:[%s1878 + $0x40] sm:$0xf]
      %v1896 = vld [vmem:[%s1878 + $0x44] sm:$0xf]
      %v1897 = vld [vmem:[%s1878 + $0x48] sm:$0xf]
      %v1898 = vld [vmem:[%s1878 + $0x4c] sm:$0xf]
      %v1899 = vld [vmem:[%s1878 + $0x50] sm:$0xf]
      %v1900 = vld [vmem:[%s1878 + $0x54] sm:$0xf]
      %v1901 = vld [vmem:[%s1878 + $0x58] sm:$0xf]
      %v1902 = vld [vmem:[%s1878 + $0x5c] sm:$0xf]
      %v1903 = vld [vmem:[%s1878 + $0x60] sm:$0xf]
      %v1904 = vld [vmem:[%s1878 + $0x64] sm:$0xf]
      %v1905 = vld [vmem:[%s1878 + $0x68] sm:$0xf]
      %v1906 = vld [vmem:[%s1878 + $0x6c] sm:$0xf]
      %v1907 = vld [vmem:[%s1878 + $0x70] sm:$0xf]
      %v1908 = vld [vmem:[%s1878 + $0x74] sm:$0xf]
      %v1909 = vld [vmem:[%s1878 + $0x78] sm:$0xf]
      %v1910 = vld [vmem:[%s1878 + $0x7c] sm:$0xf]
      %v1911 = vld [vmem:[%s1878 + $0x80] sm:$0xf]
      %v1912 = vld [vmem:[%s1878 + $0x84] sm:$0xf]
      %v1913 = vld [vmem:[%s1878 + $0x88] sm:$0xf]
      %v1914 = vld [vmem:[%s1878 + $0x8c] sm:$0xf]
      %v1915 = vld [vmem:[%s1878 + $0x90] sm:$0xf]
      %v1916 = vld [vmem:[%s1878 + $0x94] sm:$0xf]
      %v1917 = vld [vmem:[%s1878 + $0x98] sm:$0xf]
      %v1918 = vld [vmem:[%s1878 + $0x9c] sm:$0xf]
      %v1919 = vld [vmem:[%s1878 + $0xa0] sm:$0xf]
      %v1920 = vld [vmem:[%s1878 + $0xa4] sm:$0xf]
      %v1921 = vld [vmem:[%s1878 + $0xa8] sm:$0xf]
      %v1922 = vld [vmem:[%s1878 + $0xac] sm:$0xf]
      %v1923 = vld [vmem:[%s1878 + $0xb0] sm:$0xf]
      %v1924 = vld [vmem:[%s1878 + $0xb4] sm:$0xf]
      %v1925 = vld [vmem:[%s1878 + $0xb8] sm:$0xf]
      %v1926 = vld [vmem:[%s1878 + $0xbc] sm:$0xf]
      %v1927 = vld [vmem:[%s1878 + $0xc0] sm:$0xf]
      %v1928 = vld [vmem:[%s1878 + $0xc4] sm:$0xf]
      %v1929 = vld [vmem:[%s1878 + $0xc8] sm:$0xf]
      %v1930 = vld [vmem:[%s1878 + $0xcc] sm:$0xf]
      %v1931 = vld [vmem:[%s1878 + $0xd0] sm:$0xf]
      %v1932 = vld [vmem:[%s1878 + $0xd4] sm:$0xf]
      %v1933 = vld [vmem:[%s1878 + $0xd8] sm:$0xf]
      %v1934 = vld [vmem:[%s1878 + $0xdc] sm:$0xf]
      %v1935 = vld [vmem:[%s1878 + $0xe0] sm:$0xf]
      %v1936 = vld [vmem:[%s1878 + $0xe4] sm:$0xf]
      %v1937 = vld [vmem:[%s1878 + $0xe8] sm:$0xf]
      %v1938 = vld [vmem:[%s1878 + $0xec] sm:$0xf]
      %v1947 = vunpack.c.l.b16 %v1870
      %v1948 = vunpack.c.h.b16 %v1870
      %v1949 = vunpack.c.l.b16 %v1871
      %v1950 = vunpack.c.h.b16 %v1871
      %v1951 = vunpack.c.l.b16 %v1872
      %v1952 = vunpack.c.h.b16 %v1872
      %v1953 = vunpack.c.l.b16 %v1873
      %v1954 = vunpack.c.h.b16 %v1873
      %v1955 = vunpack.c.l.b16 %v1874
      %v1956 = vunpack.c.h.b16 %v1874
      %v1957 = vunpack.c.l.b16 %v1875
      %v1958 = vunpack.c.h.b16 %v1875
      %v1959 = vunpack.c.l.b16 %v1876
      %v1960 = vunpack.c.h.b16 %v1876
      %v1961 = vunpack.c.l.b16 %v1877
      %v1962 = vunpack.c.h.b16 %v1877
      %v1963 = vpack.c.b16 %v1951, %v1947
      %v1964 = vpack.c.b16 %v1952, %v1948
      %v1965 = vpack.c.b16 %v1953, %v1949
      %v1966 = vpack.c.b16 %v1954, %v1950
      %v1967 = vpack.c.b16 %v1959, %v1955
      %v1968 = vpack.c.b16 %v1960, %v1956
      %v1969 = vpack.c.b16 %v1961, %v1957
      %v1970 = vpack.c.b16 %v1962, %v1958
      %v2037 = vunpack.c.l.b16 %v1879
      %v2038 = vunpack.c.l.b16 %v1880
      %v2039 = vunpack.c.l.b16 %v1881
      %v2040 = vunpack.c.l.b16 %v1882
      %v2041 = vunpack.c.l.b16 %v1883
      %v2042 = vunpack.c.l.b16 %v1884
      %v2043 = vunpack.c.l.b16 %v1885
      %v2044 = vunpack.c.l.b16 %v1886
      %v2045 = vunpack.c.l.b16 %v1887
      %v2046 = vunpack.c.l.b16 %v1888
      %v2047 = vunpack.c.l.b16 %v1889
      %v2048 = vunpack.c.l.b16 %v1890
      %v2049 = vunpack.c.l.b16 %v1891
      %v2050 = vunpack.c.l.b16 %v1892
      %v2051 = vunpack.c.l.b16 %v1893
      %v2052 = vunpack.c.l.b16 %v1894
      %v2053 = vunpack.c.l.b16 %v1895
      %v2054 = vunpack.c.l.b16 %v1896
      %v2055 = vunpack.c.l.b16 %v1897
      %v2056 = vunpack.c.l.b16 %v1898
      %v2057 = vunpack.c.l.b16 %v1899
      %v2058 = vunpack.c.l.b16 %v1900
      %v2059 = vunpack.c.l.b16 %v1901
      %v2060 = vunpack.c.l.b16 %v1902
      %v2061 = vunpack.c.l.b16 %v1903
      %v2062 = vunpack.c.l.b16 %v1904
      %v2063 = vunpack.c.l.b16 %v1905
      %v2064 = vunpack.c.l.b16 %v1906
      %v2065 = vunpack.c.l.b16 %v1907
      %v2066 = vunpack.c.l.b16 %v1908
      %v2067 = vunpack.c.l.b16 %v1909
      %v2068 = vunpack.c.l.b16 %v1910
      %v2069 = vunpack.c.l.b16 %v1911
      %v2070 = vunpack.c.l.b16 %v1912
      %v2071 = vunpack.c.l.b16 %v1913
      %v2072 = vunpack.c.l.b16 %v1914
      %v2073 = vunpack.c.l.b16 %v1915
      %v2074 = vunpack.c.l.b16 %v1916
      %v2075 = vunpack.c.l.b16 %v1917
      %v2076 = vunpack.c.l.b16 %v1918
      %v2077 = vunpack.c.l.b16 %v1919
      %v2078 = vunpack.c.l.b16 %v1920
      %v2079 = vunpack.c.l.b16 %v1921
      %v2080 = vunpack.c.l.b16 %v1922
      %v2081 = vunpack.c.l.b16 %v1923
      %v2082 = vunpack.c.l.b16 %v1924
      %v2083 = vunpack.c.l.b16 %v1925
      %v2084 = vunpack.c.l.b16 %v1926
      %v2085 = vunpack.c.l.b16 %v1927
      %v2086 = vunpack.c.l.b16 %v1928
      %v2087 = vunpack.c.l.b16 %v1929
      %v2088 = vunpack.c.l.b16 %v1930
      %v2089 = vunpack.c.l.b16 %v1931
      %v2090 = vunpack.c.l.b16 %v1932
      %v2091 = vunpack.c.l.b16 %v1933
      %v2092 = vunpack.c.l.b16 %v1934
      %v2093 = vunpack.c.l.b16 %v1935
      %v2094 = vunpack.c.l.b16 %v1936
      %v2095 = vunpack.c.l.b16 %v1937
      %v2096 = vunpack.c.l.b16 %v1938
      %v2097 = vpack.c.b16 %v2038, %v2037
      %v2098 = vpack.c.b16 %v2040, %v2039
      %v2099 = vpack.c.b16 %v2042, %v2041
      %v2100 = vpack.c.b16 %v2044, %v2043
      %v2101 = vpack.c.b16 %v2046, %v2045
      %v2102 = vpack.c.b16 %v2048, %v2047
      %v2103 = vpack.c.b16 %v2050, %v2049
      %v2104 = vpack.c.b16 %v2052, %v2051
      %v2105 = vpack.c.b16 %v2054, %v2053
      %v2106 = vpack.c.b16 %v2056, %v2055
      %v2107 = vpack.c.b16 %v2058, %v2057
      %v2108 = vpack.c.b16 %v2060, %v2059
      %v2109 = vpack.c.b16 %v2062, %v2061
      %v2110 = vpack.c.b16 %v2064, %v2063
      %v2111 = vpack.c.b16 %v2066, %v2065
      %v2112 = vpack.c.b16 %v2068, %v2067
      %v2113 = vpack.c.b16 %v2070, %v2069
      %v2114 = vpack.c.b16 %v2072, %v2071
      %v2115 = vpack.c.b16 %v2074, %v2073
      %v2116 = vpack.c.b16 %v2076, %v2075
      %v2117 = vpack.c.b16 %v2078, %v2077
      %v2118 = vpack.c.b16 %v2080, %v2079
      %v2119 = vpack.c.b16 %v2082, %v2081
      %v2120 = vpack.c.b16 %v2084, %v2083
      %v2121 = vpack.c.b16 %v2086, %v2085
      %v2122 = vpack.c.b16 %v2088, %v2087
      %v2123 = vpack.c.b16 %v2090, %v2089
      %v2124 = vpack.c.b16 %v2092, %v2091
      %v2125 = vpack.c.b16 %v2094, %v2093
      %v2126 = vpack.c.b16 %v2096, %v2095
      %v2158 = vsel %vm518, %v1966, 0
      %v2161 = vsel %vm518, %v1970, 0
      %2163 = vmatprep.subr.bf16.mxu0 0
      %2164 = vmatpush1.bf16.msra.mxu0 %v2104
      %2165 = vmatprep.subr.bf16.mxu0 0
      %2166 = vmatpush1.bf16.msra.mxu0 %v2103
      %2167 = vmatprep.subr.bf16.mxu0 0
      %2168 = vmatpush1.bf16.msra.mxu0 %v2102
      %2169 = vmatprep.subr.bf16.mxu0 0
      %2170 = vmatpush1.bf16.msra.mxu0 %v2101
      %2171 = vmatprep.subr.bf16.mxu0 0
      %2172 = vmatpush1.bf16.msra.mxu0 %v2100
      %2173 = vmatprep.subr.bf16.mxu0 0
      %2174 = vmatpush1.bf16.msra.mxu0 %v2099
      %2175 = vmatprep.subr.bf16.mxu0 0
      %2176 = vmatpush1.bf16.msra.mxu0 %v2098
      %2177 = vmatprep.subr.bf16.mxu0 0
      %2178 = vmatpush1.bf16.msra.mxu0 %v2097
      %2179 = vmatprep.subr.bf16.mxu0 0
      %2180 = vmatpush2.bf16.msra.mxu0 %v2112
      %2181 = vmatprep.subr.bf16.mxu0 0
      %2182 = vmatpush2.bf16.msra.mxu0 %v2111
      %2183 = vmatprep.subr.bf16.mxu0 0
      %2184 = vmatpush2.bf16.msra.mxu0 %v2110
      %2185 = vmatprep.subr.bf16.mxu0 0
      %2186 = vmatpush2.bf16.msra.mxu0 %v2109
      %2187 = vmatprep.subr.bf16.mxu0 0
      %2188 = vmatpush2.bf16.msra.mxu0 %v2108
      %2189 = vmatprep.subr.bf16.mxu0 0
      %2190 = vmatpush2.bf16.msra.mxu0 %v2107
      %2191 = vmatprep.subr.bf16.mxu0 0
      %2192 = vmatpush2.bf16.msra.mxu0 %v2106
      %2193 = vmatprep.subr.bf16.mxu0 0
      %2194 = vmatpush2.bf16.msra.mxu0 %v2105
      %2195 = vmatprep.mubr.bf16.mxu0 %v1964
      %2196 = vmatmul.mubr.bf16.gmra.mxu0 %v1963
      %v2197 = vpop.f32.mrf.mxu0
      %v2198 = vadd.f32 0.0, %v2197
      %v2199 = vpop.f32.mrf.mxu0
      %v2200 = vpop.f32.mrf.mxu0
      %v2201 = vadd.f32 0.0, %v2200
      %v2202 = vpop.f32.mrf.mxu0
      %2203 = vmatprep.mubr.bf16.mxu0 %v1968
      %2204 = vmatmul.mubr.bf16.gmra.mxu0 %v1967
      %v2205 = vpop.f32.mrf.mxu0
      %v2206 = vadd.f32 0.0, %v2205
      %v2207 = vpop.f32.mrf.mxu0
      %v2208 = vpop.f32.mrf.mxu0
      %v2209 = vadd.f32 0.0, %v2208
      %v2210 = vpop.f32.mrf.mxu0
      %2211 = vdwg.mxu0
      %2212 = vmatprep.subr.bf16.mxu0 0
      %2213 = vmatpush1.bf16.msra.mxu0 %v2120
      %2214 = vmatprep.subr.bf16.mxu0 0
      %2215 = vmatpush1.bf16.msra.mxu0 %v2119
      %2216 = vmatprep.subr.bf16.mxu0 0
      %2217 = vmatpush1.bf16.msra.mxu0 %v2118
      %2218 = vmatprep.subr.bf16.mxu0 0
      %2219 = vmatpush1.bf16.msra.mxu0 %v2117
      %2220 = vmatprep.subr.bf16.mxu0 0
      %2221 = vmatpush1.bf16.msra.mxu0 %v2116
      %2222 = vmatprep.subr.bf16.mxu0 0
      %2223 = vmatpush1.bf16.msra.mxu0 %v2115
      %2224 = vmatprep.subr.bf16.mxu0 0
      %2225 = vmatpush1.bf16.msra.mxu0 %v2114
      %2226 = vmatprep.subr.bf16.mxu0 0
      %2227 = vmatpush1.bf16.msra.mxu0 %v2113
      %2228 = vmatprep.subr.bf16.mxu0 0
      %2229 = vmatpush2.bf16.msra.mxu0 0
      %2230 = vmatprep.subr.bf16.mxu0 0
      %2231 = vmatpush2.bf16.msra.mxu0 0
      %2232 = vmatprep.subr.bf16.mxu0 0
      %2233 = vmatpush2.bf16.msra.mxu0 %v2126
      %2234 = vmatprep.subr.bf16.mxu0 0
      %2235 = vmatpush2.bf16.msra.mxu0 %v2125
      %2236 = vmatprep.subr.bf16.mxu0 0
      %2237 = vmatpush2.bf16.msra.mxu0 %v2124
      %2238 = vmatprep.subr.bf16.mxu0 0
      %2239 = vmatpush2.bf16.msra.mxu0 %v2123
      %2240 = vmatprep.subr.bf16.mxu0 0
      %2241 = vmatpush2.bf16.msra.mxu0 %v2122
      %2242 = vmatprep.subr.bf16.mxu0 0
      %2243 = vmatpush2.bf16.msra.mxu0 %v2121
      %2244 = vmatprep.mubr.bf16.mxu0 %v2158
      %2245 = vmatmul.mubr.bf16.gmra.mxu0 %v1965
      %v2246 = vpop.f32.mrf.mxu0
      %v2247 = vadd.f32 %v2198, %v2246
      %v2248 = vpop.f32.mrf.mxu0
      %v2249 = vpop.f32.mrf.mxu0
      %v2250 = vadd.f32 %v2201, %v2249
      %v2251 = vpop.f32.mrf.mxu0
      %2252 = vmatprep.mubr.bf16.mxu0 %v2161
      %2253 = vmatmul.mubr.bf16.gmra.mxu0 %v1969
      %v2254 = vpop.f32.mrf.mxu0
      %v2255 = vadd.f32 %v2206, %v2254
      %v2256 = vpop.f32.mrf.mxu0
      %v2257 = vpop.f32.mrf.mxu0
      %v2258 = vadd.f32 %v2209, %v2257
      %v2259 = vpop.f32.mrf.mxu0
      %2260 = vdwg.mxu0
      %v2261 = vadd.f32 %v1865, %v2247
      %v2262 = vadd.f32 %v1866, %v2250
      %v2263 = vadd.f32 %v1867, %v2255
      %v2264 = vadd.f32 %v1868, %v2258
      %s2265 = scalar_lea.vmem [#allocation2], 64
      %v2266 = vld [vmem:[%s2265] sm:$0xff]
      %v2267 = vld [vmem:[%s2265 + $0x8] sm:$0xff]
      %v2268 = vld [vmem:[%s2265 + $0x10] sm:$0xff]
      %v2269 = vld [vmem:[%s2265 + $0x18] sm:$0xff]
      %v2270 = vld [vmem:[%s2265 + $0x20] sm:$0xff]
      %v2271 = vld [vmem:[%s2265 + $0x28] sm:$0xff]
      %v2272 = vld [vmem:[%s2265 + $0x30] sm:$0xff]
      %v2273 = vld [vmem:[%s2265 + $0x38] sm:$0xff]
      %s2274 = scalar_lea.vmem %s1, 960
      %v2275 = vld [vmem:[%s2274] sm:$0xf]
      %v2276 = vld [vmem:[%s2274 + $0x4] sm:$0xf]
      %v2277 = vld [vmem:[%s2274 + $0x8] sm:$0xf]
      %v2278 = vld [vmem:[%s2274 + $0xc] sm:$0xf]
      %v2279 = vld [vmem:[%s2274 + $0x10] sm:$0xf]
      %v2280 = vld [vmem:[%s2274 + $0x14] sm:$0xf]
      %v2281 = vld [vmem:[%s2274 + $0x18] sm:$0xf]
      %v2282 = vld [vmem:[%s2274 + $0x1c] sm:$0xf]
      %v2283 = vld [vmem:[%s2274 + $0x20] sm:$0xf]
      %v2284 = vld [vmem:[%s2274 + $0x24] sm:$0xf]
      %v2285 = vld [vmem:[%s2274 + $0x28] sm:$0xf]
      %v2286 = vld [vmem:[%s2274 + $0x2c] sm:$0xf]
      %v2287 = vld [vmem:[%s2274 + $0x30] sm:$0xf]
      %v2288 = vld [vmem:[%s2274 + $0x34] sm:$0xf]
      %v2289 = vld [vmem:[%s2274 + $0x38] sm:$0xf]
      %v2290 = vld [vmem:[%s2274 + $0x3c] sm:$0xf]
      %v2291 = vld [vmem:[%s2274 + $0x40] sm:$0xf]
      %v2292 = vld [vmem:[%s2274 + $0x44] sm:$0xf]
      %v2293 = vld [vmem:[%s2274 + $0x48] sm:$0xf]
      %v2294 = vld [vmem:[%s2274 + $0x4c] sm:$0xf]
      %v2295 = vld [vmem:[%s2274 + $0x50] sm:$0xf]
      %v2296 = vld [vmem:[%s2274 + $0x54] sm:$0xf]
      %v2297 = vld [vmem:[%s2274 + $0x58] sm:$0xf]
      %v2298 = vld [vmem:[%s2274 + $0x5c] sm:$0xf]
      %v2299 = vld [vmem:[%s2274 + $0x60] sm:$0xf]
      %v2300 = vld [vmem:[%s2274 + $0x64] sm:$0xf]
      %v2301 = vld [vmem:[%s2274 + $0x68] sm:$0xf]
      %v2302 = vld [vmem:[%s2274 + $0x6c] sm:$0xf]
      %v2303 = vld [vmem:[%s2274 + $0x70] sm:$0xf]
      %v2304 = vld [vmem:[%s2274 + $0x74] sm:$0xf]
      %v2305 = vld [vmem:[%s2274 + $0x78] sm:$0xf]
      %v2306 = vld [vmem:[%s2274 + $0x7c] sm:$0xf]
      %v2307 = vld [vmem:[%s2274 + $0x80] sm:$0xf]
      %v2308 = vld [vmem:[%s2274 + $0x84] sm:$0xf]
      %v2309 = vld [vmem:[%s2274 + $0x88] sm:$0xf]
      %v2310 = vld [vmem:[%s2274 + $0x8c] sm:$0xf]
      %v2311 = vld [vmem:[%s2274 + $0x90] sm:$0xf]
      %v2312 = vld [vmem:[%s2274 + $0x94] sm:$0xf]
      %v2313 = vld [vmem:[%s2274 + $0x98] sm:$0xf]
      %v2314 = vld [vmem:[%s2274 + $0x9c] sm:$0xf]
      %v2315 = vld [vmem:[%s2274 + $0xa0] sm:$0xf]
      %v2316 = vld [vmem:[%s2274 + $0xa4] sm:$0xf]
      %v2317 = vld [vmem:[%s2274 + $0xa8] sm:$0xf]
      %v2318 = vld [vmem:[%s2274 + $0xac] sm:$0xf]
      %v2319 = vld [vmem:[%s2274 + $0xb0] sm:$0xf]
      %v2320 = vld [vmem:[%s2274 + $0xb4] sm:$0xf]
      %v2321 = vld [vmem:[%s2274 + $0xb8] sm:$0xf]
      %v2322 = vld [vmem:[%s2274 + $0xbc] sm:$0xf]
      %v2323 = vld [vmem:[%s2274 + $0xc0] sm:$0xf]
      %v2324 = vld [vmem:[%s2274 + $0xc4] sm:$0xf]
      %v2325 = vld [vmem:[%s2274 + $0xc8] sm:$0xf]
      %v2326 = vld [vmem:[%s2274 + $0xcc] sm:$0xf]
      %v2327 = vld [vmem:[%s2274 + $0xd0] sm:$0xf]
      %v2328 = vld [vmem:[%s2274 + $0xd4] sm:$0xf]
      %v2329 = vld [vmem:[%s2274 + $0xd8] sm:$0xf]
      %v2330 = vld [vmem:[%s2274 + $0xdc] sm:$0xf]
      %v2331 = vld [vmem:[%s2274 + $0xe0] sm:$0xf]
      %v2332 = vld [vmem:[%s2274 + $0xe4] sm:$0xf]
      %v2333 = vld [vmem:[%s2274 + $0xe8] sm:$0xf]
      %v2334 = vld [vmem:[%s2274 + $0xec] sm:$0xf]
      %v2343 = vunpack.c.l.b16 %v2266
      %v2344 = vunpack.c.h.b16 %v2266
      %v2345 = vunpack.c.l.b16 %v2267
      %v2346 = vunpack.c.h.b16 %v2267
      %v2347 = vunpack.c.l.b16 %v2268
      %v2348 = vunpack.c.h.b16 %v2268
      %v2349 = vunpack.c.l.b16 %v2269
      %v2350 = vunpack.c.h.b16 %v2269
      %v2351 = vunpack.c.l.b16 %v2270
      %v2352 = vunpack.c.h.b16 %v2270
      %v2353 = vunpack.c.l.b16 %v2271
      %v2354 = vunpack.c.h.b16 %v2271
      %v2355 = vunpack.c.l.b16 %v2272
      %v2356 = vunpack.c.h.b16 %v2272
      %v2357 = vunpack.c.l.b16 %v2273
      %v2358 = vunpack.c.h.b16 %v2273
      %v2359 = vpack.c.b16 %v2347, %v2343
      %v2360 = vpack.c.b16 %v2348, %v2344
      %v2361 = vpack.c.b16 %v2349, %v2345
      %v2362 = vpack.c.b16 %v2350, %v2346
      %v2363 = vpack.c.b16 %v2355, %v2351
      %v2364 = vpack.c.b16 %v2356, %v2352
      %v2365 = vpack.c.b16 %v2357, %v2353
      %v2366 = vpack.c.b16 %v2358, %v2354
      %v2433 = vunpack.c.l.b16 %v2275
      %v2434 = vunpack.c.l.b16 %v2276
      %v2435 = vunpack.c.l.b16 %v2277
      %v2436 = vunpack.c.l.b16 %v2278
      %v2437 = vunpack.c.l.b16 %v2279
      %v2438 = vunpack.c.l.b16 %v2280
      %v2439 = vunpack.c.l.b16 %v2281
      %v2440 = vunpack.c.l.b16 %v2282
      %v2441 = vunpack.c.l.b16 %v2283
      %v2442 = vunpack.c.l.b16 %v2284
      %v2443 = vunpack.c.l.b16 %v2285
      %v2444 = vunpack.c.l.b16 %v2286
      %v2445 = vunpack.c.l.b16 %v2287
      %v2446 = vunpack.c.l.b16 %v2288
      %v2447 = vunpack.c.l.b16 %v2289
      %v2448 = vunpack.c.l.b16 %v2290
      %v2449 = vunpack.c.l.b16 %v2291
      %v2450 = vunpack.c.l.b16 %v2292
      %v2451 = vunpack.c.l.b16 %v2293
      %v2452 = vunpack.c.l.b16 %v2294
      %v2453 = vunpack.c.l.b16 %v2295
      %v2454 = vunpack.c.l.b16 %v2296
      %v2455 = vunpack.c.l.b16 %v2297
      %v2456 = vunpack.c.l.b16 %v2298
      %v2457 = vunpack.c.l.b16 %v2299
      %v2458 = vunpack.c.l.b16 %v2300
      %v2459 = vunpack.c.l.b16 %v2301
      %v2460 = vunpack.c.l.b16 %v2302
      %v2461 = vunpack.c.l.b16 %v2303
      %v2462 = vunpack.c.l.b16 %v2304
      %v2463 = vunpack.c.l.b16 %v2305
      %v2464 = vunpack.c.l.b16 %v2306
      %v2465 = vunpack.c.l.b16 %v2307
      %v2466 = vunpack.c.l.b16 %v2308
      %v2467 = vunpack.c.l.b16 %v2309
      %v2468 = vunpack.c.l.b16 %v2310
      %v2469 = vunpack.c.l.b16 %v2311
      %v2470 = vunpack.c.l.b16 %v2312
      %v2471 = vunpack.c.l.b16 %v2313
      %v2472 = vunpack.c.l.b16 %v2314
      %v2473 = vunpack.c.l.b16 %v2315
      %v2474 = vunpack.c.l.b16 %v2316
      %v2475 = vunpack.c.l.b16 %v2317
      %v2476 = vunpack.c.l.b16 %v2318
      %v2477 = vunpack.c.l.b16 %v2319
      %v2478 = vunpack.c.l.b16 %v2320
      %v2479 = vunpack.c.l.b16 %v2321
      %v2480 = vunpack.c.l.b16 %v2322
      %v2481 = vunpack.c.l.b16 %v2323
      %v2482 = vunpack.c.l.b16 %v2324
      %v2483 = vunpack.c.l.b16 %v2325
      %v2484 = vunpack.c.l.b16 %v2326
      %v2485 = vunpack.c.l.b16 %v2327
      %v2486 = vunpack.c.l.b16 %v2328
      %v2487 = vunpack.c.l.b16 %v2329
      %v2488 = vunpack.c.l.b16 %v2330
      %v2489 = vunpack.c.l.b16 %v2331
      %v2490 = vunpack.c.l.b16 %v2332
      %v2491 = vunpack.c.l.b16 %v2333
      %v2492 = vunpack.c.l.b16 %v2334
      %v2493 = vpack.c.b16 %v2434, %v2433
      %v2494 = vpack.c.b16 %v2436, %v2435
      %v2495 = vpack.c.b16 %v2438, %v2437
      %v2496 = vpack.c.b16 %v2440, %v2439
      %v2497 = vpack.c.b16 %v2442, %v2441
      %v2498 = vpack.c.b16 %v2444, %v2443
      %v2499 = vpack.c.b16 %v2446, %v2445
      %v2500 = vpack.c.b16 %v2448, %v2447
      %v2501 = vpack.c.b16 %v2450, %v2449
      %v2502 = vpack.c.b16 %v2452, %v2451
      %v2503 = vpack.c.b16 %v2454, %v2453
      %v2504 = vpack.c.b16 %v2456, %v2455
      %v2505 = vpack.c.b16 %v2458, %v2457
      %v2506 = vpack.c.b16 %v2460, %v2459
      %v2507 = vpack.c.b16 %v2462, %v2461
      %v2508 = vpack.c.b16 %v2464, %v2463
      %v2509 = vpack.c.b16 %v2466, %v2465
      %v2510 = vpack.c.b16 %v2468, %v2467
      %v2511 = vpack.c.b16 %v2470, %v2469
      %v2512 = vpack.c.b16 %v2472, %v2471
      %v2513 = vpack.c.b16 %v2474, %v2473
      %v2514 = vpack.c.b16 %v2476, %v2475
      %v2515 = vpack.c.b16 %v2478, %v2477
      %v2516 = vpack.c.b16 %v2480, %v2479
      %v2517 = vpack.c.b16 %v2482, %v2481
      %v2518 = vpack.c.b16 %v2484, %v2483
      %v2519 = vpack.c.b16 %v2486, %v2485
      %v2520 = vpack.c.b16 %v2488, %v2487
      %v2521 = vpack.c.b16 %v2490, %v2489
      %v2522 = vpack.c.b16 %v2492, %v2491
      %v2554 = vsel %vm518, %v2362, 0
      %v2557 = vsel %vm518, %v2366, 0
      %2559 = vmatprep.subr.bf16.mxu0 0
      %2560 = vmatpush1.bf16.msra.mxu0 %v2500
      %2561 = vmatprep.subr.bf16.mxu0 0
      %2562 = vmatpush1.bf16.msra.mxu0 %v2499
      %2563 = vmatprep.subr.bf16.mxu0 0
      %2564 = vmatpush1.bf16.msra.mxu0 %v2498
      %2565 = vmatprep.subr.bf16.mxu0 0
      %2566 = vmatpush1.bf16.msra.mxu0 %v2497
      %2567 = vmatprep.subr.bf16.mxu0 0
      %2568 = vmatpush1.bf16.msra.mxu0 %v2496
      %2569 = vmatprep.subr.bf16.mxu0 0
      %2570 = vmatpush1.bf16.msra.mxu0 %v2495
      %2571 = vmatprep.subr.bf16.mxu0 0
      %2572 = vmatpush1.bf16.msra.mxu0 %v2494
      %2573 = vmatprep.subr.bf16.mxu0 0
      %2574 = vmatpush1.bf16.msra.mxu0 %v2493
      %2575 = vmatprep.subr.bf16.mxu0 0
      %2576 = vmatpush2.bf16.msra.mxu0 %v2508
      %2577 = vmatprep.subr.bf16.mxu0 0
      %2578 = vmatpush2.bf16.msra.mxu0 %v2507
      %2579 = vmatprep.subr.bf16.mxu0 0
      %2580 = vmatpush2.bf16.msra.mxu0 %v2506
      %2581 = vmatprep.subr.bf16.mxu0 0
      %2582 = vmatpush2.bf16.msra.mxu0 %v2505
      %2583 = vmatprep.subr.bf16.mxu0 0
      %2584 = vmatpush2.bf16.msra.mxu0 %v2504
      %2585 = vmatprep.subr.bf16.mxu0 0
      %2586 = vmatpush2.bf16.msra.mxu0 %v2503
      %2587 = vmatprep.subr.bf16.mxu0 0
      %2588 = vmatpush2.bf16.msra.mxu0 %v2502
      %2589 = vmatprep.subr.bf16.mxu0 0
      %2590 = vmatpush2.bf16.msra.mxu0 %v2501
      %2591 = vmatprep.mubr.bf16.mxu0 %v2360
      %2592 = vmatmul.mubr.bf16.gmra.mxu0 %v2359
      %v2593 = vpop.f32.mrf.mxu0
      %v2594 = vadd.f32 0.0, %v2593
      %v2595 = vpop.f32.mrf.mxu0
      %v2596 = vpop.f32.mrf.mxu0
      %v2597 = vadd.f32 0.0, %v2596
      %v2598 = vpop.f32.mrf.mxu0
      %2599 = vmatprep.mubr.bf16.mxu0 %v2364
      %2600 = vmatmul.mubr.bf16.gmra.mxu0 %v2363
      %v2601 = vpop.f32.mrf.mxu0
      %v2602 = vadd.f32 0.0, %v2601
      %v2603 = vpop.f32.mrf.mxu0
      %v2604 = vpop.f32.mrf.mxu0
      %v2605 = vadd.f32 0.0, %v2604
      %v2606 = vpop.f32.mrf.mxu0
      %2607 = vdwg.mxu0
      %2608 = vmatprep.subr.bf16.mxu0 0
      %2609 = vmatpush1.bf16.msra.mxu0 %v2516
      %2610 = vmatprep.subr.bf16.mxu0 0
      %2611 = vmatpush1.bf16.msra.mxu0 %v2515
      %2612 = vmatprep.subr.bf16.mxu0 0
      %2613 = vmatpush1.bf16.msra.mxu0 %v2514
      %2614 = vmatprep.subr.bf16.mxu0 0
      %2615 = vmatpush1.bf16.msra.mxu0 %v2513
      %2616 = vmatprep.subr.bf16.mxu0 0
      %2617 = vmatpush1.bf16.msra.mxu0 %v2512
      %2618 = vmatprep.subr.bf16.mxu0 0
      %2619 = vmatpush1.bf16.msra.mxu0 %v2511
      %2620 = vmatprep.subr.bf16.mxu0 0
      %2621 = vmatpush1.bf16.msra.mxu0 %v2510
      %2622 = vmatprep.subr.bf16.mxu0 0
      %2623 = vmatpush1.bf16.msra.mxu0 %v2509
      %2624 = vmatprep.subr.bf16.mxu0 0
      %2625 = vmatpush2.bf16.msra.mxu0 0
      %2626 = vmatprep.subr.bf16.mxu0 0
      %2627 = vmatpush2.bf16.msra.mxu0 0
      %2628 = vmatprep.subr.bf16.mxu0 0
      %2629 = vmatpush2.bf16.msra.mxu0 %v2522
      %2630 = vmatprep.subr.bf16.mxu0 0
      %2631 = vmatpush2.bf16.msra.mxu0 %v2521
      %2632 = vmatprep.subr.bf16.mxu0 0
      %2633 = vmatpush2.bf16.msra.mxu0 %v2520
      %2634 = vmatprep.subr.bf16.mxu0 0
      %2635 = vmatpush2.bf16.msra.mxu0 %v2519
      %2636 = vmatprep.subr.bf16.mxu0 0
      %2637 = vmatpush2.bf16.msra.mxu0 %v2518
      %2638 = vmatprep.subr.bf16.mxu0 0
      %2639 = vmatpush2.bf16.msra.mxu0 %v2517
      %2640 = vmatprep.mubr.bf16.mxu0 %v2554
      %2641 = vmatmul.mubr.bf16.gmra.mxu0 %v2361
      %v2642 = vpop.f32.mrf.mxu0
      %v2643 = vadd.f32 %v2594, %v2642
      %v2644 = vpop.f32.mrf.mxu0
      %v2645 = vpop.f32.mrf.mxu0
      %v2646 = vadd.f32 %v2597, %v2645
      %v2647 = vpop.f32.mrf.mxu0
      %2648 = vmatprep.mubr.bf16.mxu0 %v2557
      %2649 = vmatmul.mubr.bf16.gmra.mxu0 %v2365
      %v2650 = vpop.f32.mrf.mxu0
      %v2651 = vadd.f32 %v2602, %v2650
      %v2652 = vpop.f32.mrf.mxu0
      %v2653 = vpop.f32.mrf.mxu0
      %v2654 = vadd.f32 %v2605, %v2653
      %v2655 = vpop.f32.mrf.mxu0
      %2656 = vdwg.mxu0
      %v2657 = vadd.f32 %v2261, %v2643
      %v2658 = vadd.f32 %v2262, %v2646
      %v2659 = vadd.f32 %v2263, %v2651
      %v2660 = vadd.f32 %v2264, %v2654
      %v2661 = vld [vmem:[%s2] sm:$0x1]
      %v2663 = vlaneseq
      %v2664 = vshrl.u32 %v2663, 7
      %v2665 = vsub.s32 0, %v2664
      %v2666 = vrot.slane %v2661, %v2665
      %v2668 = vadd.f32 %v2657, %v2666
      %v2669 = vadd.f32 %v2658, %v2666
      %v2670 = vadd.f32 %v2659, %v2666
      %v2671 = vadd.f32 %v2660, %v2666
      %v2672 = vpack.c.bf16 %v2669, %v2668
      %v2673 = vpack.c.bf16 %v2671, %v2670
      %v2676 = vunpack.c.l.b16 %v2672
      %v2677 = vunpack.c.h.b16 %v2672
      %v2678 = vunpack.c.l.b16 %v2673
      %v2679 = vunpack.c.h.b16 %v2673
      %v2680 = vpack.c.b16 %v2676, %v2676
      %v2681 = vpack.c.b16 %v2677, %v2677
      %v2682 = vpack.c.b16 %v2678, %v2678
      %v2683 = vpack.c.b16 %v2679, %v2679
      %vm2688 = vcmask 519168
      %2689 = vst.msk [vmem:[%s269] sm:$0xf] %vm2688, %v2680
      %2690 = vst.msk [vmem:[%s269 + $0x4] sm:$0xf] %vm2688, %v2681
      %2691 = vst.msk [vmem:[%s269 + $0x8] sm:$0xf] %vm2688, %v2682
      %2692 = vst.msk [vmem:[%s269 + $0xc] sm:$0xf] %vm2688, %v2683
      %v2693 = vsel %vm527, %v2668, 0.0
      %v2694 = vsel %vm527, %v2669, 0.0
      %v2695 = vadd.f32 %v2693, %v2694
      %v2696 = vsel %vm527, %v2670, 0.0
      %v2697 = vadd.f32 %v2695, %v2696
      %v2698 = vsel %vm527, %v2671, 0.0
      %v2699 = vadd.f32 %v2697, %v2698
      %v2700 = vrot.slane %v2699, 4
      %v2701 = vadd.f32 %v2699, %v2700
      %v2702 = vrot.slane %v2701, 2
      %v2703 = vadd.f32 %v2701, %v2702
      %v2704 = vrot.slane %v2703, 1
      %v2705 = vadd.f32 %v2703, %v2704
      %vm2706 = vcmask 516096
      %2707 = vst.msk [vmem:[%s277] sm:$0x1] %vm2706, %v2705
      %v2708 = vmul.f32 %v2668, %v2668
      %v2709 = vmul.f32 %v2669, %v2669
      %v2710 = vmul.f32 %v2670, %v2670
      %v2711 = vmul.f32 %v2671, %v2671
      %v2712 = vsel %vm527, %v2708, 0.0
      %v2713 = vsel %vm527, %v2709, 0.0
      %v2714 = vadd.f32 %v2712, %v2713
      %v2715 = vsel %vm527, %v2710, 0.0
      %v2716 = vadd.f32 %v2714, %v2715
      %v2717 = vsel %vm527, %v2711, 0.0
      %v2718 = vadd.f32 %v2716, %v2717
      %v2719 = vrot.slane %v2718, 4
      %v2720 = vadd.f32 %v2718, %v2719
      %v2721 = vrot.slane %v2720, 2
      %v2722 = vadd.f32 %v2720, %v2721
      %v2723 = vrot.slane %v2722, 1
      %v2724 = vadd.f32 %v2722, %v2723
      %2725 = vst.msk [vmem:[%s284] sm:$0x1] %vm2706, %v2724
      %s2726 = smul.u32 4, %s22
      %p2727 = scmp.lt.s32.totalorder %s21, 1
      %s2728 = scalar_select %p2727, %s21, 1
      %p2729 = scmp.lt.s32.totalorder %s2726, 7
      %s2730 = scalar_select %p2729, %s2726, 7
      %s2731 = smul.addr %s2728, 8
      %s2732 = sadd.s32 %s2730, %s2731
      %s2733 = smul.addr %s2732, 4
      %s2734 = scalar_lea.vmem %s3, %s2733
      %p2735 = scmp.lt.s32.totalorder %s21, 1
      %s2736 = scalar_select %p2735, %s21, 1
      %p2737 = scmp.lt.s32.totalorder %s22, 1
      %s2738 = scalar_select %p2737, %s22, 1
      %s2739 = smul.addr %s2736, 2
      %s2740 = sadd.s32 %s2738, %s2739
      %s2741 = scalar_lea.vmem %s4, %s2740
      %p2742 = scmp.lt.s32.totalorder %s21, 1
      %s2743 = scalar_select %p2742, %s21, 1
      %p2744 = scmp.lt.s32.totalorder %s22, 1
      %s2745 = scalar_select %p2744, %s22, 1
      %s2746 = smul.addr %s2743, 2
      %s2747 = sadd.s32 %s2745, %s2746
      %s2748 = scalar_lea.vmem %s5, %s2747
      // Predicated region
      $region33: #{decoder_block_forward.8} parent=31 // pred_check
        %p2749 = pneg %p117
      $region34: #{decoder_block_forward.8} parent=31 // pred_check_branch
        %2751 = sbr.rel (%p2749) target = $region36
      $region35: #{decoder_block_forward.8} parent=31 // pred_region
        %s2752 = smul.u32 4, %s22
      $region36: #{decoder_block_forward.8} parent=31 // pred_fallthru
        _
      // Predicated region
      $region37: #{decoder_block_forward.8} parent=31 // pred_check
        %p2753 = pneg %p145
      $region38: #{decoder_block_forward.8} parent=31 // pred_check_branch
        %2755 = sbr.rel (%p2753) target = $region40
      $region39: #{decoder_block_forward.8} parent=31 // pred_region
        _
      $region40: #{decoder_block_forward.8} parent=31 // pred_fallthru
        _
      // Predicated region
      $region41: #{decoder_block_forward.8} parent=31 // pred_check
        %p2756 = pneg %p173
      $region42: #{decoder_block_forward.8} parent=31 // pred_check_branch
        %2758 = sbr.rel (%p2756) target = $region44
      $region43: #{decoder_block_forward.8} parent=31 // pred_region
        _
      $region44: #{decoder_block_forward.8} parent=31 // pred_fallthru
        _
    $region32: #{decoder_block_forward.8} parent=5 // pred_fallthru
      _
    %p2759 = scmp.le.s32.totalorder 2, %s12
    // Predicated region
    $region45: #{decoder_block_forward.8} parent=5 // pred_check
      %p2760 = pneg %p2759
    $region46: #{decoder_block_forward.8} parent=5 // pred_check_branch
      %2762 = sbr.rel (%p2760) target = $region48
    $region47: #{decoder_block_forward.8} parent=5 // pred_region
      %s2763 = ssub.s32 %s12, 2
      // Predicated region
      $region49: #{decoder_block_forward.8} parent=47 // pred_check
        %p2764 = pneg %p123
      $region50: #{decoder_block_forward.8} parent=47 // pred_check_branch
        %2766 = sbr.rel (%p2764) target = $region52
      $region51: #{decoder_block_forward.8} parent=47 // pred_region
        %s2767 = smul.u32 4, %s24
        %p2768 = scmp.lt.s32.totalorder %s23, 1
        %s2769 = scalar_select %p2768, %s23, 1
        %p2770 = scmp.lt.s32.totalorder %s2767, 7
        %s2771 = scalar_select %p2770, %s2767, 7
        %s2772 = smul.addr %s2769, 8
        %s2773 = sadd.s32 %s2771, %s2772
        %s2774 = smul.addr %s2773, 4
        %s2775 = scalar_lea.vmem %s3, %s2774
      $region52: #{decoder_block_forward.8} parent=47 // pred_fallthru
        _
      // Predicated region
      $region53: #{decoder_block_forward.8} parent=47 // pred_check
        %p2776 = pneg %p151
      $region54: #{decoder_block_forward.8} parent=47 // pred_check_branch
        %2778 = sbr.rel (%p2776) target = $region56
      $region55: #{decoder_block_forward.8} parent=47 // pred_region
        %p2779 = scmp.lt.s32.totalorder %s23, 1
        %s2780 = scalar_select %p2779, %s23, 1
        %p2781 = scmp.lt.s32.totalorder %s24, 1
        %s2782 = scalar_select %p2781, %s24, 1
        %s2783 = smul.addr %s2780, 2
        %s2784 = sadd.s32 %s2782, %s2783
        %s2785 = scalar_lea.vmem %s4, %s2784
      $region56: #{decoder_block_forward.8} parent=47 // pred_fallthru
        _
      // Predicated region
      $region57: #{decoder_block_forward.8} parent=47 // pred_check
        %p2786 = pneg %p179
      $region58: #{decoder_block_forward.8} parent=47 // pred_check_branch
        %2788 = sbr.rel (%p2786) target = $region60
      $region59: #{decoder_block_forward.8} parent=47 // pred_region
        %p2789 = scmp.lt.s32.totalorder %s23, 1
        %s2790 = scalar_select %p2789, %s23, 1
        %p2791 = scmp.lt.s32.totalorder %s24, 1
        %s2792 = scalar_select %p2791, %s24, 1
        %s2793 = smul.addr %s2790, 2
        %s2794 = sadd.s32 %s2792, %s2793
        %s2795 = scalar_lea.vmem %s5, %s2794
      $region60: #{decoder_block_forward.8} parent=47 // pred_fallthru
        _
    $region48: #{decoder_block_forward.8} parent=5 // pred_fallthru
      _
  $region6: #{decoder_block_forward.8} parent=0 // loop_footer
    %s16 = sadd.s32 1, %s12
  $region7: #{decoder_block_forward.8} parent=0 // loop_footer_branch
    %11 = sbr.rel target = $region3
  $region8: #{decoder_block_forward.8} parent=0 // loop_exit
    _

</llo_original>
